<compile_context>
chip_gen: v7x
topology: tpu7x:2x2x1
jax: 0.10.0
libtpu: 0.0.40
codegen_flags: <defaults>
</compile_context>

<pallas_src>
import functools

import jax
import jax.numpy as jnp
from jax import lax
from jax.experimental import pallas as pl
from jax.experimental.pallas import tpu as pltpu


# ---------------------------------------------------------------------------
# Pallas kernel: all W windows of a head-group per grid step
# ---------------------------------------------------------------------------
def _local_attn_kernel(q_ref, k_ref, v_ref, cos_ref, sin_ref, o_ref, *,
                       ws, W, nlook, look_backward):
    HG = q_ref.shape[0]                     # heads (b*h rows) in this block
    D = q_ref.shape[-1]
    half = D // 2
    G = HG * W                              # fused (head, window) batch axis
    mask_value = -jnp.finfo(jnp.float32).max

    def rot(x):
        # rotate_half's lane permutation; the sign flip lives in sin_ref.
        return jnp.concatenate([x[..., half:], x[..., :half]], axis=-1)

    # --- rotary on queries: last ws phases (freqs[-q_len:] in the reference) --
    cos_q = cos_ref[(nlook - 1) * ws:nlook * ws]          # (ws, D) static slice
    sin_q = sin_ref[(nlook - 1) * ws:nlook * ws]
    q = q_ref[...]                                        # (HG, W, ws, D), pre-scaled
    q = q * cos_q + rot(q) * sin_q
    q = q.reshape(G, ws, D)

    k = k_ref[...]                                        # (HG, W+nlook-1, ws, D)
    v = v_ref[...]

    # window index of each fused row-group, for boundary-only pad masking
    need_mask = (look_backward > 0) or (nlook - 1 - look_backward > 0)
    w_idx = None
    if need_mask:
        w_idx = lax.broadcasted_iota(
            jnp.int32, (HG, W, ws, ws), 1).reshape(G, ws, ws)

    # --- q @ k^T per look-around chunk (batched over G, contract on D) -------
    sims = []
    for c in range(nlook):
        kc = k[:, c:c + W]                                # padded windows c..c+W-1
        cos_c = cos_ref[c * ws:(c + 1) * ws]
        sin_c = sin_ref[c * ws:(c + 1) * ws]
        kc = (kc * cos_c + rot(kc) * sin_c).reshape(G, ws, D)
        s = jnp.einsum('gqd,gkd->gqk', q, kc,
                       preferred_element_type=jnp.float32)   # (G, ws, ws)
        # chunk c holds keys of source window (w + c - look_backward);
        # mask windows that fall outside [0, W) — only boundary chunks do work.
        lo = look_backward - c
        hi = W + look_backward - c
        if lo > 0 or hi < W:
            s = jnp.where((w_idx < lo) | (w_idx >= hi), mask_value, s)
        sims.append(s)

    # --- softmax over the look-around key axis (chunked) ---------------------
    m = sims[0].max(axis=-1, keepdims=True)
    for s in sims[1:]:
        m = jnp.maximum(m, s.max(axis=-1, keepdims=True))

    denom = None
    acc = None
    for c, s in enumerate(sims):
        p = jnp.exp(s - m)
        d_c = p.sum(axis=-1, keepdims=True)
        denom = d_c if denom is None else denom + d_c
        vc = v[:, c:c + W].reshape(G, ws, D)
        pv = jnp.einsum('gqk,gkd->gqd', p, vc,
                        preferred_element_type=jnp.float32)
        acc = pv if acc is None else acc + pv

    # EUP approximate reciprocal + one Newton step (full f32 accuracy, no VPU divide)
    inv = pl.reciprocal(denom, approx=True)
    inv = inv * (2.0 - denom * inv)

    out = (acc * inv).reshape(HG, W, ws, D)
    o_ref[...] = out.astype(o_ref.dtype)


# ---------------------------------------------------------------------------
# Helpers
# ---------------------------------------------------------------------------
def _sinusoidal_tables(kw, D, theta):
    """SinusoidalEmbeddings(dim=D, use_xpos=False) over the look-around key length."""
    inv_freq = 1.0 / (theta ** (jnp.arange(0, D, 2, dtype=jnp.float32) / D))
    t = jnp.arange(kw, dtype=jnp.float32)
    fr = t[:, None] * inv_freq[None, :]
    freqs = jnp.concatenate([fr, fr], axis=-1)            # (kw, D)
    return jnp.cos(freqs), jnp.sin(freqs)


def _pick_heads_per_block(bh, w, ws, d, nlook, budget_bytes=8 * 1024 * 1024):
    """Largest divisor of B*H whose per-step f32 VMEM footprint fits the budget
    (conservative so the same sizing is safe on v7x's 64 MiB VMEM)."""
    kv_rows = (w + nlook - 1) * ws
    per_head = 4 * (2 * (2 * w * ws * d)        # q + out blocks, double-buffered
                    + 2 * (2 * kv_rows * d)     # k + v blocks, double-buffered
                    + nlook * w * ws * ws       # sim / p chunks live in-kernel
                    + 2 * w * ws * d)           # rotary / pv temporaries
    best = 1
    for hg in range(1, bh + 1):
        if bh % hg == 0 and hg * per_head <= budget_bytes:
            best = hg
    return best


# ---------------------------------------------------------------------------
# Wrapper
# ---------------------------------------------------------------------------
def local_attention(q, k, v, *, window_size, look_backward=1, look_forward=1,
                    theta=10000.0, scale=None, heads_per_block=None):
    B, H, N, D = q.shape
    ws = window_size
    assert N % ws == 0, "sequence length must be divisible by window size"
    W = N // ws
    nlook = look_backward + 1 + look_forward
    kw = nlook * ws
    scale = D ** -0.5 if scale is None else scale
    BH = B * H

    # q pre-scaled; K/V padded ONCE by one window group on each side (pad value
    # is irrelevant — padded columns are masked to -max before the softmax).
    qs = (q.astype(jnp.float32) * scale).reshape(BH, W, ws, D)
    kp = jnp.pad(k.astype(jnp.float32).reshape(BH, W, ws, D),
                 ((0, 0), (look_backward, look_forward), (0, 0), (0, 0)))
    vp = jnp.pad(v.astype(jnp.float32).reshape(BH, W, ws, D),
                 ((0, 0), (look_backward, look_forward), (0, 0), (0, 0)))

    cos, sin = _sinusoidal_tables(kw, D, theta)
    half = D // 2
    # fold rotate_half's sign flip into the sin table: x*cos + rot(x)*sin_signed
    sin_signed = jnp.concatenate([-sin[:, :half], sin[:, half:]], axis=-1)

    if heads_per_block is None:
        heads_per_block = _pick_heads_per_block(BH, W, ws, D, nlook)
    HG = heads_per_block
    assert BH % HG == 0

    kernel = functools.partial(_local_attn_kernel, ws=ws, W=W, nlook=nlook,
                               look_backward=look_backward)

    out = pl.pallas_call(
        kernel,
        out_shape=jax.ShapeDtypeStruct((BH, W, ws, D), jnp.float32),
        grid=(BH // HG,),
        in_specs=[
            pl.BlockSpec((HG, W, ws, D), lambda b: (b, 0, 0, 0)),              # q
            pl.BlockSpec((HG, W + nlook - 1, ws, D), lambda b: (b, 0, 0, 0)),  # k (padded)
            pl.BlockSpec((HG, W + nlook - 1, ws, D), lambda b: (b, 0, 0, 0)),  # v (padded)
            pl.BlockSpec((kw, D), lambda b: (0, 0)),                           # cos
            pl.BlockSpec((kw, D), lambda b: (0, 0)),                           # sin (sign-folded)
        ],
        out_specs=pl.BlockSpec((HG, W, ws, D), lambda b: (b, 0, 0, 0)),
        compiler_params=pltpu.CompilerParams(
            dimension_semantics=("parallel",),
            vmem_limit_bytes=32 * 1024 * 1024),
    )(qs, kp, vp, cos, sin_signed)

    return out.reshape(B, H, N, D)


# ---------------------------------------------------------------------------
# Pure-JAX reference (mirrors the PyTorch forward) for a correctness check
# ---------------------------------------------------------------------------
def look_around(x, backward, forward, pad_value):
    """x: (bh, W, ws, d) -> (bh, W, (backward+1+forward)*ws, d)."""
    _, W, _, _ = x.shape
    padded = jnp.pad(x, ((0, 0), (backward, forward), (0, 0), (0, 0)),
                     constant_values=pad_value)
    segs = [padded[:, t:t + W] for t in range(backward + forward + 1)]
    return jnp.concatenate(segs, axis=2)


def reference(q, k, v, *, window_size, look_backward=1, look_forward=1,
              theta=10000.0):
    B, H, N, D = q.shape
    ws = window_size
    W = N // ws
    kw = (look_backward + 1 + look_forward) * ws
    scale = D ** -0.5

    bq = (q.astype(jnp.float32) * scale).reshape(B * H, W, ws, D)
    bk = look_around(k.astype(jnp.float32).reshape(B * H, W, ws, D),
                     look_backward, look_forward, -1.0)
    bv = look_around(v.astype(jnp.float32).reshape(B * H, W, ws, D),
                     look_backward, look_forward, -1.0)

    cos_k, sin_k = _sinusoidal_tables(kw, D, theta)
    cos_q, sin_q = cos_k[-ws:], sin_k[-ws:]

    def rot(x):
        h = D // 2
        return jnp.concatenate([-x[..., h:], x[..., :h]], axis=-1)

    bq = bq * cos_q + rot(bq) * sin_q
    bk = bk * cos_k + rot(bk) * sin_k

    pos = jnp.arange(N, dtype=jnp.float32).reshape(1, W, ws, 1)
    bq_k = look_around(pos, look_backward, look_forward, -1.0)[0, :, :, 0]  # (W, kw)
    pad_mask = bq_k == -1.0

    sim = jnp.einsum('bwid,bwjd->bwij', bq, bk)
    mask_value = -jnp.finfo(jnp.float32).max
    sim = jnp.where(pad_mask[None, :, None, :], mask_value, sim)
    attn = jax.nn.softmax(sim, axis=-1)
    out = jnp.einsum('bwij,bwjd->bwid', attn, bv)
    return out.reshape(B, H, N, D)


if __name__ == "__main__":
    # LocalAttention(window_size=16, causal=False, dim=32) -> look_forward defaults to 1,
    # rotary pos emb enabled, no learnable parameters (deterministic sinusoid buffers).
    B, H, N, D = 2, 2, 64, 32
    ws = 16

    key = jax.random.PRNGKey(0)
    kq, kk, kv = jax.random.split(key, 3)
    q = jax.random.normal(kq, (B, H, N, D), jnp.float32)
    k = jax.random.normal(kk, (B, H, N, D), jnp.float32)
    v = jax.random.normal(kv, (B, H, N, D), jnp.float32)

    out = local_attention(q, k, v, window_size=ws)
    jax.block_until_ready(out)

    ref = reference(q, k, v, window_size=ws)
    assert out.shape == (B, H, N, D)
    err = float(jnp.max(jnp.abs(out - ref)))
    assert jnp.allclose(out, ref, atol=2e-4, rtol=2e-4), err

    print("KERNEL_OK")
</pallas_src>

<mosaic_0001>
module attributes {stable_mosaic.version = 11 : i64} {
  func.func @_local_attn_kernel(%arg0: i32, %arg1: memref<4x4x16x32xf32, #tpu.memory_space<vmem>>, %arg2: memref<4x6x16x32xf32, #tpu.memory_space<vmem>>, %arg3: memref<4x6x16x32xf32, #tpu.memory_space<vmem>>, %arg4: memref<48x32xf32, #tpu.memory_space<vmem>>, %arg5: memref<48x32xf32, #tpu.memory_space<vmem>>, %arg6: memref<4x4x16x32xf32, #tpu.memory_space<vmem>>) attributes {dimension_semantics = [#tpu.dimension_semantics<parallel>], iteration_bounds = array<i64: 1>, scalar_prefetch = 0 : i64, scratch_operands = 0 : i64, tpu.core_type = #tpu.core_type<tc>, window_params = [{transform_indices = @transform_0, window_bounds = array<i64: 4, 4, 16, 32>}, {transform_indices = @transform_1, window_bounds = array<i64: 4, 6, 16, 32>}, {transform_indices = @transform_2, window_bounds = array<i64: 4, 6, 16, 32>}, {pipeline_mode = #tpu.pipeline_mode<synchronous>, transform_indices = @transform_3, window_bounds = array<i64: 48, 32>}, {pipeline_mode = #tpu.pipeline_mode<synchronous>, transform_indices = @transform_4, window_bounds = array<i64: 48, 32>}, {transform_indices = @transform_5, window_bounds = array<i64: 4, 4, 16, 32>}]} {
    %c32 = arith.constant 32 : index
    %c0 = arith.constant 0 : index
    %0 = vector.load %arg4[%c32, %c0] : memref<48x32xf32, #tpu.memory_space<vmem>>, vector<16x32xf32>
    %c32_0 = arith.constant 32 : index
    %c0_1 = arith.constant 0 : index
    %1 = vector.load %arg5[%c32_0, %c0_1] : memref<48x32xf32, #tpu.memory_space<vmem>>, vector<16x32xf32>
    %c0_2 = arith.constant 0 : index
    %c0_3 = arith.constant 0 : index
    %c0_4 = arith.constant 0 : index
    %c0_5 = arith.constant 0 : index
    %2 = vector.load %arg1[%c0_2, %c0_3, %c0_4, %c0_5] : memref<4x4x16x32xf32, #tpu.memory_space<vmem>>, vector<4x4x16x32xf32>
    %3 = vector.shape_cast %0 : vector<16x32xf32> to vector<1x1x16x32xf32>
    %4 = vector.broadcast %3 : vector<1x1x16x32xf32> to vector<4x4x16x32xf32>
    %5 = arith.mulf %2, %4 : vector<4x4x16x32xf32>
    %6 = vector.extract_strided_slice %2 {offsets = [0, 0, 0, 16], sizes = [4, 4, 16, 16], strides = [1, 1, 1, 1]} : vector<4x4x16x32xf32> to vector<4x4x16x16xf32>
    %7 = vector.extract_strided_slice %2 {offsets = [0, 0, 0, 0], sizes = [4, 4, 16, 16], strides = [1, 1, 1, 1]} : vector<4x4x16x32xf32> to vector<4x4x16x16xf32>
    %8 = tpu.concatenate %6, %7 in 3 : vector<4x4x16x16xf32>, vector<4x4x16x16xf32> -> vector<4x4x16x32xf32>
    %9 = vector.shape_cast %1 : vector<16x32xf32> to vector<1x1x16x32xf32>
    %10 = vector.broadcast %9 : vector<1x1x16x32xf32> to vector<4x4x16x32xf32>
    %11 = arith.mulf %8, %10 : vector<4x4x16x32xf32>
    %12 = arith.addf %5, %11 : vector<4x4x16x32xf32>
    %13 = vector.shape_cast %12 : vector<4x4x16x32xf32> to vector<16x16x32xf32>
    %c0_6 = arith.constant 0 : index
    %c0_7 = arith.constant 0 : index
    %c0_8 = arith.constant 0 : index
    %c0_9 = arith.constant 0 : index
    %14 = vector.load %arg2[%c0_6, %c0_7, %c0_8, %c0_9] : memref<4x6x16x32xf32, #tpu.memory_space<vmem>>, vector<4x6x16x32xf32>
    %c0_10 = arith.constant 0 : index
    %c0_11 = arith.constant 0 : index
    %c0_12 = arith.constant 0 : index
    %c0_13 = arith.constant 0 : index
    %15 = vector.load %arg3[%c0_10, %c0_11, %c0_12, %c0_13] : memref<4x6x16x32xf32, #tpu.memory_space<vmem>>, vector<4x6x16x32xf32>
    %16 = tpu.iota {dimensions = array<i32: 1>} : vector<4x4x16x16xi32>
    %17 = vector.shape_cast %16 : vector<4x4x16x16xi32> to vector<16x16x16xi32>
    %18 = vector.extract_strided_slice %14 {offsets = [0, 0, 0, 0], sizes = [4, 4, 16, 32], strides = [1, 1, 1, 1]} : vector<4x6x16x32xf32> to vector<4x4x16x32xf32>
    %c0_14 = arith.constant 0 : index
    %c0_15 = arith.constant 0 : index
    %19 = vector.load %arg4[%c0_14, %c0_15] : memref<48x32xf32, #tpu.memory_space<vmem>>, vector<16x32xf32>
    %c0_16 = arith.constant 0 : index
    %c0_17 = arith.constant 0 : index
    %20 = vector.load %arg5[%c0_16, %c0_17] : memref<48x32xf32, #tpu.memory_space<vmem>>, vector<16x32xf32>
    %21 = vector.shape_cast %19 : vector<16x32xf32> to vector<1x1x16x32xf32>
    %22 = vector.broadcast %21 : vector<1x1x16x32xf32> to vector<4x4x16x32xf32>
    %23 = arith.mulf %18, %22 : vector<4x4x16x32xf32>
    %24 = vector.extract_strided_slice %18 {offsets = [0, 0, 0, 16], sizes = [4, 4, 16, 16], strides = [1, 1, 1, 1]} : vector<4x4x16x32xf32> to vector<4x4x16x16xf32>
    %25 = vector.extract_strided_slice %18 {offsets = [0, 0, 0, 0], sizes = [4, 4, 16, 16], strides = [1, 1, 1, 1]} : vector<4x4x16x32xf32> to vector<4x4x16x16xf32>
    %26 = tpu.concatenate %24, %25 in 3 : vector<4x4x16x16xf32>, vector<4x4x16x16xf32> -> vector<4x4x16x32xf32>
    %27 = vector.shape_cast %20 : vector<16x32xf32> to vector<1x1x16x32xf32>
    %28 = vector.broadcast %27 : vector<1x1x16x32xf32> to vector<4x4x16x32xf32>
    %29 = arith.mulf %26, %28 : vector<4x4x16x32xf32>
    %30 = arith.addf %23, %29 : vector<4x4x16x32xf32>
    %31 = vector.shape_cast %30 : vector<4x4x16x32xf32> to vector<16x16x32xf32>
    "tpu.trace_start"() <{level = 10 : i32, message = "gqd,gkd->gqk"}> : () -> ()
    %cst = arith.constant dense<0.000000e+00> : vector<16x16x16xf32>
    %32 = tpu.matmul %13, %31, %cst {dimension_numbers = #tpu.dot_dimension_numbers<[2], [2], [1], [1], [0, 0, 0, 1, 1, 1], [0], [0]>} : vector<16x16x32xf32>, vector<16x16x32xf32>, vector<16x16x16xf32> -> vector<16x16x16xf32>
    %c1_i32 = arith.constant 1 : i32
    "tpu.trace_stop"() : () -> ()
    %33 = vector.broadcast %c1_i32 : i32 to vector<16x16x16xi32>
    %34 = arith.cmpi slt, %17, %33 : vector<16x16x16xi32>
    %c5_i32 = arith.constant 5 : i32
    %35 = vector.broadcast %c5_i32 : i32 to vector<16x16x16xi32>
    %36 = arith.cmpi sge, %17, %35 : vector<16x16x16xi32>
    %37 = arith.ori %34, %36 : vector<16x16x16xi1>
    %cst_18 = arith.constant -3.40282347E+38 : f32
    %38 = vector.broadcast %cst_18 : f32 to vector<16x16x16xf32>
    %39 = arith.select %37, %38, %32 : vector<16x16x16xi1>, vector<16x16x16xf32>
    %40 = vector.extract_strided_slice %14 {offsets = [0, 1, 0, 0], sizes = [4, 4, 16, 32], strides = [1, 1, 1, 1]} : vector<4x6x16x32xf32> to vector<4x4x16x32xf32>
    %c16 = arith.constant 16 : index
    %c0_19 = arith.constant 0 : index
    %41 = vector.load %arg4[%c16, %c0_19] : memref<48x32xf32, #tpu.memory_space<vmem>>, vector<16x32xf32>
    %c16_20 = arith.constant 16 : index
    %c0_21 = arith.constant 0 : index
    %42 = vector.load %arg5[%c16_20, %c0_21] : memref<48x32xf32, #tpu.memory_space<vmem>>, vector<16x32xf32>
    %43 = vector.shape_cast %41 : vector<16x32xf32> to vector<1x1x16x32xf32>
    %44 = vector.broadcast %43 : vector<1x1x16x32xf32> to vector<4x4x16x32xf32>
    %45 = arith.mulf %40, %44 : vector<4x4x16x32xf32>
    %46 = vector.extract_strided_slice %40 {offsets = [0, 0, 0, 16], sizes = [4, 4, 16, 16], strides = [1, 1, 1, 1]} : vector<4x4x16x32xf32> to vector<4x4x16x16xf32>
    %47 = vector.extract_strided_slice %40 {offsets = [0, 0, 0, 0], sizes = [4, 4, 16, 16], strides = [1, 1, 1, 1]} : vector<4x4x16x32xf32> to vector<4x4x16x16xf32>
    %48 = tpu.concatenate %46, %47 in 3 : vector<4x4x16x16xf32>, vector<4x4x16x16xf32> -> vector<4x4x16x32xf32>
    %49 = vector.shape_cast %42 : vector<16x32xf32> to vector<1x1x16x32xf32>
    %50 = vector.broadcast %49 : vector<1x1x16x32xf32> to vector<4x4x16x32xf32>
    %51 = arith.mulf %48, %50 : vector<4x4x16x32xf32>
    %52 = arith.addf %45, %51 : vector<4x4x16x32xf32>
    %53 = vector.shape_cast %52 : vector<4x4x16x32xf32> to vector<16x16x32xf32>
    "tpu.trace_start"() <{level = 10 : i32, message = "gqd,gkd->gqk"}> : () -> ()
    %cst_22 = arith.constant dense<0.000000e+00> : vector<16x16x16xf32>
    %54 = tpu.matmul %13, %53, %cst_22 {dimension_numbers = #tpu.dot_dimension_numbers<[2], [2], [1], [1], [0, 0, 0, 1, 1, 1], [0], [0]>} : vector<16x16x32xf32>, vector<16x16x32xf32>, vector<16x16x16xf32> -> vector<16x16x16xf32>
    "tpu.trace_stop"() : () -> ()
    %55 = vector.extract_strided_slice %14 {offsets = [0, 2, 0, 0], sizes = [4, 4, 16, 32], strides = [1, 1, 1, 1]} : vector<4x6x16x32xf32> to vector<4x4x16x32xf32>
    %c32_23 = arith.constant 32 : index
    %c0_24 = arith.constant 0 : index
    %56 = vector.load %arg4[%c32_23, %c0_24] : memref<48x32xf32, #tpu.memory_space<vmem>>, vector<16x32xf32>
    %c32_25 = arith.constant 32 : index
    %c0_26 = arith.constant 0 : index
    %57 = vector.load %arg5[%c32_25, %c0_26] : memref<48x32xf32, #tpu.memory_space<vmem>>, vector<16x32xf32>
    %58 = vector.shape_cast %56 : vector<16x32xf32> to vector<1x1x16x32xf32>
    %59 = vector.broadcast %58 : vector<1x1x16x32xf32> to vector<4x4x16x32xf32>
    %60 = arith.mulf %55, %59 : vector<4x4x16x32xf32>
    %61 = vector.extract_strided_slice %55 {offsets = [0, 0, 0, 16], sizes = [4, 4, 16, 16], strides = [1, 1, 1, 1]} : vector<4x4x16x32xf32> to vector<4x4x16x16xf32>
    %62 = vector.extract_strided_slice %55 {offsets = [0, 0, 0, 0], sizes = [4, 4, 16, 16], strides = [1, 1, 1, 1]} : vector<4x4x16x32xf32> to vector<4x4x16x16xf32>
    %63 = tpu.concatenate %61, %62 in 3 : vector<4x4x16x16xf32>, vector<4x4x16x16xf32> -> vector<4x4x16x32xf32>
    %64 = vector.shape_cast %57 : vector<16x32xf32> to vector<1x1x16x32xf32>
    %65 = vector.broadcast %64 : vector<1x1x16x32xf32> to vector<4x4x16x32xf32>
    %66 = arith.mulf %63, %65 : vector<4x4x16x32xf32>
    %67 = arith.addf %60, %66 : vector<4x4x16x32xf32>
    %68 = vector.shape_cast %67 : vector<4x4x16x32xf32> to vector<16x16x32xf32>
    "tpu.trace_start"() <{level = 10 : i32, message = "gqd,gkd->gqk"}> : () -> ()
    %cst_27 = arith.constant dense<0.000000e+00> : vector<16x16x16xf32>
    %69 = tpu.matmul %13, %68, %cst_27 {dimension_numbers = #tpu.dot_dimension_numbers<[2], [2], [1], [1], [0, 0, 0, 1, 1, 1], [0], [0]>} : vector<16x16x32xf32>, vector<16x16x32xf32>, vector<16x16x16xf32> -> vector<16x16x16xf32>
    %c-1_i32 = arith.constant -1 : i32
    "tpu.trace_stop"() : () -> ()
    %70 = vector.broadcast %c-1_i32 : i32 to vector<16x16x16xi32>
    %71 = arith.cmpi slt, %17, %70 : vector<16x16x16xi32>
    %c3_i32 = arith.constant 3 : i32
    %72 = vector.broadcast %c3_i32 : i32 to vector<16x16x16xi32>
    %73 = arith.cmpi sge, %17, %72 : vector<16x16x16xi32>
    %74 = arith.ori %71, %73 : vector<16x16x16xi1>
    %cst_28 = arith.constant -3.40282347E+38 : f32
    %75 = vector.broadcast %cst_28 : f32 to vector<16x16x16xf32>
    %76 = arith.select %74, %75, %69 : vector<16x16x16xi1>, vector<16x16x16xf32>
    %cst_29 = arith.constant dense<0xFF800000> : vector<16x16xf32>
    %77 = vector.multi_reduction <maximumf>, %39, %cst_29 [2] : vector<16x16x16xf32> to vector<16x16xf32>
    %78 = vector.shape_cast %77 : vector<16x16xf32> to vector<16x16x1xf32>
    %cst_30 = arith.constant dense<0xFF800000> : vector<16x16xf32>
    %79 = vector.multi_reduction <maximumf>, %54, %cst_30 [2] : vector<16x16x16xf32> to vector<16x16xf32>
    %80 = vector.shape_cast %79 : vector<16x16xf32> to vector<16x16x1xf32>
    %81 = arith.maximumf %78, %80 : vector<16x16x1xf32>
    %cst_31 = arith.constant dense<0xFF800000> : vector<16x16xf32>
    %82 = vector.multi_reduction <maximumf>, %76, %cst_31 [2] : vector<16x16x16xf32> to vector<16x16xf32>
    %83 = vector.shape_cast %82 : vector<16x16xf32> to vector<16x16x1xf32>
    %84 = arith.maximumf %81, %83 : vector<16x16x1xf32>
    %85 = vector.broadcast %84 : vector<16x16x1xf32> to vector<16x16x16xf32>
    %86 = arith.subf %39, %85 : vector<16x16x16xf32>
    %87 = math.exp %86 : vector<16x16x16xf32>
    %cst_32 = arith.constant dense<0.000000e+00> : vector<16x16xf32>
    %88 = vector.multi_reduction <add>, %87, %cst_32 [2] : vector<16x16x16xf32> to vector<16x16xf32>
    %89 = vector.shape_cast %88 : vector<16x16xf32> to vector<16x16x1xf32>
    %90 = vector.extract_strided_slice %15 {offsets = [0, 0, 0, 0], sizes = [4, 4, 16, 32], strides = [1, 1, 1, 1]} : vector<4x6x16x32xf32> to vector<4x4x16x32xf32>
    %91 = vector.shape_cast %90 : vector<4x4x16x32xf32> to vector<16x16x32xf32>
    "tpu.trace_start"() <{level = 10 : i32, message = "gqk,gkd->gqd"}> : () -> ()
    %cst_33 = arith.constant dense<0.000000e+00> : vector<16x16x32xf32>
    %92 = tpu.matmul %87, %91, %cst_33 {dimension_numbers = #tpu.dot_dimension_numbers<[2], [1], [1], [2], [0, 0, 0, 1, 1, 2], [0], [0]>} : vector<16x16x16xf32>, vector<16x16x32xf32>, vector<16x16x32xf32> -> vector<16x16x32xf32>
    "tpu.trace_stop"() : () -> ()
    %93 = vector.broadcast %84 : vector<16x16x1xf32> to vector<16x16x16xf32>
    %94 = arith.subf %54, %93 : vector<16x16x16xf32>
    %95 = math.exp %94 : vector<16x16x16xf32>
    %cst_34 = arith.constant dense<0.000000e+00> : vector<16x16xf32>
    %96 = vector.multi_reduction <add>, %95, %cst_34 [2] : vector<16x16x16xf32> to vector<16x16xf32>
    %97 = vector.shape_cast %96 : vector<16x16xf32> to vector<16x16x1xf32>
    %98 = arith.addf %89, %97 : vector<16x16x1xf32>
    %99 = vector.extract_strided_slice %15 {offsets = [0, 1, 0, 0], sizes = [4, 4, 16, 32], strides = [1, 1, 1, 1]} : vector<4x6x16x32xf32> to vector<4x4x16x32xf32>
    %100 = vector.shape_cast %99 : vector<4x4x16x32xf32> to vector<16x16x32xf32>
    "tpu.trace_start"() <{level = 10 : i32, message = "gqk,gkd->gqd"}> : () -> ()
    %cst_35 = arith.constant dense<0.000000e+00> : vector<16x16x32xf32>
    %101 = tpu.matmul %95, %100, %cst_35 {dimension_numbers = #tpu.dot_dimension_numbers<[2], [1], [1], [2], [0, 0, 0, 1, 1, 2], [0], [0]>} : vector<16x16x16xf32>, vector<16x16x32xf32>, vector<16x16x32xf32> -> vector<16x16x32xf32>
    "tpu.trace_stop"() : () -> ()
    %102 = arith.addf %92, %101 : vector<16x16x32xf32>
    %103 = vector.broadcast %84 : vector<16x16x1xf32> to vector<16x16x16xf32>
    %104 = arith.subf %76, %103 : vector<16x16x16xf32>
    %105 = math.exp %104 : vector<16x16x16xf32>
    %cst_36 = arith.constant dense<0.000000e+00> : vector<16x16xf32>
    %106 = vector.multi_reduction <add>, %105, %cst_36 [2] : vector<16x16x16xf32> to vector<16x16xf32>
    %107 = vector.shape_cast %106 : vector<16x16xf32> to vector<16x16x1xf32>
    %108 = arith.addf %98, %107 : vector<16x16x1xf32>
    %109 = vector.extract_strided_slice %15 {offsets = [0, 2, 0, 0], sizes = [4, 4, 16, 32], strides = [1, 1, 1, 1]} : vector<4x6x16x32xf32> to vector<4x4x16x32xf32>
    %110 = vector.shape_cast %109 : vector<4x4x16x32xf32> to vector<16x16x32xf32>
    "tpu.trace_start"() <{level = 10 : i32, message = "gqk,gkd->gqd"}> : () -> ()
    %cst_37 = arith.constant dense<0.000000e+00> : vector<16x16x32xf32>
    %111 = tpu.matmul %105, %110, %cst_37 {dimension_numbers = #tpu.dot_dimension_numbers<[2], [1], [1], [2], [0, 0, 0, 1, 1, 2], [0], [0]>} : vector<16x16x16xf32>, vector<16x16x32xf32>, vector<16x16x32xf32> -> vector<16x16x32xf32>
    "tpu.trace_stop"() : () -> ()
    %112 = arith.addf %102, %111 : vector<16x16x32xf32>
    %113 = tpu.reciprocal %108 {approx = true} : vector<16x16x1xf32> -> vector<16x16x1xf32>
    %114 = arith.mulf %108, %113 : vector<16x16x1xf32>
    %cst_38 = arith.constant 2.000000e+00 : f32
    %115 = vector.broadcast %cst_38 : f32 to vector<16x16x1xf32>
    %116 = arith.subf %115, %114 : vector<16x16x1xf32>
    %117 = arith.mulf %113, %116 : vector<16x16x1xf32>
    %118 = vector.broadcast %117 : vector<16x16x1xf32> to vector<16x16x32xf32>
    %119 = arith.mulf %112, %118 : vector<16x16x32xf32>
    %120 = vector.shape_cast %119 : vector<16x16x32xf32> to vector<4x4x16x32xf32>
    %c0_39 = arith.constant 0 : index
    %c0_40 = arith.constant 0 : index
    %c0_41 = arith.constant 0 : index
    %c0_42 = arith.constant 0 : index
    %121 = vector.load %arg6[%c0_39, %c0_40, %c0_41, %c0_42] : memref<4x4x16x32xf32, #tpu.memory_space<vmem>>, vector<4x4x16x32xf32>
    tpu.vector_store %arg6[%c0_39, %c0_40, %c0_41, %c0_42], %120 {strides = array<i32>} : memref<4x4x16x32xf32, #tpu.memory_space<vmem>>, vector<4x4x16x32xf32>,
    return
  }
  func.func @transform_0(%arg0: i32) -> (i32, i32, i32, i32) {
    %c0_i32 = arith.constant 0 : i32
    %c0_i32_0 = arith.constant 0 : i32
    %c0_i32_1 = arith.constant 0 : i32
    %c0_i32_2 = arith.constant 0 : i32
    return %arg0, %c0_i32, %c0_i32_0, %c0_i32_1 : i32, i32, i32, i32
  }
  func.func @transform_1(%arg0: i32) -> (i32, i32, i32, i32) {
    %c0_i32 = arith.constant 0 : i32
    %c0_i32_0 = arith.constant 0 : i32
    %c0_i32_1 = arith.constant 0 : i32
    %c0_i32_2 = arith.constant 0 : i32
    return %arg0, %c0_i32, %c0_i32_0, %c0_i32_1 : i32, i32, i32, i32
  }
  func.func @transform_2(%arg0: i32) -> (i32, i32, i32, i32) {
    %c0_i32 = arith.constant 0 : i32
    %c0_i32_0 = arith.constant 0 : i32
    %c0_i32_1 = arith.constant 0 : i32
    %c0_i32_2 = arith.constant 0 : i32
    return %arg0, %c0_i32, %c0_i32_0, %c0_i32_1 : i32, i32, i32, i32
  }
  func.func @transform_3(%arg0: i32) -> (i32, i32) {
    %c0_i32 = arith.constant 0 : i32
    %c0_i32_0 = arith.constant 0 : i32
    %c0_i32_1 = arith.constant 0 : i32
    return %c0_i32, %c0_i32_0 : i32, i32
  }
  func.func @transform_4(%arg0: i32) -> (i32, i32) {
    %c0_i32 = arith.constant 0 : i32
    %c0_i32_0 = arith.constant 0 : i32
    %c0_i32_1 = arith.constant 0 : i32
    return %c0_i32, %c0_i32_0 : i32, i32
  }
  func.func @transform_5(%arg0: i32) -> (i32, i32, i32, i32) {
    %c0_i32 = arith.constant 0 : i32
    %c0_i32_0 = arith.constant 0 : i32
    %c0_i32_1 = arith.constant 0 : i32
    %c0_i32_2 = arith.constant 0 : i32
    return %arg0, %c0_i32, %c0_i32_0, %c0_i32_1 : i32, i32, i32, i32
  }
}

</mosaic_0001>

<llo_original>
// kernel: tpu_custom_call.1
$region0: #{tpu_custom_call.1}
  #allocation0 [shape = 'u32[]', space=smem, size = 0x4, offset = 0x4, fixed_abs, tag = 'smem constant byte address 0x4 - core index']
  #allocation1 [shape = 'u32[144,128]{1,0:T(1,128)}', space=vmem, size = 0x12000, scoped, tag = 'internal scratch']
  %s0 = inlined_call_operand.hbm [shape: f32[4,4,16,32], index: 0, kind: input, shape index: {}]
  %s1 = inlined_call_operand.hbm [shape: f32[4,6,16,32], index: 1, kind: input, shape index: {}]
  %s2 = inlined_call_operand.hbm [shape: f32[4,6,16,32], index: 2, kind: input, shape index: {}]
  %s3 = inlined_call_operand.vmem [shape: f32[48,32], index: 3, kind: input, shape index: {}]
  %s4 = inlined_call_operand.vmem [shape: f32[48,32], index: 4, kind: input, shape index: {}]
  %s5 = inlined_call_operand.hbm [shape: f32[4,4,16,32], index: 5, kind: output, shape index: {}]
  %s6 = sld [smem:[#allocation0]]
  $region42: #{tpu_custom_call.1} parent=0
    _
  %s8 = ssub.s32 1, %s6
  %s9 = scalar_select 0, %s8, %s6
  $region1: #{tpu_custom_call.1} parent=0
    #allocation2 [shape = 'u8[131072]{0}', space=vmem, size = 0x20000, scoped, tag = 'input window, operand 0, single buffered']
    #allocation3 [shape = 's32[1]{0}', space=sflag, size = 0x4, scoped, tag = 'scoped memory for tpu_custom_call.1']
    #allocation4 [shape = 's32[1]{0}', space=sflag, size = 0x4, scoped, tag = 'scoped memory for tpu_custom_call.1']
    #allocation5 [shape = 'u8[196608]{0}', space=vmem, size = 0x30000, scoped, tag = 'input window, operand 1, single buffered']
    #allocation6 [shape = 's32[1]{0}', space=sflag, size = 0x4, scoped, tag = 'scoped memory for tpu_custom_call.1']
    #allocation7 [shape = 'u8[196608]{0}', space=vmem, size = 0x30000, scoped, tag = 'input window, operand 2, single buffered']
    #allocation8 [shape = 'u8[131072]{0}', space=vmem, size = 0x20000, scoped, tag = 'output window, operand 0, single buffered']
    %10 = vsyncpa [#allocation3], 0
    %11 = vsyncpa [#allocation6], 0
    %12 = vsyncpa [#allocation4], 0
    // Predicated region
    $region2: #{tpu_custom_call.1} parent=1 // pred_check
      _
    $region3: #{tpu_custom_call.1} parent=1 // pred_check_branch
      %14 = sbr.rel (0) target = $region5
    $region4: #{tpu_custom_call.1} parent=1 // pred_region
      %s16 = ssub.s32 4096, 4096
      %17 = vsyncadd [#allocation3], %s16
      %s18 = sshll.u32 [#allocation2], 4
      %s19 = int_to_ptr.vmem [resolvable:$true] %s18
      %24 = dma.hbm_to_vmem [thread:$0]  %s0, 4096, %s19, [#allocation3], 128, 128, 8
    $region5: #{tpu_custom_call.1} parent=1 // pred_fallthru
      _
    // Predicated region
    $region6: #{tpu_custom_call.1} parent=1 // pred_check
      _
    $region7: #{tpu_custom_call.1} parent=1 // pred_check_branch
      %26 = sbr.rel (0) target = $region9
    $region8: #{tpu_custom_call.1} parent=1 // pred_region
      %s28 = ssub.s32 6144, 6144
      %29 = vsyncadd [#allocation6], %s28
      %s30 = sshll.u32 [#allocation5], 4
      %s31 = int_to_ptr.vmem [resolvable:$true] %s30
      %36 = dma.hbm_to_vmem [thread:$0]  %s1, 6144, %s31, [#allocation6], 128, 128, 8
    $region9: #{tpu_custom_call.1} parent=1 // pred_fallthru
      _
    // Predicated region
    $region10: #{tpu_custom_call.1} parent=1 // pred_check
      _
    $region11: #{tpu_custom_call.1} parent=1 // pred_check_branch
      %38 = sbr.rel (0) target = $region13
    $region12: #{tpu_custom_call.1} parent=1 // pred_region
      %s40 = ssub.s32 6144, 6144
      %41 = vsyncadd [#allocation6], %s40
      %s42 = sshll.u32 [#allocation7], 4
      %s43 = int_to_ptr.vmem [resolvable:$true] %s42
      %48 = dma.hbm_to_vmem [thread:$0]  %s2, 6144, %s43, [#allocation6], 128, 128, 8
    $region13: #{tpu_custom_call.1} parent=1 // pred_fallthru
      _
    // Predicated region
    $region14: #{tpu_custom_call.1} parent=1 // pred_check
      _
    $region15: #{tpu_custom_call.1} parent=1 // pred_check_branch
      %50 = sbr.rel (0) target = $region17
    $region16: #{tpu_custom_call.1} parent=1 // pred_region
      _
    $region17: #{tpu_custom_call.1} parent=1 // pred_fallthru
      _
    // Predicated region
    $region18: #{tpu_custom_call.1} parent=1 // pred_check
      _
    $region19: #{tpu_custom_call.1} parent=1 // pred_check_branch
      %52 = sbr.rel (0) target = $region21
    $region20: #{tpu_custom_call.1} parent=1 // pred_region
      _
    $region21: #{tpu_custom_call.1} parent=1 // pred_fallthru
      _
    // Predicated region
    $region22: #{tpu_custom_call.1} parent=1 // pred_check
      _
    $region23: #{tpu_custom_call.1} parent=1 // pred_check_branch
      %54 = sbr.rel (0) target = $region25
    $region24: #{tpu_custom_call.1} parent=1 // pred_region
      %55 = dma.done [#allocation3], 4096
    $region25: #{tpu_custom_call.1} parent=1 // pred_fallthru
      _
    // Predicated region
    $region26: #{tpu_custom_call.1} parent=1 // pred_check
      _
    $region27: #{tpu_custom_call.1} parent=1 // pred_check_branch
      %57 = sbr.rel (0) target = $region29
    $region28: #{tpu_custom_call.1} parent=1 // pred_region
      %58 = dma.done [#allocation6], 6144
    $region29: #{tpu_custom_call.1} parent=1 // pred_fallthru
      _
    // Predicated region
    $region30: #{tpu_custom_call.1} parent=1 // pred_check
      _
    $region31: #{tpu_custom_call.1} parent=1 // pred_check_branch
      %60 = sbr.rel (0) target = $region33
    $region32: #{tpu_custom_call.1} parent=1 // pred_region
      %61 = dma.done [#allocation6], 6144
    $region33: #{tpu_custom_call.1} parent=1 // pred_fallthru
      _
    %v62 = vld [vmem:[%s3 + $0x20] sm:$0xff]
    %v63 = vld [vmem:[%s3 + $0x28] sm:$0xff]
    %v64 = vld [vmem:[%s4 + $0x20] sm:$0xff]
    %v65 = vld [vmem:[%s4 + $0x28] sm:$0xff]
    %v66 = vld [vmem:[#allocation2] sm:$0xff]
    %v67 = vld [vmem:[#allocation2 + $0x8] sm:$0xff]
    %v68 = vld [vmem:[#allocation2 + $0x10] sm:$0xff]
    %v69 = vld [vmem:[#allocation2 + $0x18] sm:$0xff]
    %v70 = vld [vmem:[#allocation2 + $0x20] sm:$0xff]
    %v71 = vld [vmem:[#allocation2 + $0x28] sm:$0xff]
    %v72 = vld [vmem:[#allocation2 + $0x30] sm:$0xff]
    %v73 = vld [vmem:[#allocation2 + $0x38] sm:$0xff]
    %v74 = vld [vmem:[#allocation2 + $0x40] sm:$0xff]
    %v75 = vld [vmem:[#allocation2 + $0x48] sm:$0xff]
    %v76 = vld [vmem:[#allocation2 + $0x50] sm:$0xff]
    %v77 = vld [vmem:[#allocation2 + $0x58] sm:$0xff]
    %v78 = vld [vmem:[#allocation2 + $0x60] sm:$0xff]
    %v79 = vld [vmem:[#allocation2 + $0x68] sm:$0xff]
    %v80 = vld [vmem:[#allocation2 + $0x70] sm:$0xff]
    %v81 = vld [vmem:[#allocation2 + $0x78] sm:$0xff]
    %v82 = vld [vmem:[#allocation2 + $0x80] sm:$0xff]
    %v83 = vld [vmem:[#allocation2 + $0x88] sm:$0xff]
    %v84 = vld [vmem:[#allocation2 + $0x90] sm:$0xff]
    %v85 = vld [vmem:[#allocation2 + $0x98] sm:$0xff]
    %v86 = vld [vmem:[#allocation2 + $0xa0] sm:$0xff]
    %v87 = vld [vmem:[#allocation2 + $0xa8] sm:$0xff]
    %v88 = vld [vmem:[#allocation2 + $0xb0] sm:$0xff]
    %v89 = vld [vmem:[#allocation2 + $0xb8] sm:$0xff]
    %v90 = vld [vmem:[#allocation2 + $0xc0] sm:$0xff]
    %v91 = vld [vmem:[#allocation2 + $0xc8] sm:$0xff]
    %v92 = vld [vmem:[#allocation2 + $0xd0] sm:$0xff]
    %v93 = vld [vmem:[#allocation2 + $0xd8] sm:$0xff]
    %v94 = vld [vmem:[#allocation2 + $0xe0] sm:$0xff]
    %v95 = vld [vmem:[#allocation2 + $0xe8] sm:$0xff]
    %v96 = vld [vmem:[#allocation2 + $0xf0] sm:$0xff]
    %v97 = vld [vmem:[#allocation2 + $0xf8] sm:$0xff]
    %v98 = vmul.f32 %v66, %v62
    %v99 = vmul.f32 %v67, %v63
    %v100 = vmul.f32 %v68, %v62
    %v101 = vmul.f32 %v69, %v63
    %v102 = vmul.f32 %v70, %v62
    %v103 = vmul.f32 %v71, %v63
    %v104 = vmul.f32 %v72, %v62
    %v105 = vmul.f32 %v73, %v63
    %v106 = vmul.f32 %v74, %v62
    %v107 = vmul.f32 %v75, %v63
    %v108 = vmul.f32 %v76, %v62
    %v109 = vmul.f32 %v77, %v63
    %v110 = vmul.f32 %v78, %v62
    %v111 = vmul.f32 %v79, %v63
    %v112 = vmul.f32 %v80, %v62
    %v113 = vmul.f32 %v81, %v63
    %v114 = vmul.f32 %v82, %v62
    %v115 = vmul.f32 %v83, %v63
    %v116 = vmul.f32 %v84, %v62
    %v117 = vmul.f32 %v85, %v63
    %v118 = vmul.f32 %v86, %v62
    %v119 = vmul.f32 %v87, %v63
    %v120 = vmul.f32 %v88, %v62
    %v121 = vmul.f32 %v89, %v63
    %v122 = vmul.f32 %v90, %v62
    %v123 = vmul.f32 %v91, %v63
    %v124 = vmul.f32 %v92, %v62
    %v125 = vmul.f32 %v93, %v63
    %v126 = vmul.f32 %v94, %v62
    %v127 = vmul.f32 %v95, %v63
    %v128 = vmul.f32 %v96, %v62
    %v129 = vmul.f32 %v97, %v63
    %162 = vrot.lane.b32.xlu0 %v66, 112
    %v163 = vpop.permute.xlu0 %162
    %164 = vrot.lane.b32.xlu0 %v67, 112
    %v165 = vpop.permute.xlu0 %164
    %166 = vrot.lane.b32.xlu0 %v68, 112
    %v167 = vpop.permute.xlu0 %166
    %168 = vrot.lane.b32.xlu0 %v69, 112
    %v169 = vpop.permute.xlu0 %168
    %170 = vrot.lane.b32.xlu0 %v70, 112
    %v171 = vpop.permute.xlu0 %170
    %172 = vrot.lane.b32.xlu0 %v71, 112
    %v173 = vpop.permute.xlu0 %172
    %174 = vrot.lane.b32.xlu0 %v72, 112
    %v175 = vpop.permute.xlu0 %174
    %176 = vrot.lane.b32.xlu0 %v73, 112
    %v177 = vpop.permute.xlu0 %176
    %178 = vrot.lane.b32.xlu0 %v74, 112
    %v179 = vpop.permute.xlu0 %178
    %180 = vrot.lane.b32.xlu0 %v75, 112
    %v181 = vpop.permute.xlu0 %180
    %182 = vrot.lane.b32.xlu0 %v76, 112
    %v183 = vpop.permute.xlu0 %182
    %184 = vrot.lane.b32.xlu0 %v77, 112
    %v185 = vpop.permute.xlu0 %184
    %186 = vrot.lane.b32.xlu0 %v78, 112
    %v187 = vpop.permute.xlu0 %186
    %188 = vrot.lane.b32.xlu0 %v79, 112
    %v189 = vpop.permute.xlu0 %188
    %190 = vrot.lane.b32.xlu0 %v80, 112
    %v191 = vpop.permute.xlu0 %190
    %192 = vrot.lane.b32.xlu0 %v81, 112
    %v193 = vpop.permute.xlu0 %192
    %194 = vrot.lane.b32.xlu0 %v82, 112
    %v195 = vpop.permute.xlu0 %194
    %196 = vrot.lane.b32.xlu0 %v83, 112
    %v197 = vpop.permute.xlu0 %196
    %198 = vrot.lane.b32.xlu0 %v84, 112
    %v199 = vpop.permute.xlu0 %198
    %200 = vrot.lane.b32.xlu0 %v85, 112
    %v201 = vpop.permute.xlu0 %200
    %202 = vrot.lane.b32.xlu0 %v86, 112
    %v203 = vpop.permute.xlu0 %202
    %204 = vrot.lane.b32.xlu0 %v87, 112
    %v205 = vpop.permute.xlu0 %204
    %206 = vrot.lane.b32.xlu0 %v88, 112
    %v207 = vpop.permute.xlu0 %206
    %208 = vrot.lane.b32.xlu0 %v89, 112
    %v209 = vpop.permute.xlu0 %208
    %210 = vrot.lane.b32.xlu0 %v90, 112
    %v211 = vpop.permute.xlu0 %210
    %212 = vrot.lane.b32.xlu0 %v91, 112
    %v213 = vpop.permute.xlu0 %212
    %214 = vrot.lane.b32.xlu0 %v92, 112
    %v215 = vpop.permute.xlu0 %214
    %216 = vrot.lane.b32.xlu0 %v93, 112
    %v217 = vpop.permute.xlu0 %216
    %218 = vrot.lane.b32.xlu0 %v94, 112
    %v219 = vpop.permute.xlu0 %218
    %220 = vrot.lane.b32.xlu0 %v95, 112
    %v221 = vpop.permute.xlu0 %220
    %222 = vrot.lane.b32.xlu0 %v96, 112
    %v223 = vpop.permute.xlu0 %222
    %224 = vrot.lane.b32.xlu0 %v97, 112
    %v225 = vpop.permute.xlu0 %224
    %258 = vrot.lane.b32.xlu0 %v66, 16
    %v259 = vpop.permute.xlu0 %258
    %260 = vrot.lane.b32.xlu0 %v67, 16
    %v261 = vpop.permute.xlu0 %260
    %262 = vrot.lane.b32.xlu0 %v68, 16
    %v263 = vpop.permute.xlu0 %262
    %264 = vrot.lane.b32.xlu0 %v69, 16
    %v265 = vpop.permute.xlu0 %264
    %266 = vrot.lane.b32.xlu0 %v70, 16
    %v267 = vpop.permute.xlu0 %266
    %268 = vrot.lane.b32.xlu0 %v71, 16
    %v269 = vpop.permute.xlu0 %268
    %270 = vrot.lane.b32.xlu0 %v72, 16
    %v271 = vpop.permute.xlu0 %270
    %272 = vrot.lane.b32.xlu0 %v73, 16
    %v273 = vpop.permute.xlu0 %272
    %274 = vrot.lane.b32.xlu0 %v74, 16
    %v275 = vpop.permute.xlu0 %274
    %276 = vrot.lane.b32.xlu0 %v75, 16
    %v277 = vpop.permute.xlu0 %276
    %278 = vrot.lane.b32.xlu0 %v76, 16
    %v279 = vpop.permute.xlu0 %278
    %280 = vrot.lane.b32.xlu0 %v77, 16
    %v281 = vpop.permute.xlu0 %280
    %282 = vrot.lane.b32.xlu0 %v78, 16
    %v283 = vpop.permute.xlu0 %282
    %284 = vrot.lane.b32.xlu0 %v79, 16
    %v285 = vpop.permute.xlu0 %284
    %286 = vrot.lane.b32.xlu0 %v80, 16
    %v287 = vpop.permute.xlu0 %286
    %288 = vrot.lane.b32.xlu0 %v81, 16
    %v289 = vpop.permute.xlu0 %288
    %290 = vrot.lane.b32.xlu0 %v82, 16
    %v291 = vpop.permute.xlu0 %290
    %292 = vrot.lane.b32.xlu0 %v83, 16
    %v293 = vpop.permute.xlu0 %292
    %294 = vrot.lane.b32.xlu0 %v84, 16
    %v295 = vpop.permute.xlu0 %294
    %296 = vrot.lane.b32.xlu0 %v85, 16
    %v297 = vpop.permute.xlu0 %296
    %298 = vrot.lane.b32.xlu0 %v86, 16
    %v299 = vpop.permute.xlu0 %298
    %300 = vrot.lane.b32.xlu0 %v87, 16
    %v301 = vpop.permute.xlu0 %300
    %302 = vrot.lane.b32.xlu0 %v88, 16
    %v303 = vpop.permute.xlu0 %302
    %304 = vrot.lane.b32.xlu0 %v89, 16
    %v305 = vpop.permute.xlu0 %304
    %306 = vrot.lane.b32.xlu0 %v90, 16
    %v307 = vpop.permute.xlu0 %306
    %308 = vrot.lane.b32.xlu0 %v91, 16
    %v309 = vpop.permute.xlu0 %308
    %310 = vrot.lane.b32.xlu0 %v92, 16
    %v311 = vpop.permute.xlu0 %310
    %312 = vrot.lane.b32.xlu0 %v93, 16
    %v313 = vpop.permute.xlu0 %312
    %314 = vrot.lane.b32.xlu0 %v94, 16
    %v315 = vpop.permute.xlu0 %314
    %316 = vrot.lane.b32.xlu0 %v95, 16
    %v317 = vpop.permute.xlu0 %316
    %318 = vrot.lane.b32.xlu0 %v96, 16
    %v319 = vpop.permute.xlu0 %318
    %320 = vrot.lane.b32.xlu0 %v97, 16
    %v321 = vpop.permute.xlu0 %320
    %vm354 = vcmask 130048
    %v355 = vsel %vm354, %v163, %v259
    %v356 = vsel %vm354, %v165, %v261
    %v357 = vsel %vm354, %v167, %v263
    %v358 = vsel %vm354, %v169, %v265
    %v359 = vsel %vm354, %v171, %v267
    %v360 = vsel %vm354, %v173, %v269
    %v361 = vsel %vm354, %v175, %v271
    %v362 = vsel %vm354, %v177, %v273
    %v363 = vsel %vm354, %v179, %v275
    %v364 = vsel %vm354, %v181, %v277
    %v365 = vsel %vm354, %v183, %v279
    %v366 = vsel %vm354, %v185, %v281
    %v367 = vsel %vm354, %v187, %v283
    %v368 = vsel %vm354, %v189, %v285
    %v369 = vsel %vm354, %v191, %v287
    %v370 = vsel %vm354, %v193, %v289
    %v371 = vsel %vm354, %v195, %v291
    %v372 = vsel %vm354, %v197, %v293
    %v373 = vsel %vm354, %v199, %v295
    %v374 = vsel %vm354, %v201, %v297
    %v375 = vsel %vm354, %v203, %v299
    %v376 = vsel %vm354, %v205, %v301
    %v377 = vsel %vm354, %v207, %v303
    %v378 = vsel %vm354, %v209, %v305
    %v379 = vsel %vm354, %v211, %v307
    %v380 = vsel %vm354, %v213, %v309
    %v381 = vsel %vm354, %v215, %v311
    %v382 = vsel %vm354, %v217, %v313
    %v383 = vsel %vm354, %v219, %v315
    %v384 = vsel %vm354, %v221, %v317
    %v385 = vsel %vm354, %v223, %v319
    %v386 = vsel %vm354, %v225, %v321
    %v387 = vmul.f32 %v355, %v64
    %v388 = vmul.f32 %v356, %v65
    %v389 = vmul.f32 %v357, %v64
    %v390 = vmul.f32 %v358, %v65
    %v391 = vmul.f32 %v359, %v64
    %v392 = vmul.f32 %v360, %v65
    %v393 = vmul.f32 %v361, %v64
    %v394 = vmul.f32 %v362, %v65
    %v395 = vmul.f32 %v363, %v64
    %v396 = vmul.f32 %v364, %v65
    %v397 = vmul.f32 %v365, %v64
    %v398 = vmul.f32 %v366, %v65
    %v399 = vmul.f32 %v367, %v64
    %v400 = vmul.f32 %v368, %v65
    %v401 = vmul.f32 %v369, %v64
    %v402 = vmul.f32 %v370, %v65
    %v403 = vmul.f32 %v371, %v64
    %v404 = vmul.f32 %v372, %v65
    %v405 = vmul.f32 %v373, %v64
    %v406 = vmul.f32 %v374, %v65
    %v407 = vmul.f32 %v375, %v64
    %v408 = vmul.f32 %v376, %v65
    %v409 = vmul.f32 %v377, %v64
    %v410 = vmul.f32 %v378, %v65
    %v411 = vmul.f32 %v379, %v64
    %v412 = vmul.f32 %v380, %v65
    %v413 = vmul.f32 %v381, %v64
    %v414 = vmul.f32 %v382, %v65
    %v415 = vmul.f32 %v383, %v64
    %v416 = vmul.f32 %v384, %v65
    %v417 = vmul.f32 %v385, %v64
    %v418 = vmul.f32 %v386, %v65
    %v419 = vadd.f32 %v98, %v387
    %v420 = vadd.f32 %v99, %v388
    %v421 = vadd.f32 %v100, %v389
    %v422 = vadd.f32 %v101, %v390
    %v423 = vadd.f32 %v102, %v391
    %v424 = vadd.f32 %v103, %v392
    %v425 = vadd.f32 %v104, %v393
    %v426 = vadd.f32 %v105, %v394
    %v427 = vadd.f32 %v106, %v395
    %v428 = vadd.f32 %v107, %v396
    %v429 = vadd.f32 %v108, %v397
    %v430 = vadd.f32 %v109, %v398
    %v431 = vadd.f32 %v110, %v399
    %v432 = vadd.f32 %v111, %v400
    %v433 = vadd.f32 %v112, %v401
    %v434 = vadd.f32 %v113, %v402
    %v435 = vadd.f32 %v114, %v403
    %v436 = vadd.f32 %v115, %v404
    %v437 = vadd.f32 %v116, %v405
    %v438 = vadd.f32 %v117, %v406
    %v439 = vadd.f32 %v118, %v407
    %v440 = vadd.f32 %v119, %v408
    %v441 = vadd.f32 %v120, %v409
    %v442 = vadd.f32 %v121, %v410
    %v443 = vadd.f32 %v122, %v411
    %v444 = vadd.f32 %v123, %v412
    %v445 = vadd.f32 %v124, %v413
    %v446 = vadd.f32 %v125, %v414
    %v447 = vadd.f32 %v126, %v415
    %v448 = vadd.f32 %v127, %v416
    %v449 = vadd.f32 %v128, %v417
    %v450 = vadd.f32 %v129, %v418
    %v451 = vld [vmem:[#allocation5] sm:$0xff]
    %v452 = vld [vmem:[#allocation5 + $0x8] sm:$0xff]
    %v453 = vld [vmem:[#allocation5 + $0x10] sm:$0xff]
    %v454 = vld [vmem:[#allocation5 + $0x18] sm:$0xff]
    %v455 = vld [vmem:[#allocation5 + $0x20] sm:$0xff]
    %v456 = vld [vmem:[#allocation5 + $0x28] sm:$0xff]
    %v457 = vld [vmem:[#allocation5 + $0x30] sm:$0xff]
    %v458 = vld [vmem:[#allocation5 + $0x38] sm:$0xff]
    %v459 = vld [vmem:[#allocation5 + $0x40] sm:$0xff]
    %v460 = vld [vmem:[#allocation5 + $0x48] sm:$0xff]
    %v461 = vld [vmem:[#allocation5 + $0x50] sm:$0xff]
    %v462 = vld [vmem:[#allocation5 + $0x58] sm:$0xff]
    %v463 = vld [vmem:[#allocation5 + $0x60] sm:$0xff]
    %v464 = vld [vmem:[#allocation5 + $0x68] sm:$0xff]
    %v465 = vld [vmem:[#allocation5 + $0x70] sm:$0xff]
    %v466 = vld [vmem:[#allocation5 + $0x78] sm:$0xff]
    %v467 = vld [vmem:[#allocation5 + $0x80] sm:$0xff]
    %v468 = vld [vmem:[#allocation5 + $0x88] sm:$0xff]
    %v469 = vld [vmem:[#allocation5 + $0x90] sm:$0xff]
    %v470 = vld [vmem:[#allocation5 + $0x98] sm:$0xff]
    %v471 = vld [vmem:[#allocation5 + $0xa0] sm:$0xff]
    %v472 = vld [vmem:[#allocation5 + $0xa8] sm:$0xff]
    %v473 = vld [vmem:[#allocation5 + $0xb0] sm:$0xff]
    %v474 = vld [vmem:[#allocation5 + $0xb8] sm:$0xff]
    %v475 = vld [vmem:[#allocation5 + $0xc0] sm:$0xff]
    %v476 = vld [vmem:[#allocation5 + $0xc8] sm:$0xff]
    %v477 = vld [vmem:[#allocation5 + $0xd0] sm:$0xff]
    %v478 = vld [vmem:[#allocation5 + $0xd8] sm:$0xff]
    %v479 = vld [vmem:[#allocation5 + $0xe0] sm:$0xff]
    %v480 = vld [vmem:[#allocation5 + $0xe8] sm:$0xff]
    %v481 = vld [vmem:[#allocation5 + $0xf0] sm:$0xff]
    %v482 = vld [vmem:[#allocation5 + $0xf8] sm:$0xff]
    %v483 = vld [vmem:[#allocation5 + $0x100] sm:$0xff]
    %v484 = vld [vmem:[#allocation5 + $0x108] sm:$0xff]
    %v485 = vld [vmem:[#allocation5 + $0x110] sm:$0xff]
    %v486 = vld [vmem:[#allocation5 + $0x118] sm:$0xff]
    %v487 = vld [vmem:[#allocation5 + $0x120] sm:$0xff]
    %v488 = vld [vmem:[#allocation5 + $0x128] sm:$0xff]
    %v489 = vld [vmem:[#allocation5 + $0x130] sm:$0xff]
    %v490 = vld [vmem:[#allocation5 + $0x138] sm:$0xff]
    %v491 = vld [vmem:[#allocation5 + $0x140] sm:$0xff]
    %v492 = vld [vmem:[#allocation5 + $0x148] sm:$0xff]
    %v493 = vld [vmem:[#allocation5 + $0x150] sm:$0xff]
    %v494 = vld [vmem:[#allocation5 + $0x158] sm:$0xff]
    %v495 = vld [vmem:[#allocation5 + $0x160] sm:$0xff]
    %v496 = vld [vmem:[#allocation5 + $0x168] sm:$0xff]
    %v497 = vld [vmem:[#allocation5 + $0x170] sm:$0xff]
    %v498 = vld [vmem:[#allocation5 + $0x178] sm:$0xff]
    %v499 = vld [vmem:[#allocation7] sm:$0xff]
    %v500 = vld [vmem:[#allocation7 + $0x8] sm:$0xff]
    %v501 = vld [vmem:[#allocation7 + $0x10] sm:$0xff]
    %v502 = vld [vmem:[#allocation7 + $0x18] sm:$0xff]
    %v503 = vld [vmem:[#allocation7 + $0x20] sm:$0xff]
    %v504 = vld [vmem:[#allocation7 + $0x28] sm:$0xff]
    %v505 = vld [vmem:[#allocation7 + $0x30] sm:$0xff]
    %v506 = vld [vmem:[#allocation7 + $0x38] sm:$0xff]
    %v507 = vld [vmem:[#allocation7 + $0x40] sm:$0xff]
    %v508 = vld [vmem:[#allocation7 + $0x48] sm:$0xff]
    %v509 = vld [vmem:[#allocation7 + $0x50] sm:$0xff]
    %v510 = vld [vmem:[#allocation7 + $0x58] sm:$0xff]
    %v511 = vld [vmem:[#allocation7 + $0x60] sm:$0xff]
    %v512 = vld [vmem:[#allocation7 + $0x68] sm:$0xff]
    %v513 = vld [vmem:[#allocation7 + $0x70] sm:$0xff]
    %v514 = vld [vmem:[#allocation7 + $0x78] sm:$0xff]
    %v515 = vld [vmem:[#allocation7 + $0x80] sm:$0xff]
    %v516 = vld [vmem:[#allocation7 + $0x88] sm:$0xff]
    %v517 = vld [vmem:[#allocation7 + $0x90] sm:$0xff]
    %v518 = vld [vmem:[#allocation7 + $0x98] sm:$0xff]
    %v519 = vld [vmem:[#allocation7 + $0xa0] sm:$0xff]
    %v520 = vld [vmem:[#allocation7 + $0xa8] sm:$0xff]
    %v521 = vld [vmem:[#allocation7 + $0xb0] sm:$0xff]
    %v522 = vld [vmem:[#allocation7 + $0xb8] sm:$0xff]
    %v523 = vld [vmem:[#allocation7 + $0xc0] sm:$0xff]
    %v524 = vld [vmem:[#allocation7 + $0xc8] sm:$0xff]
    %v525 = vld [vmem:[#allocation7 + $0xd0] sm:$0xff]
    %v526 = vld [vmem:[#allocation7 + $0xd8] sm:$0xff]
    %v527 = vld [vmem:[#allocation7 + $0xe0] sm:$0xff]
    %v528 = vld [vmem:[#allocation7 + $0xe8] sm:$0xff]
    %v529 = vld [vmem:[#allocation7 + $0xf0] sm:$0xff]
    %v530 = vld [vmem:[#allocation7 + $0xf8] sm:$0xff]
    %v531 = vld [vmem:[#allocation7 + $0x100] sm:$0xff]
    %v532 = vld [vmem:[#allocation7 + $0x108] sm:$0xff]
    %v533 = vld [vmem:[#allocation7 + $0x110] sm:$0xff]
    %v534 = vld [vmem:[#allocation7 + $0x118] sm:$0xff]
    %v535 = vld [vmem:[#allocation7 + $0x120] sm:$0xff]
    %v536 = vld [vmem:[#allocation7 + $0x128] sm:$0xff]
    %v537 = vld [vmem:[#allocation7 + $0x130] sm:$0xff]
    %v538 = vld [vmem:[#allocation7 + $0x138] sm:$0xff]
    %v539 = vld [vmem:[#allocation7 + $0x140] sm:$0xff]
    %v540 = vld [vmem:[#allocation7 + $0x148] sm:$0xff]
    %v541 = vld [vmem:[#allocation7 + $0x150] sm:$0xff]
    %v542 = vld [vmem:[#allocation7 + $0x158] sm:$0xff]
    %v543 = vld [vmem:[#allocation7 + $0x160] sm:$0xff]
    %v544 = vld [vmem:[#allocation7 + $0x168] sm:$0xff]
    %v545 = vld [vmem:[#allocation7 + $0x170] sm:$0xff]
    %v546 = vld [vmem:[#allocation7 + $0x178] sm:$0xff]
    %v547 = vld [vmem:[%s3] sm:$0xff]
    %v548 = vld [vmem:[%s3 + $0x8] sm:$0xff]
    %v549 = vld [vmem:[%s4] sm:$0xff]
    %v550 = vld [vmem:[%s4 + $0x8] sm:$0xff]
    %v551 = vmul.f32 %v451, %v547
    %v552 = vmul.f32 %v452, %v548
    %v553 = vmul.f32 %v453, %v547
    %v554 = vmul.f32 %v454, %v548
    %v555 = vmul.f32 %v455, %v547
    %v556 = vmul.f32 %v456, %v548
    %v557 = vmul.f32 %v457, %v547
    %v558 = vmul.f32 %v458, %v548
    %v559 = vmul.f32 %v463, %v547
    %v560 = vmul.f32 %v464, %v548
    %v561 = vmul.f32 %v465, %v547
    %v562 = vmul.f32 %v466, %v548
    %v563 = vmul.f32 %v467, %v547
    %v564 = vmul.f32 %v468, %v548
    %v565 = vmul.f32 %v469, %v547
    %v566 = vmul.f32 %v470, %v548
    %v567 = vmul.f32 %v475, %v547
    %v568 = vmul.f32 %v476, %v548
    %v569 = vmul.f32 %v477, %v547
    %v570 = vmul.f32 %v478, %v548
    %v571 = vmul.f32 %v479, %v547
    %v572 = vmul.f32 %v480, %v548
    %v573 = vmul.f32 %v481, %v547
    %v574 = vmul.f32 %v482, %v548
    %v575 = vmul.f32 %v487, %v547
    %v576 = vmul.f32 %v488, %v548
    %v577 = vmul.f32 %v489, %v547
    %v578 = vmul.f32 %v490, %v548
    %v579 = vmul.f32 %v491, %v547
    %v580 = vmul.f32 %v492, %v548
    %v581 = vmul.f32 %v493, %v547
    %v582 = vmul.f32 %v494, %v548
    %615 = vrot.lane.b32.xlu0 %v451, 112
    %v616 = vpop.permute.xlu0 %615
    %617 = vrot.lane.b32.xlu0 %v452, 112
    %v618 = vpop.permute.xlu0 %617
    %619 = vrot.lane.b32.xlu0 %v453, 112
    %v620 = vpop.permute.xlu0 %619
    %621 = vrot.lane.b32.xlu0 %v454, 112
    %v622 = vpop.permute.xlu0 %621
    %623 = vrot.lane.b32.xlu0 %v455, 112
    %v624 = vpop.permute.xlu0 %623
    %625 = vrot.lane.b32.xlu0 %v456, 112
    %v626 = vpop.permute.xlu0 %625
    %627 = vrot.lane.b32.xlu0 %v457, 112
    %v628 = vpop.permute.xlu0 %627
    %629 = vrot.lane.b32.xlu0 %v458, 112
    %v630 = vpop.permute.xlu0 %629
    %631 = vrot.lane.b32.xlu0 %v463, 112
    %v632 = vpop.permute.xlu0 %631
    %633 = vrot.lane.b32.xlu0 %v464, 112
    %v634 = vpop.permute.xlu0 %633
    %635 = vrot.lane.b32.xlu0 %v465, 112
    %v636 = vpop.permute.xlu0 %635
    %637 = vrot.lane.b32.xlu0 %v466, 112
    %v638 = vpop.permute.xlu0 %637
    %639 = vrot.lane.b32.xlu0 %v467, 112
    %v640 = vpop.permute.xlu0 %639
    %641 = vrot.lane.b32.xlu0 %v468, 112
    %v642 = vpop.permute.xlu0 %641
    %643 = vrot.lane.b32.xlu0 %v469, 112
    %v644 = vpop.permute.xlu0 %643
    %645 = vrot.lane.b32.xlu0 %v470, 112
    %v646 = vpop.permute.xlu0 %645
    %647 = vrot.lane.b32.xlu0 %v475, 112
    %v648 = vpop.permute.xlu0 %647
    %649 = vrot.lane.b32.xlu0 %v476, 112
    %v650 = vpop.permute.xlu0 %649
    %651 = vrot.lane.b32.xlu0 %v477, 112
    %v652 = vpop.permute.xlu0 %651
    %653 = vrot.lane.b32.xlu0 %v478, 112
    %v654 = vpop.permute.xlu0 %653
    %655 = vrot.lane.b32.xlu0 %v479, 112
    %v656 = vpop.permute.xlu0 %655
    %657 = vrot.lane.b32.xlu0 %v480, 112
    %v658 = vpop.permute.xlu0 %657
    %659 = vrot.lane.b32.xlu0 %v481, 112
    %v660 = vpop.permute.xlu0 %659
    %661 = vrot.lane.b32.xlu0 %v482, 112
    %v662 = vpop.permute.xlu0 %661
    %663 = vrot.lane.b32.xlu0 %v487, 112
    %v664 = vpop.permute.xlu0 %663
    %665 = vrot.lane.b32.xlu0 %v488, 112
    %v666 = vpop.permute.xlu0 %665
    %667 = vrot.lane.b32.xlu0 %v489, 112
    %v668 = vpop.permute.xlu0 %667
    %669 = vrot.lane.b32.xlu0 %v490, 112
    %v670 = vpop.permute.xlu0 %669
    %671 = vrot.lane.b32.xlu0 %v491, 112
    %v672 = vpop.permute.xlu0 %671
    %673 = vrot.lane.b32.xlu0 %v492, 112
    %v674 = vpop.permute.xlu0 %673
    %675 = vrot.lane.b32.xlu0 %v493, 112
    %v676 = vpop.permute.xlu0 %675
    %677 = vrot.lane.b32.xlu0 %v494, 112
    %v678 = vpop.permute.xlu0 %677
    %711 = vrot.lane.b32.xlu0 %v451, 16
    %v712 = vpop.permute.xlu0 %711
    %713 = vrot.lane.b32.xlu0 %v452, 16
    %v714 = vpop.permute.xlu0 %713
    %715 = vrot.lane.b32.xlu0 %v453, 16
    %v716 = vpop.permute.xlu0 %715
    %717 = vrot.lane.b32.xlu0 %v454, 16
    %v718 = vpop.permute.xlu0 %717
    %719 = vrot.lane.b32.xlu0 %v455, 16
    %v720 = vpop.permute.xlu0 %719
    %721 = vrot.lane.b32.xlu0 %v456, 16
    %v722 = vpop.permute.xlu0 %721
    %723 = vrot.lane.b32.xlu0 %v457, 16
    %v724 = vpop.permute.xlu0 %723
    %725 = vrot.lane.b32.xlu0 %v458, 16
    %v726 = vpop.permute.xlu0 %725
    %727 = vrot.lane.b32.xlu0 %v463, 16
    %v728 = vpop.permute.xlu0 %727
    %729 = vrot.lane.b32.xlu0 %v464, 16
    %v730 = vpop.permute.xlu0 %729
    %731 = vrot.lane.b32.xlu0 %v465, 16
    %v732 = vpop.permute.xlu0 %731
    %733 = vrot.lane.b32.xlu0 %v466, 16
    %v734 = vpop.permute.xlu0 %733
    %735 = vrot.lane.b32.xlu0 %v467, 16
    %v736 = vpop.permute.xlu0 %735
    %737 = vrot.lane.b32.xlu0 %v468, 16
    %v738 = vpop.permute.xlu0 %737
    %739 = vrot.lane.b32.xlu0 %v469, 16
    %v740 = vpop.permute.xlu0 %739
    %741 = vrot.lane.b32.xlu0 %v470, 16
    %v742 = vpop.permute.xlu0 %741
    %743 = vrot.lane.b32.xlu0 %v475, 16
    %v744 = vpop.permute.xlu0 %743
    %745 = vrot.lane.b32.xlu0 %v476, 16
    %v746 = vpop.permute.xlu0 %745
    %747 = vrot.lane.b32.xlu0 %v477, 16
    %v748 = vpop.permute.xlu0 %747
    %749 = vrot.lane.b32.xlu0 %v478, 16
    %v750 = vpop.permute.xlu0 %749
    %751 = vrot.lane.b32.xlu0 %v479, 16
    %v752 = vpop.permute.xlu0 %751
    %753 = vrot.lane.b32.xlu0 %v480, 16
    %v754 = vpop.permute.xlu0 %753
    %755 = vrot.lane.b32.xlu0 %v481, 16
    %v756 = vpop.permute.xlu0 %755
    %757 = vrot.lane.b32.xlu0 %v482, 16
    %v758 = vpop.permute.xlu0 %757
    %759 = vrot.lane.b32.xlu0 %v487, 16
    %v760 = vpop.permute.xlu0 %759
    %761 = vrot.lane.b32.xlu0 %v488, 16
    %v762 = vpop.permute.xlu0 %761
    %763 = vrot.lane.b32.xlu0 %v489, 16
    %v764 = vpop.permute.xlu0 %763
    %765 = vrot.lane.b32.xlu0 %v490, 16
    %v766 = vpop.permute.xlu0 %765
    %767 = vrot.lane.b32.xlu0 %v491, 16
    %v768 = vpop.permute.xlu0 %767
    %769 = vrot.lane.b32.xlu0 %v492, 16
    %v770 = vpop.permute.xlu0 %769
    %771 = vrot.lane.b32.xlu0 %v493, 16
    %v772 = vpop.permute.xlu0 %771
    %773 = vrot.lane.b32.xlu0 %v494, 16
    %v774 = vpop.permute.xlu0 %773
    %v807 = vsel %vm354, %v616, %v712
    %v808 = vsel %vm354, %v618, %v714
    %v809 = vsel %vm354, %v620, %v716
    %v810 = vsel %vm354, %v622, %v718
    %v811 = vsel %vm354, %v624, %v720
    %v812 = vsel %vm354, %v626, %v722
    %v813 = vsel %vm354, %v628, %v724
    %v814 = vsel %vm354, %v630, %v726
    %v815 = vsel %vm354, %v632, %v728
    %v816 = vsel %vm354, %v634, %v730
    %v817 = vsel %vm354, %v636, %v732
    %v818 = vsel %vm354, %v638, %v734
    %v819 = vsel %vm354, %v640, %v736
    %v820 = vsel %vm354, %v642, %v738
    %v821 = vsel %vm354, %v644, %v740
    %v822 = vsel %vm354, %v646, %v742
    %v823 = vsel %vm354, %v648, %v744
    %v824 = vsel %vm354, %v650, %v746
    %v825 = vsel %vm354, %v652, %v748
    %v826 = vsel %vm354, %v654, %v750
    %v827 = vsel %vm354, %v656, %v752
    %v828 = vsel %vm354, %v658, %v754
    %v829 = vsel %vm354, %v660, %v756
    %v830 = vsel %vm354, %v662, %v758
    %v831 = vsel %vm354, %v664, %v760
    %v832 = vsel %vm354, %v666, %v762
    %v833 = vsel %vm354, %v668, %v764
    %v834 = vsel %vm354, %v670, %v766
    %v835 = vsel %vm354, %v672, %v768
    %v836 = vsel %vm354, %v674, %v770
    %v837 = vsel %vm354, %v676, %v772
    %v838 = vsel %vm354, %v678, %v774
    %v839 = vmul.f32 %v807, %v549
    %v840 = vmul.f32 %v808, %v550
    %v841 = vmul.f32 %v809, %v549
    %v842 = vmul.f32 %v810, %v550
    %v843 = vmul.f32 %v811, %v549
    %v844 = vmul.f32 %v812, %v550
    %v845 = vmul.f32 %v813, %v549
    %v846 = vmul.f32 %v814, %v550
    %v847 = vmul.f32 %v815, %v549
    %v848 = vmul.f32 %v816, %v550
    %v849 = vmul.f32 %v817, %v549
    %v850 = vmul.f32 %v818, %v550
    %v851 = vmul.f32 %v819, %v549
    %v852 = vmul.f32 %v820, %v550
    %v853 = vmul.f32 %v821, %v549
    %v854 = vmul.f32 %v822, %v550
    %v855 = vmul.f32 %v823, %v549
    %v856 = vmul.f32 %v824, %v550
    %v857 = vmul.f32 %v825, %v549
    %v858 = vmul.f32 %v826, %v550
    %v859 = vmul.f32 %v827, %v549
    %v860 = vmul.f32 %v828, %v550
    %v861 = vmul.f32 %v829, %v549
    %v862 = vmul.f32 %v830, %v550
    %v863 = vmul.f32 %v831, %v549
    %v864 = vmul.f32 %v832, %v550
    %v865 = vmul.f32 %v833, %v549
    %v866 = vmul.f32 %v834, %v550
    %v867 = vmul.f32 %v835, %v549
    %v868 = vmul.f32 %v836, %v550
    %v869 = vmul.f32 %v837, %v549
    %v870 = vmul.f32 %v838, %v550
    %v871 = vadd.f32 %v551, %v839
    %v872 = vadd.f32 %v552, %v840
    %v873 = vadd.f32 %v553, %v841
    %v874 = vadd.f32 %v554, %v842
    %v875 = vadd.f32 %v555, %v843
    %v876 = vadd.f32 %v556, %v844
    %v877 = vadd.f32 %v557, %v845
    %v878 = vadd.f32 %v558, %v846
    %v879 = vadd.f32 %v559, %v847
    %v880 = vadd.f32 %v560, %v848
    %v881 = vadd.f32 %v561, %v849
    %v882 = vadd.f32 %v562, %v850
    %v883 = vadd.f32 %v563, %v851
    %v884 = vadd.f32 %v564, %v852
    %v885 = vadd.f32 %v565, %v853
    %v886 = vadd.f32 %v566, %v854
    %v887 = vadd.f32 %v567, %v855
    %v888 = vadd.f32 %v568, %v856
    %v889 = vadd.f32 %v569, %v857
    %v890 = vadd.f32 %v570, %v858
    %v891 = vadd.f32 %v571, %v859
    %v892 = vadd.f32 %v572, %v860
    %v893 = vadd.f32 %v573, %v861
    %v894 = vadd.f32 %v574, %v862
    %v895 = vadd.f32 %v575, %v863
    %v896 = vadd.f32 %v576, %v864
    %v897 = vadd.f32 %v577, %v865
    %v898 = vadd.f32 %v578, %v866
    %v899 = vadd.f32 %v579, %v867
    %v900 = vadd.f32 %v580, %v868
    %v901 = vadd.f32 %v581, %v869
    %v902 = vadd.f32 %v582, %v870
    %vm903 = vcmask 261120
    %v905 = vsel %vm903, %v419, 0
    %v908 = vsel %vm903, %v420, 0
    %v911 = vsel %vm903, %v871, 0
    %v914 = vsel %vm903, %v872, 0
    %916 = vmatprep.subr.mxu0 0.0
    %917 = vmatpush1.xpose.msra.mxu0 %v911
    %918 = vmatprep.subr.mxu0 0.0
    %919 = vmatpush1.xpose.msra.mxu0 %v914
    %920 = vmatprep.subr.mxu0 0.0
    %921 = vmatpush1.xpose.msra.mxu0 0.0
    %922 = vmatprep.subr.mxu0 0.0
    %923 = vmatpush1.xpose.msra.mxu0 0.0
    %924 = vmatprep.subr.mxu0 0.0
    %925 = vmatpush1.xpose.msra.mxu0 0.0
    %926 = vmatprep.subr.mxu0 0.0
    %927 = vmatpush1.xpose.msra.mxu0 0.0
    %928 = vmatprep.subr.mxu0 0.0
    %929 = vmatpush1.xpose.msra.mxu0 0.0
    %930 = vmatprep.subr.mxu0 0.0
    %931 = vmatpush1.xpose.msra.mxu0 0.0
    %932 = vmatprep.subr.mxu0 0.0
    %933 = vmatpush1.xpose.msra.mxu0 0.0
    %934 = vmatprep.subr.mxu0 0.0
    %935 = vmatpush1.xpose.msra.mxu0 0.0
    %936 = vmatprep.subr.mxu0 0.0
    %937 = vmatpush1.xpose.msra.mxu0 0.0
    %938 = vmatprep.subr.mxu0 0.0
    %939 = vmatpush1.xpose.msra.mxu0 0.0
    %940 = vmatprep.subr.mxu0 0.0
    %941 = vmatpush1.xpose.msra.mxu0 0.0
    %942 = vmatprep.subr.mxu0 0.0
    %943 = vmatpush1.xpose.msra.mxu0 0.0
    %944 = vmatprep.subr.mxu0 0.0
    %945 = vmatpush1.xpose.msra.mxu0 0.0
    %946 = vmatprep.subr.mxu0 0.0
    %947 = vmatpush1.xpose.msra.mxu0 0.0
    %948 = vmatprep.subr.mxu0 0.0
    %949 = vmatpush1.xpose.msra.mxu0 0.0
    %950 = vmatprep.subr.mxu0 0.0
    %951 = vmatpush1.xpose.msra.mxu0 0.0
    %952 = vmatprep.subr.mxu0 0.0
    %953 = vmatpush1.xpose.msra.mxu0 0.0
    %954 = vmatprep.subr.mxu0 0.0
    %955 = vmatpush1.xpose.msra.mxu0 0.0
    %956 = vmatprep.subr.mxu0 0.0
    %957 = vmatpush1.xpose.msra.mxu0 0.0
    %958 = vmatprep.subr.mxu0 0.0
    %959 = vmatpush1.xpose.msra.mxu0 0.0
    %960 = vmatprep.subr.mxu0 0.0
    %961 = vmatpush1.xpose.msra.mxu0 0.0
    %962 = vmatprep.subr.mxu0 0.0
    %963 = vmatpush1.xpose.msra.mxu0 0.0
    %964 = vmatprep.subr.mxu0 0.0
    %965 = vmatpush1.xpose.msra.mxu0 0.0
    %966 = vmatprep.subr.mxu0 0.0
    %967 = vmatpush1.xpose.msra.mxu0 0.0
    %968 = vmatprep.subr.mxu0 0.0
    %969 = vmatpush1.xpose.msra.mxu0 0.0
    %970 = vmatprep.subr.mxu0 0.0
    %971 = vmatpush1.xpose.msra.mxu0 0.0
    %972 = vmatprep.subr.mxu0 0.0
    %973 = vmatpush1.xpose.msra.mxu0 0.0
    %974 = vmatprep.subr.mxu0 0.0
    %975 = vmatpush1.xpose.msra.mxu0 0.0
    %976 = vmatprep.subr.mxu0 0.0
    %977 = vmatpush1.xpose.msra.mxu0 0.0
    %978 = vmatprep.subr.mxu0 0.0
    %979 = vmatpush1.xpose.msra.mxu0 0.0
    %980 = vmatprep.mubr.f32.mxu0 0.0
    %981 = vmatmul.mubr.f32.gmra.mrb[0].mxu0 %v905
    %v982 = vpop.f32.mrb[0].mxu0
    %v983 = vadd.f32 0.0, %v982
    %v984 = vpop.f32.mrb[0].mxu0
    %985 = vmatprep.mubr.f32.mxu0 0.0
    %986 = vmatmul.mubr.f32.gmra.mrb[0].mxu0 %v908
    %v987 = vpop.f32.mrb[0].mxu0
    %v988 = vadd.f32 0.0, %v987
    %v989 = vpop.f32.mrb[0].mxu0
    %990 = vdwg.mxu0
    %v992 = vsel %vm903, %v421, 0
    %v995 = vsel %vm903, %v422, 0
    %v998 = vsel %vm903, %v873, 0
    %v1001 = vsel %vm903, %v874, 0
    %1003 = vmatprep.subr.mxu0 0.0
    %1004 = vmatpush1.xpose.msra.mxu0 %v998
    %1005 = vmatprep.subr.mxu0 0.0
    %1006 = vmatpush1.xpose.msra.mxu0 %v1001
    %1007 = vmatprep.subr.mxu0 0.0
    %1008 = vmatpush1.xpose.msra.mxu0 0.0
    %1009 = vmatprep.subr.mxu0 0.0
    %1010 = vmatpush1.xpose.msra.mxu0 0.0
    %1011 = vmatprep.subr.mxu0 0.0
    %1012 = vmatpush1.xpose.msra.mxu0 0.0
    %1013 = vmatprep.subr.mxu0 0.0
    %1014 = vmatpush1.xpose.msra.mxu0 0.0
    %1015 = vmatprep.subr.mxu0 0.0
    %1016 = vmatpush1.xpose.msra.mxu0 0.0
    %1017 = vmatprep.subr.mxu0 0.0
    %1018 = vmatpush1.xpose.msra.mxu0 0.0
    %1019 = vmatprep.subr.mxu0 0.0
    %1020 = vmatpush1.xpose.msra.mxu0 0.0
    %1021 = vmatprep.subr.mxu0 0.0
    %1022 = vmatpush1.xpose.msra.mxu0 0.0
    %1023 = vmatprep.subr.mxu0 0.0
    %1024 = vmatpush1.xpose.msra.mxu0 0.0
    %1025 = vmatprep.subr.mxu0 0.0
    %1026 = vmatpush1.xpose.msra.mxu0 0.0
    %1027 = vmatprep.subr.mxu0 0.0
    %1028 = vmatpush1.xpose.msra.mxu0 0.0
    %1029 = vmatprep.subr.mxu0 0.0
    %1030 = vmatpush1.xpose.msra.mxu0 0.0
    %1031 = vmatprep.subr.mxu0 0.0
    %1032 = vmatpush1.xpose.msra.mxu0 0.0
    %1033 = vmatprep.subr.mxu0 0.0
    %1034 = vmatpush1.xpose.msra.mxu0 0.0
    %1035 = vmatprep.subr.mxu0 0.0
    %1036 = vmatpush1.xpose.msra.mxu0 0.0
    %1037 = vmatprep.subr.mxu0 0.0
    %1038 = vmatpush1.xpose.msra.mxu0 0.0
    %1039 = vmatprep.subr.mxu0 0.0
    %1040 = vmatpush1.xpose.msra.mxu0 0.0
    %1041 = vmatprep.subr.mxu0 0.0
    %1042 = vmatpush1.xpose.msra.mxu0 0.0
    %1043 = vmatprep.subr.mxu0 0.0
    %1044 = vmatpush1.xpose.msra.mxu0 0.0
    %1045 = vmatprep.subr.mxu0 0.0
    %1046 = vmatpush1.xpose.msra.mxu0 0.0
    %1047 = vmatprep.subr.mxu0 0.0
    %1048 = vmatpush1.xpose.msra.mxu0 0.0
    %1049 = vmatprep.subr.mxu0 0.0
    %1050 = vmatpush1.xpose.msra.mxu0 0.0
    %1051 = vmatprep.subr.mxu0 0.0
    %1052 = vmatpush1.xpose.msra.mxu0 0.0
    %1053 = vmatprep.subr.mxu0 0.0
    %1054 = vmatpush1.xpose.msra.mxu0 0.0
    %1055 = vmatprep.subr.mxu0 0.0
    %1056 = vmatpush1.xpose.msra.mxu0 0.0
    %1057 = vmatprep.subr.mxu0 0.0
    %1058 = vmatpush1.xpose.msra.mxu0 0.0
    %1059 = vmatprep.subr.mxu0 0.0
    %1060 = vmatpush1.xpose.msra.mxu0 0.0
    %1061 = vmatprep.subr.mxu0 0.0
    %1062 = vmatpush1.xpose.msra.mxu0 0.0
    %1063 = vmatprep.subr.mxu0 0.0
    %1064 = vmatpush1.xpose.msra.mxu0 0.0
    %1065 = vmatprep.subr.mxu0 0.0
    %1066 = vmatpush1.xpose.msra.mxu0 0.0
    %1067 = vmatprep.mubr.f32.mxu0 0.0
    %1068 = vmatmul.mubr.f32.gmra.mrb[0].mxu0 %v992
    %v1069 = vpop.f32.mrb[0].mxu0
    %v1070 = vadd.f32 0.0, %v1069
    %v1071 = vpop.f32.mrb[0].mxu0
    %1072 = vmatprep.mubr.f32.mxu0 0.0
    %1073 = vmatmul.mubr.f32.gmra.mrb[0].mxu0 %v995
    %v1074 = vpop.f32.mrb[0].mxu0
    %v1075 = vadd.f32 0.0, %v1074
    %v1076 = vpop.f32.mrb[0].mxu0
    %1077 = vdwg.mxu0
    %v1079 = vsel %vm903, %v423, 0
    %v1082 = vsel %vm903, %v424, 0
    %v1085 = vsel %vm903, %v875, 0
    %v1088 = vsel %vm903, %v876, 0
    %1090 = vmatprep.subr.mxu0 0.0
    %1091 = vmatpush1.xpose.msra.mxu0 %v1085
    %1092 = vmatprep.subr.mxu0 0.0
    %1093 = vmatpush1.xpose.msra.mxu0 %v1088
    %1094 = vmatprep.subr.mxu0 0.0
    %1095 = vmatpush1.xpose.msra.mxu0 0.0
    %1096 = vmatprep.subr.mxu0 0.0
    %1097 = vmatpush1.xpose.msra.mxu0 0.0
    %1098 = vmatprep.subr.mxu0 0.0
    %1099 = vmatpush1.xpose.msra.mxu0 0.0
    %1100 = vmatprep.subr.mxu0 0.0
    %1101 = vmatpush1.xpose.msra.mxu0 0.0
    %1102 = vmatprep.subr.mxu0 0.0
    %1103 = vmatpush1.xpose.msra.mxu0 0.0
    %1104 = vmatprep.subr.mxu0 0.0
    %1105 = vmatpush1.xpose.msra.mxu0 0.0
    %1106 = vmatprep.subr.mxu0 0.0
    %1107 = vmatpush1.xpose.msra.mxu0 0.0
    %1108 = vmatprep.subr.mxu0 0.0
    %1109 = vmatpush1.xpose.msra.mxu0 0.0
    %1110 = vmatprep.subr.mxu0 0.0
    %1111 = vmatpush1.xpose.msra.mxu0 0.0
    %1112 = vmatprep.subr.mxu0 0.0
    %1113 = vmatpush1.xpose.msra.mxu0 0.0
    %1114 = vmatprep.subr.mxu0 0.0
    %1115 = vmatpush1.xpose.msra.mxu0 0.0
    %1116 = vmatprep.subr.mxu0 0.0
    %1117 = vmatpush1.xpose.msra.mxu0 0.0
    %1118 = vmatprep.subr.mxu0 0.0
    %1119 = vmatpush1.xpose.msra.mxu0 0.0
    %1120 = vmatprep.subr.mxu0 0.0
    %1121 = vmatpush1.xpose.msra.mxu0 0.0
    %1122 = vmatprep.subr.mxu0 0.0
    %1123 = vmatpush1.xpose.msra.mxu0 0.0
    %1124 = vmatprep.subr.mxu0 0.0
    %1125 = vmatpush1.xpose.msra.mxu0 0.0
    %1126 = vmatprep.subr.mxu0 0.0
    %1127 = vmatpush1.xpose.msra.mxu0 0.0
    %1128 = vmatprep.subr.mxu0 0.0
    %1129 = vmatpush1.xpose.msra.mxu0 0.0
    %1130 = vmatprep.subr.mxu0 0.0
    %1131 = vmatpush1.xpose.msra.mxu0 0.0
    %1132 = vmatprep.subr.mxu0 0.0
    %1133 = vmatpush1.xpose.msra.mxu0 0.0
    %1134 = vmatprep.subr.mxu0 0.0
    %1135 = vmatpush1.xpose.msra.mxu0 0.0
    %1136 = vmatprep.subr.mxu0 0.0
    %1137 = vmatpush1.xpose.msra.mxu0 0.0
    %1138 = vmatprep.subr.mxu0 0.0
    %1139 = vmatpush1.xpose.msra.mxu0 0.0
    %1140 = vmatprep.subr.mxu0 0.0
    %1141 = vmatpush1.xpose.msra.mxu0 0.0
    %1142 = vmatprep.subr.mxu0 0.0
    %1143 = vmatpush1.xpose.msra.mxu0 0.0
    %1144 = vmatprep.subr.mxu0 0.0
    %1145 = vmatpush1.xpose.msra.mxu0 0.0
    %1146 = vmatprep.subr.mxu0 0.0
    %1147 = vmatpush1.xpose.msra.mxu0 0.0
    %1148 = vmatprep.subr.mxu0 0.0
    %1149 = vmatpush1.xpose.msra.mxu0 0.0
    %1150 = vmatprep.subr.mxu0 0.0
    %1151 = vmatpush1.xpose.msra.mxu0 0.0
    %1152 = vmatprep.subr.mxu0 0.0
    %1153 = vmatpush1.xpose.msra.mxu0 0.0
    %1154 = vmatprep.mubr.f32.mxu0 0.0
    %1155 = vmatmul.mubr.f32.gmra.mrb[0].mxu0 %v1079
    %v1156 = vpop.f32.mrb[0].mxu0
    %v1157 = vadd.f32 0.0, %v1156
    %v1158 = vpop.f32.mrb[0].mxu0
    %1159 = vmatprep.mubr.f32.mxu0 0.0
    %1160 = vmatmul.mubr.f32.gmra.mrb[0].mxu0 %v1082
    %v1161 = vpop.f32.mrb[0].mxu0
    %v1162 = vadd.f32 0.0, %v1161
    %v1163 = vpop.f32.mrb[0].mxu0
    %1164 = vdwg.mxu0
    %v1166 = vsel %vm903, %v425, 0
    %v1169 = vsel %vm903, %v426, 0
    %v1172 = vsel %vm903, %v877, 0
    %v1175 = vsel %vm903, %v878, 0
    %1177 = vmatprep.subr.mxu0 0.0
    %1178 = vmatpush1.xpose.msra.mxu0 %v1172
    %1179 = vmatprep.subr.mxu0 0.0
    %1180 = vmatpush1.xpose.msra.mxu0 %v1175
    %1181 = vmatprep.subr.mxu0 0.0
    %1182 = vmatpush1.xpose.msra.mxu0 0.0
    %1183 = vmatprep.subr.mxu0 0.0
    %1184 = vmatpush1.xpose.msra.mxu0 0.0
    %1185 = vmatprep.subr.mxu0 0.0
    %1186 = vmatpush1.xpose.msra.mxu0 0.0
    %1187 = vmatprep.subr.mxu0 0.0
    %1188 = vmatpush1.xpose.msra.mxu0 0.0
    %1189 = vmatprep.subr.mxu0 0.0
    %1190 = vmatpush1.xpose.msra.mxu0 0.0
    %1191 = vmatprep.subr.mxu0 0.0
    %1192 = vmatpush1.xpose.msra.mxu0 0.0
    %1193 = vmatprep.subr.mxu0 0.0
    %1194 = vmatpush1.xpose.msra.mxu0 0.0
    %1195 = vmatprep.subr.mxu0 0.0
    %1196 = vmatpush1.xpose.msra.mxu0 0.0
    %1197 = vmatprep.subr.mxu0 0.0
    %1198 = vmatpush1.xpose.msra.mxu0 0.0
    %1199 = vmatprep.subr.mxu0 0.0
    %1200 = vmatpush1.xpose.msra.mxu0 0.0
    %1201 = vmatprep.subr.mxu0 0.0
    %1202 = vmatpush1.xpose.msra.mxu0 0.0
    %1203 = vmatprep.subr.mxu0 0.0
    %1204 = vmatpush1.xpose.msra.mxu0 0.0
    %1205 = vmatprep.subr.mxu0 0.0
    %1206 = vmatpush1.xpose.msra.mxu0 0.0
    %1207 = vmatprep.subr.mxu0 0.0
    %1208 = vmatpush1.xpose.msra.mxu0 0.0
    %1209 = vmatprep.subr.mxu0 0.0
    %1210 = vmatpush1.xpose.msra.mxu0 0.0
    %1211 = vmatprep.subr.mxu0 0.0
    %1212 = vmatpush1.xpose.msra.mxu0 0.0
    %1213 = vmatprep.subr.mxu0 0.0
    %1214 = vmatpush1.xpose.msra.mxu0 0.0
    %1215 = vmatprep.subr.mxu0 0.0
    %1216 = vmatpush1.xpose.msra.mxu0 0.0
    %1217 = vmatprep.subr.mxu0 0.0
    %1218 = vmatpush1.xpose.msra.mxu0 0.0
    %1219 = vmatprep.subr.mxu0 0.0
    %1220 = vmatpush1.xpose.msra.mxu0 0.0
    %1221 = vmatprep.subr.mxu0 0.0
    %1222 = vmatpush1.xpose.msra.mxu0 0.0
    %1223 = vmatprep.subr.mxu0 0.0
    %1224 = vmatpush1.xpose.msra.mxu0 0.0
    %1225 = vmatprep.subr.mxu0 0.0
    %1226 = vmatpush1.xpose.msra.mxu0 0.0
    %1227 = vmatprep.subr.mxu0 0.0
    %1228 = vmatpush1.xpose.msra.mxu0 0.0
    %1229 = vmatprep.subr.mxu0 0.0
    %1230 = vmatpush1.xpose.msra.mxu0 0.0
    %1231 = vmatprep.subr.mxu0 0.0
    %1232 = vmatpush1.xpose.msra.mxu0 0.0
    %1233 = vmatprep.subr.mxu0 0.0
    %1234 = vmatpush1.xpose.msra.mxu0 0.0
    %1235 = vmatprep.subr.mxu0 0.0
    %1236 = vmatpush1.xpose.msra.mxu0 0.0
    %1237 = vmatprep.subr.mxu0 0.0
    %1238 = vmatpush1.xpose.msra.mxu0 0.0
    %1239 = vmatprep.subr.mxu0 0.0
    %1240 = vmatpush1.xpose.msra.mxu0 0.0
    %1241 = vmatprep.mubr.f32.mxu0 0.0
    %1242 = vmatmul.mubr.f32.gmra.mrb[0].mxu0 %v1166
    %v1243 = vpop.f32.mrb[0].mxu0
    %v1244 = vadd.f32 0.0, %v1243
    %v1245 = vpop.f32.mrb[0].mxu0
    %1246 = vmatprep.mubr.f32.mxu0 0.0
    %1247 = vmatmul.mubr.f32.gmra.mrb[0].mxu0 %v1169
    %v1248 = vpop.f32.mrb[0].mxu0
    %v1249 = vadd.f32 0.0, %v1248
    %v1250 = vpop.f32.mrb[0].mxu0
    %1251 = vdwg.mxu0
    %v1253 = vsel %vm903, %v427, 0
    %v1256 = vsel %vm903, %v428, 0
    %v1259 = vsel %vm903, %v879, 0
    %v1262 = vsel %vm903, %v880, 0
    %1264 = vmatprep.subr.mxu0 0.0
    %1265 = vmatpush1.xpose.msra.mxu0 %v1259
    %1266 = vmatprep.subr.mxu0 0.0
    %1267 = vmatpush1.xpose.msra.mxu0 %v1262
    %1268 = vmatprep.subr.mxu0 0.0
    %1269 = vmatpush1.xpose.msra.mxu0 0.0
    %1270 = vmatprep.subr.mxu0 0.0
    %1271 = vmatpush1.xpose.msra.mxu0 0.0
    %1272 = vmatprep.subr.mxu0 0.0
    %1273 = vmatpush1.xpose.msra.mxu0 0.0
    %1274 = vmatprep.subr.mxu0 0.0
    %1275 = vmatpush1.xpose.msra.mxu0 0.0
    %1276 = vmatprep.subr.mxu0 0.0
    %1277 = vmatpush1.xpose.msra.mxu0 0.0
    %1278 = vmatprep.subr.mxu0 0.0
    %1279 = vmatpush1.xpose.msra.mxu0 0.0
    %1280 = vmatprep.subr.mxu0 0.0
    %1281 = vmatpush1.xpose.msra.mxu0 0.0
    %1282 = vmatprep.subr.mxu0 0.0
    %1283 = vmatpush1.xpose.msra.mxu0 0.0
    %1284 = vmatprep.subr.mxu0 0.0
    %1285 = vmatpush1.xpose.msra.mxu0 0.0
    %1286 = vmatprep.subr.mxu0 0.0
    %1287 = vmatpush1.xpose.msra.mxu0 0.0
    %1288 = vmatprep.subr.mxu0 0.0
    %1289 = vmatpush1.xpose.msra.mxu0 0.0
    %1290 = vmatprep.subr.mxu0 0.0
    %1291 = vmatpush1.xpose.msra.mxu0 0.0
    %1292 = vmatprep.subr.mxu0 0.0
    %1293 = vmatpush1.xpose.msra.mxu0 0.0
    %1294 = vmatprep.subr.mxu0 0.0
    %1295 = vmatpush1.xpose.msra.mxu0 0.0
    %1296 = vmatprep.subr.mxu0 0.0
    %1297 = vmatpush1.xpose.msra.mxu0 0.0
    %1298 = vmatprep.subr.mxu0 0.0
    %1299 = vmatpush1.xpose.msra.mxu0 0.0
    %1300 = vmatprep.subr.mxu0 0.0
    %1301 = vmatpush1.xpose.msra.mxu0 0.0
    %1302 = vmatprep.subr.mxu0 0.0
    %1303 = vmatpush1.xpose.msra.mxu0 0.0
    %1304 = vmatprep.subr.mxu0 0.0
    %1305 = vmatpush1.xpose.msra.mxu0 0.0
    %1306 = vmatprep.subr.mxu0 0.0
    %1307 = vmatpush1.xpose.msra.mxu0 0.0
    %1308 = vmatprep.subr.mxu0 0.0
    %1309 = vmatpush1.xpose.msra.mxu0 0.0
    %1310 = vmatprep.subr.mxu0 0.0
    %1311 = vmatpush1.xpose.msra.mxu0 0.0
    %1312 = vmatprep.subr.mxu0 0.0
    %1313 = vmatpush1.xpose.msra.mxu0 0.0
    %1314 = vmatprep.subr.mxu0 0.0
    %1315 = vmatpush1.xpose.msra.mxu0 0.0
    %1316 = vmatprep.subr.mxu0 0.0
    %1317 = vmatpush1.xpose.msra.mxu0 0.0
    %1318 = vmatprep.subr.mxu0 0.0
    %1319 = vmatpush1.xpose.msra.mxu0 0.0
    %1320 = vmatprep.subr.mxu0 0.0
    %1321 = vmatpush1.xpose.msra.mxu0 0.0
    %1322 = vmatprep.subr.mxu0 0.0
    %1323 = vmatpush1.xpose.msra.mxu0 0.0
    %1324 = vmatprep.subr.mxu0 0.0
    %1325 = vmatpush1.xpose.msra.mxu0 0.0
    %1326 = vmatprep.subr.mxu0 0.0
    %1327 = vmatpush1.xpose.msra.mxu0 0.0
    %1328 = vmatprep.mubr.f32.mxu0 0.0
    %1329 = vmatmul.mubr.f32.gmra.mrb[0].mxu0 %v1253
    %v1330 = vpop.f32.mrb[0].mxu0
    %v1331 = vadd.f32 0.0, %v1330
    %v1332 = vpop.f32.mrb[0].mxu0
    %1333 = vmatprep.mubr.f32.mxu0 0.0
    %1334 = vmatmul.mubr.f32.gmra.mrb[0].mxu0 %v1256
    %v1335 = vpop.f32.mrb[0].mxu0
    %v1336 = vadd.f32 0.0, %v1335
    %v1337 = vpop.f32.mrb[0].mxu0
    %1338 = vdwg.mxu0
    %v1340 = vsel %vm903, %v429, 0
    %v1343 = vsel %vm903, %v430, 0
    %v1346 = vsel %vm903, %v881, 0
    %v1349 = vsel %vm903, %v882, 0
    %1351 = vmatprep.subr.mxu0 0.0
    %1352 = vmatpush1.xpose.msra.mxu0 %v1346
    %1353 = vmatprep.subr.mxu0 0.0
    %1354 = vmatpush1.xpose.msra.mxu0 %v1349
    %1355 = vmatprep.subr.mxu0 0.0
    %1356 = vmatpush1.xpose.msra.mxu0 0.0
    %1357 = vmatprep.subr.mxu0 0.0
    %1358 = vmatpush1.xpose.msra.mxu0 0.0
    %1359 = vmatprep.subr.mxu0 0.0
    %1360 = vmatpush1.xpose.msra.mxu0 0.0
    %1361 = vmatprep.subr.mxu0 0.0
    %1362 = vmatpush1.xpose.msra.mxu0 0.0
    %1363 = vmatprep.subr.mxu0 0.0
    %1364 = vmatpush1.xpose.msra.mxu0 0.0
    %1365 = vmatprep.subr.mxu0 0.0
    %1366 = vmatpush1.xpose.msra.mxu0 0.0
    %1367 = vmatprep.subr.mxu0 0.0
    %1368 = vmatpush1.xpose.msra.mxu0 0.0
    %1369 = vmatprep.subr.mxu0 0.0
    %1370 = vmatpush1.xpose.msra.mxu0 0.0
    %1371 = vmatprep.subr.mxu0 0.0
    %1372 = vmatpush1.xpose.msra.mxu0 0.0
    %1373 = vmatprep.subr.mxu0 0.0
    %1374 = vmatpush1.xpose.msra.mxu0 0.0
    %1375 = vmatprep.subr.mxu0 0.0
    %1376 = vmatpush1.xpose.msra.mxu0 0.0
    %1377 = vmatprep.subr.mxu0 0.0
    %1378 = vmatpush1.xpose.msra.mxu0 0.0
    %1379 = vmatprep.subr.mxu0 0.0
    %1380 = vmatpush1.xpose.msra.mxu0 0.0
    %1381 = vmatprep.subr.mxu0 0.0
    %1382 = vmatpush1.xpose.msra.mxu0 0.0
    %1383 = vmatprep.subr.mxu0 0.0
    %1384 = vmatpush1.xpose.msra.mxu0 0.0
    %1385 = vmatprep.subr.mxu0 0.0
    %1386 = vmatpush1.xpose.msra.mxu0 0.0
    %1387 = vmatprep.subr.mxu0 0.0
    %1388 = vmatpush1.xpose.msra.mxu0 0.0
    %1389 = vmatprep.subr.mxu0 0.0
    %1390 = vmatpush1.xpose.msra.mxu0 0.0
    %1391 = vmatprep.subr.mxu0 0.0
    %1392 = vmatpush1.xpose.msra.mxu0 0.0
    %1393 = vmatprep.subr.mxu0 0.0
    %1394 = vmatpush1.xpose.msra.mxu0 0.0
    %1395 = vmatprep.subr.mxu0 0.0
    %1396 = vmatpush1.xpose.msra.mxu0 0.0
    %1397 = vmatprep.subr.mxu0 0.0
    %1398 = vmatpush1.xpose.msra.mxu0 0.0
    %1399 = vmatprep.subr.mxu0 0.0
    %1400 = vmatpush1.xpose.msra.mxu0 0.0
    %1401 = vmatprep.subr.mxu0 0.0
    %1402 = vmatpush1.xpose.msra.mxu0 0.0
    %1403 = vmatprep.subr.mxu0 0.0
    %1404 = vmatpush1.xpose.msra.mxu0 0.0
    %1405 = vmatprep.subr.mxu0 0.0
    %1406 = vmatpush1.xpose.msra.mxu0 0.0
    %1407 = vmatprep.subr.mxu0 0.0
    %1408 = vmatpush1.xpose.msra.mxu0 0.0
    %1409 = vmatprep.subr.mxu0 0.0
    %1410 = vmatpush1.xpose.msra.mxu0 0.0
    %1411 = vmatprep.subr.mxu0 0.0
    %1412 = vmatpush1.xpose.msra.mxu0 0.0
    %1413 = vmatprep.subr.mxu0 0.0
    %1414 = vmatpush1.xpose.msra.mxu0 0.0
    %1415 = vmatprep.mubr.f32.mxu0 0.0
    %1416 = vmatmul.mubr.f32.gmra.mrb[0].mxu0 %v1340
    %v1417 = vpop.f32.mrb[0].mxu0
    %v1418 = vadd.f32 0.0, %v1417
    %v1419 = vpop.f32.mrb[0].mxu0
    %1420 = vmatprep.mubr.f32.mxu0 0.0
    %1421 = vmatmul.mubr.f32.gmra.mrb[0].mxu0 %v1343
    %v1422 = vpop.f32.mrb[0].mxu0
    %v1423 = vadd.f32 0.0, %v1422
    %v1424 = vpop.f32.mrb[0].mxu0
    %1425 = vdwg.mxu0
    %v1427 = vsel %vm903, %v431, 0
    %v1430 = vsel %vm903, %v432, 0
    %v1433 = vsel %vm903, %v883, 0
    %v1436 = vsel %vm903, %v884, 0
    %1438 = vmatprep.subr.mxu0 0.0
    %1439 = vmatpush1.xpose.msra.mxu0 %v1433
    %1440 = vmatprep.subr.mxu0 0.0
    %1441 = vmatpush1.xpose.msra.mxu0 %v1436
    %1442 = vmatprep.subr.mxu0 0.0
    %1443 = vmatpush1.xpose.msra.mxu0 0.0
    %1444 = vmatprep.subr.mxu0 0.0
    %1445 = vmatpush1.xpose.msra.mxu0 0.0
    %1446 = vmatprep.subr.mxu0 0.0
    %1447 = vmatpush1.xpose.msra.mxu0 0.0
    %1448 = vmatprep.subr.mxu0 0.0
    %1449 = vmatpush1.xpose.msra.mxu0 0.0
    %1450 = vmatprep.subr.mxu0 0.0
    %1451 = vmatpush1.xpose.msra.mxu0 0.0
    %1452 = vmatprep.subr.mxu0 0.0
    %1453 = vmatpush1.xpose.msra.mxu0 0.0
    %1454 = vmatprep.subr.mxu0 0.0
    %1455 = vmatpush1.xpose.msra.mxu0 0.0
    %1456 = vmatprep.subr.mxu0 0.0
    %1457 = vmatpush1.xpose.msra.mxu0 0.0
    %1458 = vmatprep.subr.mxu0 0.0
    %1459 = vmatpush1.xpose.msra.mxu0 0.0
    %1460 = vmatprep.subr.mxu0 0.0
    %1461 = vmatpush1.xpose.msra.mxu0 0.0
    %1462 = vmatprep.subr.mxu0 0.0
    %1463 = vmatpush1.xpose.msra.mxu0 0.0
    %1464 = vmatprep.subr.mxu0 0.0
    %1465 = vmatpush1.xpose.msra.mxu0 0.0
    %1466 = vmatprep.subr.mxu0 0.0
    %1467 = vmatpush1.xpose.msra.mxu0 0.0
    %1468 = vmatprep.subr.mxu0 0.0
    %1469 = vmatpush1.xpose.msra.mxu0 0.0
    %1470 = vmatprep.subr.mxu0 0.0
    %1471 = vmatpush1.xpose.msra.mxu0 0.0
    %1472 = vmatprep.subr.mxu0 0.0
    %1473 = vmatpush1.xpose.msra.mxu0 0.0
    %1474 = vmatprep.subr.mxu0 0.0
    %1475 = vmatpush1.xpose.msra.mxu0 0.0
    %1476 = vmatprep.subr.mxu0 0.0
    %1477 = vmatpush1.xpose.msra.mxu0 0.0
    %1478 = vmatprep.subr.mxu0 0.0
    %1479 = vmatpush1.xpose.msra.mxu0 0.0
    %1480 = vmatprep.subr.mxu0 0.0
    %1481 = vmatpush1.xpose.msra.mxu0 0.0
    %1482 = vmatprep.subr.mxu0 0.0
    %1483 = vmatpush1.xpose.msra.mxu0 0.0
    %1484 = vmatprep.subr.mxu0 0.0
    %1485 = vmatpush1.xpose.msra.mxu0 0.0
    %1486 = vmatprep.subr.mxu0 0.0
    %1487 = vmatpush1.xpose.msra.mxu0 0.0
    %1488 = vmatprep.subr.mxu0 0.0
    %1489 = vmatpush1.xpose.msra.mxu0 0.0
    %1490 = vmatprep.subr.mxu0 0.0
    %1491 = vmatpush1.xpose.msra.mxu0 0.0
    %1492 = vmatprep.subr.mxu0 0.0
    %1493 = vmatpush1.xpose.msra.mxu0 0.0
    %1494 = vmatprep.subr.mxu0 0.0
    %1495 = vmatpush1.xpose.msra.mxu0 0.0
    %1496 = vmatprep.subr.mxu0 0.0
    %1497 = vmatpush1.xpose.msra.mxu0 0.0
    %1498 = vmatprep.subr.mxu0 0.0
    %1499 = vmatpush1.xpose.msra.mxu0 0.0
    %1500 = vmatprep.subr.mxu0 0.0
    %1501 = vmatpush1.xpose.msra.mxu0 0.0
    %1502 = vmatprep.mubr.f32.mxu0 0.0
    %1503 = vmatmul.mubr.f32.gmra.mrb[0].mxu0 %v1427
    %v1504 = vpop.f32.mrb[0].mxu0
    %v1505 = vadd.f32 0.0, %v1504
    %v1506 = vpop.f32.mrb[0].mxu0
    %1507 = vmatprep.mubr.f32.mxu0 0.0
    %1508 = vmatmul.mubr.f32.gmra.mrb[0].mxu0 %v1430
    %v1509 = vpop.f32.mrb[0].mxu0
    %v1510 = vadd.f32 0.0, %v1509
    %v1511 = vpop.f32.mrb[0].mxu0
    %1512 = vdwg.mxu0
    %v1514 = vsel %vm903, %v433, 0
    %v1517 = vsel %vm903, %v434, 0
    %v1520 = vsel %vm903, %v885, 0
    %v1523 = vsel %vm903, %v886, 0
    %1525 = vmatprep.subr.mxu0 0.0
    %1526 = vmatpush1.xpose.msra.mxu0 %v1520
    %1527 = vmatprep.subr.mxu0 0.0
    %1528 = vmatpush1.xpose.msra.mxu0 %v1523
    %1529 = vmatprep.subr.mxu0 0.0
    %1530 = vmatpush1.xpose.msra.mxu0 0.0
    %1531 = vmatprep.subr.mxu0 0.0
    %1532 = vmatpush1.xpose.msra.mxu0 0.0
    %1533 = vmatprep.subr.mxu0 0.0
    %1534 = vmatpush1.xpose.msra.mxu0 0.0
    %1535 = vmatprep.subr.mxu0 0.0
    %1536 = vmatpush1.xpose.msra.mxu0 0.0
    %1537 = vmatprep.subr.mxu0 0.0
    %1538 = vmatpush1.xpose.msra.mxu0 0.0
    %1539 = vmatprep.subr.mxu0 0.0
    %1540 = vmatpush1.xpose.msra.mxu0 0.0
    %1541 = vmatprep.subr.mxu0 0.0
    %1542 = vmatpush1.xpose.msra.mxu0 0.0
    %1543 = vmatprep.subr.mxu0 0.0
    %1544 = vmatpush1.xpose.msra.mxu0 0.0
    %1545 = vmatprep.subr.mxu0 0.0
    %1546 = vmatpush1.xpose.msra.mxu0 0.0
    %1547 = vmatprep.subr.mxu0 0.0
    %1548 = vmatpush1.xpose.msra.mxu0 0.0
    %1549 = vmatprep.subr.mxu0 0.0
    %1550 = vmatpush1.xpose.msra.mxu0 0.0
    %1551 = vmatprep.subr.mxu0 0.0
    %1552 = vmatpush1.xpose.msra.mxu0 0.0
    %1553 = vmatprep.subr.mxu0 0.0
    %1554 = vmatpush1.xpose.msra.mxu0 0.0
    %1555 = vmatprep.subr.mxu0 0.0
    %1556 = vmatpush1.xpose.msra.mxu0 0.0
    %1557 = vmatprep.subr.mxu0 0.0
    %1558 = vmatpush1.xpose.msra.mxu0 0.0
    %1559 = vmatprep.subr.mxu0 0.0
    %1560 = vmatpush1.xpose.msra.mxu0 0.0
    %1561 = vmatprep.subr.mxu0 0.0
    %1562 = vmatpush1.xpose.msra.mxu0 0.0
    %1563 = vmatprep.subr.mxu0 0.0
    %1564 = vmatpush1.xpose.msra.mxu0 0.0
    %1565 = vmatprep.subr.mxu0 0.0
    %1566 = vmatpush1.xpose.msra.mxu0 0.0
    %1567 = vmatprep.subr.mxu0 0.0
    %1568 = vmatpush1.xpose.msra.mxu0 0.0
    %1569 = vmatprep.subr.mxu0 0.0
    %1570 = vmatpush1.xpose.msra.mxu0 0.0
    %1571 = vmatprep.subr.mxu0 0.0
    %1572 = vmatpush1.xpose.msra.mxu0 0.0
    %1573 = vmatprep.subr.mxu0 0.0
    %1574 = vmatpush1.xpose.msra.mxu0 0.0
    %1575 = vmatprep.subr.mxu0 0.0
    %1576 = vmatpush1.xpose.msra.mxu0 0.0
    %1577 = vmatprep.subr.mxu0 0.0
    %1578 = vmatpush1.xpose.msra.mxu0 0.0
    %1579 = vmatprep.subr.mxu0 0.0
    %1580 = vmatpush1.xpose.msra.mxu0 0.0
    %1581 = vmatprep.subr.mxu0 0.0
    %1582 = vmatpush1.xpose.msra.mxu0 0.0
    %1583 = vmatprep.subr.mxu0 0.0
    %1584 = vmatpush1.xpose.msra.mxu0 0.0
    %1585 = vmatprep.subr.mxu0 0.0
    %1586 = vmatpush1.xpose.msra.mxu0 0.0
    %1587 = vmatprep.subr.mxu0 0.0
    %1588 = vmatpush1.xpose.msra.mxu0 0.0
    %1589 = vmatprep.mubr.f32.mxu0 0.0
    %1590 = vmatmul.mubr.f32.gmra.mrb[0].mxu0 %v1514
    %v1591 = vpop.f32.mrb[0].mxu0
    %v1592 = vadd.f32 0.0, %v1591
    %v1593 = vpop.f32.mrb[0].mxu0
    %1594 = vmatprep.mubr.f32.mxu0 0.0
    %1595 = vmatmul.mubr.f32.gmra.mrb[0].mxu0 %v1517
    %v1596 = vpop.f32.mrb[0].mxu0
    %v1597 = vadd.f32 0.0, %v1596
    %v1598 = vpop.f32.mrb[0].mxu0
    %1599 = vdwg.mxu0
    %v1601 = vsel %vm903, %v435, 0
    %v1604 = vsel %vm903, %v436, 0
    %v1607 = vsel %vm903, %v887, 0
    %v1610 = vsel %vm903, %v888, 0
    %1612 = vmatprep.subr.mxu0 0.0
    %1613 = vmatpush1.xpose.msra.mxu0 %v1607
    %1614 = vmatprep.subr.mxu0 0.0
    %1615 = vmatpush1.xpose.msra.mxu0 %v1610
    %1616 = vmatprep.subr.mxu0 0.0
    %1617 = vmatpush1.xpose.msra.mxu0 0.0
    %1618 = vmatprep.subr.mxu0 0.0
    %1619 = vmatpush1.xpose.msra.mxu0 0.0
    %1620 = vmatprep.subr.mxu0 0.0
    %1621 = vmatpush1.xpose.msra.mxu0 0.0
    %1622 = vmatprep.subr.mxu0 0.0
    %1623 = vmatpush1.xpose.msra.mxu0 0.0
    %1624 = vmatprep.subr.mxu0 0.0
    %1625 = vmatpush1.xpose.msra.mxu0 0.0
    %1626 = vmatprep.subr.mxu0 0.0
    %1627 = vmatpush1.xpose.msra.mxu0 0.0
    %1628 = vmatprep.subr.mxu0 0.0
    %1629 = vmatpush1.xpose.msra.mxu0 0.0
    %1630 = vmatprep.subr.mxu0 0.0
    %1631 = vmatpush1.xpose.msra.mxu0 0.0
    %1632 = vmatprep.subr.mxu0 0.0
    %1633 = vmatpush1.xpose.msra.mxu0 0.0
    %1634 = vmatprep.subr.mxu0 0.0
    %1635 = vmatpush1.xpose.msra.mxu0 0.0
    %1636 = vmatprep.subr.mxu0 0.0
    %1637 = vmatpush1.xpose.msra.mxu0 0.0
    %1638 = vmatprep.subr.mxu0 0.0
    %1639 = vmatpush1.xpose.msra.mxu0 0.0
    %1640 = vmatprep.subr.mxu0 0.0
    %1641 = vmatpush1.xpose.msra.mxu0 0.0
    %1642 = vmatprep.subr.mxu0 0.0
    %1643 = vmatpush1.xpose.msra.mxu0 0.0
    %1644 = vmatprep.subr.mxu0 0.0
    %1645 = vmatpush1.xpose.msra.mxu0 0.0
    %1646 = vmatprep.subr.mxu0 0.0
    %1647 = vmatpush1.xpose.msra.mxu0 0.0
    %1648 = vmatprep.subr.mxu0 0.0
    %1649 = vmatpush1.xpose.msra.mxu0 0.0
    %1650 = vmatprep.subr.mxu0 0.0
    %1651 = vmatpush1.xpose.msra.mxu0 0.0
    %1652 = vmatprep.subr.mxu0 0.0
    %1653 = vmatpush1.xpose.msra.mxu0 0.0
    %1654 = vmatprep.subr.mxu0 0.0
    %1655 = vmatpush1.xpose.msra.mxu0 0.0
    %1656 = vmatprep.subr.mxu0 0.0
    %1657 = vmatpush1.xpose.msra.mxu0 0.0
    %1658 = vmatprep.subr.mxu0 0.0
    %1659 = vmatpush1.xpose.msra.mxu0 0.0
    %1660 = vmatprep.subr.mxu0 0.0
    %1661 = vmatpush1.xpose.msra.mxu0 0.0
    %1662 = vmatprep.subr.mxu0 0.0
    %1663 = vmatpush1.xpose.msra.mxu0 0.0
    %1664 = vmatprep.subr.mxu0 0.0
    %1665 = vmatpush1.xpose.msra.mxu0 0.0
    %1666 = vmatprep.subr.mxu0 0.0
    %1667 = vmatpush1.xpose.msra.mxu0 0.0
    %1668 = vmatprep.subr.mxu0 0.0
    %1669 = vmatpush1.xpose.msra.mxu0 0.0
    %1670 = vmatprep.subr.mxu0 0.0
    %1671 = vmatpush1.xpose.msra.mxu0 0.0
    %1672 = vmatprep.subr.mxu0 0.0
    %1673 = vmatpush1.xpose.msra.mxu0 0.0
    %1674 = vmatprep.subr.mxu0 0.0
    %1675 = vmatpush1.xpose.msra.mxu0 0.0
    %1676 = vmatprep.mubr.f32.mxu0 0.0
    %1677 = vmatmul.mubr.f32.gmra.mrb[0].mxu0 %v1601
    %v1678 = vpop.f32.mrb[0].mxu0
    %v1679 = vadd.f32 0.0, %v1678
    %v1680 = vpop.f32.mrb[0].mxu0
    %1681 = vmatprep.mubr.f32.mxu0 0.0
    %1682 = vmatmul.mubr.f32.gmra.mrb[0].mxu0 %v1604
    %v1683 = vpop.f32.mrb[0].mxu0
    %v1684 = vadd.f32 0.0, %v1683
    %v1685 = vpop.f32.mrb[0].mxu0
    %1686 = vdwg.mxu0
    %v1688 = vsel %vm903, %v437, 0
    %v1691 = vsel %vm903, %v438, 0
    %v1694 = vsel %vm903, %v889, 0
    %v1697 = vsel %vm903, %v890, 0
    %1699 = vmatprep.subr.mxu0 0.0
    %1700 = vmatpush1.xpose.msra.mxu0 %v1694
    %1701 = vmatprep.subr.mxu0 0.0
    %1702 = vmatpush1.xpose.msra.mxu0 %v1697
    %1703 = vmatprep.subr.mxu0 0.0
    %1704 = vmatpush1.xpose.msra.mxu0 0.0
    %1705 = vmatprep.subr.mxu0 0.0
    %1706 = vmatpush1.xpose.msra.mxu0 0.0
    %1707 = vmatprep.subr.mxu0 0.0
    %1708 = vmatpush1.xpose.msra.mxu0 0.0
    %1709 = vmatprep.subr.mxu0 0.0
    %1710 = vmatpush1.xpose.msra.mxu0 0.0
    %1711 = vmatprep.subr.mxu0 0.0
    %1712 = vmatpush1.xpose.msra.mxu0 0.0
    %1713 = vmatprep.subr.mxu0 0.0
    %1714 = vmatpush1.xpose.msra.mxu0 0.0
    %1715 = vmatprep.subr.mxu0 0.0
    %1716 = vmatpush1.xpose.msra.mxu0 0.0
    %1717 = vmatprep.subr.mxu0 0.0
    %1718 = vmatpush1.xpose.msra.mxu0 0.0
    %1719 = vmatprep.subr.mxu0 0.0
    %1720 = vmatpush1.xpose.msra.mxu0 0.0
    %1721 = vmatprep.subr.mxu0 0.0
    %1722 = vmatpush1.xpose.msra.mxu0 0.0
    %1723 = vmatprep.subr.mxu0 0.0
    %1724 = vmatpush1.xpose.msra.mxu0 0.0
    %1725 = vmatprep.subr.mxu0 0.0
    %1726 = vmatpush1.xpose.msra.mxu0 0.0
    %1727 = vmatprep.subr.mxu0 0.0
    %1728 = vmatpush1.xpose.msra.mxu0 0.0
    %1729 = vmatprep.subr.mxu0 0.0
    %1730 = vmatpush1.xpose.msra.mxu0 0.0
    %1731 = vmatprep.subr.mxu0 0.0
    %1732 = vmatpush1.xpose.msra.mxu0 0.0
    %1733 = vmatprep.subr.mxu0 0.0
    %1734 = vmatpush1.xpose.msra.mxu0 0.0
    %1735 = vmatprep.subr.mxu0 0.0
    %1736 = vmatpush1.xpose.msra.mxu0 0.0
    %1737 = vmatprep.subr.mxu0 0.0
    %1738 = vmatpush1.xpose.msra.mxu0 0.0
    %1739 = vmatprep.subr.mxu0 0.0
    %1740 = vmatpush1.xpose.msra.mxu0 0.0
    %1741 = vmatprep.subr.mxu0 0.0
    %1742 = vmatpush1.xpose.msra.mxu0 0.0
    %1743 = vmatprep.subr.mxu0 0.0
    %1744 = vmatpush1.xpose.msra.mxu0 0.0
    %1745 = vmatprep.subr.mxu0 0.0
    %1746 = vmatpush1.xpose.msra.mxu0 0.0
    %1747 = vmatprep.subr.mxu0 0.0
    %1748 = vmatpush1.xpose.msra.mxu0 0.0
    %1749 = vmatprep.subr.mxu0 0.0
    %1750 = vmatpush1.xpose.msra.mxu0 0.0
    %1751 = vmatprep.subr.mxu0 0.0
    %1752 = vmatpush1.xpose.msra.mxu0 0.0
    %1753 = vmatprep.subr.mxu0 0.0
    %1754 = vmatpush1.xpose.msra.mxu0 0.0
    %1755 = vmatprep.subr.mxu0 0.0
    %1756 = vmatpush1.xpose.msra.mxu0 0.0
    %1757 = vmatprep.subr.mxu0 0.0
    %1758 = vmatpush1.xpose.msra.mxu0 0.0
    %1759 = vmatprep.subr.mxu0 0.0
    %1760 = vmatpush1.xpose.msra.mxu0 0.0
    %1761 = vmatprep.subr.mxu0 0.0
    %1762 = vmatpush1.xpose.msra.mxu0 0.0
    %1763 = vmatprep.mubr.f32.mxu0 0.0
    %1764 = vmatmul.mubr.f32.gmra.mrb[0].mxu0 %v1688
    %v1765 = vpop.f32.mrb[0].mxu0
    %v1766 = vadd.f32 0.0, %v1765
    %v1767 = vpop.f32.mrb[0].mxu0
    %1768 = vmatprep.mubr.f32.mxu0 0.0
    %1769 = vmatmul.mubr.f32.gmra.mrb[0].mxu0 %v1691
    %v1770 = vpop.f32.mrb[0].mxu0
    %v1771 = vadd.f32 0.0, %v1770
    %v1772 = vpop.f32.mrb[0].mxu0
    %1773 = vdwg.mxu0
    %v1775 = vsel %vm903, %v439, 0
    %v1778 = vsel %vm903, %v440, 0
    %v1781 = vsel %vm903, %v891, 0
    %v1784 = vsel %vm903, %v892, 0
    %1786 = vmatprep.subr.mxu0 0.0
    %1787 = vmatpush1.xpose.msra.mxu0 %v1781
    %1788 = vmatprep.subr.mxu0 0.0
    %1789 = vmatpush1.xpose.msra.mxu0 %v1784
    %1790 = vmatprep.subr.mxu0 0.0
    %1791 = vmatpush1.xpose.msra.mxu0 0.0
    %1792 = vmatprep.subr.mxu0 0.0
    %1793 = vmatpush1.xpose.msra.mxu0 0.0
    %1794 = vmatprep.subr.mxu0 0.0
    %1795 = vmatpush1.xpose.msra.mxu0 0.0
    %1796 = vmatprep.subr.mxu0 0.0
    %1797 = vmatpush1.xpose.msra.mxu0 0.0
    %1798 = vmatprep.subr.mxu0 0.0
    %1799 = vmatpush1.xpose.msra.mxu0 0.0
    %1800 = vmatprep.subr.mxu0 0.0
    %1801 = vmatpush1.xpose.msra.mxu0 0.0
    %1802 = vmatprep.subr.mxu0 0.0
    %1803 = vmatpush1.xpose.msra.mxu0 0.0
    %1804 = vmatprep.subr.mxu0 0.0
    %1805 = vmatpush1.xpose.msra.mxu0 0.0
    %1806 = vmatprep.subr.mxu0 0.0
    %1807 = vmatpush1.xpose.msra.mxu0 0.0
    %1808 = vmatprep.subr.mxu0 0.0
    %1809 = vmatpush1.xpose.msra.mxu0 0.0
    %1810 = vmatprep.subr.mxu0 0.0
    %1811 = vmatpush1.xpose.msra.mxu0 0.0
    %1812 = vmatprep.subr.mxu0 0.0
    %1813 = vmatpush1.xpose.msra.mxu0 0.0
    %1814 = vmatprep.subr.mxu0 0.0
    %1815 = vmatpush1.xpose.msra.mxu0 0.0
    %1816 = vmatprep.subr.mxu0 0.0
    %1817 = vmatpush1.xpose.msra.mxu0 0.0
    %1818 = vmatprep.subr.mxu0 0.0
    %1819 = vmatpush1.xpose.msra.mxu0 0.0
    %1820 = vmatprep.subr.mxu0 0.0
    %1821 = vmatpush1.xpose.msra.mxu0 0.0
    %1822 = vmatprep.subr.mxu0 0.0
    %1823 = vmatpush1.xpose.msra.mxu0 0.0
    %1824 = vmatprep.subr.mxu0 0.0
    %1825 = vmatpush1.xpose.msra.mxu0 0.0
    %1826 = vmatprep.subr.mxu0 0.0
    %1827 = vmatpush1.xpose.msra.mxu0 0.0
    %1828 = vmatprep.subr.mxu0 0.0
    %1829 = vmatpush1.xpose.msra.mxu0 0.0
    %1830 = vmatprep.subr.mxu0 0.0
    %1831 = vmatpush1.xpose.msra.mxu0 0.0
    %1832 = vmatprep.subr.mxu0 0.0
    %1833 = vmatpush1.xpose.msra.mxu0 0.0
    %1834 = vmatprep.subr.mxu0 0.0
    %1835 = vmatpush1.xpose.msra.mxu0 0.0
    %1836 = vmatprep.subr.mxu0 0.0
    %1837 = vmatpush1.xpose.msra.mxu0 0.0
    %1838 = vmatprep.subr.mxu0 0.0
    %1839 = vmatpush1.xpose.msra.mxu0 0.0
    %1840 = vmatprep.subr.mxu0 0.0
    %1841 = vmatpush1.xpose.msra.mxu0 0.0
    %1842 = vmatprep.subr.mxu0 0.0
    %1843 = vmatpush1.xpose.msra.mxu0 0.0
    %1844 = vmatprep.subr.mxu0 0.0
    %1845 = vmatpush1.xpose.msra.mxu0 0.0
    %1846 = vmatprep.subr.mxu0 0.0
    %1847 = vmatpush1.xpose.msra.mxu0 0.0
    %1848 = vmatprep.subr.mxu0 0.0
    %1849 = vmatpush1.xpose.msra.mxu0 0.0
    %1850 = vmatprep.mubr.f32.mxu0 0.0
    %1851 = vmatmul.mubr.f32.gmra.mrb[0].mxu0 %v1775
    %v1852 = vpop.f32.mrb[0].mxu0
    %v1853 = vadd.f32 0.0, %v1852
    %v1854 = vpop.f32.mrb[0].mxu0
    %1855 = vmatprep.mubr.f32.mxu0 0.0
    %1856 = vmatmul.mubr.f32.gmra.mrb[0].mxu0 %v1778
    %v1857 = vpop.f32.mrb[0].mxu0
    %v1858 = vadd.f32 0.0, %v1857
    %v1859 = vpop.f32.mrb[0].mxu0
    %1860 = vdwg.mxu0
    %v1862 = vsel %vm903, %v441, 0
    %v1865 = vsel %vm903, %v442, 0
    %v1868 = vsel %vm903, %v893, 0
    %v1871 = vsel %vm903, %v894, 0
    %1873 = vmatprep.subr.mxu0 0.0
    %1874 = vmatpush1.xpose.msra.mxu0 %v1868
    %1875 = vmatprep.subr.mxu0 0.0
    %1876 = vmatpush1.xpose.msra.mxu0 %v1871
    %1877 = vmatprep.subr.mxu0 0.0
    %1878 = vmatpush1.xpose.msra.mxu0 0.0
    %1879 = vmatprep.subr.mxu0 0.0
    %1880 = vmatpush1.xpose.msra.mxu0 0.0
    %1881 = vmatprep.subr.mxu0 0.0
    %1882 = vmatpush1.xpose.msra.mxu0 0.0
    %1883 = vmatprep.subr.mxu0 0.0
    %1884 = vmatpush1.xpose.msra.mxu0 0.0
    %1885 = vmatprep.subr.mxu0 0.0
    %1886 = vmatpush1.xpose.msra.mxu0 0.0
    %1887 = vmatprep.subr.mxu0 0.0
    %1888 = vmatpush1.xpose.msra.mxu0 0.0
    %1889 = vmatprep.subr.mxu0 0.0
    %1890 = vmatpush1.xpose.msra.mxu0 0.0
    %1891 = vmatprep.subr.mxu0 0.0
    %1892 = vmatpush1.xpose.msra.mxu0 0.0
    %1893 = vmatprep.subr.mxu0 0.0
    %1894 = vmatpush1.xpose.msra.mxu0 0.0
    %1895 = vmatprep.subr.mxu0 0.0
    %1896 = vmatpush1.xpose.msra.mxu0 0.0
    %1897 = vmatprep.subr.mxu0 0.0
    %1898 = vmatpush1.xpose.msra.mxu0 0.0
    %1899 = vmatprep.subr.mxu0 0.0
    %1900 = vmatpush1.xpose.msra.mxu0 0.0
    %1901 = vmatprep.subr.mxu0 0.0
    %1902 = vmatpush1.xpose.msra.mxu0 0.0
    %1903 = vmatprep.subr.mxu0 0.0
    %1904 = vmatpush1.xpose.msra.mxu0 0.0
    %1905 = vmatprep.subr.mxu0 0.0
    %1906 = vmatpush1.xpose.msra.mxu0 0.0
    %1907 = vmatprep.subr.mxu0 0.0
    %1908 = vmatpush1.xpose.msra.mxu0 0.0
    %1909 = vmatprep.subr.mxu0 0.0
    %1910 = vmatpush1.xpose.msra.mxu0 0.0
    %1911 = vmatprep.subr.mxu0 0.0
    %1912 = vmatpush1.xpose.msra.mxu0 0.0
    %1913 = vmatprep.subr.mxu0 0.0
    %1914 = vmatpush1.xpose.msra.mxu0 0.0
    %1915 = vmatprep.subr.mxu0 0.0
    %1916 = vmatpush1.xpose.msra.mxu0 0.0
    %1917 = vmatprep.subr.mxu0 0.0
    %1918 = vmatpush1.xpose.msra.mxu0 0.0
    %1919 = vmatprep.subr.mxu0 0.0
    %1920 = vmatpush1.xpose.msra.mxu0 0.0
    %1921 = vmatprep.subr.mxu0 0.0
    %1922 = vmatpush1.xpose.msra.mxu0 0.0
    %1923 = vmatprep.subr.mxu0 0.0
    %1924 = vmatpush1.xpose.msra.mxu0 0.0
    %1925 = vmatprep.subr.mxu0 0.0
    %1926 = vmatpush1.xpose.msra.mxu0 0.0
    %1927 = vmatprep.subr.mxu0 0.0
    %1928 = vmatpush1.xpose.msra.mxu0 0.0
    %1929 = vmatprep.subr.mxu0 0.0
    %1930 = vmatpush1.xpose.msra.mxu0 0.0
    %1931 = vmatprep.subr.mxu0 0.0
    %1932 = vmatpush1.xpose.msra.mxu0 0.0
    %1933 = vmatprep.subr.mxu0 0.0
    %1934 = vmatpush1.xpose.msra.mxu0 0.0
    %1935 = vmatprep.subr.mxu0 0.0
    %1936 = vmatpush1.xpose.msra.mxu0 0.0
    %1937 = vmatprep.mubr.f32.mxu0 0.0
    %1938 = vmatmul.mubr.f32.gmra.mrb[0].mxu0 %v1862
    %v1939 = vpop.f32.mrb[0].mxu0
    %v1940 = vadd.f32 0.0, %v1939
    %v1941 = vpop.f32.mrb[0].mxu0
    %1942 = vmatprep.mubr.f32.mxu0 0.0
    %1943 = vmatmul.mubr.f32.gmra.mrb[0].mxu0 %v1865
    %v1944 = vpop.f32.mrb[0].mxu0
    %v1945 = vadd.f32 0.0, %v1944
    %v1946 = vpop.f32.mrb[0].mxu0
    %1947 = vdwg.mxu0
    %v1949 = vsel %vm903, %v443, 0
    %v1952 = vsel %vm903, %v444, 0
    %v1955 = vsel %vm903, %v895, 0
    %v1958 = vsel %vm903, %v896, 0
    %1960 = vmatprep.subr.mxu0 0.0
    %1961 = vmatpush1.xpose.msra.mxu0 %v1955
    %1962 = vmatprep.subr.mxu0 0.0
    %1963 = vmatpush1.xpose.msra.mxu0 %v1958
    %1964 = vmatprep.subr.mxu0 0.0
    %1965 = vmatpush1.xpose.msra.mxu0 0.0
    %1966 = vmatprep.subr.mxu0 0.0
    %1967 = vmatpush1.xpose.msra.mxu0 0.0
    %1968 = vmatprep.subr.mxu0 0.0
    %1969 = vmatpush1.xpose.msra.mxu0 0.0
    %1970 = vmatprep.subr.mxu0 0.0
    %1971 = vmatpush1.xpose.msra.mxu0 0.0
    %1972 = vmatprep.subr.mxu0 0.0
    %1973 = vmatpush1.xpose.msra.mxu0 0.0
    %1974 = vmatprep.subr.mxu0 0.0
    %1975 = vmatpush1.xpose.msra.mxu0 0.0
    %1976 = vmatprep.subr.mxu0 0.0
    %1977 = vmatpush1.xpose.msra.mxu0 0.0
    %1978 = vmatprep.subr.mxu0 0.0
    %1979 = vmatpush1.xpose.msra.mxu0 0.0
    %1980 = vmatprep.subr.mxu0 0.0
    %1981 = vmatpush1.xpose.msra.mxu0 0.0
    %1982 = vmatprep.subr.mxu0 0.0
    %1983 = vmatpush1.xpose.msra.mxu0 0.0
    %1984 = vmatprep.subr.mxu0 0.0
    %1985 = vmatpush1.xpose.msra.mxu0 0.0
    %1986 = vmatprep.subr.mxu0 0.0
    %1987 = vmatpush1.xpose.msra.mxu0 0.0
    %1988 = vmatprep.subr.mxu0 0.0
    %1989 = vmatpush1.xpose.msra.mxu0 0.0
    %1990 = vmatprep.subr.mxu0 0.0
    %1991 = vmatpush1.xpose.msra.mxu0 0.0
    %1992 = vmatprep.subr.mxu0 0.0
    %1993 = vmatpush1.xpose.msra.mxu0 0.0
    %1994 = vmatprep.subr.mxu0 0.0
    %1995 = vmatpush1.xpose.msra.mxu0 0.0
    %1996 = vmatprep.subr.mxu0 0.0
    %1997 = vmatpush1.xpose.msra.mxu0 0.0
    %1998 = vmatprep.subr.mxu0 0.0
    %1999 = vmatpush1.xpose.msra.mxu0 0.0
    %2000 = vmatprep.subr.mxu0 0.0
    %2001 = vmatpush1.xpose.msra.mxu0 0.0
    %2002 = vmatprep.subr.mxu0 0.0
    %2003 = vmatpush1.xpose.msra.mxu0 0.0
    %2004 = vmatprep.subr.mxu0 0.0
    %2005 = vmatpush1.xpose.msra.mxu0 0.0
    %2006 = vmatprep.subr.mxu0 0.0
    %2007 = vmatpush1.xpose.msra.mxu0 0.0
    %2008 = vmatprep.subr.mxu0 0.0
    %2009 = vmatpush1.xpose.msra.mxu0 0.0
    %2010 = vmatprep.subr.mxu0 0.0
    %2011 = vmatpush1.xpose.msra.mxu0 0.0
    %2012 = vmatprep.subr.mxu0 0.0
    %2013 = vmatpush1.xpose.msra.mxu0 0.0
    %2014 = vmatprep.subr.mxu0 0.0
    %2015 = vmatpush1.xpose.msra.mxu0 0.0
    %2016 = vmatprep.subr.mxu0 0.0
    %2017 = vmatpush1.xpose.msra.mxu0 0.0
    %2018 = vmatprep.subr.mxu0 0.0
    %2019 = vmatpush1.xpose.msra.mxu0 0.0
    %2020 = vmatprep.subr.mxu0 0.0
    %2021 = vmatpush1.xpose.msra.mxu0 0.0
    %2022 = vmatprep.subr.mxu0 0.0
    %2023 = vmatpush1.xpose.msra.mxu0 0.0
    %2024 = vmatprep.mubr.f32.mxu0 0.0
    %2025 = vmatmul.mubr.f32.gmra.mrb[0].mxu0 %v1949
    %v2026 = vpop.f32.mrb[0].mxu0
    %v2027 = vadd.f32 0.0, %v2026
    %v2028 = vpop.f32.mrb[0].mxu0
    %2029 = vmatprep.mubr.f32.mxu0 0.0
    %2030 = vmatmul.mubr.f32.gmra.mrb[0].mxu0 %v1952
    %v2031 = vpop.f32.mrb[0].mxu0
    %v2032 = vadd.f32 0.0, %v2031
    %v2033 = vpop.f32.mrb[0].mxu0
    %2034 = vdwg.mxu0
    %v2036 = vsel %vm903, %v445, 0
    %v2039 = vsel %vm903, %v446, 0
    %v2042 = vsel %vm903, %v897, 0
    %v2045 = vsel %vm903, %v898, 0
    %2047 = vmatprep.subr.mxu0 0.0
    %2048 = vmatpush1.xpose.msra.mxu0 %v2042
    %2049 = vmatprep.subr.mxu0 0.0
    %2050 = vmatpush1.xpose.msra.mxu0 %v2045
    %2051 = vmatprep.subr.mxu0 0.0
    %2052 = vmatpush1.xpose.msra.mxu0 0.0
    %2053 = vmatprep.subr.mxu0 0.0
    %2054 = vmatpush1.xpose.msra.mxu0 0.0
    %2055 = vmatprep.subr.mxu0 0.0
    %2056 = vmatpush1.xpose.msra.mxu0 0.0
    %2057 = vmatprep.subr.mxu0 0.0
    %2058 = vmatpush1.xpose.msra.mxu0 0.0
    %2059 = vmatprep.subr.mxu0 0.0
    %2060 = vmatpush1.xpose.msra.mxu0 0.0
    %2061 = vmatprep.subr.mxu0 0.0
    %2062 = vmatpush1.xpose.msra.mxu0 0.0
    %2063 = vmatprep.subr.mxu0 0.0
    %2064 = vmatpush1.xpose.msra.mxu0 0.0
    %2065 = vmatprep.subr.mxu0 0.0
    %2066 = vmatpush1.xpose.msra.mxu0 0.0
    %2067 = vmatprep.subr.mxu0 0.0
    %2068 = vmatpush1.xpose.msra.mxu0 0.0
    %2069 = vmatprep.subr.mxu0 0.0
    %2070 = vmatpush1.xpose.msra.mxu0 0.0
    %2071 = vmatprep.subr.mxu0 0.0
    %2072 = vmatpush1.xpose.msra.mxu0 0.0
    %2073 = vmatprep.subr.mxu0 0.0
    %2074 = vmatpush1.xpose.msra.mxu0 0.0
    %2075 = vmatprep.subr.mxu0 0.0
    %2076 = vmatpush1.xpose.msra.mxu0 0.0
    %2077 = vmatprep.subr.mxu0 0.0
    %2078 = vmatpush1.xpose.msra.mxu0 0.0
    %2079 = vmatprep.subr.mxu0 0.0
    %2080 = vmatpush1.xpose.msra.mxu0 0.0
    %2081 = vmatprep.subr.mxu0 0.0
    %2082 = vmatpush1.xpose.msra.mxu0 0.0
    %2083 = vmatprep.subr.mxu0 0.0
    %2084 = vmatpush1.xpose.msra.mxu0 0.0
    %2085 = vmatprep.subr.mxu0 0.0
    %2086 = vmatpush1.xpose.msra.mxu0 0.0
    %2087 = vmatprep.subr.mxu0 0.0
    %2088 = vmatpush1.xpose.msra.mxu0 0.0
    %2089 = vmatprep.subr.mxu0 0.0
    %2090 = vmatpush1.xpose.msra.mxu0 0.0
    %2091 = vmatprep.subr.mxu0 0.0
    %2092 = vmatpush1.xpose.msra.mxu0 0.0
    %2093 = vmatprep.subr.mxu0 0.0
    %2094 = vmatpush1.xpose.msra.mxu0 0.0
    %2095 = vmatprep.subr.mxu0 0.0
    %2096 = vmatpush1.xpose.msra.mxu0 0.0
    %2097 = vmatprep.subr.mxu0 0.0
    %2098 = vmatpush1.xpose.msra.mxu0 0.0
    %2099 = vmatprep.subr.mxu0 0.0
    %2100 = vmatpush1.xpose.msra.mxu0 0.0
    %2101 = vmatprep.subr.mxu0 0.0
    %2102 = vmatpush1.xpose.msra.mxu0 0.0
    %2103 = vmatprep.subr.mxu0 0.0
    %2104 = vmatpush1.xpose.msra.mxu0 0.0
    %2105 = vmatprep.subr.mxu0 0.0
    %2106 = vmatpush1.xpose.msra.mxu0 0.0
    %2107 = vmatprep.subr.mxu0 0.0
    %2108 = vmatpush1.xpose.msra.mxu0 0.0
    %2109 = vmatprep.subr.mxu0 0.0
    %2110 = vmatpush1.xpose.msra.mxu0 0.0
    %2111 = vmatprep.mubr.f32.mxu0 0.0
    %2112 = vmatmul.mubr.f32.gmra.mrb[0].mxu0 %v2036
    %v2113 = vpop.f32.mrb[0].mxu0
    %v2114 = vadd.f32 0.0, %v2113
    %v2115 = vpop.f32.mrb[0].mxu0
    %2116 = vmatprep.mubr.f32.mxu0 0.0
    %2117 = vmatmul.mubr.f32.gmra.mrb[0].mxu0 %v2039
    %v2118 = vpop.f32.mrb[0].mxu0
    %v2119 = vadd.f32 0.0, %v2118
    %v2120 = vpop.f32.mrb[0].mxu0
    %2121 = vdwg.mxu0
    %v2123 = vsel %vm903, %v447, 0
    %v2126 = vsel %vm903, %v448, 0
    %v2129 = vsel %vm903, %v899, 0
    %v2132 = vsel %vm903, %v900, 0
    %2134 = vmatprep.subr.mxu0 0.0
    %2135 = vmatpush1.xpose.msra.mxu0 %v2129
    %2136 = vmatprep.subr.mxu0 0.0
    %2137 = vmatpush1.xpose.msra.mxu0 %v2132
    %2138 = vmatprep.subr.mxu0 0.0
    %2139 = vmatpush1.xpose.msra.mxu0 0.0
    %2140 = vmatprep.subr.mxu0 0.0
    %2141 = vmatpush1.xpose.msra.mxu0 0.0
    %2142 = vmatprep.subr.mxu0 0.0
    %2143 = vmatpush1.xpose.msra.mxu0 0.0
    %2144 = vmatprep.subr.mxu0 0.0
    %2145 = vmatpush1.xpose.msra.mxu0 0.0
    %2146 = vmatprep.subr.mxu0 0.0
    %2147 = vmatpush1.xpose.msra.mxu0 0.0
    %2148 = vmatprep.subr.mxu0 0.0
    %2149 = vmatpush1.xpose.msra.mxu0 0.0
    %2150 = vmatprep.subr.mxu0 0.0
    %2151 = vmatpush1.xpose.msra.mxu0 0.0
    %2152 = vmatprep.subr.mxu0 0.0
    %2153 = vmatpush1.xpose.msra.mxu0 0.0
    %2154 = vmatprep.subr.mxu0 0.0
    %2155 = vmatpush1.xpose.msra.mxu0 0.0
    %2156 = vmatprep.subr.mxu0 0.0
    %2157 = vmatpush1.xpose.msra.mxu0 0.0
    %2158 = vmatprep.subr.mxu0 0.0
    %2159 = vmatpush1.xpose.msra.mxu0 0.0
    %2160 = vmatprep.subr.mxu0 0.0
    %2161 = vmatpush1.xpose.msra.mxu0 0.0
    %2162 = vmatprep.subr.mxu0 0.0
    %2163 = vmatpush1.xpose.msra.mxu0 0.0
    %2164 = vmatprep.subr.mxu0 0.0
    %2165 = vmatpush1.xpose.msra.mxu0 0.0
    %2166 = vmatprep.subr.mxu0 0.0
    %2167 = vmatpush1.xpose.msra.mxu0 0.0
    %2168 = vmatprep.subr.mxu0 0.0
    %2169 = vmatpush1.xpose.msra.mxu0 0.0
    %2170 = vmatprep.subr.mxu0 0.0
    %2171 = vmatpush1.xpose.msra.mxu0 0.0
    %2172 = vmatprep.subr.mxu0 0.0
    %2173 = vmatpush1.xpose.msra.mxu0 0.0
    %2174 = vmatprep.subr.mxu0 0.0
    %2175 = vmatpush1.xpose.msra.mxu0 0.0
    %2176 = vmatprep.subr.mxu0 0.0
    %2177 = vmatpush1.xpose.msra.mxu0 0.0
    %2178 = vmatprep.subr.mxu0 0.0
    %2179 = vmatpush1.xpose.msra.mxu0 0.0
    %2180 = vmatprep.subr.mxu0 0.0
    %2181 = vmatpush1.xpose.msra.mxu0 0.0
    %2182 = vmatprep.subr.mxu0 0.0
    %2183 = vmatpush1.xpose.msra.mxu0 0.0
    %2184 = vmatprep.subr.mxu0 0.0
    %2185 = vmatpush1.xpose.msra.mxu0 0.0
    %2186 = vmatprep.subr.mxu0 0.0
    %2187 = vmatpush1.xpose.msra.mxu0 0.0
    %2188 = vmatprep.subr.mxu0 0.0
    %2189 = vmatpush1.xpose.msra.mxu0 0.0
    %2190 = vmatprep.subr.mxu0 0.0
    %2191 = vmatpush1.xpose.msra.mxu0 0.0
    %2192 = vmatprep.subr.mxu0 0.0
    %2193 = vmatpush1.xpose.msra.mxu0 0.0
    %2194 = vmatprep.subr.mxu0 0.0
    %2195 = vmatpush1.xpose.msra.mxu0 0.0
    %2196 = vmatprep.subr.mxu0 0.0
    %2197 = vmatpush1.xpose.msra.mxu0 0.0
    %2198 = vmatprep.mubr.f32.mxu0 0.0
    %2199 = vmatmul.mubr.f32.gmra.mrb[0].mxu0 %v2123
    %v2200 = vpop.f32.mrb[0].mxu0
    %v2201 = vadd.f32 0.0, %v2200
    %v2202 = vpop.f32.mrb[0].mxu0
    %2203 = vmatprep.mubr.f32.mxu0 0.0
    %2204 = vmatmul.mubr.f32.gmra.mrb[0].mxu0 %v2126
    %v2205 = vpop.f32.mrb[0].mxu0
    %v2206 = vadd.f32 0.0, %v2205
    %v2207 = vpop.f32.mrb[0].mxu0
    %2208 = vdwg.mxu0
    %v2210 = vsel %vm903, %v449, 0
    %v2213 = vsel %vm903, %v450, 0
    %v2216 = vsel %vm903, %v901, 0
    %v2219 = vsel %vm903, %v902, 0
    %2221 = vmatprep.subr.mxu0 0.0
    %2222 = vmatpush1.xpose.msra.mxu0 %v2216
    %2223 = vmatprep.subr.mxu0 0.0
    %2224 = vmatpush1.xpose.msra.mxu0 %v2219
    %2225 = vmatprep.subr.mxu0 0.0
    %2226 = vmatpush1.xpose.msra.mxu0 0.0
    %2227 = vmatprep.subr.mxu0 0.0
    %2228 = vmatpush1.xpose.msra.mxu0 0.0
    %2229 = vmatprep.subr.mxu0 0.0
    %2230 = vmatpush1.xpose.msra.mxu0 0.0
    %2231 = vmatprep.subr.mxu0 0.0
    %2232 = vmatpush1.xpose.msra.mxu0 0.0
    %2233 = vmatprep.subr.mxu0 0.0
    %2234 = vmatpush1.xpose.msra.mxu0 0.0
    %2235 = vmatprep.subr.mxu0 0.0
    %2236 = vmatpush1.xpose.msra.mxu0 0.0
    %2237 = vmatprep.subr.mxu0 0.0
    %2238 = vmatpush1.xpose.msra.mxu0 0.0
    %2239 = vmatprep.subr.mxu0 0.0
    %2240 = vmatpush1.xpose.msra.mxu0 0.0
    %2241 = vmatprep.subr.mxu0 0.0
    %2242 = vmatpush1.xpose.msra.mxu0 0.0
    %2243 = vmatprep.subr.mxu0 0.0
    %2244 = vmatpush1.xpose.msra.mxu0 0.0
    %2245 = vmatprep.subr.mxu0 0.0
    %2246 = vmatpush1.xpose.msra.mxu0 0.0
    %2247 = vmatprep.subr.mxu0 0.0
    %2248 = vmatpush1.xpose.msra.mxu0 0.0
    %2249 = vmatprep.subr.mxu0 0.0
    %2250 = vmatpush1.xpose.msra.mxu0 0.0
    %2251 = vmatprep.subr.mxu0 0.0
    %2252 = vmatpush1.xpose.msra.mxu0 0.0
    %2253 = vmatprep.subr.mxu0 0.0
    %2254 = vmatpush1.xpose.msra.mxu0 0.0
    %2255 = vmatprep.subr.mxu0 0.0
    %2256 = vmatpush1.xpose.msra.mxu0 0.0
    %2257 = vmatprep.subr.mxu0 0.0
    %2258 = vmatpush1.xpose.msra.mxu0 0.0
    %2259 = vmatprep.subr.mxu0 0.0
    %2260 = vmatpush1.xpose.msra.mxu0 0.0
    %2261 = vmatprep.subr.mxu0 0.0
    %2262 = vmatpush1.xpose.msra.mxu0 0.0
    %2263 = vmatprep.subr.mxu0 0.0
    %2264 = vmatpush1.xpose.msra.mxu0 0.0
    %2265 = vmatprep.subr.mxu0 0.0
    %2266 = vmatpush1.xpose.msra.mxu0 0.0
    %2267 = vmatprep.subr.mxu0 0.0
    %2268 = vmatpush1.xpose.msra.mxu0 0.0
    %2269 = vmatprep.subr.mxu0 0.0
    %2270 = vmatpush1.xpose.msra.mxu0 0.0
    %2271 = vmatprep.subr.mxu0 0.0
    %2272 = vmatpush1.xpose.msra.mxu0 0.0
    %2273 = vmatprep.subr.mxu0 0.0
    %2274 = vmatpush1.xpose.msra.mxu0 0.0
    %2275 = vmatprep.subr.mxu0 0.0
    %2276 = vmatpush1.xpose.msra.mxu0 0.0
    %2277 = vmatprep.subr.mxu0 0.0
    %2278 = vmatpush1.xpose.msra.mxu0 0.0
    %2279 = vmatprep.subr.mxu0 0.0
    %2280 = vmatpush1.xpose.msra.mxu0 0.0
    %2281 = vmatprep.subr.mxu0 0.0
    %2282 = vmatpush1.xpose.msra.mxu0 0.0
    %2283 = vmatprep.subr.mxu0 0.0
    %2284 = vmatpush1.xpose.msra.mxu0 0.0
    %2285 = vmatprep.mubr.f32.mxu0 0.0
    %2286 = vmatmul.mubr.f32.gmra.mrb[0].mxu0 %v2210
    %v2287 = vpop.f32.mrb[0].mxu0
    %v2288 = vadd.f32 0.0, %v2287
    %v2289 = vpop.f32.mrb[0].mxu0
    %2290 = vmatprep.mubr.f32.mxu0 0.0
    %2291 = vmatmul.mubr.f32.gmra.mrb[0].mxu0 %v2213
    %v2292 = vpop.f32.mrb[0].mxu0
    %v2293 = vadd.f32 0.0, %v2292
    %v2294 = vpop.f32.mrb[0].mxu0
    %2295 = vdwg.mxu0
    %v2296 = vsel 1, -3.4028235e+38, %v983
    %v2297 = vsel 1, -3.4028235e+38, %v988
    %v2298 = vsel 0, -3.4028235e+38, %v1070
    %v2299 = vsel 0, -3.4028235e+38, %v1075
    %v2300 = vsel 0, -3.4028235e+38, %v1157
    %v2301 = vsel 0, -3.4028235e+38, %v1162
    %v2302 = vsel 0, -3.4028235e+38, %v1244
    %v2303 = vsel 0, -3.4028235e+38, %v1249
    %v2304 = vsel 1, -3.4028235e+38, %v1331
    %v2305 = vsel 1, -3.4028235e+38, %v1336
    %v2306 = vsel 0, -3.4028235e+38, %v1418
    %v2307 = vsel 0, -3.4028235e+38, %v1423
    %v2308 = vsel 0, -3.4028235e+38, %v1505
    %v2309 = vsel 0, -3.4028235e+38, %v1510
    %v2310 = vsel 0, -3.4028235e+38, %v1592
    %v2311 = vsel 0, -3.4028235e+38, %v1597
    %v2312 = vsel 1, -3.4028235e+38, %v1679
    %v2313 = vsel 1, -3.4028235e+38, %v1684
    %v2314 = vsel 0, -3.4028235e+38, %v1766
    %v2315 = vsel 0, -3.4028235e+38, %v1771
    %v2316 = vsel 0, -3.4028235e+38, %v1853
    %v2317 = vsel 0, -3.4028235e+38, %v1858
    %v2318 = vsel 0, -3.4028235e+38, %v1940
    %v2319 = vsel 0, -3.4028235e+38, %v1945
    %v2320 = vsel 1, -3.4028235e+38, %v2027
    %v2321 = vsel 1, -3.4028235e+38, %v2032
    %v2322 = vsel 0, -3.4028235e+38, %v2114
    %v2323 = vsel 0, -3.4028235e+38, %v2119
    %v2324 = vsel 0, -3.4028235e+38, %v2201
    %v2325 = vsel 0, -3.4028235e+38, %v2206
    %v2326 = vsel 0, -3.4028235e+38, %v2288
    %v2327 = vsel 0, -3.4028235e+38, %v2293
    %v2328 = vld [vmem:[%s3 + $0x10] sm:$0xff]
    %v2329 = vld [vmem:[%s3 + $0x18] sm:$0xff]
    %v2330 = vld [vmem:[%s4 + $0x10] sm:$0xff]
    %v2331 = vld [vmem:[%s4 + $0x18] sm:$0xff]
    %v2332 = vmul.f32 %v453, %v2328
    %v2333 = vmul.f32 %v454, %v2329
    %v2334 = vmul.f32 %v455, %v2328
    %v2335 = vmul.f32 %v456, %v2329
    %v2336 = vmul.f32 %v457, %v2328
    %v2337 = vmul.f32 %v458, %v2329
    %v2338 = vmul.f32 %v459, %v2328
    %v2339 = vmul.f32 %v460, %v2329
    %v2340 = vmul.f32 %v465, %v2328
    %v2341 = vmul.f32 %v466, %v2329
    %v2342 = vmul.f32 %v467, %v2328
    %v2343 = vmul.f32 %v468, %v2329
    %v2344 = vmul.f32 %v469, %v2328
    %v2345 = vmul.f32 %v470, %v2329
    %v2346 = vmul.f32 %v471, %v2328
    %v2347 = vmul.f32 %v472, %v2329
    %v2348 = vmul.f32 %v477, %v2328
    %v2349 = vmul.f32 %v478, %v2329
    %v2350 = vmul.f32 %v479, %v2328
    %v2351 = vmul.f32 %v480, %v2329
    %v2352 = vmul.f32 %v481, %v2328
    %v2353 = vmul.f32 %v482, %v2329
    %v2354 = vmul.f32 %v483, %v2328
    %v2355 = vmul.f32 %v484, %v2329
    %v2356 = vmul.f32 %v489, %v2328
    %v2357 = vmul.f32 %v490, %v2329
    %v2358 = vmul.f32 %v491, %v2328
    %v2359 = vmul.f32 %v492, %v2329
    %v2360 = vmul.f32 %v493, %v2328
    %v2361 = vmul.f32 %v494, %v2329
    %v2362 = vmul.f32 %v495, %v2328
    %v2363 = vmul.f32 %v496, %v2329
    %2372 = vrot.lane.b32.xlu0 %v459, 112
    %v2373 = vpop.permute.xlu0 %2372
    %2374 = vrot.lane.b32.xlu0 %v460, 112
    %v2375 = vpop.permute.xlu0 %2374
    %2376 = vrot.lane.b32.xlu0 %v471, 112
    %v2377 = vpop.permute.xlu0 %2376
    %2378 = vrot.lane.b32.xlu0 %v472, 112
    %v2379 = vpop.permute.xlu0 %2378
    %2380 = vrot.lane.b32.xlu0 %v483, 112
    %v2381 = vpop.permute.xlu0 %2380
    %2382 = vrot.lane.b32.xlu0 %v484, 112
    %v2383 = vpop.permute.xlu0 %2382
    %2384 = vrot.lane.b32.xlu0 %v495, 112
    %v2385 = vpop.permute.xlu0 %2384
    %2386 = vrot.lane.b32.xlu0 %v496, 112
    %v2387 = vpop.permute.xlu0 %2386
    %2396 = vrot.lane.b32.xlu0 %v459, 16
    %v2397 = vpop.permute.xlu0 %2396
    %2398 = vrot.lane.b32.xlu0 %v460, 16
    %v2399 = vpop.permute.xlu0 %2398
    %2400 = vrot.lane.b32.xlu0 %v471, 16
    %v2401 = vpop.permute.xlu0 %2400
    %2402 = vrot.lane.b32.xlu0 %v472, 16
    %v2403 = vpop.permute.xlu0 %2402
    %2404 = vrot.lane.b32.xlu0 %v483, 16
    %v2405 = vpop.permute.xlu0 %2404
    %2406 = vrot.lane.b32.xlu0 %v484, 16
    %v2407 = vpop.permute.xlu0 %2406
    %2408 = vrot.lane.b32.xlu0 %v495, 16
    %v2409 = vpop.permute.xlu0 %2408
    %2410 = vrot.lane.b32.xlu0 %v496, 16
    %v2411 = vpop.permute.xlu0 %2410
    %v2420 = vsel %vm354, %v2373, %v2397
    %v2421 = vsel %vm354, %v2375, %v2399
    %v2422 = vsel %vm354, %v2377, %v2401
    %v2423 = vsel %vm354, %v2379, %v2403
    %v2424 = vsel %vm354, %v2381, %v2405
    %v2425 = vsel %vm354, %v2383, %v2407
    %v2426 = vsel %vm354, %v2385, %v2409
    %v2427 = vsel %vm354, %v2387, %v2411
    %v2428 = vmul.f32 %v809, %v2330
    %v2429 = vmul.f32 %v810, %v2331
    %v2430 = vmul.f32 %v811, %v2330
    %v2431 = vmul.f32 %v812, %v2331
    %v2432 = vmul.f32 %v813, %v2330
    %v2433 = vmul.f32 %v814, %v2331
    %v2434 = vmul.f32 %v2420, %v2330
    %v2435 = vmul.f32 %v2421, %v2331
    %v2436 = vmul.f32 %v817, %v2330
    %v2437 = vmul.f32 %v818, %v2331
    %v2438 = vmul.f32 %v819, %v2330
    %v2439 = vmul.f32 %v820, %v2331
    %v2440 = vmul.f32 %v821, %v2330
    %v2441 = vmul.f32 %v822, %v2331
    %v2442 = vmul.f32 %v2422, %v2330
    %v2443 = vmul.f32 %v2423, %v2331
    %v2444 = vmul.f32 %v825, %v2330
    %v2445 = vmul.f32 %v826, %v2331
    %v2446 = vmul.f32 %v827, %v2330
    %v2447 = vmul.f32 %v828, %v2331
    %v2448 = vmul.f32 %v829, %v2330
    %v2449 = vmul.f32 %v830, %v2331
    %v2450 = vmul.f32 %v2424, %v2330
    %v2451 = vmul.f32 %v2425, %v2331
    %v2452 = vmul.f32 %v833, %v2330
    %v2453 = vmul.f32 %v834, %v2331
    %v2454 = vmul.f32 %v835, %v2330
    %v2455 = vmul.f32 %v836, %v2331
    %v2456 = vmul.f32 %v837, %v2330
    %v2457 = vmul.f32 %v838, %v2331
    %v2458 = vmul.f32 %v2426, %v2330
    %v2459 = vmul.f32 %v2427, %v2331
    %v2460 = vadd.f32 %v2332, %v2428
    %v2461 = vadd.f32 %v2333, %v2429
    %v2462 = vadd.f32 %v2334, %v2430
    %v2463 = vadd.f32 %v2335, %v2431
    %v2464 = vadd.f32 %v2336, %v2432
    %v2465 = vadd.f32 %v2337, %v2433
    %v2466 = vadd.f32 %v2338, %v2434
    %v2467 = vadd.f32 %v2339, %v2435
    %v2468 = vadd.f32 %v2340, %v2436
    %v2469 = vadd.f32 %v2341, %v2437
    %v2470 = vadd.f32 %v2342, %v2438
    %v2471 = vadd.f32 %v2343, %v2439
    %v2472 = vadd.f32 %v2344, %v2440
    %v2473 = vadd.f32 %v2345, %v2441
    %v2474 = vadd.f32 %v2346, %v2442
    %v2475 = vadd.f32 %v2347, %v2443
    %v2476 = vadd.f32 %v2348, %v2444
    %v2477 = vadd.f32 %v2349, %v2445
    %v2478 = vadd.f32 %v2350, %v2446
    %v2479 = vadd.f32 %v2351, %v2447
    %v2480 = vadd.f32 %v2352, %v2448
    %v2481 = vadd.f32 %v2353, %v2449
    %v2482 = vadd.f32 %v2354, %v2450
    %v2483 = vadd.f32 %v2355, %v2451
    %v2484 = vadd.f32 %v2356, %v2452
    %v2485 = vadd.f32 %v2357, %v2453
    %v2486 = vadd.f32 %v2358, %v2454
    %v2487 = vadd.f32 %v2359, %v2455
    %v2488 = vadd.f32 %v2360, %v2456
    %v2489 = vadd.f32 %v2361, %v2457
    %v2490 = vadd.f32 %v2362, %v2458
    %v2491 = vadd.f32 %v2363, %v2459
    %v2493 = vsel %vm903, %v2460, 0
    %v2496 = vsel %vm903, %v2461, 0
    %2498 = vmatprep.subr.mxu0 0.0
    %2499 = vmatpush1.xpose.msra.mxu0 %v2493
    %2500 = vmatprep.subr.mxu0 0.0
    %2501 = vmatpush1.xpose.msra.mxu0 %v2496
    %2502 = vmatprep.subr.mxu0 0.0
    %2503 = vmatpush1.xpose.msra.mxu0 0.0
    %2504 = vmatprep.subr.mxu0 0.0
    %2505 = vmatpush1.xpose.msra.mxu0 0.0
    %2506 = vmatprep.subr.mxu0 0.0
    %2507 = vmatpush1.xpose.msra.mxu0 0.0
    %2508 = vmatprep.subr.mxu0 0.0
    %2509 = vmatpush1.xpose.msra.mxu0 0.0
    %2510 = vmatprep.subr.mxu0 0.0
    %2511 = vmatpush1.xpose.msra.mxu0 0.0
    %2512 = vmatprep.subr.mxu0 0.0
    %2513 = vmatpush1.xpose.msra.mxu0 0.0
    %2514 = vmatprep.subr.mxu0 0.0
    %2515 = vmatpush1.xpose.msra.mxu0 0.0
    %2516 = vmatprep.subr.mxu0 0.0
    %2517 = vmatpush1.xpose.msra.mxu0 0.0
    %2518 = vmatprep.subr.mxu0 0.0
    %2519 = vmatpush1.xpose.msra.mxu0 0.0
    %2520 = vmatprep.subr.mxu0 0.0
    %2521 = vmatpush1.xpose.msra.mxu0 0.0
    %2522 = vmatprep.subr.mxu0 0.0
    %2523 = vmatpush1.xpose.msra.mxu0 0.0
    %2524 = vmatprep.subr.mxu0 0.0
    %2525 = vmatpush1.xpose.msra.mxu0 0.0
    %2526 = vmatprep.subr.mxu0 0.0
    %2527 = vmatpush1.xpose.msra.mxu0 0.0
    %2528 = vmatprep.subr.mxu0 0.0
    %2529 = vmatpush1.xpose.msra.mxu0 0.0
    %2530 = vmatprep.subr.mxu0 0.0
    %2531 = vmatpush1.xpose.msra.mxu0 0.0
    %2532 = vmatprep.subr.mxu0 0.0
    %2533 = vmatpush1.xpose.msra.mxu0 0.0
    %2534 = vmatprep.subr.mxu0 0.0
    %2535 = vmatpush1.xpose.msra.mxu0 0.0
    %2536 = vmatprep.subr.mxu0 0.0
    %2537 = vmatpush1.xpose.msra.mxu0 0.0
    %2538 = vmatprep.subr.mxu0 0.0
    %2539 = vmatpush1.xpose.msra.mxu0 0.0
    %2540 = vmatprep.subr.mxu0 0.0
    %2541 = vmatpush1.xpose.msra.mxu0 0.0
    %2542 = vmatprep.subr.mxu0 0.0
    %2543 = vmatpush1.xpose.msra.mxu0 0.0
    %2544 = vmatprep.subr.mxu0 0.0
    %2545 = vmatpush1.xpose.msra.mxu0 0.0
    %2546 = vmatprep.subr.mxu0 0.0
    %2547 = vmatpush1.xpose.msra.mxu0 0.0
    %2548 = vmatprep.subr.mxu0 0.0
    %2549 = vmatpush1.xpose.msra.mxu0 0.0
    %2550 = vmatprep.subr.mxu0 0.0
    %2551 = vmatpush1.xpose.msra.mxu0 0.0
    %2552 = vmatprep.subr.mxu0 0.0
    %2553 = vmatpush1.xpose.msra.mxu0 0.0
    %2554 = vmatprep.subr.mxu0 0.0
    %2555 = vmatpush1.xpose.msra.mxu0 0.0
    %2556 = vmatprep.subr.mxu0 0.0
    %2557 = vmatpush1.xpose.msra.mxu0 0.0
    %2558 = vmatprep.subr.mxu0 0.0
    %2559 = vmatpush1.xpose.msra.mxu0 0.0
    %2560 = vmatprep.subr.mxu0 0.0
    %2561 = vmatpush1.xpose.msra.mxu0 0.0
    %2562 = vmatprep.mubr.f32.mxu0 0.0
    %2563 = vmatmul.mubr.f32.gmra.mrb[0].mxu0 %v905
    %v2564 = vpop.f32.mrb[0].mxu0
    %v2565 = vadd.f32 0.0, %v2564
    %v2566 = vpop.f32.mrb[0].mxu0
    %2567 = vmatprep.mubr.f32.mxu0 0.0
    %2568 = vmatmul.mubr.f32.gmra.mrb[0].mxu0 %v908
    %v2569 = vpop.f32.mrb[0].mxu0
    %v2570 = vadd.f32 0.0, %v2569
    %v2571 = vpop.f32.mrb[0].mxu0
    %2572 = vdwg.mxu0
    %v2574 = vsel %vm903, %v2462, 0
    %v2577 = vsel %vm903, %v2463, 0
    %2579 = vmatprep.subr.mxu0 0.0
    %2580 = vmatpush1.xpose.msra.mxu0 %v2574
    %2581 = vmatprep.subr.mxu0 0.0
    %2582 = vmatpush1.xpose.msra.mxu0 %v2577
    %2583 = vmatprep.subr.mxu0 0.0
    %2584 = vmatpush1.xpose.msra.mxu0 0.0
    %2585 = vmatprep.subr.mxu0 0.0
    %2586 = vmatpush1.xpose.msra.mxu0 0.0
    %2587 = vmatprep.subr.mxu0 0.0
    %2588 = vmatpush1.xpose.msra.mxu0 0.0
    %2589 = vmatprep.subr.mxu0 0.0
    %2590 = vmatpush1.xpose.msra.mxu0 0.0
    %2591 = vmatprep.subr.mxu0 0.0
    %2592 = vmatpush1.xpose.msra.mxu0 0.0
    %2593 = vmatprep.subr.mxu0 0.0
    %2594 = vmatpush1.xpose.msra.mxu0 0.0
    %2595 = vmatprep.subr.mxu0 0.0
    %2596 = vmatpush1.xpose.msra.mxu0 0.0
    %2597 = vmatprep.subr.mxu0 0.0
    %2598 = vmatpush1.xpose.msra.mxu0 0.0
    %2599 = vmatprep.subr.mxu0 0.0
    %2600 = vmatpush1.xpose.msra.mxu0 0.0
    %2601 = vmatprep.subr.mxu0 0.0
    %2602 = vmatpush1.xpose.msra.mxu0 0.0
    %2603 = vmatprep.subr.mxu0 0.0
    %2604 = vmatpush1.xpose.msra.mxu0 0.0
    %2605 = vmatprep.subr.mxu0 0.0
    %2606 = vmatpush1.xpose.msra.mxu0 0.0
    %2607 = vmatprep.subr.mxu0 0.0
    %2608 = vmatpush1.xpose.msra.mxu0 0.0
    %2609 = vmatprep.subr.mxu0 0.0
    %2610 = vmatpush1.xpose.msra.mxu0 0.0
    %2611 = vmatprep.subr.mxu0 0.0
    %2612 = vmatpush1.xpose.msra.mxu0 0.0
    %2613 = vmatprep.subr.mxu0 0.0
    %2614 = vmatpush1.xpose.msra.mxu0 0.0
    %2615 = vmatprep.subr.mxu0 0.0
    %2616 = vmatpush1.xpose.msra.mxu0 0.0
    %2617 = vmatprep.subr.mxu0 0.0
    %2618 = vmatpush1.xpose.msra.mxu0 0.0
    %2619 = vmatprep.subr.mxu0 0.0
    %2620 = vmatpush1.xpose.msra.mxu0 0.0
    %2621 = vmatprep.subr.mxu0 0.0
    %2622 = vmatpush1.xpose.msra.mxu0 0.0
    %2623 = vmatprep.subr.mxu0 0.0
    %2624 = vmatpush1.xpose.msra.mxu0 0.0
    %2625 = vmatprep.subr.mxu0 0.0
    %2626 = vmatpush1.xpose.msra.mxu0 0.0
    %2627 = vmatprep.subr.mxu0 0.0
    %2628 = vmatpush1.xpose.msra.mxu0 0.0
    %2629 = vmatprep.subr.mxu0 0.0
    %2630 = vmatpush1.xpose.msra.mxu0 0.0
    %2631 = vmatprep.subr.mxu0 0.0
    %2632 = vmatpush1.xpose.msra.mxu0 0.0
    %2633 = vmatprep.subr.mxu0 0.0
    %2634 = vmatpush1.xpose.msra.mxu0 0.0
    %2635 = vmatprep.subr.mxu0 0.0
    %2636 = vmatpush1.xpose.msra.mxu0 0.0
    %2637 = vmatprep.subr.mxu0 0.0
    %2638 = vmatpush1.xpose.msra.mxu0 0.0
    %2639 = vmatprep.subr.mxu0 0.0
    %2640 = vmatpush1.xpose.msra.mxu0 0.0
    %2641 = vmatprep.subr.mxu0 0.0
    %2642 = vmatpush1.xpose.msra.mxu0 0.0
    %2643 = vmatprep.mubr.f32.mxu0 0.0
    %2644 = vmatmul.mubr.f32.gmra.mrb[0].mxu0 %v992
    %v2645 = vpop.f32.mrb[0].mxu0
    %v2646 = vadd.f32 0.0, %v2645
    %v2647 = vpop.f32.mrb[0].mxu0
    %2648 = vmatprep.mubr.f32.mxu0 0.0
    %2649 = vmatmul.mubr.f32.gmra.mrb[0].mxu0 %v995
    %v2650 = vpop.f32.mrb[0].mxu0
    %v2651 = vadd.f32 0.0, %v2650
    %v2652 = vpop.f32.mrb[0].mxu0
    %2653 = vdwg.mxu0
    %v2655 = vsel %vm903, %v2464, 0
    %v2658 = vsel %vm903, %v2465, 0
    %2660 = vmatprep.subr.mxu0 0.0
    %2661 = vmatpush1.xpose.msra.mxu0 %v2655
    %2662 = vmatprep.subr.mxu0 0.0
    %2663 = vmatpush1.xpose.msra.mxu0 %v2658
    %2664 = vmatprep.subr.mxu0 0.0
    %2665 = vmatpush1.xpose.msra.mxu0 0.0
    %2666 = vmatprep.subr.mxu0 0.0
    %2667 = vmatpush1.xpose.msra.mxu0 0.0
    %2668 = vmatprep.subr.mxu0 0.0
    %2669 = vmatpush1.xpose.msra.mxu0 0.0
    %2670 = vmatprep.subr.mxu0 0.0
    %2671 = vmatpush1.xpose.msra.mxu0 0.0
    %2672 = vmatprep.subr.mxu0 0.0
    %2673 = vmatpush1.xpose.msra.mxu0 0.0
    %2674 = vmatprep.subr.mxu0 0.0
    %2675 = vmatpush1.xpose.msra.mxu0 0.0
    %2676 = vmatprep.subr.mxu0 0.0
    %2677 = vmatpush1.xpose.msra.mxu0 0.0
    %2678 = vmatprep.subr.mxu0 0.0
    %2679 = vmatpush1.xpose.msra.mxu0 0.0
    %2680 = vmatprep.subr.mxu0 0.0
    %2681 = vmatpush1.xpose.msra.mxu0 0.0
    %2682 = vmatprep.subr.mxu0 0.0
    %2683 = vmatpush1.xpose.msra.mxu0 0.0
    %2684 = vmatprep.subr.mxu0 0.0
    %2685 = vmatpush1.xpose.msra.mxu0 0.0
    %2686 = vmatprep.subr.mxu0 0.0
    %2687 = vmatpush1.xpose.msra.mxu0 0.0
    %2688 = vmatprep.subr.mxu0 0.0
    %2689 = vmatpush1.xpose.msra.mxu0 0.0
    %2690 = vmatprep.subr.mxu0 0.0
    %2691 = vmatpush1.xpose.msra.mxu0 0.0
    %2692 = vmatprep.subr.mxu0 0.0
    %2693 = vmatpush1.xpose.msra.mxu0 0.0
    %2694 = vmatprep.subr.mxu0 0.0
    %2695 = vmatpush1.xpose.msra.mxu0 0.0
    %2696 = vmatprep.subr.mxu0 0.0
    %2697 = vmatpush1.xpose.msra.mxu0 0.0
    %2698 = vmatprep.subr.mxu0 0.0
    %2699 = vmatpush1.xpose.msra.mxu0 0.0
    %2700 = vmatprep.subr.mxu0 0.0
    %2701 = vmatpush1.xpose.msra.mxu0 0.0
    %2702 = vmatprep.subr.mxu0 0.0
    %2703 = vmatpush1.xpose.msra.mxu0 0.0
    %2704 = vmatprep.subr.mxu0 0.0
    %2705 = vmatpush1.xpose.msra.mxu0 0.0
    %2706 = vmatprep.subr.mxu0 0.0
    %2707 = vmatpush1.xpose.msra.mxu0 0.0
    %2708 = vmatprep.subr.mxu0 0.0
    %2709 = vmatpush1.xpose.msra.mxu0 0.0
    %2710 = vmatprep.subr.mxu0 0.0
    %2711 = vmatpush1.xpose.msra.mxu0 0.0
    %2712 = vmatprep.subr.mxu0 0.0
    %2713 = vmatpush1.xpose.msra.mxu0 0.0
    %2714 = vmatprep.subr.mxu0 0.0
    %2715 = vmatpush1.xpose.msra.mxu0 0.0
    %2716 = vmatprep.subr.mxu0 0.0
    %2717 = vmatpush1.xpose.msra.mxu0 0.0
    %2718 = vmatprep.subr.mxu0 0.0
    %2719 = vmatpush1.xpose.msra.mxu0 0.0
    %2720 = vmatprep.subr.mxu0 0.0
    %2721 = vmatpush1.xpose.msra.mxu0 0.0
    %2722 = vmatprep.subr.mxu0 0.0
    %2723 = vmatpush1.xpose.msra.mxu0 0.0
    %2724 = vmatprep.mubr.f32.mxu0 0.0
    %2725 = vmatmul.mubr.f32.gmra.mrb[0].mxu0 %v1079
    %v2726 = vpop.f32.mrb[0].mxu0
    %v2727 = vadd.f32 0.0, %v2726
    %v2728 = vpop.f32.mrb[0].mxu0
    %2729 = vmatprep.mubr.f32.mxu0 0.0
    %2730 = vmatmul.mubr.f32.gmra.mrb[0].mxu0 %v1082
    %v2731 = vpop.f32.mrb[0].mxu0
    %v2732 = vadd.f32 0.0, %v2731
    %v2733 = vpop.f32.mrb[0].mxu0
    %2734 = vdwg.mxu0
    %v2736 = vsel %vm903, %v2466, 0
    %v2739 = vsel %vm903, %v2467, 0
    %2741 = vmatprep.subr.mxu0 0.0
    %2742 = vmatpush1.xpose.msra.mxu0 %v2736
    %2743 = vmatprep.subr.mxu0 0.0
    %2744 = vmatpush1.xpose.msra.mxu0 %v2739
    %2745 = vmatprep.subr.mxu0 0.0
    %2746 = vmatpush1.xpose.msra.mxu0 0.0
    %2747 = vmatprep.subr.mxu0 0.0
    %2748 = vmatpush1.xpose.msra.mxu0 0.0
    %2749 = vmatprep.subr.mxu0 0.0
    %2750 = vmatpush1.xpose.msra.mxu0 0.0
    %2751 = vmatprep.subr.mxu0 0.0
    %2752 = vmatpush1.xpose.msra.mxu0 0.0
    %2753 = vmatprep.subr.mxu0 0.0
    %2754 = vmatpush1.xpose.msra.mxu0 0.0
    %2755 = vmatprep.subr.mxu0 0.0
    %2756 = vmatpush1.xpose.msra.mxu0 0.0
    %2757 = vmatprep.subr.mxu0 0.0
    %2758 = vmatpush1.xpose.msra.mxu0 0.0
    %2759 = vmatprep.subr.mxu0 0.0
    %2760 = vmatpush1.xpose.msra.mxu0 0.0
    %2761 = vmatprep.subr.mxu0 0.0
    %2762 = vmatpush1.xpose.msra.mxu0 0.0
    %2763 = vmatprep.subr.mxu0 0.0
    %2764 = vmatpush1.xpose.msra.mxu0 0.0
    %2765 = vmatprep.subr.mxu0 0.0
    %2766 = vmatpush1.xpose.msra.mxu0 0.0
    %2767 = vmatprep.subr.mxu0 0.0
    %2768 = vmatpush1.xpose.msra.mxu0 0.0
    %2769 = vmatprep.subr.mxu0 0.0
    %2770 = vmatpush1.xpose.msra.mxu0 0.0
    %2771 = vmatprep.subr.mxu0 0.0
    %2772 = vmatpush1.xpose.msra.mxu0 0.0
    %2773 = vmatprep.subr.mxu0 0.0
    %2774 = vmatpush1.xpose.msra.mxu0 0.0
    %2775 = vmatprep.subr.mxu0 0.0
    %2776 = vmatpush1.xpose.msra.mxu0 0.0
    %2777 = vmatprep.subr.mxu0 0.0
    %2778 = vmatpush1.xpose.msra.mxu0 0.0
    %2779 = vmatprep.subr.mxu0 0.0
    %2780 = vmatpush1.xpose.msra.mxu0 0.0
    %2781 = vmatprep.subr.mxu0 0.0
    %2782 = vmatpush1.xpose.msra.mxu0 0.0
    %2783 = vmatprep.subr.mxu0 0.0
    %2784 = vmatpush1.xpose.msra.mxu0 0.0
    %2785 = vmatprep.subr.mxu0 0.0
    %2786 = vmatpush1.xpose.msra.mxu0 0.0
    %2787 = vmatprep.subr.mxu0 0.0
    %2788 = vmatpush1.xpose.msra.mxu0 0.0
    %2789 = vmatprep.subr.mxu0 0.0
    %2790 = vmatpush1.xpose.msra.mxu0 0.0
    %2791 = vmatprep.subr.mxu0 0.0
    %2792 = vmatpush1.xpose.msra.mxu0 0.0
    %2793 = vmatprep.subr.mxu0 0.0
    %2794 = vmatpush1.xpose.msra.mxu0 0.0
    %2795 = vmatprep.subr.mxu0 0.0
    %2796 = vmatpush1.xpose.msra.mxu0 0.0
    %2797 = vmatprep.subr.mxu0 0.0
    %2798 = vmatpush1.xpose.msra.mxu0 0.0
    %2799 = vmatprep.subr.mxu0 0.0
    %2800 = vmatpush1.xpose.msra.mxu0 0.0
    %2801 = vmatprep.subr.mxu0 0.0
    %2802 = vmatpush1.xpose.msra.mxu0 0.0
    %2803 = vmatprep.subr.mxu0 0.0
    %2804 = vmatpush1.xpose.msra.mxu0 0.0
    %2805 = vmatprep.mubr.f32.mxu0 0.0
    %2806 = vmatmul.mubr.f32.gmra.mrb[0].mxu0 %v1166
    %v2807 = vpop.f32.mrb[0].mxu0
    %v2808 = vadd.f32 0.0, %v2807
    %v2809 = vpop.f32.mrb[0].mxu0
    %2810 = vmatprep.mubr.f32.mxu0 0.0
    %2811 = vmatmul.mubr.f32.gmra.mrb[0].mxu0 %v1169
    %v2812 = vpop.f32.mrb[0].mxu0
    %v2813 = vadd.f32 0.0, %v2812
    %v2814 = vpop.f32.mrb[0].mxu0
    %2815 = vdwg.mxu0
    %v2817 = vsel %vm903, %v2468, 0
    %v2820 = vsel %vm903, %v2469, 0
    %2822 = vmatprep.subr.mxu0 0.0
    %2823 = vmatpush1.xpose.msra.mxu0 %v2817
    %2824 = vmatprep.subr.mxu0 0.0
    %2825 = vmatpush1.xpose.msra.mxu0 %v2820
    %2826 = vmatprep.subr.mxu0 0.0
    %2827 = vmatpush1.xpose.msra.mxu0 0.0
    %2828 = vmatprep.subr.mxu0 0.0
    %2829 = vmatpush1.xpose.msra.mxu0 0.0
    %2830 = vmatprep.subr.mxu0 0.0
    %2831 = vmatpush1.xpose.msra.mxu0 0.0
    %2832 = vmatprep.subr.mxu0 0.0
    %2833 = vmatpush1.xpose.msra.mxu0 0.0
    %2834 = vmatprep.subr.mxu0 0.0
    %2835 = vmatpush1.xpose.msra.mxu0 0.0
    %2836 = vmatprep.subr.mxu0 0.0
    %2837 = vmatpush1.xpose.msra.mxu0 0.0
    %2838 = vmatprep.subr.mxu0 0.0
    %2839 = vmatpush1.xpose.msra.mxu0 0.0
    %2840 = vmatprep.subr.mxu0 0.0
    %2841 = vmatpush1.xpose.msra.mxu0 0.0
    %2842 = vmatprep.subr.mxu0 0.0
    %2843 = vmatpush1.xpose.msra.mxu0 0.0
    %2844 = vmatprep.subr.mxu0 0.0
    %2845 = vmatpush1.xpose.msra.mxu0 0.0
    %2846 = vmatprep.subr.mxu0 0.0
    %2847 = vmatpush1.xpose.msra.mxu0 0.0
    %2848 = vmatprep.subr.mxu0 0.0
    %2849 = vmatpush1.xpose.msra.mxu0 0.0
    %2850 = vmatprep.subr.mxu0 0.0
    %2851 = vmatpush1.xpose.msra.mxu0 0.0
    %2852 = vmatprep.subr.mxu0 0.0
    %2853 = vmatpush1.xpose.msra.mxu0 0.0
    %2854 = vmatprep.subr.mxu0 0.0
    %2855 = vmatpush1.xpose.msra.mxu0 0.0
    %2856 = vmatprep.subr.mxu0 0.0
    %2857 = vmatpush1.xpose.msra.mxu0 0.0
    %2858 = vmatprep.subr.mxu0 0.0
    %2859 = vmatpush1.xpose.msra.mxu0 0.0
    %2860 = vmatprep.subr.mxu0 0.0
    %2861 = vmatpush1.xpose.msra.mxu0 0.0
    %2862 = vmatprep.subr.mxu0 0.0
    %2863 = vmatpush1.xpose.msra.mxu0 0.0
    %2864 = vmatprep.subr.mxu0 0.0
    %2865 = vmatpush1.xpose.msra.mxu0 0.0
    %2866 = vmatprep.subr.mxu0 0.0
    %2867 = vmatpush1.xpose.msra.mxu0 0.0
    %2868 = vmatprep.subr.mxu0 0.0
    %2869 = vmatpush1.xpose.msra.mxu0 0.0
    %2870 = vmatprep.subr.mxu0 0.0
    %2871 = vmatpush1.xpose.msra.mxu0 0.0
    %2872 = vmatprep.subr.mxu0 0.0
    %2873 = vmatpush1.xpose.msra.mxu0 0.0
    %2874 = vmatprep.subr.mxu0 0.0
    %2875 = vmatpush1.xpose.msra.mxu0 0.0
    %2876 = vmatprep.subr.mxu0 0.0
    %2877 = vmatpush1.xpose.msra.mxu0 0.0
    %2878 = vmatprep.subr.mxu0 0.0
    %2879 = vmatpush1.xpose.msra.mxu0 0.0
    %2880 = vmatprep.subr.mxu0 0.0
    %2881 = vmatpush1.xpose.msra.mxu0 0.0
    %2882 = vmatprep.subr.mxu0 0.0
    %2883 = vmatpush1.xpose.msra.mxu0 0.0
    %2884 = vmatprep.subr.mxu0 0.0
    %2885 = vmatpush1.xpose.msra.mxu0 0.0
    %2886 = vmatprep.mubr.f32.mxu0 0.0
    %2887 = vmatmul.mubr.f32.gmra.mrb[0].mxu0 %v1253
    %v2888 = vpop.f32.mrb[0].mxu0
    %v2889 = vadd.f32 0.0, %v2888
    %v2890 = vpop.f32.mrb[0].mxu0
    %2891 = vmatprep.mubr.f32.mxu0 0.0
    %2892 = vmatmul.mubr.f32.gmra.mrb[0].mxu0 %v1256
    %v2893 = vpop.f32.mrb[0].mxu0
    %v2894 = vadd.f32 0.0, %v2893
    %v2895 = vpop.f32.mrb[0].mxu0
    %2896 = vdwg.mxu0
    %v2898 = vsel %vm903, %v2470, 0
    %v2901 = vsel %vm903, %v2471, 0
    %2903 = vmatprep.subr.mxu0 0.0
    %2904 = vmatpush1.xpose.msra.mxu0 %v2898
    %2905 = vmatprep.subr.mxu0 0.0
    %2906 = vmatpush1.xpose.msra.mxu0 %v2901
    %2907 = vmatprep.subr.mxu0 0.0
    %2908 = vmatpush1.xpose.msra.mxu0 0.0
    %2909 = vmatprep.subr.mxu0 0.0
    %2910 = vmatpush1.xpose.msra.mxu0 0.0
    %2911 = vmatprep.subr.mxu0 0.0
    %2912 = vmatpush1.xpose.msra.mxu0 0.0
    %2913 = vmatprep.subr.mxu0 0.0
    %2914 = vmatpush1.xpose.msra.mxu0 0.0
    %2915 = vmatprep.subr.mxu0 0.0
    %2916 = vmatpush1.xpose.msra.mxu0 0.0
    %2917 = vmatprep.subr.mxu0 0.0
    %2918 = vmatpush1.xpose.msra.mxu0 0.0
    %2919 = vmatprep.subr.mxu0 0.0
    %2920 = vmatpush1.xpose.msra.mxu0 0.0
    %2921 = vmatprep.subr.mxu0 0.0
    %2922 = vmatpush1.xpose.msra.mxu0 0.0
    %2923 = vmatprep.subr.mxu0 0.0
    %2924 = vmatpush1.xpose.msra.mxu0 0.0
    %2925 = vmatprep.subr.mxu0 0.0
    %2926 = vmatpush1.xpose.msra.mxu0 0.0
    %2927 = vmatprep.subr.mxu0 0.0
    %2928 = vmatpush1.xpose.msra.mxu0 0.0
    %2929 = vmatprep.subr.mxu0 0.0
    %2930 = vmatpush1.xpose.msra.mxu0 0.0
    %2931 = vmatprep.subr.mxu0 0.0
    %2932 = vmatpush1.xpose.msra.mxu0 0.0
    %2933 = vmatprep.subr.mxu0 0.0
    %2934 = vmatpush1.xpose.msra.mxu0 0.0
    %2935 = vmatprep.subr.mxu0 0.0
    %2936 = vmatpush1.xpose.msra.mxu0 0.0
    %2937 = vmatprep.subr.mxu0 0.0
    %2938 = vmatpush1.xpose.msra.mxu0 0.0
    %2939 = vmatprep.subr.mxu0 0.0
    %2940 = vmatpush1.xpose.msra.mxu0 0.0
    %2941 = vmatprep.subr.mxu0 0.0
    %2942 = vmatpush1.xpose.msra.mxu0 0.0
    %2943 = vmatprep.subr.mxu0 0.0
    %2944 = vmatpush1.xpose.msra.mxu0 0.0
    %2945 = vmatprep.subr.mxu0 0.0
    %2946 = vmatpush1.xpose.msra.mxu0 0.0
    %2947 = vmatprep.subr.mxu0 0.0
    %2948 = vmatpush1.xpose.msra.mxu0 0.0
    %2949 = vmatprep.subr.mxu0 0.0
    %2950 = vmatpush1.xpose.msra.mxu0 0.0
    %2951 = vmatprep.subr.mxu0 0.0
    %2952 = vmatpush1.xpose.msra.mxu0 0.0
    %2953 = vmatprep.subr.mxu0 0.0
    %2954 = vmatpush1.xpose.msra.mxu0 0.0
    %2955 = vmatprep.subr.mxu0 0.0
    %2956 = vmatpush1.xpose.msra.mxu0 0.0
    %2957 = vmatprep.subr.mxu0 0.0
    %2958 = vmatpush1.xpose.msra.mxu0 0.0
    %2959 = vmatprep.subr.mxu0 0.0
    %2960 = vmatpush1.xpose.msra.mxu0 0.0
    %2961 = vmatprep.subr.mxu0 0.0
    %2962 = vmatpush1.xpose.msra.mxu0 0.0
    %2963 = vmatprep.subr.mxu0 0.0
    %2964 = vmatpush1.xpose.msra.mxu0 0.0
    %2965 = vmatprep.subr.mxu0 0.0
    %2966 = vmatpush1.xpose.msra.mxu0 0.0
    %2967 = vmatprep.mubr.f32.mxu0 0.0
    %2968 = vmatmul.mubr.f32.gmra.mrb[0].mxu0 %v1340
    %v2969 = vpop.f32.mrb[0].mxu0
    %v2970 = vadd.f32 0.0, %v2969
    %v2971 = vpop.f32.mrb[0].mxu0
    %2972 = vmatprep.mubr.f32.mxu0 0.0
    %2973 = vmatmul.mubr.f32.gmra.mrb[0].mxu0 %v1343
    %v2974 = vpop.f32.mrb[0].mxu0
    %v2975 = vadd.f32 0.0, %v2974
    %v2976 = vpop.f32.mrb[0].mxu0
    %2977 = vdwg.mxu0
    %v2979 = vsel %vm903, %v2472, 0
    %v2982 = vsel %vm903, %v2473, 0
    %2984 = vmatprep.subr.mxu0 0.0
    %2985 = vmatpush1.xpose.msra.mxu0 %v2979
    %2986 = vmatprep.subr.mxu0 0.0
    %2987 = vmatpush1.xpose.msra.mxu0 %v2982
    %2988 = vmatprep.subr.mxu0 0.0
    %2989 = vmatpush1.xpose.msra.mxu0 0.0
    %2990 = vmatprep.subr.mxu0 0.0
    %2991 = vmatpush1.xpose.msra.mxu0 0.0
    %2992 = vmatprep.subr.mxu0 0.0
    %2993 = vmatpush1.xpose.msra.mxu0 0.0
    %2994 = vmatprep.subr.mxu0 0.0
    %2995 = vmatpush1.xpose.msra.mxu0 0.0
    %2996 = vmatprep.subr.mxu0 0.0
    %2997 = vmatpush1.xpose.msra.mxu0 0.0
    %2998 = vmatprep.subr.mxu0 0.0
    %2999 = vmatpush1.xpose.msra.mxu0 0.0
    %3000 = vmatprep.subr.mxu0 0.0
    %3001 = vmatpush1.xpose.msra.mxu0 0.0
    %3002 = vmatprep.subr.mxu0 0.0
    %3003 = vmatpush1.xpose.msra.mxu0 0.0
    %3004 = vmatprep.subr.mxu0 0.0
    %3005 = vmatpush1.xpose.msra.mxu0 0.0
    %3006 = vmatprep.subr.mxu0 0.0
    %3007 = vmatpush1.xpose.msra.mxu0 0.0
    %3008 = vmatprep.subr.mxu0 0.0
    %3009 = vmatpush1.xpose.msra.mxu0 0.0
    %3010 = vmatprep.subr.mxu0 0.0
    %3011 = vmatpush1.xpose.msra.mxu0 0.0
    %3012 = vmatprep.subr.mxu0 0.0
    %3013 = vmatpush1.xpose.msra.mxu0 0.0
    %3014 = vmatprep.subr.mxu0 0.0
    %3015 = vmatpush1.xpose.msra.mxu0 0.0
    %3016 = vmatprep.subr.mxu0 0.0
    %3017 = vmatpush1.xpose.msra.mxu0 0.0
    %3018 = vmatprep.subr.mxu0 0.0
    %3019 = vmatpush1.xpose.msra.mxu0 0.0
    %3020 = vmatprep.subr.mxu0 0.0
    %3021 = vmatpush1.xpose.msra.mxu0 0.0
    %3022 = vmatprep.subr.mxu0 0.0
    %3023 = vmatpush1.xpose.msra.mxu0 0.0
    %3024 = vmatprep.subr.mxu0 0.0
    %3025 = vmatpush1.xpose.msra.mxu0 0.0
    %3026 = vmatprep.subr.mxu0 0.0
    %3027 = vmatpush1.xpose.msra.mxu0 0.0
    %3028 = vmatprep.subr.mxu0 0.0
    %3029 = vmatpush1.xpose.msra.mxu0 0.0
    %3030 = vmatprep.subr.mxu0 0.0
    %3031 = vmatpush1.xpose.msra.mxu0 0.0
    %3032 = vmatprep.subr.mxu0 0.0
    %3033 = vmatpush1.xpose.msra.mxu0 0.0
    %3034 = vmatprep.subr.mxu0 0.0
    %3035 = vmatpush1.xpose.msra.mxu0 0.0
    %3036 = vmatprep.subr.mxu0 0.0
    %3037 = vmatpush1.xpose.msra.mxu0 0.0
    %3038 = vmatprep.subr.mxu0 0.0
    %3039 = vmatpush1.xpose.msra.mxu0 0.0
    %3040 = vmatprep.subr.mxu0 0.0
    %3041 = vmatpush1.xpose.msra.mxu0 0.0
    %3042 = vmatprep.subr.mxu0 0.0
    %3043 = vmatpush1.xpose.msra.mxu0 0.0
    %3044 = vmatprep.subr.mxu0 0.0
    %3045 = vmatpush1.xpose.msra.mxu0 0.0
    %3046 = vmatprep.subr.mxu0 0.0
    %3047 = vmatpush1.xpose.msra.mxu0 0.0
    %3048 = vmatprep.mubr.f32.mxu0 0.0
    %3049 = vmatmul.mubr.f32.gmra.mrb[0].mxu0 %v1427
    %v3050 = vpop.f32.mrb[0].mxu0
    %v3051 = vadd.f32 0.0, %v3050
    %v3052 = vpop.f32.mrb[0].mxu0
    %3053 = vmatprep.mubr.f32.mxu0 0.0
    %3054 = vmatmul.mubr.f32.gmra.mrb[0].mxu0 %v1430
    %v3055 = vpop.f32.mrb[0].mxu0
    %v3056 = vadd.f32 0.0, %v3055
    %v3057 = vpop.f32.mrb[0].mxu0
    %3058 = vdwg.mxu0
    %v3060 = vsel %vm903, %v2474, 0
    %v3063 = vsel %vm903, %v2475, 0
    %3065 = vmatprep.subr.mxu0 0.0
    %3066 = vmatpush1.xpose.msra.mxu0 %v3060
    %3067 = vmatprep.subr.mxu0 0.0
    %3068 = vmatpush1.xpose.msra.mxu0 %v3063
    %3069 = vmatprep.subr.mxu0 0.0
    %3070 = vmatpush1.xpose.msra.mxu0 0.0
    %3071 = vmatprep.subr.mxu0 0.0
    %3072 = vmatpush1.xpose.msra.mxu0 0.0
    %3073 = vmatprep.subr.mxu0 0.0
    %3074 = vmatpush1.xpose.msra.mxu0 0.0
    %3075 = vmatprep.subr.mxu0 0.0
    %3076 = vmatpush1.xpose.msra.mxu0 0.0
    %3077 = vmatprep.subr.mxu0 0.0
    %3078 = vmatpush1.xpose.msra.mxu0 0.0
    %3079 = vmatprep.subr.mxu0 0.0
    %3080 = vmatpush1.xpose.msra.mxu0 0.0
    %3081 = vmatprep.subr.mxu0 0.0
    %3082 = vmatpush1.xpose.msra.mxu0 0.0
    %3083 = vmatprep.subr.mxu0 0.0
    %3084 = vmatpush1.xpose.msra.mxu0 0.0
    %3085 = vmatprep.subr.mxu0 0.0
    %3086 = vmatpush1.xpose.msra.mxu0 0.0
    %3087 = vmatprep.subr.mxu0 0.0
    %3088 = vmatpush1.xpose.msra.mxu0 0.0
    %3089 = vmatprep.subr.mxu0 0.0
    %3090 = vmatpush1.xpose.msra.mxu0 0.0
    %3091 = vmatprep.subr.mxu0 0.0
    %3092 = vmatpush1.xpose.msra.mxu0 0.0
    %3093 = vmatprep.subr.mxu0 0.0
    %3094 = vmatpush1.xpose.msra.mxu0 0.0
    %3095 = vmatprep.subr.mxu0 0.0
    %3096 = vmatpush1.xpose.msra.mxu0 0.0
    %3097 = vmatprep.subr.mxu0 0.0
    %3098 = vmatpush1.xpose.msra.mxu0 0.0
    %3099 = vmatprep.subr.mxu0 0.0
    %3100 = vmatpush1.xpose.msra.mxu0 0.0
    %3101 = vmatprep.subr.mxu0 0.0
    %3102 = vmatpush1.xpose.msra.mxu0 0.0
    %3103 = vmatprep.subr.mxu0 0.0
    %3104 = vmatpush1.xpose.msra.mxu0 0.0
    %3105 = vmatprep.subr.mxu0 0.0
    %3106 = vmatpush1.xpose.msra.mxu0 0.0
    %3107 = vmatprep.subr.mxu0 0.0
    %3108 = vmatpush1.xpose.msra.mxu0 0.0
    %3109 = vmatprep.subr.mxu0 0.0
    %3110 = vmatpush1.xpose.msra.mxu0 0.0
    %3111 = vmatprep.subr.mxu0 0.0
    %3112 = vmatpush1.xpose.msra.mxu0 0.0
    %3113 = vmatprep.subr.mxu0 0.0
    %3114 = vmatpush1.xpose.msra.mxu0 0.0
    %3115 = vmatprep.subr.mxu0 0.0
    %3116 = vmatpush1.xpose.msra.mxu0 0.0
    %3117 = vmatprep.subr.mxu0 0.0
    %3118 = vmatpush1.xpose.msra.mxu0 0.0
    %3119 = vmatprep.subr.mxu0 0.0
    %3120 = vmatpush1.xpose.msra.mxu0 0.0
    %3121 = vmatprep.subr.mxu0 0.0
    %3122 = vmatpush1.xpose.msra.mxu0 0.0
    %3123 = vmatprep.subr.mxu0 0.0
    %3124 = vmatpush1.xpose.msra.mxu0 0.0
    %3125 = vmatprep.subr.mxu0 0.0
    %3126 = vmatpush1.xpose.msra.mxu0 0.0
    %3127 = vmatprep.subr.mxu0 0.0
    %3128 = vmatpush1.xpose.msra.mxu0 0.0
    %3129 = vmatprep.mubr.f32.mxu0 0.0
    %3130 = vmatmul.mubr.f32.gmra.mrb[0].mxu0 %v1514
    %v3131 = vpop.f32.mrb[0].mxu0
    %v3132 = vadd.f32 0.0, %v3131
    %v3133 = vpop.f32.mrb[0].mxu0
    %3134 = vmatprep.mubr.f32.mxu0 0.0
    %3135 = vmatmul.mubr.f32.gmra.mrb[0].mxu0 %v1517
    %v3136 = vpop.f32.mrb[0].mxu0
    %v3137 = vadd.f32 0.0, %v3136
    %v3138 = vpop.f32.mrb[0].mxu0
    %3139 = vdwg.mxu0
    %v3141 = vsel %vm903, %v2476, 0
    %v3144 = vsel %vm903, %v2477, 0
    %3146 = vmatprep.subr.mxu0 0.0
    %3147 = vmatpush1.xpose.msra.mxu0 %v3141
    %3148 = vmatprep.subr.mxu0 0.0
    %3149 = vmatpush1.xpose.msra.mxu0 %v3144
    %3150 = vmatprep.subr.mxu0 0.0
    %3151 = vmatpush1.xpose.msra.mxu0 0.0
    %3152 = vmatprep.subr.mxu0 0.0
    %3153 = vmatpush1.xpose.msra.mxu0 0.0
    %3154 = vmatprep.subr.mxu0 0.0
    %3155 = vmatpush1.xpose.msra.mxu0 0.0
    %3156 = vmatprep.subr.mxu0 0.0
    %3157 = vmatpush1.xpose.msra.mxu0 0.0
    %3158 = vmatprep.subr.mxu0 0.0
    %3159 = vmatpush1.xpose.msra.mxu0 0.0
    %3160 = vmatprep.subr.mxu0 0.0
    %3161 = vmatpush1.xpose.msra.mxu0 0.0
    %3162 = vmatprep.subr.mxu0 0.0
    %3163 = vmatpush1.xpose.msra.mxu0 0.0
    %3164 = vmatprep.subr.mxu0 0.0
    %3165 = vmatpush1.xpose.msra.mxu0 0.0
    %3166 = vmatprep.subr.mxu0 0.0
    %3167 = vmatpush1.xpose.msra.mxu0 0.0
    %3168 = vmatprep.subr.mxu0 0.0
    %3169 = vmatpush1.xpose.msra.mxu0 0.0
    %3170 = vmatprep.subr.mxu0 0.0
    %3171 = vmatpush1.xpose.msra.mxu0 0.0
    %3172 = vmatprep.subr.mxu0 0.0
    %3173 = vmatpush1.xpose.msra.mxu0 0.0
    %3174 = vmatprep.subr.mxu0 0.0
    %3175 = vmatpush1.xpose.msra.mxu0 0.0
    %3176 = vmatprep.subr.mxu0 0.0
    %3177 = vmatpush1.xpose.msra.mxu0 0.0
    %3178 = vmatprep.subr.mxu0 0.0
    %3179 = vmatpush1.xpose.msra.mxu0 0.0
    %3180 = vmatprep.subr.mxu0 0.0
    %3181 = vmatpush1.xpose.msra.mxu0 0.0
    %3182 = vmatprep.subr.mxu0 0.0
    %3183 = vmatpush1.xpose.msra.mxu0 0.0
    %3184 = vmatprep.subr.mxu0 0.0
    %3185 = vmatpush1.xpose.msra.mxu0 0.0
    %3186 = vmatprep.subr.mxu0 0.0
    %3187 = vmatpush1.xpose.msra.mxu0 0.0
    %3188 = vmatprep.subr.mxu0 0.0
    %3189 = vmatpush1.xpose.msra.mxu0 0.0
    %3190 = vmatprep.subr.mxu0 0.0
    %3191 = vmatpush1.xpose.msra.mxu0 0.0
    %3192 = vmatprep.subr.mxu0 0.0
    %3193 = vmatpush1.xpose.msra.mxu0 0.0
    %3194 = vmatprep.subr.mxu0 0.0
    %3195 = vmatpush1.xpose.msra.mxu0 0.0
    %3196 = vmatprep.subr.mxu0 0.0
    %3197 = vmatpush1.xpose.msra.mxu0 0.0
    %3198 = vmatprep.subr.mxu0 0.0
    %3199 = vmatpush1.xpose.msra.mxu0 0.0
    %3200 = vmatprep.subr.mxu0 0.0
    %3201 = vmatpush1.xpose.msra.mxu0 0.0
    %3202 = vmatprep.subr.mxu0 0.0
    %3203 = vmatpush1.xpose.msra.mxu0 0.0
    %3204 = vmatprep.subr.mxu0 0.0
    %3205 = vmatpush1.xpose.msra.mxu0 0.0
    %3206 = vmatprep.subr.mxu0 0.0
    %3207 = vmatpush1.xpose.msra.mxu0 0.0
    %3208 = vmatprep.subr.mxu0 0.0
    %3209 = vmatpush1.xpose.msra.mxu0 0.0
    %3210 = vmatprep.mubr.f32.mxu0 0.0
    %3211 = vmatmul.mubr.f32.gmra.mrb[0].mxu0 %v1601
    %v3212 = vpop.f32.mrb[0].mxu0
    %v3213 = vadd.f32 0.0, %v3212
    %v3214 = vpop.f32.mrb[0].mxu0
    %3215 = vmatprep.mubr.f32.mxu0 0.0
    %3216 = vmatmul.mubr.f32.gmra.mrb[0].mxu0 %v1604
    %v3217 = vpop.f32.mrb[0].mxu0
    %v3218 = vadd.f32 0.0, %v3217
    %v3219 = vpop.f32.mrb[0].mxu0
    %3220 = vdwg.mxu0
    %v3222 = vsel %vm903, %v2478, 0
    %v3225 = vsel %vm903, %v2479, 0
    %3227 = vmatprep.subr.mxu0 0.0
    %3228 = vmatpush1.xpose.msra.mxu0 %v3222
    %3229 = vmatprep.subr.mxu0 0.0
    %3230 = vmatpush1.xpose.msra.mxu0 %v3225
    %3231 = vmatprep.subr.mxu0 0.0
    %3232 = vmatpush1.xpose.msra.mxu0 0.0
    %3233 = vmatprep.subr.mxu0 0.0
    %3234 = vmatpush1.xpose.msra.mxu0 0.0
    %3235 = vmatprep.subr.mxu0 0.0
    %3236 = vmatpush1.xpose.msra.mxu0 0.0
    %3237 = vmatprep.subr.mxu0 0.0
    %3238 = vmatpush1.xpose.msra.mxu0 0.0
    %3239 = vmatprep.subr.mxu0 0.0
    %3240 = vmatpush1.xpose.msra.mxu0 0.0
    %3241 = vmatprep.subr.mxu0 0.0
    %3242 = vmatpush1.xpose.msra.mxu0 0.0
    %3243 = vmatprep.subr.mxu0 0.0
    %3244 = vmatpush1.xpose.msra.mxu0 0.0
    %3245 = vmatprep.subr.mxu0 0.0
    %3246 = vmatpush1.xpose.msra.mxu0 0.0
    %3247 = vmatprep.subr.mxu0 0.0
    %3248 = vmatpush1.xpose.msra.mxu0 0.0
    %3249 = vmatprep.subr.mxu0 0.0
    %3250 = vmatpush1.xpose.msra.mxu0 0.0
    %3251 = vmatprep.subr.mxu0 0.0
    %3252 = vmatpush1.xpose.msra.mxu0 0.0
    %3253 = vmatprep.subr.mxu0 0.0
    %3254 = vmatpush1.xpose.msra.mxu0 0.0
    %3255 = vmatprep.subr.mxu0 0.0
    %3256 = vmatpush1.xpose.msra.mxu0 0.0
    %3257 = vmatprep.subr.mxu0 0.0
    %3258 = vmatpush1.xpose.msra.mxu0 0.0
    %3259 = vmatprep.subr.mxu0 0.0
    %3260 = vmatpush1.xpose.msra.mxu0 0.0
    %3261 = vmatprep.subr.mxu0 0.0
    %3262 = vmatpush1.xpose.msra.mxu0 0.0
    %3263 = vmatprep.subr.mxu0 0.0
    %3264 = vmatpush1.xpose.msra.mxu0 0.0
    %3265 = vmatprep.subr.mxu0 0.0
    %3266 = vmatpush1.xpose.msra.mxu0 0.0
    %3267 = vmatprep.subr.mxu0 0.0
    %3268 = vmatpush1.xpose.msra.mxu0 0.0
    %3269 = vmatprep.subr.mxu0 0.0
    %3270 = vmatpush1.xpose.msra.mxu0 0.0
    %3271 = vmatprep.subr.mxu0 0.0
    %3272 = vmatpush1.xpose.msra.mxu0 0.0
    %3273 = vmatprep.subr.mxu0 0.0
    %3274 = vmatpush1.xpose.msra.mxu0 0.0
    %3275 = vmatprep.subr.mxu0 0.0
    %3276 = vmatpush1.xpose.msra.mxu0 0.0
    %3277 = vmatprep.subr.mxu0 0.0
    %3278 = vmatpush1.xpose.msra.mxu0 0.0
    %3279 = vmatprep.subr.mxu0 0.0
    %3280 = vmatpush1.xpose.msra.mxu0 0.0
    %3281 = vmatprep.subr.mxu0 0.0
    %3282 = vmatpush1.xpose.msra.mxu0 0.0
    %3283 = vmatprep.subr.mxu0 0.0
    %3284 = vmatpush1.xpose.msra.mxu0 0.0
    %3285 = vmatprep.subr.mxu0 0.0
    %3286 = vmatpush1.xpose.msra.mxu0 0.0
    %3287 = vmatprep.subr.mxu0 0.0
    %3288 = vmatpush1.xpose.msra.mxu0 0.0
    %3289 = vmatprep.subr.mxu0 0.0
    %3290 = vmatpush1.xpose.msra.mxu0 0.0
    %3291 = vmatprep.mubr.f32.mxu0 0.0
    %3292 = vmatmul.mubr.f32.gmra.mrb[0].mxu0 %v1688
    %v3293 = vpop.f32.mrb[0].mxu0
    %v3294 = vadd.f32 0.0, %v3293
    %v3295 = vpop.f32.mrb[0].mxu0
    %3296 = vmatprep.mubr.f32.mxu0 0.0
    %3297 = vmatmul.mubr.f32.gmra.mrb[0].mxu0 %v1691
    %v3298 = vpop.f32.mrb[0].mxu0
    %v3299 = vadd.f32 0.0, %v3298
    %v3300 = vpop.f32.mrb[0].mxu0
    %3301 = vdwg.mxu0
    %v3303 = vsel %vm903, %v2480, 0
    %v3306 = vsel %vm903, %v2481, 0
    %3308 = vmatprep.subr.mxu0 0.0
    %3309 = vmatpush1.xpose.msra.mxu0 %v3303
    %3310 = vmatprep.subr.mxu0 0.0
    %3311 = vmatpush1.xpose.msra.mxu0 %v3306
    %3312 = vmatprep.subr.mxu0 0.0
    %3313 = vmatpush1.xpose.msra.mxu0 0.0
    %3314 = vmatprep.subr.mxu0 0.0
    %3315 = vmatpush1.xpose.msra.mxu0 0.0
    %3316 = vmatprep.subr.mxu0 0.0
    %3317 = vmatpush1.xpose.msra.mxu0 0.0
    %3318 = vmatprep.subr.mxu0 0.0
    %3319 = vmatpush1.xpose.msra.mxu0 0.0
    %3320 = vmatprep.subr.mxu0 0.0
    %3321 = vmatpush1.xpose.msra.mxu0 0.0
    %3322 = vmatprep.subr.mxu0 0.0
    %3323 = vmatpush1.xpose.msra.mxu0 0.0
    %3324 = vmatprep.subr.mxu0 0.0
    %3325 = vmatpush1.xpose.msra.mxu0 0.0
    %3326 = vmatprep.subr.mxu0 0.0
    %3327 = vmatpush1.xpose.msra.mxu0 0.0
    %3328 = vmatprep.subr.mxu0 0.0
    %3329 = vmatpush1.xpose.msra.mxu0 0.0
    %3330 = vmatprep.subr.mxu0 0.0
    %3331 = vmatpush1.xpose.msra.mxu0 0.0
    %3332 = vmatprep.subr.mxu0 0.0
    %3333 = vmatpush1.xpose.msra.mxu0 0.0
    %3334 = vmatprep.subr.mxu0 0.0
    %3335 = vmatpush1.xpose.msra.mxu0 0.0
    %3336 = vmatprep.subr.mxu0 0.0
    %3337 = vmatpush1.xpose.msra.mxu0 0.0
    %3338 = vmatprep.subr.mxu0 0.0
    %3339 = vmatpush1.xpose.msra.mxu0 0.0
    %3340 = vmatprep.subr.mxu0 0.0
    %3341 = vmatpush1.xpose.msra.mxu0 0.0
    %3342 = vmatprep.subr.mxu0 0.0
    %3343 = vmatpush1.xpose.msra.mxu0 0.0
    %3344 = vmatprep.subr.mxu0 0.0
    %3345 = vmatpush1.xpose.msra.mxu0 0.0
    %3346 = vmatprep.subr.mxu0 0.0
    %3347 = vmatpush1.xpose.msra.mxu0 0.0
    %3348 = vmatprep.subr.mxu0 0.0
    %3349 = vmatpush1.xpose.msra.mxu0 0.0
    %3350 = vmatprep.subr.mxu0 0.0
    %3351 = vmatpush1.xpose.msra.mxu0 0.0
    %3352 = vmatprep.subr.mxu0 0.0
    %3353 = vmatpush1.xpose.msra.mxu0 0.0
    %3354 = vmatprep.subr.mxu0 0.0
    %3355 = vmatpush1.xpose.msra.mxu0 0.0
    %3356 = vmatprep.subr.mxu0 0.0
    %3357 = vmatpush1.xpose.msra.mxu0 0.0
    %3358 = vmatprep.subr.mxu0 0.0
    %3359 = vmatpush1.xpose.msra.mxu0 0.0
    %3360 = vmatprep.subr.mxu0 0.0
    %3361 = vmatpush1.xpose.msra.mxu0 0.0
    %3362 = vmatprep.subr.mxu0 0.0
    %3363 = vmatpush1.xpose.msra.mxu0 0.0
    %3364 = vmatprep.subr.mxu0 0.0
    %3365 = vmatpush1.xpose.msra.mxu0 0.0
    %3366 = vmatprep.subr.mxu0 0.0
    %3367 = vmatpush1.xpose.msra.mxu0 0.0
    %3368 = vmatprep.subr.mxu0 0.0
    %3369 = vmatpush1.xpose.msra.mxu0 0.0
    %3370 = vmatprep.subr.mxu0 0.0
    %3371 = vmatpush1.xpose.msra.mxu0 0.0
    %3372 = vmatprep.mubr.f32.mxu0 0.0
    %3373 = vmatmul.mubr.f32.gmra.mrb[0].mxu0 %v1775
    %v3374 = vpop.f32.mrb[0].mxu0
    %v3375 = vadd.f32 0.0, %v3374
    %v3376 = vpop.f32.mrb[0].mxu0
    %3377 = vmatprep.mubr.f32.mxu0 0.0
    %3378 = vmatmul.mubr.f32.gmra.mrb[0].mxu0 %v1778
    %v3379 = vpop.f32.mrb[0].mxu0
    %v3380 = vadd.f32 0.0, %v3379
    %v3381 = vpop.f32.mrb[0].mxu0
    %3382 = vdwg.mxu0
    %v3384 = vsel %vm903, %v2482, 0
    %v3387 = vsel %vm903, %v2483, 0
    %3389 = vmatprep.subr.mxu0 0.0
    %3390 = vmatpush1.xpose.msra.mxu0 %v3384
    %3391 = vmatprep.subr.mxu0 0.0
    %3392 = vmatpush1.xpose.msra.mxu0 %v3387
    %3393 = vmatprep.subr.mxu0 0.0
    %3394 = vmatpush1.xpose.msra.mxu0 0.0
    %3395 = vmatprep.subr.mxu0 0.0
    %3396 = vmatpush1.xpose.msra.mxu0 0.0
    %3397 = vmatprep.subr.mxu0 0.0
    %3398 = vmatpush1.xpose.msra.mxu0 0.0
    %3399 = vmatprep.subr.mxu0 0.0
    %3400 = vmatpush1.xpose.msra.mxu0 0.0
    %3401 = vmatprep.subr.mxu0 0.0
    %3402 = vmatpush1.xpose.msra.mxu0 0.0
    %3403 = vmatprep.subr.mxu0 0.0
    %3404 = vmatpush1.xpose.msra.mxu0 0.0
    %3405 = vmatprep.subr.mxu0 0.0
    %3406 = vmatpush1.xpose.msra.mxu0 0.0
    %3407 = vmatprep.subr.mxu0 0.0
    %3408 = vmatpush1.xpose.msra.mxu0 0.0
    %3409 = vmatprep.subr.mxu0 0.0
    %3410 = vmatpush1.xpose.msra.mxu0 0.0
    %3411 = vmatprep.subr.mxu0 0.0
    %3412 = vmatpush1.xpose.msra.mxu0 0.0
    %3413 = vmatprep.subr.mxu0 0.0
    %3414 = vmatpush1.xpose.msra.mxu0 0.0
    %3415 = vmatprep.subr.mxu0 0.0
    %3416 = vmatpush1.xpose.msra.mxu0 0.0
    %3417 = vmatprep.subr.mxu0 0.0
    %3418 = vmatpush1.xpose.msra.mxu0 0.0
    %3419 = vmatprep.subr.mxu0 0.0
    %3420 = vmatpush1.xpose.msra.mxu0 0.0
    %3421 = vmatprep.subr.mxu0 0.0
    %3422 = vmatpush1.xpose.msra.mxu0 0.0
    %3423 = vmatprep.subr.mxu0 0.0
    %3424 = vmatpush1.xpose.msra.mxu0 0.0
    %3425 = vmatprep.subr.mxu0 0.0
    %3426 = vmatpush1.xpose.msra.mxu0 0.0
    %3427 = vmatprep.subr.mxu0 0.0
    %3428 = vmatpush1.xpose.msra.mxu0 0.0
    %3429 = vmatprep.subr.mxu0 0.0
    %3430 = vmatpush1.xpose.msra.mxu0 0.0
    %3431 = vmatprep.subr.mxu0 0.0
    %3432 = vmatpush1.xpose.msra.mxu0 0.0
    %3433 = vmatprep.subr.mxu0 0.0
    %3434 = vmatpush1.xpose.msra.mxu0 0.0
    %3435 = vmatprep.subr.mxu0 0.0
    %3436 = vmatpush1.xpose.msra.mxu0 0.0
    %3437 = vmatprep.subr.mxu0 0.0
    %3438 = vmatpush1.xpose.msra.mxu0 0.0
    %3439 = vmatprep.subr.mxu0 0.0
    %3440 = vmatpush1.xpose.msra.mxu0 0.0
    %3441 = vmatprep.subr.mxu0 0.0
    %3442 = vmatpush1.xpose.msra.mxu0 0.0
    %3443 = vmatprep.subr.mxu0 0.0
    %3444 = vmatpush1.xpose.msra.mxu0 0.0
    %3445 = vmatprep.subr.mxu0 0.0
    %3446 = vmatpush1.xpose.msra.mxu0 0.0
    %3447 = vmatprep.subr.mxu0 0.0
    %3448 = vmatpush1.xpose.msra.mxu0 0.0
    %3449 = vmatprep.subr.mxu0 0.0
    %3450 = vmatpush1.xpose.msra.mxu0 0.0
    %3451 = vmatprep.subr.mxu0 0.0
    %3452 = vmatpush1.xpose.msra.mxu0 0.0
    %3453 = vmatprep.mubr.f32.mxu0 0.0
    %3454 = vmatmul.mubr.f32.gmra.mrb[0].mxu0 %v1862
    %v3455 = vpop.f32.mrb[0].mxu0
    %v3456 = vadd.f32 0.0, %v3455
    %v3457 = vpop.f32.mrb[0].mxu0
    %3458 = vmatprep.mubr.f32.mxu0 0.0
    %3459 = vmatmul.mubr.f32.gmra.mrb[0].mxu0 %v1865
    %v3460 = vpop.f32.mrb[0].mxu0
    %v3461 = vadd.f32 0.0, %v3460
    %v3462 = vpop.f32.mrb[0].mxu0
    %3463 = vdwg.mxu0
    %v3465 = vsel %vm903, %v2484, 0
    %v3468 = vsel %vm903, %v2485, 0
    %3470 = vmatprep.subr.mxu0 0.0
    %3471 = vmatpush1.xpose.msra.mxu0 %v3465
    %3472 = vmatprep.subr.mxu0 0.0
    %3473 = vmatpush1.xpose.msra.mxu0 %v3468
    %3474 = vmatprep.subr.mxu0 0.0
    %3475 = vmatpush1.xpose.msra.mxu0 0.0
    %3476 = vmatprep.subr.mxu0 0.0
    %3477 = vmatpush1.xpose.msra.mxu0 0.0
    %3478 = vmatprep.subr.mxu0 0.0
    %3479 = vmatpush1.xpose.msra.mxu0 0.0
    %3480 = vmatprep.subr.mxu0 0.0
    %3481 = vmatpush1.xpose.msra.mxu0 0.0
    %3482 = vmatprep.subr.mxu0 0.0
    %3483 = vmatpush1.xpose.msra.mxu0 0.0
    %3484 = vmatprep.subr.mxu0 0.0
    %3485 = vmatpush1.xpose.msra.mxu0 0.0
    %3486 = vmatprep.subr.mxu0 0.0
    %3487 = vmatpush1.xpose.msra.mxu0 0.0
    %3488 = vmatprep.subr.mxu0 0.0
    %3489 = vmatpush1.xpose.msra.mxu0 0.0
    %3490 = vmatprep.subr.mxu0 0.0
    %3491 = vmatpush1.xpose.msra.mxu0 0.0
    %3492 = vmatprep.subr.mxu0 0.0
    %3493 = vmatpush1.xpose.msra.mxu0 0.0
    %3494 = vmatprep.subr.mxu0 0.0
    %3495 = vmatpush1.xpose.msra.mxu0 0.0
    %3496 = vmatprep.subr.mxu0 0.0
    %3497 = vmatpush1.xpose.msra.mxu0 0.0
    %3498 = vmatprep.subr.mxu0 0.0
    %3499 = vmatpush1.xpose.msra.mxu0 0.0
    %3500 = vmatprep.subr.mxu0 0.0
    %3501 = vmatpush1.xpose.msra.mxu0 0.0
    %3502 = vmatprep.subr.mxu0 0.0
    %3503 = vmatpush1.xpose.msra.mxu0 0.0
    %3504 = vmatprep.subr.mxu0 0.0
    %3505 = vmatpush1.xpose.msra.mxu0 0.0
    %3506 = vmatprep.subr.mxu0 0.0
    %3507 = vmatpush1.xpose.msra.mxu0 0.0
    %3508 = vmatprep.subr.mxu0 0.0
    %3509 = vmatpush1.xpose.msra.mxu0 0.0
    %3510 = vmatprep.subr.mxu0 0.0
    %3511 = vmatpush1.xpose.msra.mxu0 0.0
    %3512 = vmatprep.subr.mxu0 0.0
    %3513 = vmatpush1.xpose.msra.mxu0 0.0
    %3514 = vmatprep.subr.mxu0 0.0
    %3515 = vmatpush1.xpose.msra.mxu0 0.0
    %3516 = vmatprep.subr.mxu0 0.0
    %3517 = vmatpush1.xpose.msra.mxu0 0.0
    %3518 = vmatprep.subr.mxu0 0.0
    %3519 = vmatpush1.xpose.msra.mxu0 0.0
    %3520 = vmatprep.subr.mxu0 0.0
    %3521 = vmatpush1.xpose.msra.mxu0 0.0
    %3522 = vmatprep.subr.mxu0 0.0
    %3523 = vmatpush1.xpose.msra.mxu0 0.0
    %3524 = vmatprep.subr.mxu0 0.0
    %3525 = vmatpush1.xpose.msra.mxu0 0.0
    %3526 = vmatprep.subr.mxu0 0.0
    %3527 = vmatpush1.xpose.msra.mxu0 0.0
    %3528 = vmatprep.subr.mxu0 0.0
    %3529 = vmatpush1.xpose.msra.mxu0 0.0
    %3530 = vmatprep.subr.mxu0 0.0
    %3531 = vmatpush1.xpose.msra.mxu0 0.0
    %3532 = vmatprep.subr.mxu0 0.0
    %3533 = vmatpush1.xpose.msra.mxu0 0.0
    %3534 = vmatprep.mubr.f32.mxu0 0.0
    %3535 = vmatmul.mubr.f32.gmra.mrb[0].mxu0 %v1949
    %v3536 = vpop.f32.mrb[0].mxu0
    %v3537 = vadd.f32 0.0, %v3536
    %v3538 = vpop.f32.mrb[0].mxu0
    %3539 = vmatprep.mubr.f32.mxu0 0.0
    %3540 = vmatmul.mubr.f32.gmra.mrb[0].mxu0 %v1952
    %v3541 = vpop.f32.mrb[0].mxu0
    %v3542 = vadd.f32 0.0, %v3541
    %v3543 = vpop.f32.mrb[0].mxu0
    %3544 = vdwg.mxu0
    %v3546 = vsel %vm903, %v2486, 0
    %v3549 = vsel %vm903, %v2487, 0
    %3551 = vmatprep.subr.mxu0 0.0
    %3552 = vmatpush1.xpose.msra.mxu0 %v3546
    %3553 = vmatprep.subr.mxu0 0.0
    %3554 = vmatpush1.xpose.msra.mxu0 %v3549
    %3555 = vmatprep.subr.mxu0 0.0
    %3556 = vmatpush1.xpose.msra.mxu0 0.0
    %3557 = vmatprep.subr.mxu0 0.0
    %3558 = vmatpush1.xpose.msra.mxu0 0.0
    %3559 = vmatprep.subr.mxu0 0.0
    %3560 = vmatpush1.xpose.msra.mxu0 0.0
    %3561 = vmatprep.subr.mxu0 0.0
    %3562 = vmatpush1.xpose.msra.mxu0 0.0
    %3563 = vmatprep.subr.mxu0 0.0
    %3564 = vmatpush1.xpose.msra.mxu0 0.0
    %3565 = vmatprep.subr.mxu0 0.0
    %3566 = vmatpush1.xpose.msra.mxu0 0.0
    %3567 = vmatprep.subr.mxu0 0.0
    %3568 = vmatpush1.xpose.msra.mxu0 0.0
    %3569 = vmatprep.subr.mxu0 0.0
    %3570 = vmatpush1.xpose.msra.mxu0 0.0
    %3571 = vmatprep.subr.mxu0 0.0
    %3572 = vmatpush1.xpose.msra.mxu0 0.0
    %3573 = vmatprep.subr.mxu0 0.0
    %3574 = vmatpush1.xpose.msra.mxu0 0.0
    %3575 = vmatprep.subr.mxu0 0.0
    %3576 = vmatpush1.xpose.msra.mxu0 0.0
    %3577 = vmatprep.subr.mxu0 0.0
    %3578 = vmatpush1.xpose.msra.mxu0 0.0
    %3579 = vmatprep.subr.mxu0 0.0
    %3580 = vmatpush1.xpose.msra.mxu0 0.0
    %3581 = vmatprep.subr.mxu0 0.0
    %3582 = vmatpush1.xpose.msra.mxu0 0.0
    %3583 = vmatprep.subr.mxu0 0.0
    %3584 = vmatpush1.xpose.msra.mxu0 0.0
    %3585 = vmatprep.subr.mxu0 0.0
    %3586 = vmatpush1.xpose.msra.mxu0 0.0
    %3587 = vmatprep.subr.mxu0 0.0
    %3588 = vmatpush1.xpose.msra.mxu0 0.0
    %3589 = vmatprep.subr.mxu0 0.0
    %3590 = vmatpush1.xpose.msra.mxu0 0.0
    %3591 = vmatprep.subr.mxu0 0.0
    %3592 = vmatpush1.xpose.msra.mxu0 0.0
    %3593 = vmatprep.subr.mxu0 0.0
    %3594 = vmatpush1.xpose.msra.mxu0 0.0
    %3595 = vmatprep.subr.mxu0 0.0
    %3596 = vmatpush1.xpose.msra.mxu0 0.0
    %3597 = vmatprep.subr.mxu0 0.0
    %3598 = vmatpush1.xpose.msra.mxu0 0.0
    %3599 = vmatprep.subr.mxu0 0.0
    %3600 = vmatpush1.xpose.msra.mxu0 0.0
    %3601 = vmatprep.subr.mxu0 0.0
    %3602 = vmatpush1.xpose.msra.mxu0 0.0
    %3603 = vmatprep.subr.mxu0 0.0
    %3604 = vmatpush1.xpose.msra.mxu0 0.0
    %3605 = vmatprep.subr.mxu0 0.0
    %3606 = vmatpush1.xpose.msra.mxu0 0.0
    %3607 = vmatprep.subr.mxu0 0.0
    %3608 = vmatpush1.xpose.msra.mxu0 0.0
    %3609 = vmatprep.subr.mxu0 0.0
    %3610 = vmatpush1.xpose.msra.mxu0 0.0
    %3611 = vmatprep.subr.mxu0 0.0
    %3612 = vmatpush1.xpose.msra.mxu0 0.0
    %3613 = vmatprep.subr.mxu0 0.0
    %3614 = vmatpush1.xpose.msra.mxu0 0.0
    %3615 = vmatprep.mubr.f32.mxu0 0.0
    %3616 = vmatmul.mubr.f32.gmra.mrb[0].mxu0 %v2036
    %v3617 = vpop.f32.mrb[0].mxu0
    %v3618 = vadd.f32 0.0, %v3617
    %v3619 = vpop.f32.mrb[0].mxu0
    %3620 = vmatprep.mubr.f32.mxu0 0.0
    %3621 = vmatmul.mubr.f32.gmra.mrb[0].mxu0 %v2039
    %v3622 = vpop.f32.mrb[0].mxu0
    %v3623 = vadd.f32 0.0, %v3622
    %v3624 = vpop.f32.mrb[0].mxu0
    %3625 = vdwg.mxu0
    %v3627 = vsel %vm903, %v2488, 0
    %v3630 = vsel %vm903, %v2489, 0
    %3632 = vmatprep.subr.mxu0 0.0
    %3633 = vmatpush1.xpose.msra.mxu0 %v3627
    %3634 = vmatprep.subr.mxu0 0.0
    %3635 = vmatpush1.xpose.msra.mxu0 %v3630
    %3636 = vmatprep.subr.mxu0 0.0
    %3637 = vmatpush1.xpose.msra.mxu0 0.0
    %3638 = vmatprep.subr.mxu0 0.0
    %3639 = vmatpush1.xpose.msra.mxu0 0.0
    %3640 = vmatprep.subr.mxu0 0.0
    %3641 = vmatpush1.xpose.msra.mxu0 0.0
    %3642 = vmatprep.subr.mxu0 0.0
    %3643 = vmatpush1.xpose.msra.mxu0 0.0
    %3644 = vmatprep.subr.mxu0 0.0
    %3645 = vmatpush1.xpose.msra.mxu0 0.0
    %3646 = vmatprep.subr.mxu0 0.0
    %3647 = vmatpush1.xpose.msra.mxu0 0.0
    %3648 = vmatprep.subr.mxu0 0.0
    %3649 = vmatpush1.xpose.msra.mxu0 0.0
    %3650 = vmatprep.subr.mxu0 0.0
    %3651 = vmatpush1.xpose.msra.mxu0 0.0
    %3652 = vmatprep.subr.mxu0 0.0
    %3653 = vmatpush1.xpose.msra.mxu0 0.0
    %3654 = vmatprep.subr.mxu0 0.0
    %3655 = vmatpush1.xpose.msra.mxu0 0.0
    %3656 = vmatprep.subr.mxu0 0.0
    %3657 = vmatpush1.xpose.msra.mxu0 0.0
    %3658 = vmatprep.subr.mxu0 0.0
    %3659 = vmatpush1.xpose.msra.mxu0 0.0
    %3660 = vmatprep.subr.mxu0 0.0
    %3661 = vmatpush1.xpose.msra.mxu0 0.0
    %3662 = vmatprep.subr.mxu0 0.0
    %3663 = vmatpush1.xpose.msra.mxu0 0.0
    %3664 = vmatprep.subr.mxu0 0.0
    %3665 = vmatpush1.xpose.msra.mxu0 0.0
    %3666 = vmatprep.subr.mxu0 0.0
    %3667 = vmatpush1.xpose.msra.mxu0 0.0
    %3668 = vmatprep.subr.mxu0 0.0
    %3669 = vmatpush1.xpose.msra.mxu0 0.0
    %3670 = vmatprep.subr.mxu0 0.0
    %3671 = vmatpush1.xpose.msra.mxu0 0.0
    %3672 = vmatprep.subr.mxu0 0.0
    %3673 = vmatpush1.xpose.msra.mxu0 0.0
    %3674 = vmatprep.subr.mxu0 0.0
    %3675 = vmatpush1.xpose.msra.mxu0 0.0
    %3676 = vmatprep.subr.mxu0 0.0
    %3677 = vmatpush1.xpose.msra.mxu0 0.0
    %3678 = vmatprep.subr.mxu0 0.0
    %3679 = vmatpush1.xpose.msra.mxu0 0.0
    %3680 = vmatprep.subr.mxu0 0.0
    %3681 = vmatpush1.xpose.msra.mxu0 0.0
    %3682 = vmatprep.subr.mxu0 0.0
    %3683 = vmatpush1.xpose.msra.mxu0 0.0
    %3684 = vmatprep.subr.mxu0 0.0
    %3685 = vmatpush1.xpose.msra.mxu0 0.0
    %3686 = vmatprep.subr.mxu0 0.0
    %3687 = vmatpush1.xpose.msra.mxu0 0.0
    %3688 = vmatprep.subr.mxu0 0.0
    %3689 = vmatpush1.xpose.msra.mxu0 0.0
    %3690 = vmatprep.subr.mxu0 0.0
    %3691 = vmatpush1.xpose.msra.mxu0 0.0
    %3692 = vmatprep.subr.mxu0 0.0
    %3693 = vmatpush1.xpose.msra.mxu0 0.0
    %3694 = vmatprep.subr.mxu0 0.0
    %3695 = vmatpush1.xpose.msra.mxu0 0.0
    %3696 = vmatprep.mubr.f32.mxu0 0.0
    %3697 = vmatmul.mubr.f32.gmra.mrb[0].mxu0 %v2123
    %v3698 = vpop.f32.mrb[0].mxu0
    %v3699 = vadd.f32 0.0, %v3698
    %v3700 = vpop.f32.mrb[0].mxu0
    %3701 = vmatprep.mubr.f32.mxu0 0.0
    %3702 = vmatmul.mubr.f32.gmra.mrb[0].mxu0 %v2126
    %v3703 = vpop.f32.mrb[0].mxu0
    %v3704 = vadd.f32 0.0, %v3703
    %v3705 = vpop.f32.mrb[0].mxu0
    %3706 = vdwg.mxu0
    %v3708 = vsel %vm903, %v2490, 0
    %v3711 = vsel %vm903, %v2491, 0
    %3713 = vmatprep.subr.mxu0 0.0
    %3714 = vmatpush1.xpose.msra.mxu0 %v3708
    %3715 = vmatprep.subr.mxu0 0.0
    %3716 = vmatpush1.xpose.msra.mxu0 %v3711
    %3717 = vmatprep.subr.mxu0 0.0
    %3718 = vmatpush1.xpose.msra.mxu0 0.0
    %3719 = vmatprep.subr.mxu0 0.0
    %3720 = vmatpush1.xpose.msra.mxu0 0.0
    %3721 = vmatprep.subr.mxu0 0.0
    %3722 = vmatpush1.xpose.msra.mxu0 0.0
    %3723 = vmatprep.subr.mxu0 0.0
    %3724 = vmatpush1.xpose.msra.mxu0 0.0
    %3725 = vmatprep.subr.mxu0 0.0
    %3726 = vmatpush1.xpose.msra.mxu0 0.0
    %3727 = vmatprep.subr.mxu0 0.0
    %3728 = vmatpush1.xpose.msra.mxu0 0.0
    %3729 = vmatprep.subr.mxu0 0.0
    %3730 = vmatpush1.xpose.msra.mxu0 0.0
    %3731 = vmatprep.subr.mxu0 0.0
    %3732 = vmatpush1.xpose.msra.mxu0 0.0
    %3733 = vmatprep.subr.mxu0 0.0
    %3734 = vmatpush1.xpose.msra.mxu0 0.0
    %3735 = vmatprep.subr.mxu0 0.0
    %3736 = vmatpush1.xpose.msra.mxu0 0.0
    %3737 = vmatprep.subr.mxu0 0.0
    %3738 = vmatpush1.xpose.msra.mxu0 0.0
    %3739 = vmatprep.subr.mxu0 0.0
    %3740 = vmatpush1.xpose.msra.mxu0 0.0
    %3741 = vmatprep.subr.mxu0 0.0
    %3742 = vmatpush1.xpose.msra.mxu0 0.0
    %3743 = vmatprep.subr.mxu0 0.0
    %3744 = vmatpush1.xpose.msra.mxu0 0.0
    %3745 = vmatprep.subr.mxu0 0.0
    %3746 = vmatpush1.xpose.msra.mxu0 0.0
    %3747 = vmatprep.subr.mxu0 0.0
    %3748 = vmatpush1.xpose.msra.mxu0 0.0
    %3749 = vmatprep.subr.mxu0 0.0
    %3750 = vmatpush1.xpose.msra.mxu0 0.0
    %3751 = vmatprep.subr.mxu0 0.0
    %3752 = vmatpush1.xpose.msra.mxu0 0.0
    %3753 = vmatprep.subr.mxu0 0.0
    %3754 = vmatpush1.xpose.msra.mxu0 0.0
    %3755 = vmatprep.subr.mxu0 0.0
    %3756 = vmatpush1.xpose.msra.mxu0 0.0
    %3757 = vmatprep.subr.mxu0 0.0
    %3758 = vmatpush1.xpose.msra.mxu0 0.0
    %3759 = vmatprep.subr.mxu0 0.0
    %3760 = vmatpush1.xpose.msra.mxu0 0.0
    %3761 = vmatprep.subr.mxu0 0.0
    %3762 = vmatpush1.xpose.msra.mxu0 0.0
    %3763 = vmatprep.subr.mxu0 0.0
    %3764 = vmatpush1.xpose.msra.mxu0 0.0
    %3765 = vmatprep.subr.mxu0 0.0
    %3766 = vmatpush1.xpose.msra.mxu0 0.0
    %3767 = vmatprep.subr.mxu0 0.0
    %3768 = vmatpush1.xpose.msra.mxu0 0.0
    %3769 = vmatprep.subr.mxu0 0.0
    %3770 = vmatpush1.xpose.msra.mxu0 0.0
    %3771 = vmatprep.subr.mxu0 0.0
    %3772 = vmatpush1.xpose.msra.mxu0 0.0
    %3773 = vmatprep.subr.mxu0 0.0
    %3774 = vmatpush1.xpose.msra.mxu0 0.0
    %3775 = vmatprep.subr.mxu0 0.0
    %3776 = vmatpush1.xpose.msra.mxu0 0.0
    %3777 = vmatprep.mubr.f32.mxu0 0.0
    %3778 = vmatmul.mubr.f32.gmra.mrb[0].mxu0 %v2210
    %v3779 = vpop.f32.mrb[0].mxu0
    %v3780 = vadd.f32 0.0, %v3779
    %v3781 = vpop.f32.mrb[0].mxu0
    %3782 = vmatprep.mubr.f32.mxu0 0.0
    %3783 = vmatmul.mubr.f32.gmra.mrb[0].mxu0 %v2213
    %v3784 = vpop.f32.mrb[0].mxu0
    %v3785 = vadd.f32 0.0, %v3784
    %v3786 = vpop.f32.mrb[0].mxu0
    %3787 = vdwg.mxu0
    %v3788 = vld [vmem:[%s3 + $0x20] sm:$0xff]
    %v3789 = vld [vmem:[%s3 + $0x28] sm:$0xff]
    %v3790 = vld [vmem:[%s4 + $0x20] sm:$0xff]
    %v3791 = vld [vmem:[%s4 + $0x28] sm:$0xff]
    %v3792 = vmul.f32 %v455, %v3788
    %v3793 = vmul.f32 %v456, %v3789
    %v3794 = vmul.f32 %v457, %v3788
    %v3795 = vmul.f32 %v458, %v3789
    %v3796 = vmul.f32 %v459, %v3788
    %v3797 = vmul.f32 %v460, %v3789
    %v3798 = vmul.f32 %v461, %v3788
    %v3799 = vmul.f32 %v462, %v3789
    %v3800 = vmul.f32 %v467, %v3788
    %v3801 = vmul.f32 %v468, %v3789
    %v3802 = vmul.f32 %v469, %v3788
    %v3803 = vmul.f32 %v470, %v3789
    %v3804 = vmul.f32 %v471, %v3788
    %v3805 = vmul.f32 %v472, %v3789
    %v3806 = vmul.f32 %v473, %v3788
    %v3807 = vmul.f32 %v474, %v3789
    %v3808 = vmul.f32 %v479, %v3788
    %v3809 = vmul.f32 %v480, %v3789
    %v3810 = vmul.f32 %v481, %v3788
    %v3811 = vmul.f32 %v482, %v3789
    %v3812 = vmul.f32 %v483, %v3788
    %v3813 = vmul.f32 %v484, %v3789
    %v3814 = vmul.f32 %v485, %v3788
    %v3815 = vmul.f32 %v486, %v3789
    %v3816 = vmul.f32 %v491, %v3788
    %v3817 = vmul.f32 %v492, %v3789
    %v3818 = vmul.f32 %v493, %v3788
    %v3819 = vmul.f32 %v494, %v3789
    %v3820 = vmul.f32 %v495, %v3788
    %v3821 = vmul.f32 %v496, %v3789
    %v3822 = vmul.f32 %v497, %v3788
    %v3823 = vmul.f32 %v498, %v3789
    %3832 = vrot.lane.b32.xlu0 %v461, 112
    %v3833 = vpop.permute.xlu0 %3832
    %3834 = vrot.lane.b32.xlu0 %v462, 112
    %v3835 = vpop.permute.xlu0 %3834
    %3836 = vrot.lane.b32.xlu0 %v473, 112
    %v3837 = vpop.permute.xlu0 %3836
    %3838 = vrot.lane.b32.xlu0 %v474, 112
    %v3839 = vpop.permute.xlu0 %3838
    %3840 = vrot.lane.b32.xlu0 %v485, 112
    %v3841 = vpop.permute.xlu0 %3840
    %3842 = vrot.lane.b32.xlu0 %v486, 112
    %v3843 = vpop.permute.xlu0 %3842
    %3844 = vrot.lane.b32.xlu0 %v497, 112
    %v3845 = vpop.permute.xlu0 %3844
    %3846 = vrot.lane.b32.xlu0 %v498, 112
    %v3847 = vpop.permute.xlu0 %3846
    %3856 = vrot.lane.b32.xlu0 %v461, 16
    %v3857 = vpop.permute.xlu0 %3856
    %3858 = vrot.lane.b32.xlu0 %v462, 16
    %v3859 = vpop.permute.xlu0 %3858
    %3860 = vrot.lane.b32.xlu0 %v473, 16
    %v3861 = vpop.permute.xlu0 %3860
    %3862 = vrot.lane.b32.xlu0 %v474, 16
    %v3863 = vpop.permute.xlu0 %3862
    %3864 = vrot.lane.b32.xlu0 %v485, 16
    %v3865 = vpop.permute.xlu0 %3864
    %3866 = vrot.lane.b32.xlu0 %v486, 16
    %v3867 = vpop.permute.xlu0 %3866
    %3868 = vrot.lane.b32.xlu0 %v497, 16
    %v3869 = vpop.permute.xlu0 %3868
    %3870 = vrot.lane.b32.xlu0 %v498, 16
    %v3871 = vpop.permute.xlu0 %3870
    %v3880 = vsel %vm354, %v3833, %v3857
    %v3881 = vsel %vm354, %v3835, %v3859
    %v3882 = vsel %vm354, %v3837, %v3861
    %v3883 = vsel %vm354, %v3839, %v3863
    %v3884 = vsel %vm354, %v3841, %v3865
    %v3885 = vsel %vm354, %v3843, %v3867
    %v3886 = vsel %vm354, %v3845, %v3869
    %v3887 = vsel %vm354, %v3847, %v3871
    %v3888 = vmul.f32 %v811, %v3790
    %v3889 = vmul.f32 %v812, %v3791
    %v3890 = vmul.f32 %v813, %v3790
    %v3891 = vmul.f32 %v814, %v3791
    %v3892 = vmul.f32 %v2420, %v3790
    %v3893 = vmul.f32 %v2421, %v3791
    %v3894 = vmul.f32 %v3880, %v3790
    %v3895 = vmul.f32 %v3881, %v3791
    %v3896 = vmul.f32 %v819, %v3790
    %v3897 = vmul.f32 %v820, %v3791
    %v3898 = vmul.f32 %v821, %v3790
    %v3899 = vmul.f32 %v822, %v3791
    %v3900 = vmul.f32 %v2422, %v3790
    %v3901 = vmul.f32 %v2423, %v3791
    %v3902 = vmul.f32 %v3882, %v3790
    %v3903 = vmul.f32 %v3883, %v3791
    %v3904 = vmul.f32 %v827, %v3790
    %v3905 = vmul.f32 %v828, %v3791
    %v3906 = vmul.f32 %v829, %v3790
    %v3907 = vmul.f32 %v830, %v3791
    %v3908 = vmul.f32 %v2424, %v3790
    %v3909 = vmul.f32 %v2425, %v3791
    %v3910 = vmul.f32 %v3884, %v3790
    %v3911 = vmul.f32 %v3885, %v3791
    %v3912 = vmul.f32 %v835, %v3790
    %v3913 = vmul.f32 %v836, %v3791
    %v3914 = vmul.f32 %v837, %v3790
    %v3915 = vmul.f32 %v838, %v3791
    %v3916 = vmul.f32 %v2426, %v3790
    %v3917 = vmul.f32 %v2427, %v3791
    %v3918 = vmul.f32 %v3886, %v3790
    %v3919 = vmul.f32 %v3887, %v3791
    %v3920 = vadd.f32 %v3792, %v3888
    %v3921 = vadd.f32 %v3793, %v3889
    %v3922 = vadd.f32 %v3794, %v3890
    %v3923 = vadd.f32 %v3795, %v3891
    %v3924 = vadd.f32 %v3796, %v3892
    %v3925 = vadd.f32 %v3797, %v3893
    %v3926 = vadd.f32 %v3798, %v3894
    %v3927 = vadd.f32 %v3799, %v3895
    %v3928 = vadd.f32 %v3800, %v3896
    %v3929 = vadd.f32 %v3801, %v3897
    %v3930 = vadd.f32 %v3802, %v3898
    %v3931 = vadd.f32 %v3803, %v3899
    %v3932 = vadd.f32 %v3804, %v3900
    %v3933 = vadd.f32 %v3805, %v3901
    %v3934 = vadd.f32 %v3806, %v3902
    %v3935 = vadd.f32 %v3807, %v3903
    %v3936 = vadd.f32 %v3808, %v3904
    %v3937 = vadd.f32 %v3809, %v3905
    %v3938 = vadd.f32 %v3810, %v3906
    %v3939 = vadd.f32 %v3811, %v3907
    %v3940 = vadd.f32 %v3812, %v3908
    %v3941 = vadd.f32 %v3813, %v3909
    %v3942 = vadd.f32 %v3814, %v3910
    %v3943 = vadd.f32 %v3815, %v3911
    %v3944 = vadd.f32 %v3816, %v3912
    %v3945 = vadd.f32 %v3817, %v3913
    %v3946 = vadd.f32 %v3818, %v3914
    %v3947 = vadd.f32 %v3819, %v3915
    %v3948 = vadd.f32 %v3820, %v3916
    %v3949 = vadd.f32 %v3821, %v3917
    %v3950 = vadd.f32 %v3822, %v3918
    %v3951 = vadd.f32 %v3823, %v3919
    %v3953 = vsel %vm903, %v3920, 0
    %v3956 = vsel %vm903, %v3921, 0
    %3958 = vmatprep.subr.mxu0 0.0
    %3959 = vmatpush1.xpose.msra.mxu0 %v3953
    %3960 = vmatprep.subr.mxu0 0.0
    %3961 = vmatpush1.xpose.msra.mxu0 %v3956
    %3962 = vmatprep.subr.mxu0 0.0
    %3963 = vmatpush1.xpose.msra.mxu0 0.0
    %3964 = vmatprep.subr.mxu0 0.0
    %3965 = vmatpush1.xpose.msra.mxu0 0.0
    %3966 = vmatprep.subr.mxu0 0.0
    %3967 = vmatpush1.xpose.msra.mxu0 0.0
    %3968 = vmatprep.subr.mxu0 0.0
    %3969 = vmatpush1.xpose.msra.mxu0 0.0
    %3970 = vmatprep.subr.mxu0 0.0
    %3971 = vmatpush1.xpose.msra.mxu0 0.0
    %3972 = vmatprep.subr.mxu0 0.0
    %3973 = vmatpush1.xpose.msra.mxu0 0.0
    %3974 = vmatprep.subr.mxu0 0.0
    %3975 = vmatpush1.xpose.msra.mxu0 0.0
    %3976 = vmatprep.subr.mxu0 0.0
    %3977 = vmatpush1.xpose.msra.mxu0 0.0
    %3978 = vmatprep.subr.mxu0 0.0
    %3979 = vmatpush1.xpose.msra.mxu0 0.0
    %3980 = vmatprep.subr.mxu0 0.0
    %3981 = vmatpush1.xpose.msra.mxu0 0.0
    %3982 = vmatprep.subr.mxu0 0.0
    %3983 = vmatpush1.xpose.msra.mxu0 0.0
    %3984 = vmatprep.subr.mxu0 0.0
    %3985 = vmatpush1.xpose.msra.mxu0 0.0
    %3986 = vmatprep.subr.mxu0 0.0
    %3987 = vmatpush1.xpose.msra.mxu0 0.0
    %3988 = vmatprep.subr.mxu0 0.0
    %3989 = vmatpush1.xpose.msra.mxu0 0.0
    %3990 = vmatprep.subr.mxu0 0.0
    %3991 = vmatpush1.xpose.msra.mxu0 0.0
    %3992 = vmatprep.subr.mxu0 0.0
    %3993 = vmatpush1.xpose.msra.mxu0 0.0
    %3994 = vmatprep.subr.mxu0 0.0
    %3995 = vmatpush1.xpose.msra.mxu0 0.0
    %3996 = vmatprep.subr.mxu0 0.0
    %3997 = vmatpush1.xpose.msra.mxu0 0.0
    %3998 = vmatprep.subr.mxu0 0.0
    %3999 = vmatpush1.xpose.msra.mxu0 0.0
    %4000 = vmatprep.subr.mxu0 0.0
    %4001 = vmatpush1.xpose.msra.mxu0 0.0
    %4002 = vmatprep.subr.mxu0 0.0
    %4003 = vmatpush1.xpose.msra.mxu0 0.0
    %4004 = vmatprep.subr.mxu0 0.0
    %4005 = vmatpush1.xpose.msra.mxu0 0.0
    %4006 = vmatprep.subr.mxu0 0.0
    %4007 = vmatpush1.xpose.msra.mxu0 0.0
    %4008 = vmatprep.subr.mxu0 0.0
    %4009 = vmatpush1.xpose.msra.mxu0 0.0
    %4010 = vmatprep.subr.mxu0 0.0
    %4011 = vmatpush1.xpose.msra.mxu0 0.0
    %4012 = vmatprep.subr.mxu0 0.0
    %4013 = vmatpush1.xpose.msra.mxu0 0.0
    %4014 = vmatprep.subr.mxu0 0.0
    %4015 = vmatpush1.xpose.msra.mxu0 0.0
    %4016 = vmatprep.subr.mxu0 0.0
    %4017 = vmatpush1.xpose.msra.mxu0 0.0
    %4018 = vmatprep.subr.mxu0 0.0
    %4019 = vmatpush1.xpose.msra.mxu0 0.0
    %4020 = vmatprep.subr.mxu0 0.0
    %4021 = vmatpush1.xpose.msra.mxu0 0.0
    %4022 = vmatprep.mubr.f32.mxu0 0.0
    %4023 = vmatmul.mubr.f32.gmra.mrb[0].mxu0 %v905
    %v4024 = vpop.f32.mrb[0].mxu0
    %v4025 = vadd.f32 0.0, %v4024
    %v4026 = vpop.f32.mrb[0].mxu0
    %4027 = vmatprep.mubr.f32.mxu0 0.0
    %4028 = vmatmul.mubr.f32.gmra.mrb[0].mxu0 %v908
    %v4029 = vpop.f32.mrb[0].mxu0
    %v4030 = vadd.f32 0.0, %v4029
    %v4031 = vpop.f32.mrb[0].mxu0
    %4032 = vdwg.mxu0
    %v4034 = vsel %vm903, %v3922, 0
    %v4037 = vsel %vm903, %v3923, 0
    %4039 = vmatprep.subr.mxu0 0.0
    %4040 = vmatpush1.xpose.msra.mxu0 %v4034
    %4041 = vmatprep.subr.mxu0 0.0
    %4042 = vmatpush1.xpose.msra.mxu0 %v4037
    %4043 = vmatprep.subr.mxu0 0.0
    %4044 = vmatpush1.xpose.msra.mxu0 0.0
    %4045 = vmatprep.subr.mxu0 0.0
    %4046 = vmatpush1.xpose.msra.mxu0 0.0
    %4047 = vmatprep.subr.mxu0 0.0
    %4048 = vmatpush1.xpose.msra.mxu0 0.0
    %4049 = vmatprep.subr.mxu0 0.0
    %4050 = vmatpush1.xpose.msra.mxu0 0.0
    %4051 = vmatprep.subr.mxu0 0.0
    %4052 = vmatpush1.xpose.msra.mxu0 0.0
    %4053 = vmatprep.subr.mxu0 0.0
    %4054 = vmatpush1.xpose.msra.mxu0 0.0
    %4055 = vmatprep.subr.mxu0 0.0
    %4056 = vmatpush1.xpose.msra.mxu0 0.0
    %4057 = vmatprep.subr.mxu0 0.0
    %4058 = vmatpush1.xpose.msra.mxu0 0.0
    %4059 = vmatprep.subr.mxu0 0.0
    %4060 = vmatpush1.xpose.msra.mxu0 0.0
    %4061 = vmatprep.subr.mxu0 0.0
    %4062 = vmatpush1.xpose.msra.mxu0 0.0
    %4063 = vmatprep.subr.mxu0 0.0
    %4064 = vmatpush1.xpose.msra.mxu0 0.0
    %4065 = vmatprep.subr.mxu0 0.0
    %4066 = vmatpush1.xpose.msra.mxu0 0.0
    %4067 = vmatprep.subr.mxu0 0.0
    %4068 = vmatpush1.xpose.msra.mxu0 0.0
    %4069 = vmatprep.subr.mxu0 0.0
    %4070 = vmatpush1.xpose.msra.mxu0 0.0
    %4071 = vmatprep.subr.mxu0 0.0
    %4072 = vmatpush1.xpose.msra.mxu0 0.0
    %4073 = vmatprep.subr.mxu0 0.0
    %4074 = vmatpush1.xpose.msra.mxu0 0.0
    %4075 = vmatprep.subr.mxu0 0.0
    %4076 = vmatpush1.xpose.msra.mxu0 0.0
    %4077 = vmatprep.subr.mxu0 0.0
    %4078 = vmatpush1.xpose.msra.mxu0 0.0
    %4079 = vmatprep.subr.mxu0 0.0
    %4080 = vmatpush1.xpose.msra.mxu0 0.0
    %4081 = vmatprep.subr.mxu0 0.0
    %4082 = vmatpush1.xpose.msra.mxu0 0.0
    %4083 = vmatprep.subr.mxu0 0.0
    %4084 = vmatpush1.xpose.msra.mxu0 0.0
    %4085 = vmatprep.subr.mxu0 0.0
    %4086 = vmatpush1.xpose.msra.mxu0 0.0
    %4087 = vmatprep.subr.mxu0 0.0
    %4088 = vmatpush1.xpose.msra.mxu0 0.0
    %4089 = vmatprep.subr.mxu0 0.0
    %4090 = vmatpush1.xpose.msra.mxu0 0.0
    %4091 = vmatprep.subr.mxu0 0.0
    %4092 = vmatpush1.xpose.msra.mxu0 0.0
    %4093 = vmatprep.subr.mxu0 0.0
    %4094 = vmatpush1.xpose.msra.mxu0 0.0
    %4095 = vmatprep.subr.mxu0 0.0
    %4096 = vmatpush1.xpose.msra.mxu0 0.0
    %4097 = vmatprep.subr.mxu0 0.0
    %4098 = vmatpush1.xpose.msra.mxu0 0.0
    %4099 = vmatprep.subr.mxu0 0.0
    %4100 = vmatpush1.xpose.msra.mxu0 0.0
    %4101 = vmatprep.subr.mxu0 0.0
    %4102 = vmatpush1.xpose.msra.mxu0 0.0
    %4103 = vmatprep.mubr.f32.mxu0 0.0
    %4104 = vmatmul.mubr.f32.gmra.mrb[0].mxu0 %v992
    %v4105 = vpop.f32.mrb[0].mxu0
    %v4106 = vadd.f32 0.0, %v4105
    %v4107 = vpop.f32.mrb[0].mxu0
    %4108 = vmatprep.mubr.f32.mxu0 0.0
    %4109 = vmatmul.mubr.f32.gmra.mrb[0].mxu0 %v995
    %v4110 = vpop.f32.mrb[0].mxu0
    %v4111 = vadd.f32 0.0, %v4110
    %v4112 = vpop.f32.mrb[0].mxu0
    %4113 = vdwg.mxu0
    %v4115 = vsel %vm903, %v3924, 0
    %v4118 = vsel %vm903, %v3925, 0
    %4120 = vmatprep.subr.mxu0 0.0
    %4121 = vmatpush1.xpose.msra.mxu0 %v4115
    %4122 = vmatprep.subr.mxu0 0.0
    %4123 = vmatpush1.xpose.msra.mxu0 %v4118
    %4124 = vmatprep.subr.mxu0 0.0
    %4125 = vmatpush1.xpose.msra.mxu0 0.0
    %4126 = vmatprep.subr.mxu0 0.0
    %4127 = vmatpush1.xpose.msra.mxu0 0.0
    %4128 = vmatprep.subr.mxu0 0.0
    %4129 = vmatpush1.xpose.msra.mxu0 0.0
    %4130 = vmatprep.subr.mxu0 0.0
    %4131 = vmatpush1.xpose.msra.mxu0 0.0
    %4132 = vmatprep.subr.mxu0 0.0
    %4133 = vmatpush1.xpose.msra.mxu0 0.0
    %4134 = vmatprep.subr.mxu0 0.0
    %4135 = vmatpush1.xpose.msra.mxu0 0.0
    %4136 = vmatprep.subr.mxu0 0.0
    %4137 = vmatpush1.xpose.msra.mxu0 0.0
    %4138 = vmatprep.subr.mxu0 0.0
    %4139 = vmatpush1.xpose.msra.mxu0 0.0
    %4140 = vmatprep.subr.mxu0 0.0
    %4141 = vmatpush1.xpose.msra.mxu0 0.0
    %4142 = vmatprep.subr.mxu0 0.0
    %4143 = vmatpush1.xpose.msra.mxu0 0.0
    %4144 = vmatprep.subr.mxu0 0.0
    %4145 = vmatpush1.xpose.msra.mxu0 0.0
    %4146 = vmatprep.subr.mxu0 0.0
    %4147 = vmatpush1.xpose.msra.mxu0 0.0
    %4148 = vmatprep.subr.mxu0 0.0
    %4149 = vmatpush1.xpose.msra.mxu0 0.0
    %4150 = vmatprep.subr.mxu0 0.0
    %4151 = vmatpush1.xpose.msra.mxu0 0.0
    %4152 = vmatprep.subr.mxu0 0.0
    %4153 = vmatpush1.xpose.msra.mxu0 0.0
    %4154 = vmatprep.subr.mxu0 0.0
    %4155 = vmatpush1.xpose.msra.mxu0 0.0
    %4156 = vmatprep.subr.mxu0 0.0
    %4157 = vmatpush1.xpose.msra.mxu0 0.0
    %4158 = vmatprep.subr.mxu0 0.0
    %4159 = vmatpush1.xpose.msra.mxu0 0.0
    %4160 = vmatprep.subr.mxu0 0.0
    %4161 = vmatpush1.xpose.msra.mxu0 0.0
    %4162 = vmatprep.subr.mxu0 0.0
    %4163 = vmatpush1.xpose.msra.mxu0 0.0
    %4164 = vmatprep.subr.mxu0 0.0
    %4165 = vmatpush1.xpose.msra.mxu0 0.0
    %4166 = vmatprep.subr.mxu0 0.0
    %4167 = vmatpush1.xpose.msra.mxu0 0.0
    %4168 = vmatprep.subr.mxu0 0.0
    %4169 = vmatpush1.xpose.msra.mxu0 0.0
    %4170 = vmatprep.subr.mxu0 0.0
    %4171 = vmatpush1.xpose.msra.mxu0 0.0
    %4172 = vmatprep.subr.mxu0 0.0
    %4173 = vmatpush1.xpose.msra.mxu0 0.0
    %4174 = vmatprep.subr.mxu0 0.0
    %4175 = vmatpush1.xpose.msra.mxu0 0.0
    %4176 = vmatprep.subr.mxu0 0.0
    %4177 = vmatpush1.xpose.msra.mxu0 0.0
    %4178 = vmatprep.subr.mxu0 0.0
    %4179 = vmatpush1.xpose.msra.mxu0 0.0
    %4180 = vmatprep.subr.mxu0 0.0
    %4181 = vmatpush1.xpose.msra.mxu0 0.0
    %4182 = vmatprep.subr.mxu0 0.0
    %4183 = vmatpush1.xpose.msra.mxu0 0.0
    %4184 = vmatprep.mubr.f32.mxu0 0.0
    %4185 = vmatmul.mubr.f32.gmra.mrb[0].mxu0 %v1079
    %v4186 = vpop.f32.mrb[0].mxu0
    %v4187 = vadd.f32 0.0, %v4186
    %v4188 = vpop.f32.mrb[0].mxu0
    %4189 = vmatprep.mubr.f32.mxu0 0.0
    %4190 = vmatmul.mubr.f32.gmra.mrb[0].mxu0 %v1082
    %v4191 = vpop.f32.mrb[0].mxu0
    %v4192 = vadd.f32 0.0, %v4191
    %v4193 = vpop.f32.mrb[0].mxu0
    %4194 = vdwg.mxu0
    %v4196 = vsel %vm903, %v3926, 0
    %v4199 = vsel %vm903, %v3927, 0
    %4201 = vmatprep.subr.mxu0 0.0
    %4202 = vmatpush1.xpose.msra.mxu0 %v4196
    %4203 = vmatprep.subr.mxu0 0.0
    %4204 = vmatpush1.xpose.msra.mxu0 %v4199
    %4205 = vmatprep.subr.mxu0 0.0
    %4206 = vmatpush1.xpose.msra.mxu0 0.0
    %4207 = vmatprep.subr.mxu0 0.0
    %4208 = vmatpush1.xpose.msra.mxu0 0.0
    %4209 = vmatprep.subr.mxu0 0.0
    %4210 = vmatpush1.xpose.msra.mxu0 0.0
    %4211 = vmatprep.subr.mxu0 0.0
    %4212 = vmatpush1.xpose.msra.mxu0 0.0
    %4213 = vmatprep.subr.mxu0 0.0
    %4214 = vmatpush1.xpose.msra.mxu0 0.0
    %4215 = vmatprep.subr.mxu0 0.0
    %4216 = vmatpush1.xpose.msra.mxu0 0.0
    %4217 = vmatprep.subr.mxu0 0.0
    %4218 = vmatpush1.xpose.msra.mxu0 0.0
    %4219 = vmatprep.subr.mxu0 0.0
    %4220 = vmatpush1.xpose.msra.mxu0 0.0
    %4221 = vmatprep.subr.mxu0 0.0
    %4222 = vmatpush1.xpose.msra.mxu0 0.0
    %4223 = vmatprep.subr.mxu0 0.0
    %4224 = vmatpush1.xpose.msra.mxu0 0.0
    %4225 = vmatprep.subr.mxu0 0.0
    %4226 = vmatpush1.xpose.msra.mxu0 0.0
    %4227 = vmatprep.subr.mxu0 0.0
    %4228 = vmatpush1.xpose.msra.mxu0 0.0
    %4229 = vmatprep.subr.mxu0 0.0
    %4230 = vmatpush1.xpose.msra.mxu0 0.0
    %4231 = vmatprep.subr.mxu0 0.0
    %4232 = vmatpush1.xpose.msra.mxu0 0.0
    %4233 = vmatprep.subr.mxu0 0.0
    %4234 = vmatpush1.xpose.msra.mxu0 0.0
    %4235 = vmatprep.subr.mxu0 0.0
    %4236 = vmatpush1.xpose.msra.mxu0 0.0
    %4237 = vmatprep.subr.mxu0 0.0
    %4238 = vmatpush1.xpose.msra.mxu0 0.0
    %4239 = vmatprep.subr.mxu0 0.0
    %4240 = vmatpush1.xpose.msra.mxu0 0.0
    %4241 = vmatprep.subr.mxu0 0.0
    %4242 = vmatpush1.xpose.msra.mxu0 0.0
    %4243 = vmatprep.subr.mxu0 0.0
    %4244 = vmatpush1.xpose.msra.mxu0 0.0
    %4245 = vmatprep.subr.mxu0 0.0
    %4246 = vmatpush1.xpose.msra.mxu0 0.0
    %4247 = vmatprep.subr.mxu0 0.0
    %4248 = vmatpush1.xpose.msra.mxu0 0.0
    %4249 = vmatprep.subr.mxu0 0.0
    %4250 = vmatpush1.xpose.msra.mxu0 0.0
    %4251 = vmatprep.subr.mxu0 0.0
    %4252 = vmatpush1.xpose.msra.mxu0 0.0
    %4253 = vmatprep.subr.mxu0 0.0
    %4254 = vmatpush1.xpose.msra.mxu0 0.0
    %4255 = vmatprep.subr.mxu0 0.0
    %4256 = vmatpush1.xpose.msra.mxu0 0.0
    %4257 = vmatprep.subr.mxu0 0.0
    %4258 = vmatpush1.xpose.msra.mxu0 0.0
    %4259 = vmatprep.subr.mxu0 0.0
    %4260 = vmatpush1.xpose.msra.mxu0 0.0
    %4261 = vmatprep.subr.mxu0 0.0
    %4262 = vmatpush1.xpose.msra.mxu0 0.0
    %4263 = vmatprep.subr.mxu0 0.0
    %4264 = vmatpush1.xpose.msra.mxu0 0.0
    %4265 = vmatprep.mubr.f32.mxu0 0.0
    %4266 = vmatmul.mubr.f32.gmra.mrb[0].mxu0 %v1166
    %v4267 = vpop.f32.mrb[0].mxu0
    %v4268 = vadd.f32 0.0, %v4267
    %v4269 = vpop.f32.mrb[0].mxu0
    %4270 = vmatprep.mubr.f32.mxu0 0.0
    %4271 = vmatmul.mubr.f32.gmra.mrb[0].mxu0 %v1169
    %v4272 = vpop.f32.mrb[0].mxu0
    %v4273 = vadd.f32 0.0, %v4272
    %v4274 = vpop.f32.mrb[0].mxu0
    %4275 = vdwg.mxu0
    %v4277 = vsel %vm903, %v3928, 0
    %v4280 = vsel %vm903, %v3929, 0
    %4282 = vmatprep.subr.mxu0 0.0
    %4283 = vmatpush1.xpose.msra.mxu0 %v4277
    %4284 = vmatprep.subr.mxu0 0.0
    %4285 = vmatpush1.xpose.msra.mxu0 %v4280
    %4286 = vmatprep.subr.mxu0 0.0
    %4287 = vmatpush1.xpose.msra.mxu0 0.0
    %4288 = vmatprep.subr.mxu0 0.0
    %4289 = vmatpush1.xpose.msra.mxu0 0.0
    %4290 = vmatprep.subr.mxu0 0.0
    %4291 = vmatpush1.xpose.msra.mxu0 0.0
    %4292 = vmatprep.subr.mxu0 0.0
    %4293 = vmatpush1.xpose.msra.mxu0 0.0
    %4294 = vmatprep.subr.mxu0 0.0
    %4295 = vmatpush1.xpose.msra.mxu0 0.0
    %4296 = vmatprep.subr.mxu0 0.0
    %4297 = vmatpush1.xpose.msra.mxu0 0.0
    %4298 = vmatprep.subr.mxu0 0.0
    %4299 = vmatpush1.xpose.msra.mxu0 0.0
    %4300 = vmatprep.subr.mxu0 0.0
    %4301 = vmatpush1.xpose.msra.mxu0 0.0
    %4302 = vmatprep.subr.mxu0 0.0
    %4303 = vmatpush1.xpose.msra.mxu0 0.0
    %4304 = vmatprep.subr.mxu0 0.0
    %4305 = vmatpush1.xpose.msra.mxu0 0.0
    %4306 = vmatprep.subr.mxu0 0.0
    %4307 = vmatpush1.xpose.msra.mxu0 0.0
    %4308 = vmatprep.subr.mxu0 0.0
    %4309 = vmatpush1.xpose.msra.mxu0 0.0
    %4310 = vmatprep.subr.mxu0 0.0
    %4311 = vmatpush1.xpose.msra.mxu0 0.0
    %4312 = vmatprep.subr.mxu0 0.0
    %4313 = vmatpush1.xpose.msra.mxu0 0.0
    %4314 = vmatprep.subr.mxu0 0.0
    %4315 = vmatpush1.xpose.msra.mxu0 0.0
    %4316 = vmatprep.subr.mxu0 0.0
    %4317 = vmatpush1.xpose.msra.mxu0 0.0
    %4318 = vmatprep.subr.mxu0 0.0
    %4319 = vmatpush1.xpose.msra.mxu0 0.0
    %4320 = vmatprep.subr.mxu0 0.0
    %4321 = vmatpush1.xpose.msra.mxu0 0.0
    %4322 = vmatprep.subr.mxu0 0.0
    %4323 = vmatpush1.xpose.msra.mxu0 0.0
    %4324 = vmatprep.subr.mxu0 0.0
    %4325 = vmatpush1.xpose.msra.mxu0 0.0
    %4326 = vmatprep.subr.mxu0 0.0
    %4327 = vmatpush1.xpose.msra.mxu0 0.0
    %4328 = vmatprep.subr.mxu0 0.0
    %4329 = vmatpush1.xpose.msra.mxu0 0.0
    %4330 = vmatprep.subr.mxu0 0.0
    %4331 = vmatpush1.xpose.msra.mxu0 0.0
    %4332 = vmatprep.subr.mxu0 0.0
    %4333 = vmatpush1.xpose.msra.mxu0 0.0
    %4334 = vmatprep.subr.mxu0 0.0
    %4335 = vmatpush1.xpose.msra.mxu0 0.0
    %4336 = vmatprep.subr.mxu0 0.0
    %4337 = vmatpush1.xpose.msra.mxu0 0.0
    %4338 = vmatprep.subr.mxu0 0.0
    %4339 = vmatpush1.xpose.msra.mxu0 0.0
    %4340 = vmatprep.subr.mxu0 0.0
    %4341 = vmatpush1.xpose.msra.mxu0 0.0
    %4342 = vmatprep.subr.mxu0 0.0
    %4343 = vmatpush1.xpose.msra.mxu0 0.0
    %4344 = vmatprep.subr.mxu0 0.0
    %4345 = vmatpush1.xpose.msra.mxu0 0.0
    %4346 = vmatprep.mubr.f32.mxu0 0.0
    %4347 = vmatmul.mubr.f32.gmra.mrb[0].mxu0 %v1253
    %v4348 = vpop.f32.mrb[0].mxu0
    %v4349 = vadd.f32 0.0, %v4348
    %v4350 = vpop.f32.mrb[0].mxu0
    %4351 = vmatprep.mubr.f32.mxu0 0.0
    %4352 = vmatmul.mubr.f32.gmra.mrb[0].mxu0 %v1256
    %v4353 = vpop.f32.mrb[0].mxu0
    %v4354 = vadd.f32 0.0, %v4353
    %v4355 = vpop.f32.mrb[0].mxu0
    %4356 = vdwg.mxu0
    %v4358 = vsel %vm903, %v3930, 0
    %v4361 = vsel %vm903, %v3931, 0
    %4363 = vmatprep.subr.mxu0 0.0
    %4364 = vmatpush1.xpose.msra.mxu0 %v4358
    %4365 = vmatprep.subr.mxu0 0.0
    %4366 = vmatpush1.xpose.msra.mxu0 %v4361
    %4367 = vmatprep.subr.mxu0 0.0
    %4368 = vmatpush1.xpose.msra.mxu0 0.0
    %4369 = vmatprep.subr.mxu0 0.0
    %4370 = vmatpush1.xpose.msra.mxu0 0.0
    %4371 = vmatprep.subr.mxu0 0.0
    %4372 = vmatpush1.xpose.msra.mxu0 0.0
    %4373 = vmatprep.subr.mxu0 0.0
    %4374 = vmatpush1.xpose.msra.mxu0 0.0
    %4375 = vmatprep.subr.mxu0 0.0
    %4376 = vmatpush1.xpose.msra.mxu0 0.0
    %4377 = vmatprep.subr.mxu0 0.0
    %4378 = vmatpush1.xpose.msra.mxu0 0.0
    %4379 = vmatprep.subr.mxu0 0.0
    %4380 = vmatpush1.xpose.msra.mxu0 0.0
    %4381 = vmatprep.subr.mxu0 0.0
    %4382 = vmatpush1.xpose.msra.mxu0 0.0
    %4383 = vmatprep.subr.mxu0 0.0
    %4384 = vmatpush1.xpose.msra.mxu0 0.0
    %4385 = vmatprep.subr.mxu0 0.0
    %4386 = vmatpush1.xpose.msra.mxu0 0.0
    %4387 = vmatprep.subr.mxu0 0.0
    %4388 = vmatpush1.xpose.msra.mxu0 0.0
    %4389 = vmatprep.subr.mxu0 0.0
    %4390 = vmatpush1.xpose.msra.mxu0 0.0
    %4391 = vmatprep.subr.mxu0 0.0
    %4392 = vmatpush1.xpose.msra.mxu0 0.0
    %4393 = vmatprep.subr.mxu0 0.0
    %4394 = vmatpush1.xpose.msra.mxu0 0.0
    %4395 = vmatprep.subr.mxu0 0.0
    %4396 = vmatpush1.xpose.msra.mxu0 0.0
    %4397 = vmatprep.subr.mxu0 0.0
    %4398 = vmatpush1.xpose.msra.mxu0 0.0
    %4399 = vmatprep.subr.mxu0 0.0
    %4400 = vmatpush1.xpose.msra.mxu0 0.0
    %4401 = vmatprep.subr.mxu0 0.0
    %4402 = vmatpush1.xpose.msra.mxu0 0.0
    %4403 = vmatprep.subr.mxu0 0.0
    %4404 = vmatpush1.xpose.msra.mxu0 0.0
    %4405 = vmatprep.subr.mxu0 0.0
    %4406 = vmatpush1.xpose.msra.mxu0 0.0
    %4407 = vmatprep.subr.mxu0 0.0
    %4408 = vmatpush1.xpose.msra.mxu0 0.0
    %4409 = vmatprep.subr.mxu0 0.0
    %4410 = vmatpush1.xpose.msra.mxu0 0.0
    %4411 = vmatprep.subr.mxu0 0.0
    %4412 = vmatpush1.xpose.msra.mxu0 0.0
    %4413 = vmatprep.subr.mxu0 0.0
    %4414 = vmatpush1.xpose.msra.mxu0 0.0
    %4415 = vmatprep.subr.mxu0 0.0
    %4416 = vmatpush1.xpose.msra.mxu0 0.0
    %4417 = vmatprep.subr.mxu0 0.0
    %4418 = vmatpush1.xpose.msra.mxu0 0.0
    %4419 = vmatprep.subr.mxu0 0.0
    %4420 = vmatpush1.xpose.msra.mxu0 0.0
    %4421 = vmatprep.subr.mxu0 0.0
    %4422 = vmatpush1.xpose.msra.mxu0 0.0
    %4423 = vmatprep.subr.mxu0 0.0
    %4424 = vmatpush1.xpose.msra.mxu0 0.0
    %4425 = vmatprep.subr.mxu0 0.0
    %4426 = vmatpush1.xpose.msra.mxu0 0.0
    %4427 = vmatprep.mubr.f32.mxu0 0.0
    %4428 = vmatmul.mubr.f32.gmra.mrb[0].mxu0 %v1340
    %v4429 = vpop.f32.mrb[0].mxu0
    %v4430 = vadd.f32 0.0, %v4429
    %v4431 = vpop.f32.mrb[0].mxu0
    %4432 = vmatprep.mubr.f32.mxu0 0.0
    %4433 = vmatmul.mubr.f32.gmra.mrb[0].mxu0 %v1343
    %v4434 = vpop.f32.mrb[0].mxu0
    %v4435 = vadd.f32 0.0, %v4434
    %v4436 = vpop.f32.mrb[0].mxu0
    %4437 = vdwg.mxu0
    %v4439 = vsel %vm903, %v3932, 0
    %v4442 = vsel %vm903, %v3933, 0
    %4444 = vmatprep.subr.mxu0 0.0
    %4445 = vmatpush1.xpose.msra.mxu0 %v4439
    %4446 = vmatprep.subr.mxu0 0.0
    %4447 = vmatpush1.xpose.msra.mxu0 %v4442
    %4448 = vmatprep.subr.mxu0 0.0
    %4449 = vmatpush1.xpose.msra.mxu0 0.0
    %4450 = vmatprep.subr.mxu0 0.0
    %4451 = vmatpush1.xpose.msra.mxu0 0.0
    %4452 = vmatprep.subr.mxu0 0.0
    %4453 = vmatpush1.xpose.msra.mxu0 0.0
    %4454 = vmatprep.subr.mxu0 0.0
    %4455 = vmatpush1.xpose.msra.mxu0 0.0
    %4456 = vmatprep.subr.mxu0 0.0
    %4457 = vmatpush1.xpose.msra.mxu0 0.0
    %4458 = vmatprep.subr.mxu0 0.0
    %4459 = vmatpush1.xpose.msra.mxu0 0.0
    %4460 = vmatprep.subr.mxu0 0.0
    %4461 = vmatpush1.xpose.msra.mxu0 0.0
    %4462 = vmatprep.subr.mxu0 0.0
    %4463 = vmatpush1.xpose.msra.mxu0 0.0
    %4464 = vmatprep.subr.mxu0 0.0
    %4465 = vmatpush1.xpose.msra.mxu0 0.0
    %4466 = vmatprep.subr.mxu0 0.0
    %4467 = vmatpush1.xpose.msra.mxu0 0.0
    %4468 = vmatprep.subr.mxu0 0.0
    %4469 = vmatpush1.xpose.msra.mxu0 0.0
    %4470 = vmatprep.subr.mxu0 0.0
    %4471 = vmatpush1.xpose.msra.mxu0 0.0
    %4472 = vmatprep.subr.mxu0 0.0
    %4473 = vmatpush1.xpose.msra.mxu0 0.0
    %4474 = vmatprep.subr.mxu0 0.0
    %4475 = vmatpush1.xpose.msra.mxu0 0.0
    %4476 = vmatprep.subr.mxu0 0.0
    %4477 = vmatpush1.xpose.msra.mxu0 0.0
    %4478 = vmatprep.subr.mxu0 0.0
    %4479 = vmatpush1.xpose.msra.mxu0 0.0
    %4480 = vmatprep.subr.mxu0 0.0
    %4481 = vmatpush1.xpose.msra.mxu0 0.0
    %4482 = vmatprep.subr.mxu0 0.0
    %4483 = vmatpush1.xpose.msra.mxu0 0.0
    %4484 = vmatprep.subr.mxu0 0.0
    %4485 = vmatpush1.xpose.msra.mxu0 0.0
    %4486 = vmatprep.subr.mxu0 0.0
    %4487 = vmatpush1.xpose.msra.mxu0 0.0
    %4488 = vmatprep.subr.mxu0 0.0
    %4489 = vmatpush1.xpose.msra.mxu0 0.0
    %4490 = vmatprep.subr.mxu0 0.0
    %4491 = vmatpush1.xpose.msra.mxu0 0.0
    %4492 = vmatprep.subr.mxu0 0.0
    %4493 = vmatpush1.xpose.msra.mxu0 0.0
    %4494 = vmatprep.subr.mxu0 0.0
    %4495 = vmatpush1.xpose.msra.mxu0 0.0
    %4496 = vmatprep.subr.mxu0 0.0
    %4497 = vmatpush1.xpose.msra.mxu0 0.0
    %4498 = vmatprep.subr.mxu0 0.0
    %4499 = vmatpush1.xpose.msra.mxu0 0.0
    %4500 = vmatprep.subr.mxu0 0.0
    %4501 = vmatpush1.xpose.msra.mxu0 0.0
    %4502 = vmatprep.subr.mxu0 0.0
    %4503 = vmatpush1.xpose.msra.mxu0 0.0
    %4504 = vmatprep.subr.mxu0 0.0
    %4505 = vmatpush1.xpose.msra.mxu0 0.0
    %4506 = vmatprep.subr.mxu0 0.0
    %4507 = vmatpush1.xpose.msra.mxu0 0.0
    %4508 = vmatprep.mubr.f32.mxu0 0.0
    %4509 = vmatmul.mubr.f32.gmra.mrb[0].mxu0 %v1427
    %v4510 = vpop.f32.mrb[0].mxu0
    %v4511 = vadd.f32 0.0, %v4510
    %v4512 = vpop.f32.mrb[0].mxu0
    %4513 = vmatprep.mubr.f32.mxu0 0.0
    %4514 = vmatmul.mubr.f32.gmra.mrb[0].mxu0 %v1430
    %v4515 = vpop.f32.mrb[0].mxu0
    %v4516 = vadd.f32 0.0, %v4515
    %v4517 = vpop.f32.mrb[0].mxu0
    %4518 = vdwg.mxu0
    %v4520 = vsel %vm903, %v3934, 0
    %v4523 = vsel %vm903, %v3935, 0
    %4525 = vmatprep.subr.mxu0 0.0
    %4526 = vmatpush1.xpose.msra.mxu0 %v4520
    %4527 = vmatprep.subr.mxu0 0.0
    %4528 = vmatpush1.xpose.msra.mxu0 %v4523
    %4529 = vmatprep.subr.mxu0 0.0
    %4530 = vmatpush1.xpose.msra.mxu0 0.0
    %4531 = vmatprep.subr.mxu0 0.0
    %4532 = vmatpush1.xpose.msra.mxu0 0.0
    %4533 = vmatprep.subr.mxu0 0.0
    %4534 = vmatpush1.xpose.msra.mxu0 0.0
    %4535 = vmatprep.subr.mxu0 0.0
    %4536 = vmatpush1.xpose.msra.mxu0 0.0
    %4537 = vmatprep.subr.mxu0 0.0
    %4538 = vmatpush1.xpose.msra.mxu0 0.0
    %4539 = vmatprep.subr.mxu0 0.0
    %4540 = vmatpush1.xpose.msra.mxu0 0.0
    %4541 = vmatprep.subr.mxu0 0.0
    %4542 = vmatpush1.xpose.msra.mxu0 0.0
    %4543 = vmatprep.subr.mxu0 0.0
    %4544 = vmatpush1.xpose.msra.mxu0 0.0
    %4545 = vmatprep.subr.mxu0 0.0
    %4546 = vmatpush1.xpose.msra.mxu0 0.0
    %4547 = vmatprep.subr.mxu0 0.0
    %4548 = vmatpush1.xpose.msra.mxu0 0.0
    %4549 = vmatprep.subr.mxu0 0.0
    %4550 = vmatpush1.xpose.msra.mxu0 0.0
    %4551 = vmatprep.subr.mxu0 0.0
    %4552 = vmatpush1.xpose.msra.mxu0 0.0
    %4553 = vmatprep.subr.mxu0 0.0
    %4554 = vmatpush1.xpose.msra.mxu0 0.0
    %4555 = vmatprep.subr.mxu0 0.0
    %4556 = vmatpush1.xpose.msra.mxu0 0.0
    %4557 = vmatprep.subr.mxu0 0.0
    %4558 = vmatpush1.xpose.msra.mxu0 0.0
    %4559 = vmatprep.subr.mxu0 0.0
    %4560 = vmatpush1.xpose.msra.mxu0 0.0
    %4561 = vmatprep.subr.mxu0 0.0
    %4562 = vmatpush1.xpose.msra.mxu0 0.0
    %4563 = vmatprep.subr.mxu0 0.0
    %4564 = vmatpush1.xpose.msra.mxu0 0.0
    %4565 = vmatprep.subr.mxu0 0.0
    %4566 = vmatpush1.xpose.msra.mxu0 0.0
    %4567 = vmatprep.subr.mxu0 0.0
    %4568 = vmatpush1.xpose.msra.mxu0 0.0
    %4569 = vmatprep.subr.mxu0 0.0
    %4570 = vmatpush1.xpose.msra.mxu0 0.0
    %4571 = vmatprep.subr.mxu0 0.0
    %4572 = vmatpush1.xpose.msra.mxu0 0.0
    %4573 = vmatprep.subr.mxu0 0.0
    %4574 = vmatpush1.xpose.msra.mxu0 0.0
    %4575 = vmatprep.subr.mxu0 0.0
    %4576 = vmatpush1.xpose.msra.mxu0 0.0
    %4577 = vmatprep.subr.mxu0 0.0
    %4578 = vmatpush1.xpose.msra.mxu0 0.0
    %4579 = vmatprep.subr.mxu0 0.0
    %4580 = vmatpush1.xpose.msra.mxu0 0.0
    %4581 = vmatprep.subr.mxu0 0.0
    %4582 = vmatpush1.xpose.msra.mxu0 0.0
    %4583 = vmatprep.subr.mxu0 0.0
    %4584 = vmatpush1.xpose.msra.mxu0 0.0
    %4585 = vmatprep.subr.mxu0 0.0
    %4586 = vmatpush1.xpose.msra.mxu0 0.0
    %4587 = vmatprep.subr.mxu0 0.0
    %4588 = vmatpush1.xpose.msra.mxu0 0.0
    %4589 = vmatprep.mubr.f32.mxu0 0.0
    %4590 = vmatmul.mubr.f32.gmra.mrb[0].mxu0 %v1514
    %v4591 = vpop.f32.mrb[0].mxu0
    %v4592 = vadd.f32 0.0, %v4591
    %v4593 = vpop.f32.mrb[0].mxu0
    %4594 = vmatprep.mubr.f32.mxu0 0.0
    %4595 = vmatmul.mubr.f32.gmra.mrb[0].mxu0 %v1517
    %v4596 = vpop.f32.mrb[0].mxu0
    %v4597 = vadd.f32 0.0, %v4596
    %v4598 = vpop.f32.mrb[0].mxu0
    %4599 = vdwg.mxu0
    %v4601 = vsel %vm903, %v3936, 0
    %v4604 = vsel %vm903, %v3937, 0
    %4606 = vmatprep.subr.mxu0 0.0
    %4607 = vmatpush1.xpose.msra.mxu0 %v4601
    %4608 = vmatprep.subr.mxu0 0.0
    %4609 = vmatpush1.xpose.msra.mxu0 %v4604
    %4610 = vmatprep.subr.mxu0 0.0
    %4611 = vmatpush1.xpose.msra.mxu0 0.0
    %4612 = vmatprep.subr.mxu0 0.0
    %4613 = vmatpush1.xpose.msra.mxu0 0.0
    %4614 = vmatprep.subr.mxu0 0.0
    %4615 = vmatpush1.xpose.msra.mxu0 0.0
    %4616 = vmatprep.subr.mxu0 0.0
    %4617 = vmatpush1.xpose.msra.mxu0 0.0
    %4618 = vmatprep.subr.mxu0 0.0
    %4619 = vmatpush1.xpose.msra.mxu0 0.0
    %4620 = vmatprep.subr.mxu0 0.0
    %4621 = vmatpush1.xpose.msra.mxu0 0.0
    %4622 = vmatprep.subr.mxu0 0.0
    %4623 = vmatpush1.xpose.msra.mxu0 0.0
    %4624 = vmatprep.subr.mxu0 0.0
    %4625 = vmatpush1.xpose.msra.mxu0 0.0
    %4626 = vmatprep.subr.mxu0 0.0
    %4627 = vmatpush1.xpose.msra.mxu0 0.0
    %4628 = vmatprep.subr.mxu0 0.0
    %4629 = vmatpush1.xpose.msra.mxu0 0.0
    %4630 = vmatprep.subr.mxu0 0.0
    %4631 = vmatpush1.xpose.msra.mxu0 0.0
    %4632 = vmatprep.subr.mxu0 0.0
    %4633 = vmatpush1.xpose.msra.mxu0 0.0
    %4634 = vmatprep.subr.mxu0 0.0
    %4635 = vmatpush1.xpose.msra.mxu0 0.0
    %4636 = vmatprep.subr.mxu0 0.0
    %4637 = vmatpush1.xpose.msra.mxu0 0.0
    %4638 = vmatprep.subr.mxu0 0.0
    %4639 = vmatpush1.xpose.msra.mxu0 0.0
    %4640 = vmatprep.subr.mxu0 0.0
    %4641 = vmatpush1.xpose.msra.mxu0 0.0
    %4642 = vmatprep.subr.mxu0 0.0
    %4643 = vmatpush1.xpose.msra.mxu0 0.0
    %4644 = vmatprep.subr.mxu0 0.0
    %4645 = vmatpush1.xpose.msra.mxu0 0.0
    %4646 = vmatprep.subr.mxu0 0.0
    %4647 = vmatpush1.xpose.msra.mxu0 0.0
    %4648 = vmatprep.subr.mxu0 0.0
    %4649 = vmatpush1.xpose.msra.mxu0 0.0
    %4650 = vmatprep.subr.mxu0 0.0
    %4651 = vmatpush1.xpose.msra.mxu0 0.0
    %4652 = vmatprep.subr.mxu0 0.0
    %4653 = vmatpush1.xpose.msra.mxu0 0.0
    %4654 = vmatprep.subr.mxu0 0.0
    %4655 = vmatpush1.xpose.msra.mxu0 0.0
    %4656 = vmatprep.subr.mxu0 0.0
    %4657 = vmatpush1.xpose.msra.mxu0 0.0
    %4658 = vmatprep.subr.mxu0 0.0
    %4659 = vmatpush1.xpose.msra.mxu0 0.0
    %4660 = vmatprep.subr.mxu0 0.0
    %4661 = vmatpush1.xpose.msra.mxu0 0.0
    %4662 = vmatprep.subr.mxu0 0.0
    %4663 = vmatpush1.xpose.msra.mxu0 0.0
    %4664 = vmatprep.subr.mxu0 0.0
    %4665 = vmatpush1.xpose.msra.mxu0 0.0
    %4666 = vmatprep.subr.mxu0 0.0
    %4667 = vmatpush1.xpose.msra.mxu0 0.0
    %4668 = vmatprep.subr.mxu0 0.0
    %4669 = vmatpush1.xpose.msra.mxu0 0.0
    %4670 = vmatprep.mubr.f32.mxu0 0.0
    %4671 = vmatmul.mubr.f32.gmra.mrb[0].mxu0 %v1601
    %v4672 = vpop.f32.mrb[0].mxu0
    %v4673 = vadd.f32 0.0, %v4672
    %v4674 = vpop.f32.mrb[0].mxu0
    %4675 = vmatprep.mubr.f32.mxu0 0.0
    %4676 = vmatmul.mubr.f32.gmra.mrb[0].mxu0 %v1604
    %v4677 = vpop.f32.mrb[0].mxu0
    %v4678 = vadd.f32 0.0, %v4677
    %v4679 = vpop.f32.mrb[0].mxu0
    %4680 = vdwg.mxu0
    %v4682 = vsel %vm903, %v3938, 0
    %v4685 = vsel %vm903, %v3939, 0
    %4687 = vmatprep.subr.mxu0 0.0
    %4688 = vmatpush1.xpose.msra.mxu0 %v4682
    %4689 = vmatprep.subr.mxu0 0.0
    %4690 = vmatpush1.xpose.msra.mxu0 %v4685
    %4691 = vmatprep.subr.mxu0 0.0
    %4692 = vmatpush1.xpose.msra.mxu0 0.0
    %4693 = vmatprep.subr.mxu0 0.0
    %4694 = vmatpush1.xpose.msra.mxu0 0.0
    %4695 = vmatprep.subr.mxu0 0.0
    %4696 = vmatpush1.xpose.msra.mxu0 0.0
    %4697 = vmatprep.subr.mxu0 0.0
    %4698 = vmatpush1.xpose.msra.mxu0 0.0
    %4699 = vmatprep.subr.mxu0 0.0
    %4700 = vmatpush1.xpose.msra.mxu0 0.0
    %4701 = vmatprep.subr.mxu0 0.0
    %4702 = vmatpush1.xpose.msra.mxu0 0.0
    %4703 = vmatprep.subr.mxu0 0.0
    %4704 = vmatpush1.xpose.msra.mxu0 0.0
    %4705 = vmatprep.subr.mxu0 0.0
    %4706 = vmatpush1.xpose.msra.mxu0 0.0
    %4707 = vmatprep.subr.mxu0 0.0
    %4708 = vmatpush1.xpose.msra.mxu0 0.0
    %4709 = vmatprep.subr.mxu0 0.0
    %4710 = vmatpush1.xpose.msra.mxu0 0.0
    %4711 = vmatprep.subr.mxu0 0.0
    %4712 = vmatpush1.xpose.msra.mxu0 0.0
    %4713 = vmatprep.subr.mxu0 0.0
    %4714 = vmatpush1.xpose.msra.mxu0 0.0
    %4715 = vmatprep.subr.mxu0 0.0
    %4716 = vmatpush1.xpose.msra.mxu0 0.0
    %4717 = vmatprep.subr.mxu0 0.0
    %4718 = vmatpush1.xpose.msra.mxu0 0.0
    %4719 = vmatprep.subr.mxu0 0.0
    %4720 = vmatpush1.xpose.msra.mxu0 0.0
    %4721 = vmatprep.subr.mxu0 0.0
    %4722 = vmatpush1.xpose.msra.mxu0 0.0
    %4723 = vmatprep.subr.mxu0 0.0
    %4724 = vmatpush1.xpose.msra.mxu0 0.0
    %4725 = vmatprep.subr.mxu0 0.0
    %4726 = vmatpush1.xpose.msra.mxu0 0.0
    %4727 = vmatprep.subr.mxu0 0.0
    %4728 = vmatpush1.xpose.msra.mxu0 0.0
    %4729 = vmatprep.subr.mxu0 0.0
    %4730 = vmatpush1.xpose.msra.mxu0 0.0
    %4731 = vmatprep.subr.mxu0 0.0
    %4732 = vmatpush1.xpose.msra.mxu0 0.0
    %4733 = vmatprep.subr.mxu0 0.0
    %4734 = vmatpush1.xpose.msra.mxu0 0.0
    %4735 = vmatprep.subr.mxu0 0.0
    %4736 = vmatpush1.xpose.msra.mxu0 0.0
    %4737 = vmatprep.subr.mxu0 0.0
    %4738 = vmatpush1.xpose.msra.mxu0 0.0
    %4739 = vmatprep.subr.mxu0 0.0
    %4740 = vmatpush1.xpose.msra.mxu0 0.0
    %4741 = vmatprep.subr.mxu0 0.0
    %4742 = vmatpush1.xpose.msra.mxu0 0.0
    %4743 = vmatprep.subr.mxu0 0.0
    %4744 = vmatpush1.xpose.msra.mxu0 0.0
    %4745 = vmatprep.subr.mxu0 0.0
    %4746 = vmatpush1.xpose.msra.mxu0 0.0
    %4747 = vmatprep.subr.mxu0 0.0
    %4748 = vmatpush1.xpose.msra.mxu0 0.0
    %4749 = vmatprep.subr.mxu0 0.0
    %4750 = vmatpush1.xpose.msra.mxu0 0.0
    %4751 = vmatprep.mubr.f32.mxu0 0.0
    %4752 = vmatmul.mubr.f32.gmra.mrb[0].mxu0 %v1688
    %v4753 = vpop.f32.mrb[0].mxu0
    %v4754 = vadd.f32 0.0, %v4753
    %v4755 = vpop.f32.mrb[0].mxu0
    %4756 = vmatprep.mubr.f32.mxu0 0.0
    %4757 = vmatmul.mubr.f32.gmra.mrb[0].mxu0 %v1691
    %v4758 = vpop.f32.mrb[0].mxu0
    %v4759 = vadd.f32 0.0, %v4758
    %v4760 = vpop.f32.mrb[0].mxu0
    %4761 = vdwg.mxu0
    %v4763 = vsel %vm903, %v3940, 0
    %v4766 = vsel %vm903, %v3941, 0
    %4768 = vmatprep.subr.mxu0 0.0
    %4769 = vmatpush1.xpose.msra.mxu0 %v4763
    %4770 = vmatprep.subr.mxu0 0.0
    %4771 = vmatpush1.xpose.msra.mxu0 %v4766
    %4772 = vmatprep.subr.mxu0 0.0
    %4773 = vmatpush1.xpose.msra.mxu0 0.0
    %4774 = vmatprep.subr.mxu0 0.0
    %4775 = vmatpush1.xpose.msra.mxu0 0.0
    %4776 = vmatprep.subr.mxu0 0.0
    %4777 = vmatpush1.xpose.msra.mxu0 0.0
    %4778 = vmatprep.subr.mxu0 0.0
    %4779 = vmatpush1.xpose.msra.mxu0 0.0
    %4780 = vmatprep.subr.mxu0 0.0
    %4781 = vmatpush1.xpose.msra.mxu0 0.0
    %4782 = vmatprep.subr.mxu0 0.0
    %4783 = vmatpush1.xpose.msra.mxu0 0.0
    %4784 = vmatprep.subr.mxu0 0.0
    %4785 = vmatpush1.xpose.msra.mxu0 0.0
    %4786 = vmatprep.subr.mxu0 0.0
    %4787 = vmatpush1.xpose.msra.mxu0 0.0
    %4788 = vmatprep.subr.mxu0 0.0
    %4789 = vmatpush1.xpose.msra.mxu0 0.0
    %4790 = vmatprep.subr.mxu0 0.0
    %4791 = vmatpush1.xpose.msra.mxu0 0.0
    %4792 = vmatprep.subr.mxu0 0.0
    %4793 = vmatpush1.xpose.msra.mxu0 0.0
    %4794 = vmatprep.subr.mxu0 0.0
    %4795 = vmatpush1.xpose.msra.mxu0 0.0
    %4796 = vmatprep.subr.mxu0 0.0
    %4797 = vmatpush1.xpose.msra.mxu0 0.0
    %4798 = vmatprep.subr.mxu0 0.0
    %4799 = vmatpush1.xpose.msra.mxu0 0.0
    %4800 = vmatprep.subr.mxu0 0.0
    %4801 = vmatpush1.xpose.msra.mxu0 0.0
    %4802 = vmatprep.subr.mxu0 0.0
    %4803 = vmatpush1.xpose.msra.mxu0 0.0
    %4804 = vmatprep.subr.mxu0 0.0
    %4805 = vmatpush1.xpose.msra.mxu0 0.0
    %4806 = vmatprep.subr.mxu0 0.0
    %4807 = vmatpush1.xpose.msra.mxu0 0.0
    %4808 = vmatprep.subr.mxu0 0.0
    %4809 = vmatpush1.xpose.msra.mxu0 0.0
    %4810 = vmatprep.subr.mxu0 0.0
    %4811 = vmatpush1.xpose.msra.mxu0 0.0
    %4812 = vmatprep.subr.mxu0 0.0
    %4813 = vmatpush1.xpose.msra.mxu0 0.0
    %4814 = vmatprep.subr.mxu0 0.0
    %4815 = vmatpush1.xpose.msra.mxu0 0.0
    %4816 = vmatprep.subr.mxu0 0.0
    %4817 = vmatpush1.xpose.msra.mxu0 0.0
    %4818 = vmatprep.subr.mxu0 0.0
    %4819 = vmatpush1.xpose.msra.mxu0 0.0
    %4820 = vmatprep.subr.mxu0 0.0
    %4821 = vmatpush1.xpose.msra.mxu0 0.0
    %4822 = vmatprep.subr.mxu0 0.0
    %4823 = vmatpush1.xpose.msra.mxu0 0.0
    %4824 = vmatprep.subr.mxu0 0.0
    %4825 = vmatpush1.xpose.msra.mxu0 0.0
    %4826 = vmatprep.subr.mxu0 0.0
    %4827 = vmatpush1.xpose.msra.mxu0 0.0
    %4828 = vmatprep.subr.mxu0 0.0
    %4829 = vmatpush1.xpose.msra.mxu0 0.0
    %4830 = vmatprep.subr.mxu0 0.0
    %4831 = vmatpush1.xpose.msra.mxu0 0.0
    %4832 = vmatprep.mubr.f32.mxu0 0.0
    %4833 = vmatmul.mubr.f32.gmra.mrb[0].mxu0 %v1775
    %v4834 = vpop.f32.mrb[0].mxu0
    %v4835 = vadd.f32 0.0, %v4834
    %v4836 = vpop.f32.mrb[0].mxu0
    %4837 = vmatprep.mubr.f32.mxu0 0.0
    %4838 = vmatmul.mubr.f32.gmra.mrb[0].mxu0 %v1778
    %v4839 = vpop.f32.mrb[0].mxu0
    %v4840 = vadd.f32 0.0, %v4839
    %v4841 = vpop.f32.mrb[0].mxu0
    %4842 = vdwg.mxu0
    %v4844 = vsel %vm903, %v3942, 0
    %v4847 = vsel %vm903, %v3943, 0
    %4849 = vmatprep.subr.mxu0 0.0
    %4850 = vmatpush1.xpose.msra.mxu0 %v4844
    %4851 = vmatprep.subr.mxu0 0.0
    %4852 = vmatpush1.xpose.msra.mxu0 %v4847
    %4853 = vmatprep.subr.mxu0 0.0
    %4854 = vmatpush1.xpose.msra.mxu0 0.0
    %4855 = vmatprep.subr.mxu0 0.0
    %4856 = vmatpush1.xpose.msra.mxu0 0.0
    %4857 = vmatprep.subr.mxu0 0.0
    %4858 = vmatpush1.xpose.msra.mxu0 0.0
    %4859 = vmatprep.subr.mxu0 0.0
    %4860 = vmatpush1.xpose.msra.mxu0 0.0
    %4861 = vmatprep.subr.mxu0 0.0
    %4862 = vmatpush1.xpose.msra.mxu0 0.0
    %4863 = vmatprep.subr.mxu0 0.0
    %4864 = vmatpush1.xpose.msra.mxu0 0.0
    %4865 = vmatprep.subr.mxu0 0.0
    %4866 = vmatpush1.xpose.msra.mxu0 0.0
    %4867 = vmatprep.subr.mxu0 0.0
    %4868 = vmatpush1.xpose.msra.mxu0 0.0
    %4869 = vmatprep.subr.mxu0 0.0
    %4870 = vmatpush1.xpose.msra.mxu0 0.0
    %4871 = vmatprep.subr.mxu0 0.0
    %4872 = vmatpush1.xpose.msra.mxu0 0.0
    %4873 = vmatprep.subr.mxu0 0.0
    %4874 = vmatpush1.xpose.msra.mxu0 0.0
    %4875 = vmatprep.subr.mxu0 0.0
    %4876 = vmatpush1.xpose.msra.mxu0 0.0
    %4877 = vmatprep.subr.mxu0 0.0
    %4878 = vmatpush1.xpose.msra.mxu0 0.0
    %4879 = vmatprep.subr.mxu0 0.0
    %4880 = vmatpush1.xpose.msra.mxu0 0.0
    %4881 = vmatprep.subr.mxu0 0.0
    %4882 = vmatpush1.xpose.msra.mxu0 0.0
    %4883 = vmatprep.subr.mxu0 0.0
    %4884 = vmatpush1.xpose.msra.mxu0 0.0
    %4885 = vmatprep.subr.mxu0 0.0
    %4886 = vmatpush1.xpose.msra.mxu0 0.0
    %4887 = vmatprep.subr.mxu0 0.0
    %4888 = vmatpush1.xpose.msra.mxu0 0.0
    %4889 = vmatprep.subr.mxu0 0.0
    %4890 = vmatpush1.xpose.msra.mxu0 0.0
    %4891 = vmatprep.subr.mxu0 0.0
    %4892 = vmatpush1.xpose.msra.mxu0 0.0
    %4893 = vmatprep.subr.mxu0 0.0
    %4894 = vmatpush1.xpose.msra.mxu0 0.0
    %4895 = vmatprep.subr.mxu0 0.0
    %4896 = vmatpush1.xpose.msra.mxu0 0.0
    %4897 = vmatprep.subr.mxu0 0.0
    %4898 = vmatpush1.xpose.msra.mxu0 0.0
    %4899 = vmatprep.subr.mxu0 0.0
    %4900 = vmatpush1.xpose.msra.mxu0 0.0
    %4901 = vmatprep.subr.mxu0 0.0
    %4902 = vmatpush1.xpose.msra.mxu0 0.0
    %4903 = vmatprep.subr.mxu0 0.0
    %4904 = vmatpush1.xpose.msra.mxu0 0.0
    %4905 = vmatprep.subr.mxu0 0.0
    %4906 = vmatpush1.xpose.msra.mxu0 0.0
    %4907 = vmatprep.subr.mxu0 0.0
    %4908 = vmatpush1.xpose.msra.mxu0 0.0
    %4909 = vmatprep.subr.mxu0 0.0
    %4910 = vmatpush1.xpose.msra.mxu0 0.0
    %4911 = vmatprep.subr.mxu0 0.0
    %4912 = vmatpush1.xpose.msra.mxu0 0.0
    %4913 = vmatprep.mubr.f32.mxu0 0.0
    %4914 = vmatmul.mubr.f32.gmra.mrb[0].mxu0 %v1862
    %v4915 = vpop.f32.mrb[0].mxu0
    %v4916 = vadd.f32 0.0, %v4915
    %v4917 = vpop.f32.mrb[0].mxu0
    %4918 = vmatprep.mubr.f32.mxu0 0.0
    %4919 = vmatmul.mubr.f32.gmra.mrb[0].mxu0 %v1865
    %v4920 = vpop.f32.mrb[0].mxu0
    %v4921 = vadd.f32 0.0, %v4920
    %v4922 = vpop.f32.mrb[0].mxu0
    %4923 = vdwg.mxu0
    %v4925 = vsel %vm903, %v3944, 0
    %v4928 = vsel %vm903, %v3945, 0
    %4930 = vmatprep.subr.mxu0 0.0
    %4931 = vmatpush1.xpose.msra.mxu0 %v4925
    %4932 = vmatprep.subr.mxu0 0.0
    %4933 = vmatpush1.xpose.msra.mxu0 %v4928
    %4934 = vmatprep.subr.mxu0 0.0
    %4935 = vmatpush1.xpose.msra.mxu0 0.0
    %4936 = vmatprep.subr.mxu0 0.0
    %4937 = vmatpush1.xpose.msra.mxu0 0.0
    %4938 = vmatprep.subr.mxu0 0.0
    %4939 = vmatpush1.xpose.msra.mxu0 0.0
    %4940 = vmatprep.subr.mxu0 0.0
    %4941 = vmatpush1.xpose.msra.mxu0 0.0
    %4942 = vmatprep.subr.mxu0 0.0
    %4943 = vmatpush1.xpose.msra.mxu0 0.0
    %4944 = vmatprep.subr.mxu0 0.0
    %4945 = vmatpush1.xpose.msra.mxu0 0.0
    %4946 = vmatprep.subr.mxu0 0.0
    %4947 = vmatpush1.xpose.msra.mxu0 0.0
    %4948 = vmatprep.subr.mxu0 0.0
    %4949 = vmatpush1.xpose.msra.mxu0 0.0
    %4950 = vmatprep.subr.mxu0 0.0
    %4951 = vmatpush1.xpose.msra.mxu0 0.0
    %4952 = vmatprep.subr.mxu0 0.0
    %4953 = vmatpush1.xpose.msra.mxu0 0.0
    %4954 = vmatprep.subr.mxu0 0.0
    %4955 = vmatpush1.xpose.msra.mxu0 0.0
    %4956 = vmatprep.subr.mxu0 0.0
    %4957 = vmatpush1.xpose.msra.mxu0 0.0
    %4958 = vmatprep.subr.mxu0 0.0
    %4959 = vmatpush1.xpose.msra.mxu0 0.0
    %4960 = vmatprep.subr.mxu0 0.0
    %4961 = vmatpush1.xpose.msra.mxu0 0.0
    %4962 = vmatprep.subr.mxu0 0.0
    %4963 = vmatpush1.xpose.msra.mxu0 0.0
    %4964 = vmatprep.subr.mxu0 0.0
    %4965 = vmatpush1.xpose.msra.mxu0 0.0
    %4966 = vmatprep.subr.mxu0 0.0
    %4967 = vmatpush1.xpose.msra.mxu0 0.0
    %4968 = vmatprep.subr.mxu0 0.0
    %4969 = vmatpush1.xpose.msra.mxu0 0.0
    %4970 = vmatprep.subr.mxu0 0.0
    %4971 = vmatpush1.xpose.msra.mxu0 0.0
    %4972 = vmatprep.subr.mxu0 0.0
    %4973 = vmatpush1.xpose.msra.mxu0 0.0
    %4974 = vmatprep.subr.mxu0 0.0
    %4975 = vmatpush1.xpose.msra.mxu0 0.0
    %4976 = vmatprep.subr.mxu0 0.0
    %4977 = vmatpush1.xpose.msra.mxu0 0.0
    %4978 = vmatprep.subr.mxu0 0.0
    %4979 = vmatpush1.xpose.msra.mxu0 0.0
    %4980 = vmatprep.subr.mxu0 0.0
    %4981 = vmatpush1.xpose.msra.mxu0 0.0
    %4982 = vmatprep.subr.mxu0 0.0
    %4983 = vmatpush1.xpose.msra.mxu0 0.0
    %4984 = vmatprep.subr.mxu0 0.0
    %4985 = vmatpush1.xpose.msra.mxu0 0.0
    %4986 = vmatprep.subr.mxu0 0.0
    %4987 = vmatpush1.xpose.msra.mxu0 0.0
    %4988 = vmatprep.subr.mxu0 0.0
    %4989 = vmatpush1.xpose.msra.mxu0 0.0
    %4990 = vmatprep.subr.mxu0 0.0
    %4991 = vmatpush1.xpose.msra.mxu0 0.0
    %4992 = vmatprep.subr.mxu0 0.0
    %4993 = vmatpush1.xpose.msra.mxu0 0.0
    %4994 = vmatprep.mubr.f32.mxu0 0.0
    %4995 = vmatmul.mubr.f32.gmra.mrb[0].mxu0 %v1949
    %v4996 = vpop.f32.mrb[0].mxu0
    %v4997 = vadd.f32 0.0, %v4996
    %v4998 = vpop.f32.mrb[0].mxu0
    %4999 = vmatprep.mubr.f32.mxu0 0.0
    %5000 = vmatmul.mubr.f32.gmra.mrb[0].mxu0 %v1952
    %v5001 = vpop.f32.mrb[0].mxu0
    %v5002 = vadd.f32 0.0, %v5001
    %v5003 = vpop.f32.mrb[0].mxu0
    %5004 = vdwg.mxu0
    %v5006 = vsel %vm903, %v3946, 0
    %v5009 = vsel %vm903, %v3947, 0
    %5011 = vmatprep.subr.mxu0 0.0
    %5012 = vmatpush1.xpose.msra.mxu0 %v5006
    %5013 = vmatprep.subr.mxu0 0.0
    %5014 = vmatpush1.xpose.msra.mxu0 %v5009
    %5015 = vmatprep.subr.mxu0 0.0
    %5016 = vmatpush1.xpose.msra.mxu0 0.0
    %5017 = vmatprep.subr.mxu0 0.0
    %5018 = vmatpush1.xpose.msra.mxu0 0.0
    %5019 = vmatprep.subr.mxu0 0.0
    %5020 = vmatpush1.xpose.msra.mxu0 0.0
    %5021 = vmatprep.subr.mxu0 0.0
    %5022 = vmatpush1.xpose.msra.mxu0 0.0
    %5023 = vmatprep.subr.mxu0 0.0
    %5024 = vmatpush1.xpose.msra.mxu0 0.0
    %5025 = vmatprep.subr.mxu0 0.0
    %5026 = vmatpush1.xpose.msra.mxu0 0.0
    %5027 = vmatprep.subr.mxu0 0.0
    %5028 = vmatpush1.xpose.msra.mxu0 0.0
    %5029 = vmatprep.subr.mxu0 0.0
    %5030 = vmatpush1.xpose.msra.mxu0 0.0
    %5031 = vmatprep.subr.mxu0 0.0
    %5032 = vmatpush1.xpose.msra.mxu0 0.0
    %5033 = vmatprep.subr.mxu0 0.0
    %5034 = vmatpush1.xpose.msra.mxu0 0.0
    %5035 = vmatprep.subr.mxu0 0.0
    %5036 = vmatpush1.xpose.msra.mxu0 0.0
    %5037 = vmatprep.subr.mxu0 0.0
    %5038 = vmatpush1.xpose.msra.mxu0 0.0
    %5039 = vmatprep.subr.mxu0 0.0
    %5040 = vmatpush1.xpose.msra.mxu0 0.0
    %5041 = vmatprep.subr.mxu0 0.0
    %5042 = vmatpush1.xpose.msra.mxu0 0.0
    %5043 = vmatprep.subr.mxu0 0.0
    %5044 = vmatpush1.xpose.msra.mxu0 0.0
    %5045 = vmatprep.subr.mxu0 0.0
    %5046 = vmatpush1.xpose.msra.mxu0 0.0
    %5047 = vmatprep.subr.mxu0 0.0
    %5048 = vmatpush1.xpose.msra.mxu0 0.0
    %5049 = vmatprep.subr.mxu0 0.0
    %5050 = vmatpush1.xpose.msra.mxu0 0.0
    %5051 = vmatprep.subr.mxu0 0.0
    %5052 = vmatpush1.xpose.msra.mxu0 0.0
    %5053 = vmatprep.subr.mxu0 0.0
    %5054 = vmatpush1.xpose.msra.mxu0 0.0
    %5055 = vmatprep.subr.mxu0 0.0
    %5056 = vmatpush1.xpose.msra.mxu0 0.0
    %5057 = vmatprep.subr.mxu0 0.0
    %5058 = vmatpush1.xpose.msra.mxu0 0.0
    %5059 = vmatprep.subr.mxu0 0.0
    %5060 = vmatpush1.xpose.msra.mxu0 0.0
    %5061 = vmatprep.subr.mxu0 0.0
    %5062 = vmatpush1.xpose.msra.mxu0 0.0
    %5063 = vmatprep.subr.mxu0 0.0
    %5064 = vmatpush1.xpose.msra.mxu0 0.0
    %5065 = vmatprep.subr.mxu0 0.0
    %5066 = vmatpush1.xpose.msra.mxu0 0.0
    %5067 = vmatprep.subr.mxu0 0.0
    %5068 = vmatpush1.xpose.msra.mxu0 0.0
    %5069 = vmatprep.subr.mxu0 0.0
    %5070 = vmatpush1.xpose.msra.mxu0 0.0
    %5071 = vmatprep.subr.mxu0 0.0
    %5072 = vmatpush1.xpose.msra.mxu0 0.0
    %5073 = vmatprep.subr.mxu0 0.0
    %5074 = vmatpush1.xpose.msra.mxu0 0.0
    %5075 = vmatprep.mubr.f32.mxu0 0.0
    %5076 = vmatmul.mubr.f32.gmra.mrb[0].mxu0 %v2036
    %v5077 = vpop.f32.mrb[0].mxu0
    %v5078 = vadd.f32 0.0, %v5077
    %v5079 = vpop.f32.mrb[0].mxu0
    %5080 = vmatprep.mubr.f32.mxu0 0.0
    %5081 = vmatmul.mubr.f32.gmra.mrb[0].mxu0 %v2039
    %v5082 = vpop.f32.mrb[0].mxu0
    %v5083 = vadd.f32 0.0, %v5082
    %v5084 = vpop.f32.mrb[0].mxu0
    %5085 = vdwg.mxu0
    %v5087 = vsel %vm903, %v3948, 0
    %v5090 = vsel %vm903, %v3949, 0
    %5092 = vmatprep.subr.mxu0 0.0
    %5093 = vmatpush1.xpose.msra.mxu0 %v5087
    %5094 = vmatprep.subr.mxu0 0.0
    %5095 = vmatpush1.xpose.msra.mxu0 %v5090
    %5096 = vmatprep.subr.mxu0 0.0
    %5097 = vmatpush1.xpose.msra.mxu0 0.0
    %5098 = vmatprep.subr.mxu0 0.0
    %5099 = vmatpush1.xpose.msra.mxu0 0.0
    %5100 = vmatprep.subr.mxu0 0.0
    %5101 = vmatpush1.xpose.msra.mxu0 0.0
    %5102 = vmatprep.subr.mxu0 0.0
    %5103 = vmatpush1.xpose.msra.mxu0 0.0
    %5104 = vmatprep.subr.mxu0 0.0
    %5105 = vmatpush1.xpose.msra.mxu0 0.0
    %5106 = vmatprep.subr.mxu0 0.0
    %5107 = vmatpush1.xpose.msra.mxu0 0.0
    %5108 = vmatprep.subr.mxu0 0.0
    %5109 = vmatpush1.xpose.msra.mxu0 0.0
    %5110 = vmatprep.subr.mxu0 0.0
    %5111 = vmatpush1.xpose.msra.mxu0 0.0
    %5112 = vmatprep.subr.mxu0 0.0
    %5113 = vmatpush1.xpose.msra.mxu0 0.0
    %5114 = vmatprep.subr.mxu0 0.0
    %5115 = vmatpush1.xpose.msra.mxu0 0.0
    %5116 = vmatprep.subr.mxu0 0.0
    %5117 = vmatpush1.xpose.msra.mxu0 0.0
    %5118 = vmatprep.subr.mxu0 0.0
    %5119 = vmatpush1.xpose.msra.mxu0 0.0
    %5120 = vmatprep.subr.mxu0 0.0
    %5121 = vmatpush1.xpose.msra.mxu0 0.0
    %5122 = vmatprep.subr.mxu0 0.0
    %5123 = vmatpush1.xpose.msra.mxu0 0.0
    %5124 = vmatprep.subr.mxu0 0.0
    %5125 = vmatpush1.xpose.msra.mxu0 0.0
    %5126 = vmatprep.subr.mxu0 0.0
    %5127 = vmatpush1.xpose.msra.mxu0 0.0
    %5128 = vmatprep.subr.mxu0 0.0
    %5129 = vmatpush1.xpose.msra.mxu0 0.0
    %5130 = vmatprep.subr.mxu0 0.0
    %5131 = vmatpush1.xpose.msra.mxu0 0.0
    %5132 = vmatprep.subr.mxu0 0.0
    %5133 = vmatpush1.xpose.msra.mxu0 0.0
    %5134 = vmatprep.subr.mxu0 0.0
    %5135 = vmatpush1.xpose.msra.mxu0 0.0
    %5136 = vmatprep.subr.mxu0 0.0
    %5137 = vmatpush1.xpose.msra.mxu0 0.0
    %5138 = vmatprep.subr.mxu0 0.0
    %5139 = vmatpush1.xpose.msra.mxu0 0.0
    %5140 = vmatprep.subr.mxu0 0.0
    %5141 = vmatpush1.xpose.msra.mxu0 0.0
    %5142 = vmatprep.subr.mxu0 0.0
    %5143 = vmatpush1.xpose.msra.mxu0 0.0
    %5144 = vmatprep.subr.mxu0 0.0
    %5145 = vmatpush1.xpose.msra.mxu0 0.0
    %5146 = vmatprep.subr.mxu0 0.0
    %5147 = vmatpush1.xpose.msra.mxu0 0.0
    %5148 = vmatprep.subr.mxu0 0.0
    %5149 = vmatpush1.xpose.msra.mxu0 0.0
    %5150 = vmatprep.subr.mxu0 0.0
    %5151 = vmatpush1.xpose.msra.mxu0 0.0
    %5152 = vmatprep.subr.mxu0 0.0
    %5153 = vmatpush1.xpose.msra.mxu0 0.0
    %5154 = vmatprep.subr.mxu0 0.0
    %5155 = vmatpush1.xpose.msra.mxu0 0.0
    %5156 = vmatprep.mubr.f32.mxu0 0.0
    %5157 = vmatmul.mubr.f32.gmra.mrb[0].mxu0 %v2123
    %v5158 = vpop.f32.mrb[0].mxu0
    %v5159 = vadd.f32 0.0, %v5158
    %v5160 = vpop.f32.mrb[0].mxu0
    %5161 = vmatprep.mubr.f32.mxu0 0.0
    %5162 = vmatmul.mubr.f32.gmra.mrb[0].mxu0 %v2126
    %v5163 = vpop.f32.mrb[0].mxu0
    %v5164 = vadd.f32 0.0, %v5163
    %v5165 = vpop.f32.mrb[0].mxu0
    %5166 = vdwg.mxu0
    %v5168 = vsel %vm903, %v3950, 0
    %v5171 = vsel %vm903, %v3951, 0
    %5173 = vmatprep.subr.mxu0 0.0
    %5174 = vmatpush1.xpose.msra.mxu0 %v5168
    %5175 = vmatprep.subr.mxu0 0.0
    %5176 = vmatpush1.xpose.msra.mxu0 %v5171
    %5177 = vmatprep.subr.mxu0 0.0
    %5178 = vmatpush1.xpose.msra.mxu0 0.0
    %5179 = vmatprep.subr.mxu0 0.0
    %5180 = vmatpush1.xpose.msra.mxu0 0.0
    %5181 = vmatprep.subr.mxu0 0.0
    %5182 = vmatpush1.xpose.msra.mxu0 0.0
    %5183 = vmatprep.subr.mxu0 0.0
    %5184 = vmatpush1.xpose.msra.mxu0 0.0
    %5185 = vmatprep.subr.mxu0 0.0
    %5186 = vmatpush1.xpose.msra.mxu0 0.0
    %5187 = vmatprep.subr.mxu0 0.0
    %5188 = vmatpush1.xpose.msra.mxu0 0.0
    %5189 = vmatprep.subr.mxu0 0.0
    %5190 = vmatpush1.xpose.msra.mxu0 0.0
    %5191 = vmatprep.subr.mxu0 0.0
    %5192 = vmatpush1.xpose.msra.mxu0 0.0
    %5193 = vmatprep.subr.mxu0 0.0
    %5194 = vmatpush1.xpose.msra.mxu0 0.0
    %5195 = vmatprep.subr.mxu0 0.0
    %5196 = vmatpush1.xpose.msra.mxu0 0.0
    %5197 = vmatprep.subr.mxu0 0.0
    %5198 = vmatpush1.xpose.msra.mxu0 0.0
    %5199 = vmatprep.subr.mxu0 0.0
    %5200 = vmatpush1.xpose.msra.mxu0 0.0
    %5201 = vmatprep.subr.mxu0 0.0
    %5202 = vmatpush1.xpose.msra.mxu0 0.0
    %5203 = vmatprep.subr.mxu0 0.0
    %5204 = vmatpush1.xpose.msra.mxu0 0.0
    %5205 = vmatprep.subr.mxu0 0.0
    %5206 = vmatpush1.xpose.msra.mxu0 0.0
    %5207 = vmatprep.subr.mxu0 0.0
    %5208 = vmatpush1.xpose.msra.mxu0 0.0
    %5209 = vmatprep.subr.mxu0 0.0
    %5210 = vmatpush1.xpose.msra.mxu0 0.0
    %5211 = vmatprep.subr.mxu0 0.0
    %5212 = vmatpush1.xpose.msra.mxu0 0.0
    %5213 = vmatprep.subr.mxu0 0.0
    %5214 = vmatpush1.xpose.msra.mxu0 0.0
    %5215 = vmatprep.subr.mxu0 0.0
    %5216 = vmatpush1.xpose.msra.mxu0 0.0
    %5217 = vmatprep.subr.mxu0 0.0
    %5218 = vmatpush1.xpose.msra.mxu0 0.0
    %5219 = vmatprep.subr.mxu0 0.0
    %5220 = vmatpush1.xpose.msra.mxu0 0.0
    %5221 = vmatprep.subr.mxu0 0.0
    %5222 = vmatpush1.xpose.msra.mxu0 0.0
    %5223 = vmatprep.subr.mxu0 0.0
    %5224 = vmatpush1.xpose.msra.mxu0 0.0
    %5225 = vmatprep.subr.mxu0 0.0
    %5226 = vmatpush1.xpose.msra.mxu0 0.0
    %5227 = vmatprep.subr.mxu0 0.0
    %5228 = vmatpush1.xpose.msra.mxu0 0.0
    %5229 = vmatprep.subr.mxu0 0.0
    %5230 = vmatpush1.xpose.msra.mxu0 0.0
    %5231 = vmatprep.subr.mxu0 0.0
    %5232 = vmatpush1.xpose.msra.mxu0 0.0
    %5233 = vmatprep.subr.mxu0 0.0
    %5234 = vmatpush1.xpose.msra.mxu0 0.0
    %5235 = vmatprep.subr.mxu0 0.0
    %5236 = vmatpush1.xpose.msra.mxu0 0.0
    %5237 = vmatprep.mubr.f32.mxu0 0.0
    %5238 = vmatmul.mubr.f32.gmra.mrb[0].mxu0 %v2210
    %v5239 = vpop.f32.mrb[0].mxu0
    %v5240 = vadd.f32 0.0, %v5239
    %v5241 = vpop.f32.mrb[0].mxu0
    %5242 = vmatprep.mubr.f32.mxu0 0.0
    %5243 = vmatmul.mubr.f32.gmra.mrb[0].mxu0 %v2213
    %v5244 = vpop.f32.mrb[0].mxu0
    %v5245 = vadd.f32 0.0, %v5244
    %v5246 = vpop.f32.mrb[0].mxu0
    %5247 = vdwg.mxu0
    %v5248 = vsel 0, -3.4028235e+38, %v4025
    %v5249 = vsel 0, -3.4028235e+38, %v4030
    %v5250 = vsel 0, -3.4028235e+38, %v4106
    %v5251 = vsel 0, -3.4028235e+38, %v4111
    %v5252 = vsel 0, -3.4028235e+38, %v4187
    %v5253 = vsel 0, -3.4028235e+38, %v4192
    %v5254 = vsel 1, -3.4028235e+38, %v4268
    %v5255 = vsel 1, -3.4028235e+38, %v4273
    %v5256 = vsel 0, -3.4028235e+38, %v4349
    %v5257 = vsel 0, -3.4028235e+38, %v4354
    %v5258 = vsel 0, -3.4028235e+38, %v4430
    %v5259 = vsel 0, -3.4028235e+38, %v4435
    %v5260 = vsel 0, -3.4028235e+38, %v4511
    %v5261 = vsel 0, -3.4028235e+38, %v4516
    %v5262 = vsel 1, -3.4028235e+38, %v4592
    %v5263 = vsel 1, -3.4028235e+38, %v4597
    %v5264 = vsel 0, -3.4028235e+38, %v4673
    %v5265 = vsel 0, -3.4028235e+38, %v4678
    %v5266 = vsel 0, -3.4028235e+38, %v4754
    %v5267 = vsel 0, -3.4028235e+38, %v4759
    %v5268 = vsel 0, -3.4028235e+38, %v4835
    %v5269 = vsel 0, -3.4028235e+38, %v4840
    %v5270 = vsel 1, -3.4028235e+38, %v4916
    %v5271 = vsel 1, -3.4028235e+38, %v4921
    %v5272 = vsel 0, -3.4028235e+38, %v4997
    %v5273 = vsel 0, -3.4028235e+38, %v5002
    %v5274 = vsel 0, -3.4028235e+38, %v5078
    %v5275 = vsel 0, -3.4028235e+38, %v5083
    %v5276 = vsel 0, -3.4028235e+38, %v5159
    %v5277 = vsel 0, -3.4028235e+38, %v5164
    %v5278 = vsel 1, -3.4028235e+38, %v5240
    %v5279 = vsel 1, -3.4028235e+38, %v5245
    %v5280 = vsel %vm354, %v2296, -inf
    %5281 = vmax.xlane.f32.xlu0 %v5280
    %v5282 = vpop.xlane.xlu0 %5281
    %v5283 = vsel %vm354, %v2297, -inf
    %5284 = vmax.xlane.f32.xlu0 %v5283
    %v5285 = vpop.xlane.xlu0 %5284
    %v5286 = vsel %vm354, %v2298, -inf
    %5287 = vmax.xlane.f32.xlu0 %v5286
    %v5288 = vpop.xlane.xlu0 %5287
    %v5289 = vsel %vm354, %v2299, -inf
    %5290 = vmax.xlane.f32.xlu0 %v5289
    %v5291 = vpop.xlane.xlu0 %5290
    %v5292 = vsel %vm354, %v2300, -inf
    %5293 = vmax.xlane.f32.xlu0 %v5292
    %v5294 = vpop.xlane.xlu0 %5293
    %v5295 = vsel %vm354, %v2301, -inf
    %5296 = vmax.xlane.f32.xlu0 %v5295
    %v5297 = vpop.xlane.xlu0 %5296
    %v5298 = vsel %vm354, %v2302, -inf
    %5299 = vmax.xlane.f32.xlu0 %v5298
    %v5300 = vpop.xlane.xlu0 %5299
    %v5301 = vsel %vm354, %v2303, -inf
    %5302 = vmax.xlane.f32.xlu0 %v5301
    %v5303 = vpop.xlane.xlu0 %5302
    %v5304 = vsel %vm354, %v2304, -inf
    %5305 = vmax.xlane.f32.xlu0 %v5304
    %v5306 = vpop.xlane.xlu0 %5305
    %v5307 = vsel %vm354, %v2305, -inf
    %5308 = vmax.xlane.f32.xlu0 %v5307
    %v5309 = vpop.xlane.xlu0 %5308
    %v5310 = vsel %vm354, %v2306, -inf
    %5311 = vmax.xlane.f32.xlu0 %v5310
    %v5312 = vpop.xlane.xlu0 %5311
    %v5313 = vsel %vm354, %v2307, -inf
    %5314 = vmax.xlane.f32.xlu0 %v5313
    %v5315 = vpop.xlane.xlu0 %5314
    %v5316 = vsel %vm354, %v2308, -inf
    %5317 = vmax.xlane.f32.xlu0 %v5316
    %v5318 = vpop.xlane.xlu0 %5317
    %v5319 = vsel %vm354, %v2309, -inf
    %5320 = vmax.xlane.f32.xlu0 %v5319
    %v5321 = vpop.xlane.xlu0 %5320
    %v5322 = vsel %vm354, %v2310, -inf
    %5323 = vmax.xlane.f32.xlu0 %v5322
    %v5324 = vpop.xlane.xlu0 %5323
    %v5325 = vsel %vm354, %v2311, -inf
    %5326 = vmax.xlane.f32.xlu0 %v5325
    %v5327 = vpop.xlane.xlu0 %5326
    %v5328 = vsel %vm354, %v2312, -inf
    %5329 = vmax.xlane.f32.xlu0 %v5328
    %v5330 = vpop.xlane.xlu0 %5329
    %v5331 = vsel %vm354, %v2313, -inf
    %5332 = vmax.xlane.f32.xlu0 %v5331
    %v5333 = vpop.xlane.xlu0 %5332
    %v5334 = vsel %vm354, %v2314, -inf
    %5335 = vmax.xlane.f32.xlu0 %v5334
    %v5336 = vpop.xlane.xlu0 %5335
    %v5337 = vsel %vm354, %v2315, -inf
    %5338 = vmax.xlane.f32.xlu0 %v5337
    %v5339 = vpop.xlane.xlu0 %5338
    %v5340 = vsel %vm354, %v2316, -inf
    %5341 = vmax.xlane.f32.xlu0 %v5340
    %v5342 = vpop.xlane.xlu0 %5341
    %v5343 = vsel %vm354, %v2317, -inf
    %5344 = vmax.xlane.f32.xlu0 %v5343
    %v5345 = vpop.xlane.xlu0 %5344
    %v5346 = vsel %vm354, %v2318, -inf
    %5347 = vmax.xlane.f32.xlu0 %v5346
    %v5348 = vpop.xlane.xlu0 %5347
    %v5349 = vsel %vm354, %v2319, -inf
    %5350 = vmax.xlane.f32.xlu0 %v5349
    %v5351 = vpop.xlane.xlu0 %5350
    %v5352 = vsel %vm354, %v2320, -inf
    %5353 = vmax.xlane.f32.xlu0 %v5352
    %v5354 = vpop.xlane.xlu0 %5353
    %v5355 = vsel %vm354, %v2321, -inf
    %5356 = vmax.xlane.f32.xlu0 %v5355
    %v5357 = vpop.xlane.xlu0 %5356
    %v5358 = vsel %vm354, %v2322, -inf
    %5359 = vmax.xlane.f32.xlu0 %v5358
    %v5360 = vpop.xlane.xlu0 %5359
    %v5361 = vsel %vm354, %v2323, -inf
    %5362 = vmax.xlane.f32.xlu0 %v5361
    %v5363 = vpop.xlane.xlu0 %5362
    %v5364 = vsel %vm354, %v2324, -inf
    %5365 = vmax.xlane.f32.xlu0 %v5364
    %v5366 = vpop.xlane.xlu0 %5365
    %v5367 = vsel %vm354, %v2325, -inf
    %5368 = vmax.xlane.f32.xlu0 %v5367
    %v5369 = vpop.xlane.xlu0 %5368
    %v5370 = vsel %vm354, %v2326, -inf
    %5371 = vmax.xlane.f32.xlu0 %v5370
    %v5372 = vpop.xlane.xlu0 %5371
    %v5373 = vsel %vm354, %v2327, -inf
    %5374 = vmax.xlane.f32.xlu0 %v5373
    %v5375 = vpop.xlane.xlu0 %5374
    %v5376 = vsel %vm354, %v2565, -inf
    %5377 = vmax.xlane.f32.xlu0 %v5376
    %v5378 = vpop.xlane.xlu0 %5377
    %v5379 = vsel %vm354, %v2570, -inf
    %5380 = vmax.xlane.f32.xlu0 %v5379
    %v5381 = vpop.xlane.xlu0 %5380
    %v5382 = vsel %vm354, %v2646, -inf
    %5383 = vmax.xlane.f32.xlu0 %v5382
    %v5384 = vpop.xlane.xlu0 %5383
    %v5385 = vsel %vm354, %v2651, -inf
    %5386 = vmax.xlane.f32.xlu0 %v5385
    %v5387 = vpop.xlane.xlu0 %5386
    %v5388 = vsel %vm354, %v2727, -inf
    %5389 = vmax.xlane.f32.xlu0 %v5388
    %v5390 = vpop.xlane.xlu0 %5389
    %v5391 = vsel %vm354, %v2732, -inf
    %5392 = vmax.xlane.f32.xlu0 %v5391
    %v5393 = vpop.xlane.xlu0 %5392
    %v5394 = vsel %vm354, %v2808, -inf
    %5395 = vmax.xlane.f32.xlu0 %v5394
    %v5396 = vpop.xlane.xlu0 %5395
    %v5397 = vsel %vm354, %v2813, -inf
    %5398 = vmax.xlane.f32.xlu0 %v5397
    %v5399 = vpop.xlane.xlu0 %5398
    %v5400 = vsel %vm354, %v2889, -inf
    %5401 = vmax.xlane.f32.xlu0 %v5400
    %v5402 = vpop.xlane.xlu0 %5401
    %v5403 = vsel %vm354, %v2894, -inf
    %5404 = vmax.xlane.f32.xlu0 %v5403
    %v5405 = vpop.xlane.xlu0 %5404
    %v5406 = vsel %vm354, %v2970, -inf
    %5407 = vmax.xlane.f32.xlu0 %v5406
    %v5408 = vpop.xlane.xlu0 %5407
    %v5409 = vsel %vm354, %v2975, -inf
    %5410 = vmax.xlane.f32.xlu0 %v5409
    %v5411 = vpop.xlane.xlu0 %5410
    %v5412 = vsel %vm354, %v3051, -inf
    %5413 = vmax.xlane.f32.xlu0 %v5412
    %v5414 = vpop.xlane.xlu0 %5413
    %v5415 = vsel %vm354, %v3056, -inf
    %5416 = vmax.xlane.f32.xlu0 %v5415
    %v5417 = vpop.xlane.xlu0 %5416
    %v5418 = vsel %vm354, %v3132, -inf
    %5419 = vmax.xlane.f32.xlu0 %v5418
    %v5420 = vpop.xlane.xlu0 %5419
    %v5421 = vsel %vm354, %v3137, -inf
    %5422 = vmax.xlane.f32.xlu0 %v5421
    %v5423 = vpop.xlane.xlu0 %5422
    %v5424 = vsel %vm354, %v3213, -inf
    %5425 = vmax.xlane.f32.xlu0 %v5424
    %v5426 = vpop.xlane.xlu0 %5425
    %v5427 = vsel %vm354, %v3218, -inf
    %5428 = vmax.xlane.f32.xlu0 %v5427
    %v5429 = vpop.xlane.xlu0 %5428
    %v5430 = vsel %vm354, %v3294, -inf
    %5431 = vmax.xlane.f32.xlu0 %v5430
    %v5432 = vpop.xlane.xlu0 %5431
    %v5433 = vsel %vm354, %v3299, -inf
    %5434 = vmax.xlane.f32.xlu0 %v5433
    %v5435 = vpop.xlane.xlu0 %5434
    %v5436 = vsel %vm354, %v3375, -inf
    %5437 = vmax.xlane.f32.xlu0 %v5436
    %v5438 = vpop.xlane.xlu0 %5437
    %v5439 = vsel %vm354, %v3380, -inf
    %5440 = vmax.xlane.f32.xlu0 %v5439
    %v5441 = vpop.xlane.xlu0 %5440
    %v5442 = vsel %vm354, %v3456, -inf
    %5443 = vmax.xlane.f32.xlu0 %v5442
    %v5444 = vpop.xlane.xlu0 %5443
    %v5445 = vsel %vm354, %v3461, -inf
    %5446 = vmax.xlane.f32.xlu0 %v5445
    %v5447 = vpop.xlane.xlu0 %5446
    %v5448 = vsel %vm354, %v3537, -inf
    %5449 = vmax.xlane.f32.xlu0 %v5448
    %v5450 = vpop.xlane.xlu0 %5449
    %v5451 = vsel %vm354, %v3542, -inf
    %5452 = vmax.xlane.f32.xlu0 %v5451
    %v5453 = vpop.xlane.xlu0 %5452
    %v5454 = vsel %vm354, %v3618, -inf
    %5455 = vmax.xlane.f32.xlu0 %v5454
    %v5456 = vpop.xlane.xlu0 %5455
    %v5457 = vsel %vm354, %v3623, -inf
    %5458 = vmax.xlane.f32.xlu0 %v5457
    %v5459 = vpop.xlane.xlu0 %5458
    %v5460 = vsel %vm354, %v3699, -inf
    %5461 = vmax.xlane.f32.xlu0 %v5460
    %v5462 = vpop.xlane.xlu0 %5461
    %v5463 = vsel %vm354, %v3704, -inf
    %5464 = vmax.xlane.f32.xlu0 %v5463
    %v5465 = vpop.xlane.xlu0 %5464
    %v5466 = vsel %vm354, %v3780, -inf
    %5467 = vmax.xlane.f32.xlu0 %v5466
    %v5468 = vpop.xlane.xlu0 %5467
    %v5469 = vsel %vm354, %v3785, -inf
    %5470 = vmax.xlane.f32.xlu0 %v5469
    %v5471 = vpop.xlane.xlu0 %5470
    %v5472 = vmax.f32 %v5282, %v5378
    %v5473 = vmax.f32 %v5285, %v5381
    %v5474 = vmax.f32 %v5288, %v5384
    %v5475 = vmax.f32 %v5291, %v5387
    %v5476 = vmax.f32 %v5294, %v5390
    %v5477 = vmax.f32 %v5297, %v5393
    %v5478 = vmax.f32 %v5300, %v5396
    %v5479 = vmax.f32 %v5303, %v5399
    %v5480 = vmax.f32 %v5306, %v5402
    %v5481 = vmax.f32 %v5309, %v5405
    %v5482 = vmax.f32 %v5312, %v5408
    %v5483 = vmax.f32 %v5315, %v5411
    %v5484 = vmax.f32 %v5318, %v5414
    %v5485 = vmax.f32 %v5321, %v5417
    %v5486 = vmax.f32 %v5324, %v5420
    %v5487 = vmax.f32 %v5327, %v5423
    %v5488 = vmax.f32 %v5330, %v5426
    %v5489 = vmax.f32 %v5333, %v5429
    %v5490 = vmax.f32 %v5336, %v5432
    %v5491 = vmax.f32 %v5339, %v5435
    %v5492 = vmax.f32 %v5342, %v5438
    %v5493 = vmax.f32 %v5345, %v5441
    %v5494 = vmax.f32 %v5348, %v5444
    %v5495 = vmax.f32 %v5351, %v5447
    %v5496 = vmax.f32 %v5354, %v5450
    %v5497 = vmax.f32 %v5357, %v5453
    %v5498 = vmax.f32 %v5360, %v5456
    %v5499 = vmax.f32 %v5363, %v5459
    %v5500 = vmax.f32 %v5366, %v5462
    %v5501 = vmax.f32 %v5369, %v5465
    %v5502 = vmax.f32 %v5372, %v5468
    %v5503 = vmax.f32 %v5375, %v5471
    %v5504 = vsel %vm354, %v5248, -inf
    %5505 = vmax.xlane.f32.xlu0 %v5504
    %v5506 = vpop.xlane.xlu0 %5505
    %v5507 = vsel %vm354, %v5249, -inf
    %5508 = vmax.xlane.f32.xlu0 %v5507
    %v5509 = vpop.xlane.xlu0 %5508
    %v5510 = vsel %vm354, %v5250, -inf
    %5511 = vmax.xlane.f32.xlu0 %v5510
    %v5512 = vpop.xlane.xlu0 %5511
    %v5513 = vsel %vm354, %v5251, -inf
    %5514 = vmax.xlane.f32.xlu0 %v5513
    %v5515 = vpop.xlane.xlu0 %5514
    %v5516 = vsel %vm354, %v5252, -inf
    %5517 = vmax.xlane.f32.xlu0 %v5516
    %v5518 = vpop.xlane.xlu0 %5517
    %v5519 = vsel %vm354, %v5253, -inf
    %5520 = vmax.xlane.f32.xlu0 %v5519
    %v5521 = vpop.xlane.xlu0 %5520
    %v5522 = vsel %vm354, %v5254, -inf
    %5523 = vmax.xlane.f32.xlu0 %v5522
    %v5524 = vpop.xlane.xlu0 %5523
    %v5525 = vsel %vm354, %v5255, -inf
    %5526 = vmax.xlane.f32.xlu0 %v5525
    %v5527 = vpop.xlane.xlu0 %5526
    %v5528 = vsel %vm354, %v5256, -inf
    %5529 = vmax.xlane.f32.xlu0 %v5528
    %v5530 = vpop.xlane.xlu0 %5529
    %v5531 = vsel %vm354, %v5257, -inf
    %5532 = vmax.xlane.f32.xlu0 %v5531
    %v5533 = vpop.xlane.xlu0 %5532
    %v5534 = vsel %vm354, %v5258, -inf
    %5535 = vmax.xlane.f32.xlu0 %v5534
    %v5536 = vpop.xlane.xlu0 %5535
    %v5537 = vsel %vm354, %v5259, -inf
    %5538 = vmax.xlane.f32.xlu0 %v5537
    %v5539 = vpop.xlane.xlu0 %5538
    %v5540 = vsel %vm354, %v5260, -inf
    %5541 = vmax.xlane.f32.xlu0 %v5540
    %v5542 = vpop.xlane.xlu0 %5541
    %v5543 = vsel %vm354, %v5261, -inf
    %5544 = vmax.xlane.f32.xlu0 %v5543
    %v5545 = vpop.xlane.xlu0 %5544
    %v5546 = vsel %vm354, %v5262, -inf
    %5547 = vmax.xlane.f32.xlu0 %v5546
    %v5548 = vpop.xlane.xlu0 %5547
    %v5549 = vsel %vm354, %v5263, -inf
    %5550 = vmax.xlane.f32.xlu0 %v5549
    %v5551 = vpop.xlane.xlu0 %5550
    %v5552 = vsel %vm354, %v5264, -inf
    %5553 = vmax.xlane.f32.xlu0 %v5552
    %v5554 = vpop.xlane.xlu0 %5553
    %v5555 = vsel %vm354, %v5265, -inf
    %5556 = vmax.xlane.f32.xlu0 %v5555
    %v5557 = vpop.xlane.xlu0 %5556
    %v5558 = vsel %vm354, %v5266, -inf
    %5559 = vmax.xlane.f32.xlu0 %v5558
    %v5560 = vpop.xlane.xlu0 %5559
    %v5561 = vsel %vm354, %v5267, -inf
    %5562 = vmax.xlane.f32.xlu0 %v5561
    %v5563 = vpop.xlane.xlu0 %5562
    %v5564 = vsel %vm354, %v5268, -inf
    %5565 = vmax.xlane.f32.xlu0 %v5564
    %v5566 = vpop.xlane.xlu0 %5565
    %v5567 = vsel %vm354, %v5269, -inf
    %5568 = vmax.xlane.f32.xlu0 %v5567
    %v5569 = vpop.xlane.xlu0 %5568
    %v5570 = vsel %vm354, %v5270, -inf
    %5571 = vmax.xlane.f32.xlu0 %v5570
    %v5572 = vpop.xlane.xlu0 %5571
    %v5573 = vsel %vm354, %v5271, -inf
    %5574 = vmax.xlane.f32.xlu0 %v5573
    %v5575 = vpop.xlane.xlu0 %5574
    %v5576 = vsel %vm354, %v5272, -inf
    %5577 = vmax.xlane.f32.xlu0 %v5576
    %v5578 = vpop.xlane.xlu0 %5577
    %v5579 = vsel %vm354, %v5273, -inf
    %5580 = vmax.xlane.f32.xlu0 %v5579
    %v5581 = vpop.xlane.xlu0 %5580
    %v5582 = vsel %vm354, %v5274, -inf
    %5583 = vmax.xlane.f32.xlu0 %v5582
    %v5584 = vpop.xlane.xlu0 %5583
    %v5585 = vsel %vm354, %v5275, -inf
    %5586 = vmax.xlane.f32.xlu0 %v5585
    %v5587 = vpop.xlane.xlu0 %5586
    %v5588 = vsel %vm354, %v5276, -inf
    %5589 = vmax.xlane.f32.xlu0 %v5588
    %v5590 = vpop.xlane.xlu0 %5589
    %v5591 = vsel %vm354, %v5277, -inf
    %5592 = vmax.xlane.f32.xlu0 %v5591
    %v5593 = vpop.xlane.xlu0 %5592
    %v5594 = vsel %vm354, %v5278, -inf
    %5595 = vmax.xlane.f32.xlu0 %v5594
    %v5596 = vpop.xlane.xlu0 %5595
    %v5597 = vsel %vm354, %v5279, -inf
    %5598 = vmax.xlane.f32.xlu0 %v5597
    %v5599 = vpop.xlane.xlu0 %5598
    %v5600 = vmax.f32 %v5472, %v5506
    %v5601 = vmax.f32 %v5473, %v5509
    %v5602 = vmax.f32 %v5474, %v5512
    %v5603 = vmax.f32 %v5475, %v5515
    %v5604 = vmax.f32 %v5476, %v5518
    %v5605 = vmax.f32 %v5477, %v5521
    %v5606 = vmax.f32 %v5478, %v5524
    %v5607 = vmax.f32 %v5479, %v5527
    %v5608 = vmax.f32 %v5480, %v5530
    %v5609 = vmax.f32 %v5481, %v5533
    %v5610 = vmax.f32 %v5482, %v5536
    %v5611 = vmax.f32 %v5483, %v5539
    %v5612 = vmax.f32 %v5484, %v5542
    %v5613 = vmax.f32 %v5485, %v5545
    %v5614 = vmax.f32 %v5486, %v5548
    %v5615 = vmax.f32 %v5487, %v5551
    %v5616 = vmax.f32 %v5488, %v5554
    %v5617 = vmax.f32 %v5489, %v5557
    %v5618 = vmax.f32 %v5490, %v5560
    %v5619 = vmax.f32 %v5491, %v5563
    %v5620 = vmax.f32 %v5492, %v5566
    %v5621 = vmax.f32 %v5493, %v5569
    %v5622 = vmax.f32 %v5494, %v5572
    %v5623 = vmax.f32 %v5495, %v5575
    %v5624 = vmax.f32 %v5496, %v5578
    %v5625 = vmax.f32 %v5497, %v5581
    %v5626 = vmax.f32 %v5498, %v5584
    %v5627 = vmax.f32 %v5499, %v5587
    %v5628 = vmax.f32 %v5500, %v5590
    %v5629 = vmax.f32 %v5501, %v5593
    %v5630 = vmax.f32 %v5502, %v5596
    %v5631 = vmax.f32 %v5503, %v5599
    %v5632 = vsub.f32 %v2296, %v5600
    %v5633 = vsub.f32 %v2297, %v5601
    %v5634 = vsub.f32 %v2298, %v5602
    %v5635 = vsub.f32 %v2299, %v5603
    %v5636 = vsub.f32 %v2300, %v5604
    %v5637 = vsub.f32 %v2301, %v5605
    %v5638 = vsub.f32 %v2302, %v5606
    %v5639 = vsub.f32 %v2303, %v5607
    %v5640 = vsub.f32 %v2304, %v5608
    %v5641 = vsub.f32 %v2305, %v5609
    %v5642 = vsub.f32 %v2306, %v5610
    %v5643 = vsub.f32 %v2307, %v5611
    %v5644 = vsub.f32 %v2308, %v5612
    %v5645 = vsub.f32 %v2309, %v5613
    %v5646 = vsub.f32 %v2310, %v5614
    %v5647 = vsub.f32 %v2311, %v5615
    %v5648 = vsub.f32 %v2312, %v5616
    %v5649 = vsub.f32 %v2313, %v5617
    %v5650 = vsub.f32 %v2314, %v5618
    %v5651 = vsub.f32 %v2315, %v5619
    %v5652 = vsub.f32 %v2316, %v5620
    %v5653 = vsub.f32 %v2317, %v5621
    %v5654 = vsub.f32 %v2318, %v5622
    %v5655 = vsub.f32 %v2319, %v5623
    %v5656 = vsub.f32 %v2320, %v5624
    %v5657 = vsub.f32 %v2321, %v5625
    %v5658 = vsub.f32 %v2322, %v5626
    %v5659 = vsub.f32 %v2323, %v5627
    %v5660 = vsub.f32 %v2324, %v5628
    %v5661 = vsub.f32 %v2325, %v5629
    %v5662 = vsub.f32 %v2326, %v5630
    %v5663 = vsub.f32 %v2327, %v5631
    %v5664 = vmul.f32 %v5632, 1.442695
    %v5665 = vpow.pop %v5664
    %v5666 = vmul.f32 %v5633, 1.442695
    %v5667 = vpow.pop %v5666
    %v5668 = vmul.f32 %v5634, 1.442695
    %v5669 = vpow.pop %v5668
    %v5670 = vmul.f32 %v5635, 1.442695
    %v5671 = vpow.pop %v5670
    %v5672 = vmul.f32 %v5636, 1.442695
    %v5673 = vpow.pop %v5672
    %v5674 = vmul.f32 %v5637, 1.442695
    %v5675 = vpow.pop %v5674
    %v5676 = vmul.f32 %v5638, 1.442695
    %v5677 = vpow.pop %v5676
    %v5678 = vmul.f32 %v5639, 1.442695
    %v5679 = vpow.pop %v5678
    %v5680 = vmul.f32 %v5640, 1.442695
    %v5681 = vpow.pop %v5680
    %v5682 = vmul.f32 %v5641, 1.442695
    %v5683 = vpow.pop %v5682
    %v5684 = vmul.f32 %v5642, 1.442695
    %v5685 = vpow.pop %v5684
    %v5686 = vmul.f32 %v5643, 1.442695
    %v5687 = vpow.pop %v5686
    %v5688 = vmul.f32 %v5644, 1.442695
    %v5689 = vpow.pop %v5688
    %v5690 = vmul.f32 %v5645, 1.442695
    %v5691 = vpow.pop %v5690
    %v5692 = vmul.f32 %v5646, 1.442695
    %v5693 = vpow.pop %v5692
    %v5694 = vmul.f32 %v5647, 1.442695
    %v5695 = vpow.pop %v5694
    %v5696 = vmul.f32 %v5648, 1.442695
    %v5697 = vpow.pop %v5696
    %v5698 = vmul.f32 %v5649, 1.442695
    %v5699 = vpow.pop %v5698
    %v5700 = vmul.f32 %v5650, 1.442695
    %v5701 = vpow.pop %v5700
    %v5702 = vmul.f32 %v5651, 1.442695
    %v5703 = vpow.pop %v5702
    %v5704 = vmul.f32 %v5652, 1.442695
    %v5705 = vpow.pop %v5704
    %v5706 = vmul.f32 %v5653, 1.442695
    %v5707 = vpow.pop %v5706
    %v5708 = vmul.f32 %v5654, 1.442695
    %v5709 = vpow.pop %v5708
    %v5710 = vmul.f32 %v5655, 1.442695
    %v5711 = vpow.pop %v5710
    %v5712 = vmul.f32 %v5656, 1.442695
    %v5713 = vpow.pop %v5712
    %v5714 = vmul.f32 %v5657, 1.442695
    %v5715 = vpow.pop %v5714
    %v5716 = vmul.f32 %v5658, 1.442695
    %v5717 = vpow.pop %v5716
    %v5718 = vmul.f32 %v5659, 1.442695
    %v5719 = vpow.pop %v5718
    %v5720 = vmul.f32 %v5660, 1.442695
    %v5721 = vpow.pop %v5720
    %v5722 = vmul.f32 %v5661, 1.442695
    %v5723 = vpow.pop %v5722
    %v5724 = vmul.f32 %v5662, 1.442695
    %v5725 = vpow.pop %v5724
    %v5726 = vmul.f32 %v5663, 1.442695
    %v5727 = vpow.pop %v5726
    %v5728 = vsel %vm354, %v5665, 0.0
    %5729 = vadd.xlane.f32.xlu0 %v5728
    %v5730 = vpop.xlane.xlu0 %5729
    %v5731 = vsel %vm354, %v5667, 0.0
    %5732 = vadd.xlane.f32.xlu0 %v5731
    %v5733 = vpop.xlane.xlu0 %5732
    %v5734 = vsel %vm354, %v5669, 0.0
    %5735 = vadd.xlane.f32.xlu0 %v5734
    %v5736 = vpop.xlane.xlu0 %5735
    %v5737 = vsel %vm354, %v5671, 0.0
    %5738 = vadd.xlane.f32.xlu0 %v5737
    %v5739 = vpop.xlane.xlu0 %5738
    %v5740 = vsel %vm354, %v5673, 0.0
    %5741 = vadd.xlane.f32.xlu0 %v5740
    %v5742 = vpop.xlane.xlu0 %5741
    %v5743 = vsel %vm354, %v5675, 0.0
    %5744 = vadd.xlane.f32.xlu0 %v5743
    %v5745 = vpop.xlane.xlu0 %5744
    %v5746 = vsel %vm354, %v5677, 0.0
    %5747 = vadd.xlane.f32.xlu0 %v5746
    %v5748 = vpop.xlane.xlu0 %5747
    %v5749 = vsel %vm354, %v5679, 0.0
    %5750 = vadd.xlane.f32.xlu0 %v5749
    %v5751 = vpop.xlane.xlu0 %5750
    %v5752 = vsel %vm354, %v5681, 0.0
    %5753 = vadd.xlane.f32.xlu0 %v5752
    %v5754 = vpop.xlane.xlu0 %5753
    %v5755 = vsel %vm354, %v5683, 0.0
    %5756 = vadd.xlane.f32.xlu0 %v5755
    %v5757 = vpop.xlane.xlu0 %5756
    %v5758 = vsel %vm354, %v5685, 0.0
    %5759 = vadd.xlane.f32.xlu0 %v5758
    %v5760 = vpop.xlane.xlu0 %5759
    %v5761 = vsel %vm354, %v5687, 0.0
    %5762 = vadd.xlane.f32.xlu0 %v5761
    %v5763 = vpop.xlane.xlu0 %5762
    %v5764 = vsel %vm354, %v5689, 0.0
    %5765 = vadd.xlane.f32.xlu0 %v5764
    %v5766 = vpop.xlane.xlu0 %5765
    %v5767 = vsel %vm354, %v5691, 0.0
    %5768 = vadd.xlane.f32.xlu0 %v5767
    %v5769 = vpop.xlane.xlu0 %5768
    %v5770 = vsel %vm354, %v5693, 0.0
    %5771 = vadd.xlane.f32.xlu0 %v5770
    %v5772 = vpop.xlane.xlu0 %5771
    %v5773 = vsel %vm354, %v5695, 0.0
    %5774 = vadd.xlane.f32.xlu0 %v5773
    %v5775 = vpop.xlane.xlu0 %5774
    %v5776 = vsel %vm354, %v5697, 0.0
    %5777 = vadd.xlane.f32.xlu0 %v5776
    %v5778 = vpop.xlane.xlu0 %5777
    %v5779 = vsel %vm354, %v5699, 0.0
    %5780 = vadd.xlane.f32.xlu0 %v5779
    %v5781 = vpop.xlane.xlu0 %5780
    %v5782 = vsel %vm354, %v5701, 0.0
    %5783 = vadd.xlane.f32.xlu0 %v5782
    %v5784 = vpop.xlane.xlu0 %5783
    %v5785 = vsel %vm354, %v5703, 0.0
    %5786 = vadd.xlane.f32.xlu0 %v5785
    %v5787 = vpop.xlane.xlu0 %5786
    %v5788 = vsel %vm354, %v5705, 0.0
    %5789 = vadd.xlane.f32.xlu0 %v5788
    %v5790 = vpop.xlane.xlu0 %5789
    %v5791 = vsel %vm354, %v5707, 0.0
    %5792 = vadd.xlane.f32.xlu0 %v5791
    %v5793 = vpop.xlane.xlu0 %5792
    %v5794 = vsel %vm354, %v5709, 0.0
    %5795 = vadd.xlane.f32.xlu0 %v5794
    %v5796 = vpop.xlane.xlu0 %5795
    %v5797 = vsel %vm354, %v5711, 0.0
    %5798 = vadd.xlane.f32.xlu0 %v5797
    %v5799 = vpop.xlane.xlu0 %5798
    %v5800 = vsel %vm354, %v5713, 0.0
    %5801 = vadd.xlane.f32.xlu0 %v5800
    %v5802 = vpop.xlane.xlu0 %5801
    %v5803 = vsel %vm354, %v5715, 0.0
    %5804 = vadd.xlane.f32.xlu0 %v5803
    %v5805 = vpop.xlane.xlu0 %5804
    %v5806 = vsel %vm354, %v5717, 0.0
    %5807 = vadd.xlane.f32.xlu0 %v5806
    %v5808 = vpop.xlane.xlu0 %5807
    %v5809 = vsel %vm354, %v5719, 0.0
    %5810 = vadd.xlane.f32.xlu0 %v5809
    %v5811 = vpop.xlane.xlu0 %5810
    %v5812 = vsel %vm354, %v5721, 0.0
    %5813 = vadd.xlane.f32.xlu0 %v5812
    %v5814 = vpop.xlane.xlu0 %5813
    %v5815 = vsel %vm354, %v5723, 0.0
    %5816 = vadd.xlane.f32.xlu0 %v5815
    %v5817 = vpop.xlane.xlu0 %5816
    %v5818 = vsel %vm354, %v5725, 0.0
    %5819 = vadd.xlane.f32.xlu0 %v5818
    %v5820 = vpop.xlane.xlu0 %5819
    %v5821 = vsel %vm354, %v5727, 0.0
    %5822 = vadd.xlane.f32.xlu0 %v5821
    %v5823 = vpop.xlane.xlu0 %5822
    %v5824 = vsub.f32 %v2565, %v5600
    %v5825 = vsub.f32 %v2570, %v5601
    %v5826 = vsub.f32 %v2646, %v5602
    %v5827 = vsub.f32 %v2651, %v5603
    %v5828 = vsub.f32 %v2727, %v5604
    %v5829 = vsub.f32 %v2732, %v5605
    %v5830 = vsub.f32 %v2808, %v5606
    %v5831 = vsub.f32 %v2813, %v5607
    %v5832 = vsub.f32 %v2889, %v5608
    %v5833 = vsub.f32 %v2894, %v5609
    %v5834 = vsub.f32 %v2970, %v5610
    %v5835 = vsub.f32 %v2975, %v5611
    %v5836 = vsub.f32 %v3051, %v5612
    %v5837 = vsub.f32 %v3056, %v5613
    %v5838 = vsub.f32 %v3132, %v5614
    %v5839 = vsub.f32 %v3137, %v5615
    %v5840 = vsub.f32 %v3213, %v5616
    %v5841 = vsub.f32 %v3218, %v5617
    %v5842 = vsub.f32 %v3294, %v5618
    %v5843 = vsub.f32 %v3299, %v5619
    %v5844 = vsub.f32 %v3375, %v5620
    %v5845 = vsub.f32 %v3380, %v5621
    %v5846 = vsub.f32 %v3456, %v5622
    %v5847 = vsub.f32 %v3461, %v5623
    %v5848 = vsub.f32 %v3537, %v5624
    %v5849 = vsub.f32 %v3542, %v5625
    %v5850 = vsub.f32 %v3618, %v5626
    %v5851 = vsub.f32 %v3623, %v5627
    %v5852 = vsub.f32 %v3699, %v5628
    %v5853 = vsub.f32 %v3704, %v5629
    %v5854 = vsub.f32 %v3780, %v5630
    %v5855 = vsub.f32 %v3785, %v5631
    %v5856 = vmul.f32 %v5824, 1.442695
    %v5857 = vpow.pop %v5856
    %v5858 = vmul.f32 %v5825, 1.442695
    %v5859 = vpow.pop %v5858
    %v5860 = vmul.f32 %v5826, 1.442695
    %v5861 = vpow.pop %v5860
    %v5862 = vmul.f32 %v5827, 1.442695
    %v5863 = vpow.pop %v5862
    %v5864 = vmul.f32 %v5828, 1.442695
    %v5865 = vpow.pop %v5864
    %v5866 = vmul.f32 %v5829, 1.442695
    %v5867 = vpow.pop %v5866
    %v5868 = vmul.f32 %v5830, 1.442695
    %v5869 = vpow.pop %v5868
    %v5870 = vmul.f32 %v5831, 1.442695
    %v5871 = vpow.pop %v5870
    %v5872 = vmul.f32 %v5832, 1.442695
    %v5873 = vpow.pop %v5872
    %v5874 = vmul.f32 %v5833, 1.442695
    %v5875 = vpow.pop %v5874
    %v5876 = vmul.f32 %v5834, 1.442695
    %v5877 = vpow.pop %v5876
    %v5878 = vmul.f32 %v5835, 1.442695
    %v5879 = vpow.pop %v5878
    %v5880 = vmul.f32 %v5836, 1.442695
    %v5881 = vpow.pop %v5880
    %v5882 = vmul.f32 %v5837, 1.442695
    %v5883 = vpow.pop %v5882
    %v5884 = vmul.f32 %v5838, 1.442695
    %v5885 = vpow.pop %v5884
    %v5886 = vmul.f32 %v5839, 1.442695
    %v5887 = vpow.pop %v5886
    %v5888 = vmul.f32 %v5840, 1.442695
    %v5889 = vpow.pop %v5888
    %v5890 = vmul.f32 %v5841, 1.442695
    %v5891 = vpow.pop %v5890
    %v5892 = vmul.f32 %v5842, 1.442695
    %v5893 = vpow.pop %v5892
    %v5894 = vmul.f32 %v5843, 1.442695
    %v5895 = vpow.pop %v5894
    %v5896 = vmul.f32 %v5844, 1.442695
    %v5897 = vpow.pop %v5896
    %v5898 = vmul.f32 %v5845, 1.442695
    %v5899 = vpow.pop %v5898
    %v5900 = vmul.f32 %v5846, 1.442695
    %v5901 = vpow.pop %v5900
    %v5902 = vmul.f32 %v5847, 1.442695
    %v5903 = vpow.pop %v5902
    %v5904 = vmul.f32 %v5848, 1.442695
    %v5905 = vpow.pop %v5904
    %v5906 = vmul.f32 %v5849, 1.442695
    %v5907 = vpow.pop %v5906
    %v5908 = vmul.f32 %v5850, 1.442695
    %v5909 = vpow.pop %v5908
    %v5910 = vmul.f32 %v5851, 1.442695
    %v5911 = vpow.pop %v5910
    %v5912 = vmul.f32 %v5852, 1.442695
    %v5913 = vpow.pop %v5912
    %v5914 = vmul.f32 %v5853, 1.442695
    %v5915 = vpow.pop %v5914
    %v5916 = vmul.f32 %v5854, 1.442695
    %v5917 = vpow.pop %v5916
    %v5918 = vmul.f32 %v5855, 1.442695
    %v5919 = vpow.pop %v5918
    %v5920 = vsel %vm354, %v5857, 0.0
    %5921 = vadd.xlane.f32.xlu0 %v5920
    %v5922 = vpop.xlane.xlu0 %5921
    %v5923 = vsel %vm354, %v5859, 0.0
    %5924 = vadd.xlane.f32.xlu0 %v5923
    %v5925 = vpop.xlane.xlu0 %5924
    %v5926 = vsel %vm354, %v5861, 0.0
    %5927 = vadd.xlane.f32.xlu0 %v5926
    %v5928 = vpop.xlane.xlu0 %5927
    %v5929 = vsel %vm354, %v5863, 0.0
    %5930 = vadd.xlane.f32.xlu0 %v5929
    %v5931 = vpop.xlane.xlu0 %5930
    %v5932 = vsel %vm354, %v5865, 0.0
    %5933 = vadd.xlane.f32.xlu0 %v5932
    %v5934 = vpop.xlane.xlu0 %5933
    %v5935 = vsel %vm354, %v5867, 0.0
    %5936 = vadd.xlane.f32.xlu0 %v5935
    %v5937 = vpop.xlane.xlu0 %5936
    %v5938 = vsel %vm354, %v5869, 0.0
    %5939 = vadd.xlane.f32.xlu0 %v5938
    %v5940 = vpop.xlane.xlu0 %5939
    %v5941 = vsel %vm354, %v5871, 0.0
    %5942 = vadd.xlane.f32.xlu0 %v5941
    %v5943 = vpop.xlane.xlu0 %5942
    %v5944 = vsel %vm354, %v5873, 0.0
    %5945 = vadd.xlane.f32.xlu0 %v5944
    %v5946 = vpop.xlane.xlu0 %5945
    %v5947 = vsel %vm354, %v5875, 0.0
    %5948 = vadd.xlane.f32.xlu0 %v5947
    %v5949 = vpop.xlane.xlu0 %5948
    %v5950 = vsel %vm354, %v5877, 0.0
    %5951 = vadd.xlane.f32.xlu0 %v5950
    %v5952 = vpop.xlane.xlu0 %5951
    %v5953 = vsel %vm354, %v5879, 0.0
    %5954 = vadd.xlane.f32.xlu0 %v5953
    %v5955 = vpop.xlane.xlu0 %5954
    %v5956 = vsel %vm354, %v5881, 0.0
    %5957 = vadd.xlane.f32.xlu0 %v5956
    %v5958 = vpop.xlane.xlu0 %5957
    %v5959 = vsel %vm354, %v5883, 0.0
    %5960 = vadd.xlane.f32.xlu0 %v5959
    %v5961 = vpop.xlane.xlu0 %5960
    %v5962 = vsel %vm354, %v5885, 0.0
    %5963 = vadd.xlane.f32.xlu0 %v5962
    %v5964 = vpop.xlane.xlu0 %5963
    %v5965 = vsel %vm354, %v5887, 0.0
    %5966 = vadd.xlane.f32.xlu0 %v5965
    %v5967 = vpop.xlane.xlu0 %5966
    %v5968 = vsel %vm354, %v5889, 0.0
    %5969 = vadd.xlane.f32.xlu0 %v5968
    %v5970 = vpop.xlane.xlu0 %5969
    %v5971 = vsel %vm354, %v5891, 0.0
    %5972 = vadd.xlane.f32.xlu0 %v5971
    %v5973 = vpop.xlane.xlu0 %5972
    %v5974 = vsel %vm354, %v5893, 0.0
    %5975 = vadd.xlane.f32.xlu0 %v5974
    %v5976 = vpop.xlane.xlu0 %5975
    %v5977 = vsel %vm354, %v5895, 0.0
    %5978 = vadd.xlane.f32.xlu0 %v5977
    %v5979 = vpop.xlane.xlu0 %5978
    %v5980 = vsel %vm354, %v5897, 0.0
    %5981 = vadd.xlane.f32.xlu0 %v5980
    %v5982 = vpop.xlane.xlu0 %5981
    %v5983 = vsel %vm354, %v5899, 0.0
    %5984 = vadd.xlane.f32.xlu0 %v5983
    %v5985 = vpop.xlane.xlu0 %5984
    %v5986 = vsel %vm354, %v5901, 0.0
    %5987 = vadd.xlane.f32.xlu0 %v5986
    %v5988 = vpop.xlane.xlu0 %5987
    %v5989 = vsel %vm354, %v5903, 0.0
    %5990 = vadd.xlane.f32.xlu0 %v5989
    %v5991 = vpop.xlane.xlu0 %5990
    %v5992 = vsel %vm354, %v5905, 0.0
    %5993 = vadd.xlane.f32.xlu0 %v5992
    %v5994 = vpop.xlane.xlu0 %5993
    %v5995 = vsel %vm354, %v5907, 0.0
    %5996 = vadd.xlane.f32.xlu0 %v5995
    %v5997 = vpop.xlane.xlu0 %5996
    %v5998 = vsel %vm354, %v5909, 0.0
    %5999 = vadd.xlane.f32.xlu0 %v5998
    %v6000 = vpop.xlane.xlu0 %5999
    %v6001 = vsel %vm354, %v5911, 0.0
    %6002 = vadd.xlane.f32.xlu0 %v6001
    %v6003 = vpop.xlane.xlu0 %6002
    %v6004 = vsel %vm354, %v5913, 0.0
    %6005 = vadd.xlane.f32.xlu0 %v6004
    %v6006 = vpop.xlane.xlu0 %6005
    %v6007 = vsel %vm354, %v5915, 0.0
    %6008 = vadd.xlane.f32.xlu0 %v6007
    %v6009 = vpop.xlane.xlu0 %6008
    %v6010 = vsel %vm354, %v5917, 0.0
    %6011 = vadd.xlane.f32.xlu0 %v6010
    %v6012 = vpop.xlane.xlu0 %6011
    %v6013 = vsel %vm354, %v5919, 0.0
    %6014 = vadd.xlane.f32.xlu0 %v6013
    %v6015 = vpop.xlane.xlu0 %6014
    %v6016 = vadd.f32 %v5730, %v5922
    %v6017 = vadd.f32 %v5733, %v5925
    %v6018 = vadd.f32 %v5736, %v5928
    %v6019 = vadd.f32 %v5739, %v5931
    %v6020 = vadd.f32 %v5742, %v5934
    %v6021 = vadd.f32 %v5745, %v5937
    %v6022 = vadd.f32 %v5748, %v5940
    %v6023 = vadd.f32 %v5751, %v5943
    %v6024 = vadd.f32 %v5754, %v5946
    %v6025 = vadd.f32 %v5757, %v5949
    %v6026 = vadd.f32 %v5760, %v5952
    %v6027 = vadd.f32 %v5763, %v5955
    %v6028 = vadd.f32 %v5766, %v5958
    %v6029 = vadd.f32 %v5769, %v5961
    %v6030 = vadd.f32 %v5772, %v5964
    %v6031 = vadd.f32 %v5775, %v5967
    %v6032 = vadd.f32 %v5778, %v5970
    %v6033 = vadd.f32 %v5781, %v5973
    %v6034 = vadd.f32 %v5784, %v5976
    %v6035 = vadd.f32 %v5787, %v5979
    %v6036 = vadd.f32 %v5790, %v5982
    %v6037 = vadd.f32 %v5793, %v5985
    %v6038 = vadd.f32 %v5796, %v5988
    %v6039 = vadd.f32 %v5799, %v5991
    %v6040 = vadd.f32 %v5802, %v5994
    %v6041 = vadd.f32 %v5805, %v5997
    %v6042 = vadd.f32 %v5808, %v6000
    %v6043 = vadd.f32 %v5811, %v6003
    %v6044 = vadd.f32 %v5814, %v6006
    %v6045 = vadd.f32 %v5817, %v6009
    %v6046 = vadd.f32 %v5820, %v6012
    %v6047 = vadd.f32 %v5823, %v6015
    %v6049 = vsel %vm354, %v5857, 0
    %v6052 = vsel %vm354, %v5859, 0
    %6054 = vmatprep.subr.mxu0 0.0
    %6055 = vmatpush1.msra.mxu0 %v501
    %6056 = vmatprep.subr.mxu0 0.0
    %6057 = vmatpush1.msra.mxu0 %v502
    %6058 = vmatprep.subr.mxu0 0.0
    %6059 = vmatpush1.msra.mxu0 0.0
    %6060 = vmatprep.subr.mxu0 0.0
    %6061 = vmatpush1.msra.mxu0 0.0
    %6062 = vmatprep.subr.mxu0 0.0
    %6063 = vmatpush1.msra.mxu0 0.0
    %6064 = vmatprep.subr.mxu0 0.0
    %6065 = vmatpush1.msra.mxu0 0.0
    %6066 = vmatprep.subr.mxu0 0.0
    %6067 = vmatpush1.msra.mxu0 0.0
    %6068 = vmatprep.subr.mxu0 0.0
    %6069 = vmatpush1.msra.mxu0 0.0
    %6070 = vmatprep.subr.mxu0 0.0
    %6071 = vmatpush1.msra.mxu0 0.0
    %6072 = vmatprep.subr.mxu0 0.0
    %6073 = vmatpush1.msra.mxu0 0.0
    %6074 = vmatprep.subr.mxu0 0.0
    %6075 = vmatpush1.msra.mxu0 0.0
    %6076 = vmatprep.subr.mxu0 0.0
    %6077 = vmatpush1.msra.mxu0 0.0
    %6078 = vmatprep.subr.mxu0 0.0
    %6079 = vmatpush1.msra.mxu0 0.0
    %6080 = vmatprep.subr.mxu0 0.0
    %6081 = vmatpush1.msra.mxu0 0.0
    %6082 = vmatprep.subr.mxu0 0.0
    %6083 = vmatpush1.msra.mxu0 0.0
    %6084 = vmatprep.subr.mxu0 0.0
    %6085 = vmatpush1.msra.mxu0 0.0
    %6086 = vmatprep.subr.mxu0 0.0
    %6087 = vmatpush1.msra.mxu0 0.0
    %6088 = vmatprep.subr.mxu0 0.0
    %6089 = vmatpush1.msra.mxu0 0.0
    %6090 = vmatprep.subr.mxu0 0.0
    %6091 = vmatpush1.msra.mxu0 0.0
    %6092 = vmatprep.subr.mxu0 0.0
    %6093 = vmatpush1.msra.mxu0 0.0
    %6094 = vmatprep.subr.mxu0 0.0
    %6095 = vmatpush1.msra.mxu0 0.0
    %6096 = vmatprep.subr.mxu0 0.0
    %6097 = vmatpush1.msra.mxu0 0.0
    %6098 = vmatprep.subr.mxu0 0.0
    %6099 = vmatpush1.msra.mxu0 0.0
    %6100 = vmatprep.subr.mxu0 0.0
    %6101 = vmatpush1.msra.mxu0 0.0
    %6102 = vmatprep.subr.mxu0 0.0
    %6103 = vmatpush1.msra.mxu0 0.0
    %6104 = vmatprep.subr.mxu0 0.0
    %6105 = vmatpush1.msra.mxu0 0.0
    %6106 = vmatprep.subr.mxu0 0.0
    %6107 = vmatpush1.msra.mxu0 0.0
    %6108 = vmatprep.subr.mxu0 0.0
    %6109 = vmatpush1.msra.mxu0 0.0
    %6110 = vmatprep.subr.mxu0 0.0
    %6111 = vmatpush1.msra.mxu0 0.0
    %6112 = vmatprep.subr.mxu0 0.0
    %6113 = vmatpush1.msra.mxu0 0.0
    %6114 = vmatprep.subr.mxu0 0.0
    %6115 = vmatpush1.msra.mxu0 0.0
    %6116 = vmatprep.subr.mxu0 0.0
    %6117 = vmatpush1.msra.mxu0 0.0
    %6118 = vmatprep.mubr.f32.mxu0 0.0
    %6119 = vmatmul.mubr.f32.gmra.mrb[0].mxu0 %v6049
    %v6120 = vpop.f32.mrb[0].mxu0
    %v6121 = vadd.f32 0.0, %v6120
    %v6122 = vpop.f32.mrb[0].mxu0
    %6123 = vmatprep.mubr.f32.mxu0 0.0
    %6124 = vmatmul.mubr.f32.gmra.mrb[0].mxu0 %v6052
    %v6125 = vpop.f32.mrb[0].mxu0
    %v6126 = vadd.f32 0.0, %v6125
    %v6127 = vpop.f32.mrb[0].mxu0
    %6128 = vdwg.mxu0
    %v6130 = vsel %vm354, %v5861, 0
    %v6133 = vsel %vm354, %v5863, 0
    %6135 = vmatprep.subr.mxu0 0.0
    %6136 = vmatpush1.msra.mxu0 %v503
    %6137 = vmatprep.subr.mxu0 0.0
    %6138 = vmatpush1.msra.mxu0 %v504
    %6139 = vmatprep.subr.mxu0 0.0
    %6140 = vmatpush1.msra.mxu0 0.0
    %6141 = vmatprep.subr.mxu0 0.0
    %6142 = vmatpush1.msra.mxu0 0.0
    %6143 = vmatprep.subr.mxu0 0.0
    %6144 = vmatpush1.msra.mxu0 0.0
    %6145 = vmatprep.subr.mxu0 0.0
    %6146 = vmatpush1.msra.mxu0 0.0
    %6147 = vmatprep.subr.mxu0 0.0
    %6148 = vmatpush1.msra.mxu0 0.0
    %6149 = vmatprep.subr.mxu0 0.0
    %6150 = vmatpush1.msra.mxu0 0.0
    %6151 = vmatprep.subr.mxu0 0.0
    %6152 = vmatpush1.msra.mxu0 0.0
    %6153 = vmatprep.subr.mxu0 0.0
    %6154 = vmatpush1.msra.mxu0 0.0
    %6155 = vmatprep.subr.mxu0 0.0
    %6156 = vmatpush1.msra.mxu0 0.0
    %6157 = vmatprep.subr.mxu0 0.0
    %6158 = vmatpush1.msra.mxu0 0.0
    %6159 = vmatprep.subr.mxu0 0.0
    %6160 = vmatpush1.msra.mxu0 0.0
    %6161 = vmatprep.subr.mxu0 0.0
    %6162 = vmatpush1.msra.mxu0 0.0
    %6163 = vmatprep.subr.mxu0 0.0
    %6164 = vmatpush1.msra.mxu0 0.0
    %6165 = vmatprep.subr.mxu0 0.0
    %6166 = vmatpush1.msra.mxu0 0.0
    %6167 = vmatprep.subr.mxu0 0.0
    %6168 = vmatpush1.msra.mxu0 0.0
    %6169 = vmatprep.subr.mxu0 0.0
    %6170 = vmatpush1.msra.mxu0 0.0
    %6171 = vmatprep.subr.mxu0 0.0
    %6172 = vmatpush1.msra.mxu0 0.0
    %6173 = vmatprep.subr.mxu0 0.0
    %6174 = vmatpush1.msra.mxu0 0.0
    %6175 = vmatprep.subr.mxu0 0.0
    %6176 = vmatpush1.msra.mxu0 0.0
    %6177 = vmatprep.subr.mxu0 0.0
    %6178 = vmatpush1.msra.mxu0 0.0
    %6179 = vmatprep.subr.mxu0 0.0
    %6180 = vmatpush1.msra.mxu0 0.0
    %6181 = vmatprep.subr.mxu0 0.0
    %6182 = vmatpush1.msra.mxu0 0.0
    %6183 = vmatprep.subr.mxu0 0.0
    %6184 = vmatpush1.msra.mxu0 0.0
    %6185 = vmatprep.subr.mxu0 0.0
    %6186 = vmatpush1.msra.mxu0 0.0
    %6187 = vmatprep.subr.mxu0 0.0
    %6188 = vmatpush1.msra.mxu0 0.0
    %6189 = vmatprep.subr.mxu0 0.0
    %6190 = vmatpush1.msra.mxu0 0.0
    %6191 = vmatprep.subr.mxu0 0.0
    %6192 = vmatpush1.msra.mxu0 0.0
    %6193 = vmatprep.subr.mxu0 0.0
    %6194 = vmatpush1.msra.mxu0 0.0
    %6195 = vmatprep.subr.mxu0 0.0
    %6196 = vmatpush1.msra.mxu0 0.0
    %6197 = vmatprep.subr.mxu0 0.0
    %6198 = vmatpush1.msra.mxu0 0.0
    %6199 = vmatprep.mubr.f32.mxu0 0.0
    %6200 = vmatmul.mubr.f32.gmra.mrb[0].mxu0 %v6130
    %v6201 = vpop.f32.mrb[0].mxu0
    %v6202 = vadd.f32 0.0, %v6201
    %v6203 = vpop.f32.mrb[0].mxu0
    %6204 = vmatprep.mubr.f32.mxu0 0.0
    %6205 = vmatmul.mubr.f32.gmra.mrb[0].mxu0 %v6133
    %v6206 = vpop.f32.mrb[0].mxu0
    %v6207 = vadd.f32 0.0, %v6206
    %v6208 = vpop.f32.mrb[0].mxu0
    %6209 = vdwg.mxu0
    %v6211 = vsel %vm354, %v5865, 0
    %v6214 = vsel %vm354, %v5867, 0
    %6216 = vmatprep.subr.mxu0 0.0
    %6217 = vmatpush1.msra.mxu0 %v505
    %6218 = vmatprep.subr.mxu0 0.0
    %6219 = vmatpush1.msra.mxu0 %v506
    %6220 = vmatprep.subr.mxu0 0.0
    %6221 = vmatpush1.msra.mxu0 0.0
    %6222 = vmatprep.subr.mxu0 0.0
    %6223 = vmatpush1.msra.mxu0 0.0
    %6224 = vmatprep.subr.mxu0 0.0
    %6225 = vmatpush1.msra.mxu0 0.0
    %6226 = vmatprep.subr.mxu0 0.0
    %6227 = vmatpush1.msra.mxu0 0.0
    %6228 = vmatprep.subr.mxu0 0.0
    %6229 = vmatpush1.msra.mxu0 0.0
    %6230 = vmatprep.subr.mxu0 0.0
    %6231 = vmatpush1.msra.mxu0 0.0
    %6232 = vmatprep.subr.mxu0 0.0
    %6233 = vmatpush1.msra.mxu0 0.0
    %6234 = vmatprep.subr.mxu0 0.0
    %6235 = vmatpush1.msra.mxu0 0.0
    %6236 = vmatprep.subr.mxu0 0.0
    %6237 = vmatpush1.msra.mxu0 0.0
    %6238 = vmatprep.subr.mxu0 0.0
    %6239 = vmatpush1.msra.mxu0 0.0
    %6240 = vmatprep.subr.mxu0 0.0
    %6241 = vmatpush1.msra.mxu0 0.0
    %6242 = vmatprep.subr.mxu0 0.0
    %6243 = vmatpush1.msra.mxu0 0.0
    %6244 = vmatprep.subr.mxu0 0.0
    %6245 = vmatpush1.msra.mxu0 0.0
    %6246 = vmatprep.subr.mxu0 0.0
    %6247 = vmatpush1.msra.mxu0 0.0
    %6248 = vmatprep.subr.mxu0 0.0
    %6249 = vmatpush1.msra.mxu0 0.0
    %6250 = vmatprep.subr.mxu0 0.0
    %6251 = vmatpush1.msra.mxu0 0.0
    %6252 = vmatprep.subr.mxu0 0.0
    %6253 = vmatpush1.msra.mxu0 0.0
    %6254 = vmatprep.subr.mxu0 0.0
    %6255 = vmatpush1.msra.mxu0 0.0
    %6256 = vmatprep.subr.mxu0 0.0
    %6257 = vmatpush1.msra.mxu0 0.0
    %6258 = vmatprep.subr.mxu0 0.0
    %6259 = vmatpush1.msra.mxu0 0.0
    %6260 = vmatprep.subr.mxu0 0.0
    %6261 = vmatpush1.msra.mxu0 0.0
    %6262 = vmatprep.subr.mxu0 0.0
    %6263 = vmatpush1.msra.mxu0 0.0
    %6264 = vmatprep.subr.mxu0 0.0
    %6265 = vmatpush1.msra.mxu0 0.0
    %6266 = vmatprep.subr.mxu0 0.0
    %6267 = vmatpush1.msra.mxu0 0.0
    %6268 = vmatprep.subr.mxu0 0.0
    %6269 = vmatpush1.msra.mxu0 0.0
    %6270 = vmatprep.subr.mxu0 0.0
    %6271 = vmatpush1.msra.mxu0 0.0
    %6272 = vmatprep.subr.mxu0 0.0
    %6273 = vmatpush1.msra.mxu0 0.0
    %6274 = vmatprep.subr.mxu0 0.0
    %6275 = vmatpush1.msra.mxu0 0.0
    %6276 = vmatprep.subr.mxu0 0.0
    %6277 = vmatpush1.msra.mxu0 0.0
    %6278 = vmatprep.subr.mxu0 0.0
    %6279 = vmatpush1.msra.mxu0 0.0
    %6280 = vmatprep.mubr.f32.mxu0 0.0
    %6281 = vmatmul.mubr.f32.gmra.mrb[0].mxu0 %v6211
    %v6282 = vpop.f32.mrb[0].mxu0
    %v6283 = vadd.f32 0.0, %v6282
    %v6284 = vpop.f32.mrb[0].mxu0
    %6285 = vmatprep.mubr.f32.mxu0 0.0
    %6286 = vmatmul.mubr.f32.gmra.mrb[0].mxu0 %v6214
    %v6287 = vpop.f32.mrb[0].mxu0
    %v6288 = vadd.f32 0.0, %v6287
    %v6289 = vpop.f32.mrb[0].mxu0
    %6290 = vdwg.mxu0
    %v6292 = vsel %vm354, %v5869, 0
    %v6295 = vsel %vm354, %v5871, 0
    %6297 = vmatprep.subr.mxu0 0.0
    %6298 = vmatpush1.msra.mxu0 %v507
    %6299 = vmatprep.subr.mxu0 0.0
    %6300 = vmatpush1.msra.mxu0 %v508
    %6301 = vmatprep.subr.mxu0 0.0
    %6302 = vmatpush1.msra.mxu0 0.0
    %6303 = vmatprep.subr.mxu0 0.0
    %6304 = vmatpush1.msra.mxu0 0.0
    %6305 = vmatprep.subr.mxu0 0.0
    %6306 = vmatpush1.msra.mxu0 0.0
    %6307 = vmatprep.subr.mxu0 0.0
    %6308 = vmatpush1.msra.mxu0 0.0
    %6309 = vmatprep.subr.mxu0 0.0
    %6310 = vmatpush1.msra.mxu0 0.0
    %6311 = vmatprep.subr.mxu0 0.0
    %6312 = vmatpush1.msra.mxu0 0.0
    %6313 = vmatprep.subr.mxu0 0.0
    %6314 = vmatpush1.msra.mxu0 0.0
    %6315 = vmatprep.subr.mxu0 0.0
    %6316 = vmatpush1.msra.mxu0 0.0
    %6317 = vmatprep.subr.mxu0 0.0
    %6318 = vmatpush1.msra.mxu0 0.0
    %6319 = vmatprep.subr.mxu0 0.0
    %6320 = vmatpush1.msra.mxu0 0.0
    %6321 = vmatprep.subr.mxu0 0.0
    %6322 = vmatpush1.msra.mxu0 0.0
    %6323 = vmatprep.subr.mxu0 0.0
    %6324 = vmatpush1.msra.mxu0 0.0
    %6325 = vmatprep.subr.mxu0 0.0
    %6326 = vmatpush1.msra.mxu0 0.0
    %6327 = vmatprep.subr.mxu0 0.0
    %6328 = vmatpush1.msra.mxu0 0.0
    %6329 = vmatprep.subr.mxu0 0.0
    %6330 = vmatpush1.msra.mxu0 0.0
    %6331 = vmatprep.subr.mxu0 0.0
    %6332 = vmatpush1.msra.mxu0 0.0
    %6333 = vmatprep.subr.mxu0 0.0
    %6334 = vmatpush1.msra.mxu0 0.0
    %6335 = vmatprep.subr.mxu0 0.0
    %6336 = vmatpush1.msra.mxu0 0.0
    %6337 = vmatprep.subr.mxu0 0.0
    %6338 = vmatpush1.msra.mxu0 0.0
    %6339 = vmatprep.subr.mxu0 0.0
    %6340 = vmatpush1.msra.mxu0 0.0
    %6341 = vmatprep.subr.mxu0 0.0
    %6342 = vmatpush1.msra.mxu0 0.0
    %6343 = vmatprep.subr.mxu0 0.0
    %6344 = vmatpush1.msra.mxu0 0.0
    %6345 = vmatprep.subr.mxu0 0.0
    %6346 = vmatpush1.msra.mxu0 0.0
    %6347 = vmatprep.subr.mxu0 0.0
    %6348 = vmatpush1.msra.mxu0 0.0
    %6349 = vmatprep.subr.mxu0 0.0
    %6350 = vmatpush1.msra.mxu0 0.0
    %6351 = vmatprep.subr.mxu0 0.0
    %6352 = vmatpush1.msra.mxu0 0.0
    %6353 = vmatprep.subr.mxu0 0.0
    %6354 = vmatpush1.msra.mxu0 0.0
    %6355 = vmatprep.subr.mxu0 0.0
    %6356 = vmatpush1.msra.mxu0 0.0
    %6357 = vmatprep.subr.mxu0 0.0
    %6358 = vmatpush1.msra.mxu0 0.0
    %6359 = vmatprep.subr.mxu0 0.0
    %6360 = vmatpush1.msra.mxu0 0.0
    %6361 = vmatprep.mubr.f32.mxu0 0.0
    %6362 = vmatmul.mubr.f32.gmra.mrb[0].mxu0 %v6292
    %v6363 = vpop.f32.mrb[0].mxu0
    %v6364 = vadd.f32 0.0, %v6363
    %v6365 = vpop.f32.mrb[0].mxu0
    %6366 = vmatprep.mubr.f32.mxu0 0.0
    %6367 = vmatmul.mubr.f32.gmra.mrb[0].mxu0 %v6295
    %v6368 = vpop.f32.mrb[0].mxu0
    %v6369 = vadd.f32 0.0, %v6368
    %v6370 = vpop.f32.mrb[0].mxu0
    %6371 = vdwg.mxu0
    %v6373 = vsel %vm354, %v5873, 0
    %v6376 = vsel %vm354, %v5875, 0
    %6378 = vmatprep.subr.mxu0 0.0
    %6379 = vmatpush1.msra.mxu0 %v513
    %6380 = vmatprep.subr.mxu0 0.0
    %6381 = vmatpush1.msra.mxu0 %v514
    %6382 = vmatprep.subr.mxu0 0.0
    %6383 = vmatpush1.msra.mxu0 0.0
    %6384 = vmatprep.subr.mxu0 0.0
    %6385 = vmatpush1.msra.mxu0 0.0
    %6386 = vmatprep.subr.mxu0 0.0
    %6387 = vmatpush1.msra.mxu0 0.0
    %6388 = vmatprep.subr.mxu0 0.0
    %6389 = vmatpush1.msra.mxu0 0.0
    %6390 = vmatprep.subr.mxu0 0.0
    %6391 = vmatpush1.msra.mxu0 0.0
    %6392 = vmatprep.subr.mxu0 0.0
    %6393 = vmatpush1.msra.mxu0 0.0
    %6394 = vmatprep.subr.mxu0 0.0
    %6395 = vmatpush1.msra.mxu0 0.0
    %6396 = vmatprep.subr.mxu0 0.0
    %6397 = vmatpush1.msra.mxu0 0.0
    %6398 = vmatprep.subr.mxu0 0.0
    %6399 = vmatpush1.msra.mxu0 0.0
    %6400 = vmatprep.subr.mxu0 0.0
    %6401 = vmatpush1.msra.mxu0 0.0
    %6402 = vmatprep.subr.mxu0 0.0
    %6403 = vmatpush1.msra.mxu0 0.0
    %6404 = vmatprep.subr.mxu0 0.0
    %6405 = vmatpush1.msra.mxu0 0.0
    %6406 = vmatprep.subr.mxu0 0.0
    %6407 = vmatpush1.msra.mxu0 0.0
    %6408 = vmatprep.subr.mxu0 0.0
    %6409 = vmatpush1.msra.mxu0 0.0
    %6410 = vmatprep.subr.mxu0 0.0
    %6411 = vmatpush1.msra.mxu0 0.0
    %6412 = vmatprep.subr.mxu0 0.0
    %6413 = vmatpush1.msra.mxu0 0.0
    %6414 = vmatprep.subr.mxu0 0.0
    %6415 = vmatpush1.msra.mxu0 0.0
    %6416 = vmatprep.subr.mxu0 0.0
    %6417 = vmatpush1.msra.mxu0 0.0
    %6418 = vmatprep.subr.mxu0 0.0
    %6419 = vmatpush1.msra.mxu0 0.0
    %6420 = vmatprep.subr.mxu0 0.0
    %6421 = vmatpush1.msra.mxu0 0.0
    %6422 = vmatprep.subr.mxu0 0.0
    %6423 = vmatpush1.msra.mxu0 0.0
    %6424 = vmatprep.subr.mxu0 0.0
    %6425 = vmatpush1.msra.mxu0 0.0
    %6426 = vmatprep.subr.mxu0 0.0
    %6427 = vmatpush1.msra.mxu0 0.0
    %6428 = vmatprep.subr.mxu0 0.0
    %6429 = vmatpush1.msra.mxu0 0.0
    %6430 = vmatprep.subr.mxu0 0.0
    %6431 = vmatpush1.msra.mxu0 0.0
    %6432 = vmatprep.subr.mxu0 0.0
    %6433 = vmatpush1.msra.mxu0 0.0
    %6434 = vmatprep.subr.mxu0 0.0
    %6435 = vmatpush1.msra.mxu0 0.0
    %6436 = vmatprep.subr.mxu0 0.0
    %6437 = vmatpush1.msra.mxu0 0.0
    %6438 = vmatprep.subr.mxu0 0.0
    %6439 = vmatpush1.msra.mxu0 0.0
    %6440 = vmatprep.subr.mxu0 0.0
    %6441 = vmatpush1.msra.mxu0 0.0
    %6442 = vmatprep.mubr.f32.mxu0 0.0
    %6443 = vmatmul.mubr.f32.gmra.mrb[0].mxu0 %v6373
    %v6444 = vpop.f32.mrb[0].mxu0
    %v6445 = vadd.f32 0.0, %v6444
    %v6446 = vpop.f32.mrb[0].mxu0
    %6447 = vmatprep.mubr.f32.mxu0 0.0
    %6448 = vmatmul.mubr.f32.gmra.mrb[0].mxu0 %v6376
    %v6449 = vpop.f32.mrb[0].mxu0
    %v6450 = vadd.f32 0.0, %v6449
    %v6451 = vpop.f32.mrb[0].mxu0
    %6452 = vdwg.mxu0
    %v6454 = vsel %vm354, %v5877, 0
    %v6457 = vsel %vm354, %v5879, 0
    %6459 = vmatprep.subr.mxu0 0.0
    %6460 = vmatpush1.msra.mxu0 %v515
    %6461 = vmatprep.subr.mxu0 0.0
    %6462 = vmatpush1.msra.mxu0 %v516
    %6463 = vmatprep.subr.mxu0 0.0
    %6464 = vmatpush1.msra.mxu0 0.0
    %6465 = vmatprep.subr.mxu0 0.0
    %6466 = vmatpush1.msra.mxu0 0.0
    %6467 = vmatprep.subr.mxu0 0.0
    %6468 = vmatpush1.msra.mxu0 0.0
    %6469 = vmatprep.subr.mxu0 0.0
    %6470 = vmatpush1.msra.mxu0 0.0
    %6471 = vmatprep.subr.mxu0 0.0
    %6472 = vmatpush1.msra.mxu0 0.0
    %6473 = vmatprep.subr.mxu0 0.0
    %6474 = vmatpush1.msra.mxu0 0.0
    %6475 = vmatprep.subr.mxu0 0.0
    %6476 = vmatpush1.msra.mxu0 0.0
    %6477 = vmatprep.subr.mxu0 0.0
    %6478 = vmatpush1.msra.mxu0 0.0
    %6479 = vmatprep.subr.mxu0 0.0
    %6480 = vmatpush1.msra.mxu0 0.0
    %6481 = vmatprep.subr.mxu0 0.0
    %6482 = vmatpush1.msra.mxu0 0.0
    %6483 = vmatprep.subr.mxu0 0.0
    %6484 = vmatpush1.msra.mxu0 0.0
    %6485 = vmatprep.subr.mxu0 0.0
    %6486 = vmatpush1.msra.mxu0 0.0
    %6487 = vmatprep.subr.mxu0 0.0
    %6488 = vmatpush1.msra.mxu0 0.0
    %6489 = vmatprep.subr.mxu0 0.0
    %6490 = vmatpush1.msra.mxu0 0.0
    %6491 = vmatprep.subr.mxu0 0.0
    %6492 = vmatpush1.msra.mxu0 0.0
    %6493 = vmatprep.subr.mxu0 0.0
    %6494 = vmatpush1.msra.mxu0 0.0
    %6495 = vmatprep.subr.mxu0 0.0
    %6496 = vmatpush1.msra.mxu0 0.0
    %6497 = vmatprep.subr.mxu0 0.0
    %6498 = vmatpush1.msra.mxu0 0.0
    %6499 = vmatprep.subr.mxu0 0.0
    %6500 = vmatpush1.msra.mxu0 0.0
    %6501 = vmatprep.subr.mxu0 0.0
    %6502 = vmatpush1.msra.mxu0 0.0
    %6503 = vmatprep.subr.mxu0 0.0
    %6504 = vmatpush1.msra.mxu0 0.0
    %6505 = vmatprep.subr.mxu0 0.0
    %6506 = vmatpush1.msra.mxu0 0.0
    %6507 = vmatprep.subr.mxu0 0.0
    %6508 = vmatpush1.msra.mxu0 0.0
    %6509 = vmatprep.subr.mxu0 0.0
    %6510 = vmatpush1.msra.mxu0 0.0
    %6511 = vmatprep.subr.mxu0 0.0
    %6512 = vmatpush1.msra.mxu0 0.0
    %6513 = vmatprep.subr.mxu0 0.0
    %6514 = vmatpush1.msra.mxu0 0.0
    %6515 = vmatprep.subr.mxu0 0.0
    %6516 = vmatpush1.msra.mxu0 0.0
    %6517 = vmatprep.subr.mxu0 0.0
    %6518 = vmatpush1.msra.mxu0 0.0
    %6519 = vmatprep.subr.mxu0 0.0
    %6520 = vmatpush1.msra.mxu0 0.0
    %6521 = vmatprep.subr.mxu0 0.0
    %6522 = vmatpush1.msra.mxu0 0.0
    %6523 = vmatprep.mubr.f32.mxu0 0.0
    %6524 = vmatmul.mubr.f32.gmra.mrb[0].mxu0 %v6454
    %v6525 = vpop.f32.mrb[0].mxu0
    %v6526 = vadd.f32 0.0, %v6525
    %v6527 = vpop.f32.mrb[0].mxu0
    %6528 = vmatprep.mubr.f32.mxu0 0.0
    %6529 = vmatmul.mubr.f32.gmra.mrb[0].mxu0 %v6457
    %v6530 = vpop.f32.mrb[0].mxu0
    %v6531 = vadd.f32 0.0, %v6530
    %v6532 = vpop.f32.mrb[0].mxu0
    %6533 = vdwg.mxu0
    %v6535 = vsel %vm354, %v5881, 0
    %v6538 = vsel %vm354, %v5883, 0
    %6540 = vmatprep.subr.mxu0 0.0
    %6541 = vmatpush1.msra.mxu0 %v517
    %6542 = vmatprep.subr.mxu0 0.0
    %6543 = vmatpush1.msra.mxu0 %v518
    %6544 = vmatprep.subr.mxu0 0.0
    %6545 = vmatpush1.msra.mxu0 0.0
    %6546 = vmatprep.subr.mxu0 0.0
    %6547 = vmatpush1.msra.mxu0 0.0
    %6548 = vmatprep.subr.mxu0 0.0
    %6549 = vmatpush1.msra.mxu0 0.0
    %6550 = vmatprep.subr.mxu0 0.0
    %6551 = vmatpush1.msra.mxu0 0.0
    %6552 = vmatprep.subr.mxu0 0.0
    %6553 = vmatpush1.msra.mxu0 0.0
    %6554 = vmatprep.subr.mxu0 0.0
    %6555 = vmatpush1.msra.mxu0 0.0
    %6556 = vmatprep.subr.mxu0 0.0
    %6557 = vmatpush1.msra.mxu0 0.0
    %6558 = vmatprep.subr.mxu0 0.0
    %6559 = vmatpush1.msra.mxu0 0.0
    %6560 = vmatprep.subr.mxu0 0.0
    %6561 = vmatpush1.msra.mxu0 0.0
    %6562 = vmatprep.subr.mxu0 0.0
    %6563 = vmatpush1.msra.mxu0 0.0
    %6564 = vmatprep.subr.mxu0 0.0
    %6565 = vmatpush1.msra.mxu0 0.0
    %6566 = vmatprep.subr.mxu0 0.0
    %6567 = vmatpush1.msra.mxu0 0.0
    %6568 = vmatprep.subr.mxu0 0.0
    %6569 = vmatpush1.msra.mxu0 0.0
    %6570 = vmatprep.subr.mxu0 0.0
    %6571 = vmatpush1.msra.mxu0 0.0
    %6572 = vmatprep.subr.mxu0 0.0
    %6573 = vmatpush1.msra.mxu0 0.0
    %6574 = vmatprep.subr.mxu0 0.0
    %6575 = vmatpush1.msra.mxu0 0.0
    %6576 = vmatprep.subr.mxu0 0.0
    %6577 = vmatpush1.msra.mxu0 0.0
    %6578 = vmatprep.subr.mxu0 0.0
    %6579 = vmatpush1.msra.mxu0 0.0
    %6580 = vmatprep.subr.mxu0 0.0
    %6581 = vmatpush1.msra.mxu0 0.0
    %6582 = vmatprep.subr.mxu0 0.0
    %6583 = vmatpush1.msra.mxu0 0.0
    %6584 = vmatprep.subr.mxu0 0.0
    %6585 = vmatpush1.msra.mxu0 0.0
    %6586 = vmatprep.subr.mxu0 0.0
    %6587 = vmatpush1.msra.mxu0 0.0
    %6588 = vmatprep.subr.mxu0 0.0
    %6589 = vmatpush1.msra.mxu0 0.0
    %6590 = vmatprep.subr.mxu0 0.0
    %6591 = vmatpush1.msra.mxu0 0.0
    %6592 = vmatprep.subr.mxu0 0.0
    %6593 = vmatpush1.msra.mxu0 0.0
    %6594 = vmatprep.subr.mxu0 0.0
    %6595 = vmatpush1.msra.mxu0 0.0
    %6596 = vmatprep.subr.mxu0 0.0
    %6597 = vmatpush1.msra.mxu0 0.0
    %6598 = vmatprep.subr.mxu0 0.0
    %6599 = vmatpush1.msra.mxu0 0.0
    %6600 = vmatprep.subr.mxu0 0.0
    %6601 = vmatpush1.msra.mxu0 0.0
    %6602 = vmatprep.subr.mxu0 0.0
    %6603 = vmatpush1.msra.mxu0 0.0
    %6604 = vmatprep.mubr.f32.mxu0 0.0
    %6605 = vmatmul.mubr.f32.gmra.mrb[0].mxu0 %v6535
    %v6606 = vpop.f32.mrb[0].mxu0
    %v6607 = vadd.f32 0.0, %v6606
    %v6608 = vpop.f32.mrb[0].mxu0
    %6609 = vmatprep.mubr.f32.mxu0 0.0
    %6610 = vmatmul.mubr.f32.gmra.mrb[0].mxu0 %v6538
    %v6611 = vpop.f32.mrb[0].mxu0
    %v6612 = vadd.f32 0.0, %v6611
    %v6613 = vpop.f32.mrb[0].mxu0
    %6614 = vdwg.mxu0
    %v6616 = vsel %vm354, %v5885, 0
    %v6619 = vsel %vm354, %v5887, 0
    %6621 = vmatprep.subr.mxu0 0.0
    %6622 = vmatpush1.msra.mxu0 %v519
    %6623 = vmatprep.subr.mxu0 0.0
    %6624 = vmatpush1.msra.mxu0 %v520
    %6625 = vmatprep.subr.mxu0 0.0
    %6626 = vmatpush1.msra.mxu0 0.0
    %6627 = vmatprep.subr.mxu0 0.0
    %6628 = vmatpush1.msra.mxu0 0.0
    %6629 = vmatprep.subr.mxu0 0.0
    %6630 = vmatpush1.msra.mxu0 0.0
    %6631 = vmatprep.subr.mxu0 0.0
    %6632 = vmatpush1.msra.mxu0 0.0
    %6633 = vmatprep.subr.mxu0 0.0
    %6634 = vmatpush1.msra.mxu0 0.0
    %6635 = vmatprep.subr.mxu0 0.0
    %6636 = vmatpush1.msra.mxu0 0.0
    %6637 = vmatprep.subr.mxu0 0.0
    %6638 = vmatpush1.msra.mxu0 0.0
    %6639 = vmatprep.subr.mxu0 0.0
    %6640 = vmatpush1.msra.mxu0 0.0
    %6641 = vmatprep.subr.mxu0 0.0
    %6642 = vmatpush1.msra.mxu0 0.0
    %6643 = vmatprep.subr.mxu0 0.0
    %6644 = vmatpush1.msra.mxu0 0.0
    %6645 = vmatprep.subr.mxu0 0.0
    %6646 = vmatpush1.msra.mxu0 0.0
    %6647 = vmatprep.subr.mxu0 0.0
    %6648 = vmatpush1.msra.mxu0 0.0
    %6649 = vmatprep.subr.mxu0 0.0
    %6650 = vmatpush1.msra.mxu0 0.0
    %6651 = vmatprep.subr.mxu0 0.0
    %6652 = vmatpush1.msra.mxu0 0.0
    %6653 = vmatprep.subr.mxu0 0.0
    %6654 = vmatpush1.msra.mxu0 0.0
    %6655 = vmatprep.subr.mxu0 0.0
    %6656 = vmatpush1.msra.mxu0 0.0
    %6657 = vmatprep.subr.mxu0 0.0
    %6658 = vmatpush1.msra.mxu0 0.0
    %6659 = vmatprep.subr.mxu0 0.0
    %6660 = vmatpush1.msra.mxu0 0.0
    %6661 = vmatprep.subr.mxu0 0.0
    %6662 = vmatpush1.msra.mxu0 0.0
    %6663 = vmatprep.subr.mxu0 0.0
    %6664 = vmatpush1.msra.mxu0 0.0
    %6665 = vmatprep.subr.mxu0 0.0
    %6666 = vmatpush1.msra.mxu0 0.0
    %6667 = vmatprep.subr.mxu0 0.0
    %6668 = vmatpush1.msra.mxu0 0.0
    %6669 = vmatprep.subr.mxu0 0.0
    %6670 = vmatpush1.msra.mxu0 0.0
    %6671 = vmatprep.subr.mxu0 0.0
    %6672 = vmatpush1.msra.mxu0 0.0
    %6673 = vmatprep.subr.mxu0 0.0
    %6674 = vmatpush1.msra.mxu0 0.0
    %6675 = vmatprep.subr.mxu0 0.0
    %6676 = vmatpush1.msra.mxu0 0.0
    %6677 = vmatprep.subr.mxu0 0.0
    %6678 = vmatpush1.msra.mxu0 0.0
    %6679 = vmatprep.subr.mxu0 0.0
    %6680 = vmatpush1.msra.mxu0 0.0
    %6681 = vmatprep.subr.mxu0 0.0
    %6682 = vmatpush1.msra.mxu0 0.0
    %6683 = vmatprep.subr.mxu0 0.0
    %6684 = vmatpush1.msra.mxu0 0.0
    %6685 = vmatprep.mubr.f32.mxu0 0.0
    %6686 = vmatmul.mubr.f32.gmra.mrb[0].mxu0 %v6616
    %v6687 = vpop.f32.mrb[0].mxu0
    %v6688 = vadd.f32 0.0, %v6687
    %v6689 = vpop.f32.mrb[0].mxu0
    %6690 = vmatprep.mubr.f32.mxu0 0.0
    %6691 = vmatmul.mubr.f32.gmra.mrb[0].mxu0 %v6619
    %v6692 = vpop.f32.mrb[0].mxu0
    %v6693 = vadd.f32 0.0, %v6692
    %v6694 = vpop.f32.mrb[0].mxu0
    %6695 = vdwg.mxu0
    %v6697 = vsel %vm354, %v5889, 0
    %v6700 = vsel %vm354, %v5891, 0
    %6702 = vmatprep.subr.mxu0 0.0
    %6703 = vmatpush1.msra.mxu0 %v525
    %6704 = vmatprep.subr.mxu0 0.0
    %6705 = vmatpush1.msra.mxu0 %v526
    %6706 = vmatprep.subr.mxu0 0.0
    %6707 = vmatpush1.msra.mxu0 0.0
    %6708 = vmatprep.subr.mxu0 0.0
    %6709 = vmatpush1.msra.mxu0 0.0
    %6710 = vmatprep.subr.mxu0 0.0
    %6711 = vmatpush1.msra.mxu0 0.0
    %6712 = vmatprep.subr.mxu0 0.0
    %6713 = vmatpush1.msra.mxu0 0.0
    %6714 = vmatprep.subr.mxu0 0.0
    %6715 = vmatpush1.msra.mxu0 0.0
    %6716 = vmatprep.subr.mxu0 0.0
    %6717 = vmatpush1.msra.mxu0 0.0
    %6718 = vmatprep.subr.mxu0 0.0
    %6719 = vmatpush1.msra.mxu0 0.0
    %6720 = vmatprep.subr.mxu0 0.0
    %6721 = vmatpush1.msra.mxu0 0.0
    %6722 = vmatprep.subr.mxu0 0.0
    %6723 = vmatpush1.msra.mxu0 0.0
    %6724 = vmatprep.subr.mxu0 0.0
    %6725 = vmatpush1.msra.mxu0 0.0
    %6726 = vmatprep.subr.mxu0 0.0
    %6727 = vmatpush1.msra.mxu0 0.0
    %6728 = vmatprep.subr.mxu0 0.0
    %6729 = vmatpush1.msra.mxu0 0.0
    %6730 = vmatprep.subr.mxu0 0.0
    %6731 = vmatpush1.msra.mxu0 0.0
    %6732 = vmatprep.subr.mxu0 0.0
    %6733 = vmatpush1.msra.mxu0 0.0
    %6734 = vmatprep.subr.mxu0 0.0
    %6735 = vmatpush1.msra.mxu0 0.0
    %6736 = vmatprep.subr.mxu0 0.0
    %6737 = vmatpush1.msra.mxu0 0.0
    %6738 = vmatprep.subr.mxu0 0.0
    %6739 = vmatpush1.msra.mxu0 0.0
    %6740 = vmatprep.subr.mxu0 0.0
    %6741 = vmatpush1.msra.mxu0 0.0
    %6742 = vmatprep.subr.mxu0 0.0
    %6743 = vmatpush1.msra.mxu0 0.0
    %6744 = vmatprep.subr.mxu0 0.0
    %6745 = vmatpush1.msra.mxu0 0.0
    %6746 = vmatprep.subr.mxu0 0.0
    %6747 = vmatpush1.msra.mxu0 0.0
    %6748 = vmatprep.subr.mxu0 0.0
    %6749 = vmatpush1.msra.mxu0 0.0
    %6750 = vmatprep.subr.mxu0 0.0
    %6751 = vmatpush1.msra.mxu0 0.0
    %6752 = vmatprep.subr.mxu0 0.0
    %6753 = vmatpush1.msra.mxu0 0.0
    %6754 = vmatprep.subr.mxu0 0.0
    %6755 = vmatpush1.msra.mxu0 0.0
    %6756 = vmatprep.subr.mxu0 0.0
    %6757 = vmatpush1.msra.mxu0 0.0
    %6758 = vmatprep.subr.mxu0 0.0
    %6759 = vmatpush1.msra.mxu0 0.0
    %6760 = vmatprep.subr.mxu0 0.0
    %6761 = vmatpush1.msra.mxu0 0.0
    %6762 = vmatprep.subr.mxu0 0.0
    %6763 = vmatpush1.msra.mxu0 0.0
    %6764 = vmatprep.subr.mxu0 0.0
    %6765 = vmatpush1.msra.mxu0 0.0
    %6766 = vmatprep.mubr.f32.mxu0 0.0
    %6767 = vmatmul.mubr.f32.gmra.mrb[0].mxu0 %v6697
    %v6768 = vpop.f32.mrb[0].mxu0
    %v6769 = vadd.f32 0.0, %v6768
    %v6770 = vpop.f32.mrb[0].mxu0
    %6771 = vmatprep.mubr.f32.mxu0 0.0
    %6772 = vmatmul.mubr.f32.gmra.mrb[0].mxu0 %v6700
    %v6773 = vpop.f32.mrb[0].mxu0
    %v6774 = vadd.f32 0.0, %v6773
    %v6775 = vpop.f32.mrb[0].mxu0
    %6776 = vdwg.mxu0
    %v6778 = vsel %vm354, %v5893, 0
    %v6781 = vsel %vm354, %v5895, 0
    %6783 = vmatprep.subr.mxu0 0.0
    %6784 = vmatpush1.msra.mxu0 %v527
    %6785 = vmatprep.subr.mxu0 0.0
    %6786 = vmatpush1.msra.mxu0 %v528
    %6787 = vmatprep.subr.mxu0 0.0
    %6788 = vmatpush1.msra.mxu0 0.0
    %6789 = vmatprep.subr.mxu0 0.0
    %6790 = vmatpush1.msra.mxu0 0.0
    %6791 = vmatprep.subr.mxu0 0.0
    %6792 = vmatpush1.msra.mxu0 0.0
    %6793 = vmatprep.subr.mxu0 0.0
    %6794 = vmatpush1.msra.mxu0 0.0
    %6795 = vmatprep.subr.mxu0 0.0
    %6796 = vmatpush1.msra.mxu0 0.0
    %6797 = vmatprep.subr.mxu0 0.0
    %6798 = vmatpush1.msra.mxu0 0.0
    %6799 = vmatprep.subr.mxu0 0.0
    %6800 = vmatpush1.msra.mxu0 0.0
    %6801 = vmatprep.subr.mxu0 0.0
    %6802 = vmatpush1.msra.mxu0 0.0
    %6803 = vmatprep.subr.mxu0 0.0
    %6804 = vmatpush1.msra.mxu0 0.0
    %6805 = vmatprep.subr.mxu0 0.0
    %6806 = vmatpush1.msra.mxu0 0.0
    %6807 = vmatprep.subr.mxu0 0.0
    %6808 = vmatpush1.msra.mxu0 0.0
    %6809 = vmatprep.subr.mxu0 0.0
    %6810 = vmatpush1.msra.mxu0 0.0
    %6811 = vmatprep.subr.mxu0 0.0
    %6812 = vmatpush1.msra.mxu0 0.0
    %6813 = vmatprep.subr.mxu0 0.0
    %6814 = vmatpush1.msra.mxu0 0.0
    %6815 = vmatprep.subr.mxu0 0.0
    %6816 = vmatpush1.msra.mxu0 0.0
    %6817 = vmatprep.subr.mxu0 0.0
    %6818 = vmatpush1.msra.mxu0 0.0
    %6819 = vmatprep.subr.mxu0 0.0
    %6820 = vmatpush1.msra.mxu0 0.0
    %6821 = vmatprep.subr.mxu0 0.0
    %6822 = vmatpush1.msra.mxu0 0.0
    %6823 = vmatprep.subr.mxu0 0.0
    %6824 = vmatpush1.msra.mxu0 0.0
    %6825 = vmatprep.subr.mxu0 0.0
    %6826 = vmatpush1.msra.mxu0 0.0
    %6827 = vmatprep.subr.mxu0 0.0
    %6828 = vmatpush1.msra.mxu0 0.0
    %6829 = vmatprep.subr.mxu0 0.0
    %6830 = vmatpush1.msra.mxu0 0.0
    %6831 = vmatprep.subr.mxu0 0.0
    %6832 = vmatpush1.msra.mxu0 0.0
    %6833 = vmatprep.subr.mxu0 0.0
    %6834 = vmatpush1.msra.mxu0 0.0
    %6835 = vmatprep.subr.mxu0 0.0
    %6836 = vmatpush1.msra.mxu0 0.0
    %6837 = vmatprep.subr.mxu0 0.0
    %6838 = vmatpush1.msra.mxu0 0.0
    %6839 = vmatprep.subr.mxu0 0.0
    %6840 = vmatpush1.msra.mxu0 0.0
    %6841 = vmatprep.subr.mxu0 0.0
    %6842 = vmatpush1.msra.mxu0 0.0
    %6843 = vmatprep.subr.mxu0 0.0
    %6844 = vmatpush1.msra.mxu0 0.0
    %6845 = vmatprep.subr.mxu0 0.0
    %6846 = vmatpush1.msra.mxu0 0.0
    %6847 = vmatprep.mubr.f32.mxu0 0.0
    %6848 = vmatmul.mubr.f32.gmra.mrb[0].mxu0 %v6778
    %v6849 = vpop.f32.mrb[0].mxu0
    %v6850 = vadd.f32 0.0, %v6849
    %v6851 = vpop.f32.mrb[0].mxu0
    %6852 = vmatprep.mubr.f32.mxu0 0.0
    %6853 = vmatmul.mubr.f32.gmra.mrb[0].mxu0 %v6781
    %v6854 = vpop.f32.mrb[0].mxu0
    %v6855 = vadd.f32 0.0, %v6854
    %v6856 = vpop.f32.mrb[0].mxu0
    %6857 = vdwg.mxu0
    %v6859 = vsel %vm354, %v5897, 0
    %v6862 = vsel %vm354, %v5899, 0
    %6864 = vmatprep.subr.mxu0 0.0
    %6865 = vmatpush1.msra.mxu0 %v529
    %6866 = vmatprep.subr.mxu0 0.0
    %6867 = vmatpush1.msra.mxu0 %v530
    %6868 = vmatprep.subr.mxu0 0.0
    %6869 = vmatpush1.msra.mxu0 0.0
    %6870 = vmatprep.subr.mxu0 0.0
    %6871 = vmatpush1.msra.mxu0 0.0
    %6872 = vmatprep.subr.mxu0 0.0
    %6873 = vmatpush1.msra.mxu0 0.0
    %6874 = vmatprep.subr.mxu0 0.0
    %6875 = vmatpush1.msra.mxu0 0.0
    %6876 = vmatprep.subr.mxu0 0.0
    %6877 = vmatpush1.msra.mxu0 0.0
    %6878 = vmatprep.subr.mxu0 0.0
    %6879 = vmatpush1.msra.mxu0 0.0
    %6880 = vmatprep.subr.mxu0 0.0
    %6881 = vmatpush1.msra.mxu0 0.0
    %6882 = vmatprep.subr.mxu0 0.0
    %6883 = vmatpush1.msra.mxu0 0.0
    %6884 = vmatprep.subr.mxu0 0.0
    %6885 = vmatpush1.msra.mxu0 0.0
    %6886 = vmatprep.subr.mxu0 0.0
    %6887 = vmatpush1.msra.mxu0 0.0
    %6888 = vmatprep.subr.mxu0 0.0
    %6889 = vmatpush1.msra.mxu0 0.0
    %6890 = vmatprep.subr.mxu0 0.0
    %6891 = vmatpush1.msra.mxu0 0.0
    %6892 = vmatprep.subr.mxu0 0.0
    %6893 = vmatpush1.msra.mxu0 0.0
    %6894 = vmatprep.subr.mxu0 0.0
    %6895 = vmatpush1.msra.mxu0 0.0
    %6896 = vmatprep.subr.mxu0 0.0
    %6897 = vmatpush1.msra.mxu0 0.0
    %6898 = vmatprep.subr.mxu0 0.0
    %6899 = vmatpush1.msra.mxu0 0.0
    %6900 = vmatprep.subr.mxu0 0.0
    %6901 = vmatpush1.msra.mxu0 0.0
    %6902 = vmatprep.subr.mxu0 0.0
    %6903 = vmatpush1.msra.mxu0 0.0
    %6904 = vmatprep.subr.mxu0 0.0
    %6905 = vmatpush1.msra.mxu0 0.0
    %6906 = vmatprep.subr.mxu0 0.0
    %6907 = vmatpush1.msra.mxu0 0.0
    %6908 = vmatprep.subr.mxu0 0.0
    %6909 = vmatpush1.msra.mxu0 0.0
    %6910 = vmatprep.subr.mxu0 0.0
    %6911 = vmatpush1.msra.mxu0 0.0
    %6912 = vmatprep.subr.mxu0 0.0
    %6913 = vmatpush1.msra.mxu0 0.0
    %6914 = vmatprep.subr.mxu0 0.0
    %6915 = vmatpush1.msra.mxu0 0.0
    %6916 = vmatprep.subr.mxu0 0.0
    %6917 = vmatpush1.msra.mxu0 0.0
    %6918 = vmatprep.subr.mxu0 0.0
    %6919 = vmatpush1.msra.mxu0 0.0
    %6920 = vmatprep.subr.mxu0 0.0
    %6921 = vmatpush1.msra.mxu0 0.0
    %6922 = vmatprep.subr.mxu0 0.0
    %6923 = vmatpush1.msra.mxu0 0.0
    %6924 = vmatprep.subr.mxu0 0.0
    %6925 = vmatpush1.msra.mxu0 0.0
    %6926 = vmatprep.subr.mxu0 0.0
    %6927 = vmatpush1.msra.mxu0 0.0
    %6928 = vmatprep.mubr.f32.mxu0 0.0
    %6929 = vmatmul.mubr.f32.gmra.mrb[0].mxu0 %v6859
    %v6930 = vpop.f32.mrb[0].mxu0
    %v6931 = vadd.f32 0.0, %v6930
    %v6932 = vpop.f32.mrb[0].mxu0
    %6933 = vmatprep.mubr.f32.mxu0 0.0
    %6934 = vmatmul.mubr.f32.gmra.mrb[0].mxu0 %v6862
    %v6935 = vpop.f32.mrb[0].mxu0
    %v6936 = vadd.f32 0.0, %v6935
    %v6937 = vpop.f32.mrb[0].mxu0
    %6938 = vdwg.mxu0
    %v6940 = vsel %vm354, %v5901, 0
    %v6943 = vsel %vm354, %v5903, 0
    %6945 = vmatprep.subr.mxu0 0.0
    %6946 = vmatpush1.msra.mxu0 %v531
    %6947 = vmatprep.subr.mxu0 0.0
    %6948 = vmatpush1.msra.mxu0 %v532
    %6949 = vmatprep.subr.mxu0 0.0
    %6950 = vmatpush1.msra.mxu0 0.0
    %6951 = vmatprep.subr.mxu0 0.0
    %6952 = vmatpush1.msra.mxu0 0.0
    %6953 = vmatprep.subr.mxu0 0.0
    %6954 = vmatpush1.msra.mxu0 0.0
    %6955 = vmatprep.subr.mxu0 0.0
    %6956 = vmatpush1.msra.mxu0 0.0
    %6957 = vmatprep.subr.mxu0 0.0
    %6958 = vmatpush1.msra.mxu0 0.0
    %6959 = vmatprep.subr.mxu0 0.0
    %6960 = vmatpush1.msra.mxu0 0.0
    %6961 = vmatprep.subr.mxu0 0.0
    %6962 = vmatpush1.msra.mxu0 0.0
    %6963 = vmatprep.subr.mxu0 0.0
    %6964 = vmatpush1.msra.mxu0 0.0
    %6965 = vmatprep.subr.mxu0 0.0
    %6966 = vmatpush1.msra.mxu0 0.0
    %6967 = vmatprep.subr.mxu0 0.0
    %6968 = vmatpush1.msra.mxu0 0.0
    %6969 = vmatprep.subr.mxu0 0.0
    %6970 = vmatpush1.msra.mxu0 0.0
    %6971 = vmatprep.subr.mxu0 0.0
    %6972 = vmatpush1.msra.mxu0 0.0
    %6973 = vmatprep.subr.mxu0 0.0
    %6974 = vmatpush1.msra.mxu0 0.0
    %6975 = vmatprep.subr.mxu0 0.0
    %6976 = vmatpush1.msra.mxu0 0.0
    %6977 = vmatprep.subr.mxu0 0.0
    %6978 = vmatpush1.msra.mxu0 0.0
    %6979 = vmatprep.subr.mxu0 0.0
    %6980 = vmatpush1.msra.mxu0 0.0
    %6981 = vmatprep.subr.mxu0 0.0
    %6982 = vmatpush1.msra.mxu0 0.0
    %6983 = vmatprep.subr.mxu0 0.0
    %6984 = vmatpush1.msra.mxu0 0.0
    %6985 = vmatprep.subr.mxu0 0.0
    %6986 = vmatpush1.msra.mxu0 0.0
    %6987 = vmatprep.subr.mxu0 0.0
    %6988 = vmatpush1.msra.mxu0 0.0
    %6989 = vmatprep.subr.mxu0 0.0
    %6990 = vmatpush1.msra.mxu0 0.0
    %6991 = vmatprep.subr.mxu0 0.0
    %6992 = vmatpush1.msra.mxu0 0.0
    %6993 = vmatprep.subr.mxu0 0.0
    %6994 = vmatpush1.msra.mxu0 0.0
    %6995 = vmatprep.subr.mxu0 0.0
    %6996 = vmatpush1.msra.mxu0 0.0
    %6997 = vmatprep.subr.mxu0 0.0
    %6998 = vmatpush1.msra.mxu0 0.0
    %6999 = vmatprep.subr.mxu0 0.0
    %7000 = vmatpush1.msra.mxu0 0.0
    %7001 = vmatprep.subr.mxu0 0.0
    %7002 = vmatpush1.msra.mxu0 0.0
    %7003 = vmatprep.subr.mxu0 0.0
    %7004 = vmatpush1.msra.mxu0 0.0
    %7005 = vmatprep.subr.mxu0 0.0
    %7006 = vmatpush1.msra.mxu0 0.0
    %7007 = vmatprep.subr.mxu0 0.0
    %7008 = vmatpush1.msra.mxu0 0.0
    %7009 = vmatprep.mubr.f32.mxu0 0.0
    %7010 = vmatmul.mubr.f32.gmra.mrb[0].mxu0 %v6940
    %v7011 = vpop.f32.mrb[0].mxu0
    %v7012 = vadd.f32 0.0, %v7011
    %v7013 = vpop.f32.mrb[0].mxu0
    %7014 = vmatprep.mubr.f32.mxu0 0.0
    %7015 = vmatmul.mubr.f32.gmra.mrb[0].mxu0 %v6943
    %v7016 = vpop.f32.mrb[0].mxu0
    %v7017 = vadd.f32 0.0, %v7016
    %v7018 = vpop.f32.mrb[0].mxu0
    %7019 = vdwg.mxu0
    %v7021 = vsel %vm354, %v5905, 0
    %v7024 = vsel %vm354, %v5907, 0
    %7026 = vmatprep.subr.mxu0 0.0
    %7027 = vmatpush1.msra.mxu0 %v537
    %7028 = vmatprep.subr.mxu0 0.0
    %7029 = vmatpush1.msra.mxu0 %v538
    %7030 = vmatprep.subr.mxu0 0.0
    %7031 = vmatpush1.msra.mxu0 0.0
    %7032 = vmatprep.subr.mxu0 0.0
    %7033 = vmatpush1.msra.mxu0 0.0
    %7034 = vmatprep.subr.mxu0 0.0
    %7035 = vmatpush1.msra.mxu0 0.0
    %7036 = vmatprep.subr.mxu0 0.0
    %7037 = vmatpush1.msra.mxu0 0.0
    %7038 = vmatprep.subr.mxu0 0.0
    %7039 = vmatpush1.msra.mxu0 0.0
    %7040 = vmatprep.subr.mxu0 0.0
    %7041 = vmatpush1.msra.mxu0 0.0
    %7042 = vmatprep.subr.mxu0 0.0
    %7043 = vmatpush1.msra.mxu0 0.0
    %7044 = vmatprep.subr.mxu0 0.0
    %7045 = vmatpush1.msra.mxu0 0.0
    %7046 = vmatprep.subr.mxu0 0.0
    %7047 = vmatpush1.msra.mxu0 0.0
    %7048 = vmatprep.subr.mxu0 0.0
    %7049 = vmatpush1.msra.mxu0 0.0
    %7050 = vmatprep.subr.mxu0 0.0
    %7051 = vmatpush1.msra.mxu0 0.0
    %7052 = vmatprep.subr.mxu0 0.0
    %7053 = vmatpush1.msra.mxu0 0.0
    %7054 = vmatprep.subr.mxu0 0.0
    %7055 = vmatpush1.msra.mxu0 0.0
    %7056 = vmatprep.subr.mxu0 0.0
    %7057 = vmatpush1.msra.mxu0 0.0
    %7058 = vmatprep.subr.mxu0 0.0
    %7059 = vmatpush1.msra.mxu0 0.0
    %7060 = vmatprep.subr.mxu0 0.0
    %7061 = vmatpush1.msra.mxu0 0.0
    %7062 = vmatprep.subr.mxu0 0.0
    %7063 = vmatpush1.msra.mxu0 0.0
    %7064 = vmatprep.subr.mxu0 0.0
    %7065 = vmatpush1.msra.mxu0 0.0
    %7066 = vmatprep.subr.mxu0 0.0
    %7067 = vmatpush1.msra.mxu0 0.0
    %7068 = vmatprep.subr.mxu0 0.0
    %7069 = vmatpush1.msra.mxu0 0.0
    %7070 = vmatprep.subr.mxu0 0.0
    %7071 = vmatpush1.msra.mxu0 0.0
    %7072 = vmatprep.subr.mxu0 0.0
    %7073 = vmatpush1.msra.mxu0 0.0
    %7074 = vmatprep.subr.mxu0 0.0
    %7075 = vmatpush1.msra.mxu0 0.0
    %7076 = vmatprep.subr.mxu0 0.0
    %7077 = vmatpush1.msra.mxu0 0.0
    %7078 = vmatprep.subr.mxu0 0.0
    %7079 = vmatpush1.msra.mxu0 0.0
    %7080 = vmatprep.subr.mxu0 0.0
    %7081 = vmatpush1.msra.mxu0 0.0
    %7082 = vmatprep.subr.mxu0 0.0
    %7083 = vmatpush1.msra.mxu0 0.0
    %7084 = vmatprep.subr.mxu0 0.0
    %7085 = vmatpush1.msra.mxu0 0.0
    %7086 = vmatprep.subr.mxu0 0.0
    %7087 = vmatpush1.msra.mxu0 0.0
    %7088 = vmatprep.subr.mxu0 0.0
    %7089 = vmatpush1.msra.mxu0 0.0
    %7090 = vmatprep.mubr.f32.mxu0 0.0
    %7091 = vmatmul.mubr.f32.gmra.mrb[0].mxu0 %v7021
    %v7092 = vpop.f32.mrb[0].mxu0
    %v7093 = vadd.f32 0.0, %v7092
    %v7094 = vpop.f32.mrb[0].mxu0
    %7095 = vmatprep.mubr.f32.mxu0 0.0
    %7096 = vmatmul.mubr.f32.gmra.mrb[0].mxu0 %v7024
    %v7097 = vpop.f32.mrb[0].mxu0
    %v7098 = vadd.f32 0.0, %v7097
    %v7099 = vpop.f32.mrb[0].mxu0
    %7100 = vdwg.mxu0
    %v7102 = vsel %vm354, %v5909, 0
    %v7105 = vsel %vm354, %v5911, 0
    %7107 = vmatprep.subr.mxu0 0.0
    %7108 = vmatpush1.msra.mxu0 %v539
    %7109 = vmatprep.subr.mxu0 0.0
    %7110 = vmatpush1.msra.mxu0 %v540
    %7111 = vmatprep.subr.mxu0 0.0
    %7112 = vmatpush1.msra.mxu0 0.0
    %7113 = vmatprep.subr.mxu0 0.0
    %7114 = vmatpush1.msra.mxu0 0.0
    %7115 = vmatprep.subr.mxu0 0.0
    %7116 = vmatpush1.msra.mxu0 0.0
    %7117 = vmatprep.subr.mxu0 0.0
    %7118 = vmatpush1.msra.mxu0 0.0
    %7119 = vmatprep.subr.mxu0 0.0
    %7120 = vmatpush1.msra.mxu0 0.0
    %7121 = vmatprep.subr.mxu0 0.0
    %7122 = vmatpush1.msra.mxu0 0.0
    %7123 = vmatprep.subr.mxu0 0.0
    %7124 = vmatpush1.msra.mxu0 0.0
    %7125 = vmatprep.subr.mxu0 0.0
    %7126 = vmatpush1.msra.mxu0 0.0
    %7127 = vmatprep.subr.mxu0 0.0
    %7128 = vmatpush1.msra.mxu0 0.0
    %7129 = vmatprep.subr.mxu0 0.0
    %7130 = vmatpush1.msra.mxu0 0.0
    %7131 = vmatprep.subr.mxu0 0.0
    %7132 = vmatpush1.msra.mxu0 0.0
    %7133 = vmatprep.subr.mxu0 0.0
    %7134 = vmatpush1.msra.mxu0 0.0
    %7135 = vmatprep.subr.mxu0 0.0
    %7136 = vmatpush1.msra.mxu0 0.0
    %7137 = vmatprep.subr.mxu0 0.0
    %7138 = vmatpush1.msra.mxu0 0.0
    %7139 = vmatprep.subr.mxu0 0.0
    %7140 = vmatpush1.msra.mxu0 0.0
    %7141 = vmatprep.subr.mxu0 0.0
    %7142 = vmatpush1.msra.mxu0 0.0
    %7143 = vmatprep.subr.mxu0 0.0
    %7144 = vmatpush1.msra.mxu0 0.0
    %7145 = vmatprep.subr.mxu0 0.0
    %7146 = vmatpush1.msra.mxu0 0.0
    %7147 = vmatprep.subr.mxu0 0.0
    %7148 = vmatpush1.msra.mxu0 0.0
    %7149 = vmatprep.subr.mxu0 0.0
    %7150 = vmatpush1.msra.mxu0 0.0
    %7151 = vmatprep.subr.mxu0 0.0
    %7152 = vmatpush1.msra.mxu0 0.0
    %7153 = vmatprep.subr.mxu0 0.0
    %7154 = vmatpush1.msra.mxu0 0.0
    %7155 = vmatprep.subr.mxu0 0.0
    %7156 = vmatpush1.msra.mxu0 0.0
    %7157 = vmatprep.subr.mxu0 0.0
    %7158 = vmatpush1.msra.mxu0 0.0
    %7159 = vmatprep.subr.mxu0 0.0
    %7160 = vmatpush1.msra.mxu0 0.0
    %7161 = vmatprep.subr.mxu0 0.0
    %7162 = vmatpush1.msra.mxu0 0.0
    %7163 = vmatprep.subr.mxu0 0.0
    %7164 = vmatpush1.msra.mxu0 0.0
    %7165 = vmatprep.subr.mxu0 0.0
    %7166 = vmatpush1.msra.mxu0 0.0
    %7167 = vmatprep.subr.mxu0 0.0
    %7168 = vmatpush1.msra.mxu0 0.0
    %7169 = vmatprep.subr.mxu0 0.0
    %7170 = vmatpush1.msra.mxu0 0.0
    %7171 = vmatprep.mubr.f32.mxu0 0.0
    %7172 = vmatmul.mubr.f32.gmra.mrb[0].mxu0 %v7102
    %v7173 = vpop.f32.mrb[0].mxu0
    %v7174 = vadd.f32 0.0, %v7173
    %v7175 = vpop.f32.mrb[0].mxu0
    %7176 = vmatprep.mubr.f32.mxu0 0.0
    %7177 = vmatmul.mubr.f32.gmra.mrb[0].mxu0 %v7105
    %v7178 = vpop.f32.mrb[0].mxu0
    %v7179 = vadd.f32 0.0, %v7178
    %v7180 = vpop.f32.mrb[0].mxu0
    %7181 = vdwg.mxu0
    %v7183 = vsel %vm354, %v5913, 0
    %v7186 = vsel %vm354, %v5915, 0
    %7188 = vmatprep.subr.mxu0 0.0
    %7189 = vmatpush1.msra.mxu0 %v541
    %7190 = vmatprep.subr.mxu0 0.0
    %7191 = vmatpush1.msra.mxu0 %v542
    %7192 = vmatprep.subr.mxu0 0.0
    %7193 = vmatpush1.msra.mxu0 0.0
    %7194 = vmatprep.subr.mxu0 0.0
    %7195 = vmatpush1.msra.mxu0 0.0
    %7196 = vmatprep.subr.mxu0 0.0
    %7197 = vmatpush1.msra.mxu0 0.0
    %7198 = vmatprep.subr.mxu0 0.0
    %7199 = vmatpush1.msra.mxu0 0.0
    %7200 = vmatprep.subr.mxu0 0.0
    %7201 = vmatpush1.msra.mxu0 0.0
    %7202 = vmatprep.subr.mxu0 0.0
    %7203 = vmatpush1.msra.mxu0 0.0
    %7204 = vmatprep.subr.mxu0 0.0
    %7205 = vmatpush1.msra.mxu0 0.0
    %7206 = vmatprep.subr.mxu0 0.0
    %7207 = vmatpush1.msra.mxu0 0.0
    %7208 = vmatprep.subr.mxu0 0.0
    %7209 = vmatpush1.msra.mxu0 0.0
    %7210 = vmatprep.subr.mxu0 0.0
    %7211 = vmatpush1.msra.mxu0 0.0
    %7212 = vmatprep.subr.mxu0 0.0
    %7213 = vmatpush1.msra.mxu0 0.0
    %7214 = vmatprep.subr.mxu0 0.0
    %7215 = vmatpush1.msra.mxu0 0.0
    %7216 = vmatprep.subr.mxu0 0.0
    %7217 = vmatpush1.msra.mxu0 0.0
    %7218 = vmatprep.subr.mxu0 0.0
    %7219 = vmatpush1.msra.mxu0 0.0
    %7220 = vmatprep.subr.mxu0 0.0
    %7221 = vmatpush1.msra.mxu0 0.0
    %7222 = vmatprep.subr.mxu0 0.0
    %7223 = vmatpush1.msra.mxu0 0.0
    %7224 = vmatprep.subr.mxu0 0.0
    %7225 = vmatpush1.msra.mxu0 0.0
    %7226 = vmatprep.subr.mxu0 0.0
    %7227 = vmatpush1.msra.mxu0 0.0
    %7228 = vmatprep.subr.mxu0 0.0
    %7229 = vmatpush1.msra.mxu0 0.0
    %7230 = vmatprep.subr.mxu0 0.0
    %7231 = vmatpush1.msra.mxu0 0.0
    %7232 = vmatprep.subr.mxu0 0.0
    %7233 = vmatpush1.msra.mxu0 0.0
    %7234 = vmatprep.subr.mxu0 0.0
    %7235 = vmatpush1.msra.mxu0 0.0
    %7236 = vmatprep.subr.mxu0 0.0
    %7237 = vmatpush1.msra.mxu0 0.0
    %7238 = vmatprep.subr.mxu0 0.0
    %7239 = vmatpush1.msra.mxu0 0.0
    %7240 = vmatprep.subr.mxu0 0.0
    %7241 = vmatpush1.msra.mxu0 0.0
    %7242 = vmatprep.subr.mxu0 0.0
    %7243 = vmatpush1.msra.mxu0 0.0
    %7244 = vmatprep.subr.mxu0 0.0
    %7245 = vmatpush1.msra.mxu0 0.0
    %7246 = vmatprep.subr.mxu0 0.0
    %7247 = vmatpush1.msra.mxu0 0.0
    %7248 = vmatprep.subr.mxu0 0.0
    %7249 = vmatpush1.msra.mxu0 0.0
    %7250 = vmatprep.subr.mxu0 0.0
    %7251 = vmatpush1.msra.mxu0 0.0
    %7252 = vmatprep.mubr.f32.mxu0 0.0
    %7253 = vmatmul.mubr.f32.gmra.mrb[0].mxu0 %v7183
    %v7254 = vpop.f32.mrb[0].mxu0
    %v7255 = vadd.f32 0.0, %v7254
    %v7256 = vpop.f32.mrb[0].mxu0
    %7257 = vmatprep.mubr.f32.mxu0 0.0
    %7258 = vmatmul.mubr.f32.gmra.mrb[0].mxu0 %v7186
    %v7259 = vpop.f32.mrb[0].mxu0
    %v7260 = vadd.f32 0.0, %v7259
    %v7261 = vpop.f32.mrb[0].mxu0
    %7262 = vdwg.mxu0
    %v7264 = vsel %vm354, %v5917, 0
    %v7267 = vsel %vm354, %v5919, 0
    %7269 = vmatprep.subr.mxu0 0.0
    %7270 = vmatpush1.msra.mxu0 %v543
    %7271 = vmatprep.subr.mxu0 0.0
    %7272 = vmatpush1.msra.mxu0 %v544
    %7273 = vmatprep.subr.mxu0 0.0
    %7274 = vmatpush1.msra.mxu0 0.0
    %7275 = vmatprep.subr.mxu0 0.0
    %7276 = vmatpush1.msra.mxu0 0.0
    %7277 = vmatprep.subr.mxu0 0.0
    %7278 = vmatpush1.msra.mxu0 0.0
    %7279 = vmatprep.subr.mxu0 0.0
    %7280 = vmatpush1.msra.mxu0 0.0
    %7281 = vmatprep.subr.mxu0 0.0
    %7282 = vmatpush1.msra.mxu0 0.0
    %7283 = vmatprep.subr.mxu0 0.0
    %7284 = vmatpush1.msra.mxu0 0.0
    %7285 = vmatprep.subr.mxu0 0.0
    %7286 = vmatpush1.msra.mxu0 0.0
    %7287 = vmatprep.subr.mxu0 0.0
    %7288 = vmatpush1.msra.mxu0 0.0
    %7289 = vmatprep.subr.mxu0 0.0
    %7290 = vmatpush1.msra.mxu0 0.0
    %7291 = vmatprep.subr.mxu0 0.0
    %7292 = vmatpush1.msra.mxu0 0.0
    %7293 = vmatprep.subr.mxu0 0.0
    %7294 = vmatpush1.msra.mxu0 0.0
    %7295 = vmatprep.subr.mxu0 0.0
    %7296 = vmatpush1.msra.mxu0 0.0
    %7297 = vmatprep.subr.mxu0 0.0
    %7298 = vmatpush1.msra.mxu0 0.0
    %7299 = vmatprep.subr.mxu0 0.0
    %7300 = vmatpush1.msra.mxu0 0.0
    %7301 = vmatprep.subr.mxu0 0.0
    %7302 = vmatpush1.msra.mxu0 0.0
    %7303 = vmatprep.subr.mxu0 0.0
    %7304 = vmatpush1.msra.mxu0 0.0
    %7305 = vmatprep.subr.mxu0 0.0
    %7306 = vmatpush1.msra.mxu0 0.0
    %7307 = vmatprep.subr.mxu0 0.0
    %7308 = vmatpush1.msra.mxu0 0.0
    %7309 = vmatprep.subr.mxu0 0.0
    %7310 = vmatpush1.msra.mxu0 0.0
    %7311 = vmatprep.subr.mxu0 0.0
    %7312 = vmatpush1.msra.mxu0 0.0
    %7313 = vmatprep.subr.mxu0 0.0
    %7314 = vmatpush1.msra.mxu0 0.0
    %7315 = vmatprep.subr.mxu0 0.0
    %7316 = vmatpush1.msra.mxu0 0.0
    %7317 = vmatprep.subr.mxu0 0.0
    %7318 = vmatpush1.msra.mxu0 0.0
    %7319 = vmatprep.subr.mxu0 0.0
    %7320 = vmatpush1.msra.mxu0 0.0
    %7321 = vmatprep.subr.mxu0 0.0
    %7322 = vmatpush1.msra.mxu0 0.0
    %7323 = vmatprep.subr.mxu0 0.0
    %7324 = vmatpush1.msra.mxu0 0.0
    %7325 = vmatprep.subr.mxu0 0.0
    %7326 = vmatpush1.msra.mxu0 0.0
    %7327 = vmatprep.subr.mxu0 0.0
    %7328 = vmatpush1.msra.mxu0 0.0
    %7329 = vmatprep.subr.mxu0 0.0
    %7330 = vmatpush1.msra.mxu0 0.0
    %7331 = vmatprep.subr.mxu0 0.0
    %7332 = vmatpush1.msra.mxu0 0.0
    %7333 = vmatprep.mubr.f32.mxu0 0.0
    %7334 = vmatmul.mubr.f32.gmra.mrb[0].mxu0 %v7264
    %v7335 = vpop.f32.mrb[0].mxu0
    %v7336 = vadd.f32 0.0, %v7335
    %v7337 = vpop.f32.mrb[0].mxu0
    %7338 = vmatprep.mubr.f32.mxu0 0.0
    %7339 = vmatmul.mubr.f32.gmra.mrb[0].mxu0 %v7267
    %v7340 = vpop.f32.mrb[0].mxu0
    %v7341 = vadd.f32 0.0, %v7340
    %v7342 = vpop.f32.mrb[0].mxu0
    %7343 = vdwg.mxu0
    %v7345 = vsel %vm354, %v5665, 0
    %v7348 = vsel %vm354, %v5667, 0
    %7350 = vmatprep.subr.mxu0 0.0
    %7351 = vmatpush1.msra.mxu0 %v499
    %7352 = vmatprep.subr.mxu0 0.0
    %7353 = vmatpush1.msra.mxu0 %v500
    %7354 = vmatprep.subr.mxu0 0.0
    %7355 = vmatpush1.msra.mxu0 0.0
    %7356 = vmatprep.subr.mxu0 0.0
    %7357 = vmatpush1.msra.mxu0 0.0
    %7358 = vmatprep.subr.mxu0 0.0
    %7359 = vmatpush1.msra.mxu0 0.0
    %7360 = vmatprep.subr.mxu0 0.0
    %7361 = vmatpush1.msra.mxu0 0.0
    %7362 = vmatprep.subr.mxu0 0.0
    %7363 = vmatpush1.msra.mxu0 0.0
    %7364 = vmatprep.subr.mxu0 0.0
    %7365 = vmatpush1.msra.mxu0 0.0
    %7366 = vmatprep.subr.mxu0 0.0
    %7367 = vmatpush1.msra.mxu0 0.0
    %7368 = vmatprep.subr.mxu0 0.0
    %7369 = vmatpush1.msra.mxu0 0.0
    %7370 = vmatprep.subr.mxu0 0.0
    %7371 = vmatpush1.msra.mxu0 0.0
    %7372 = vmatprep.subr.mxu0 0.0
    %7373 = vmatpush1.msra.mxu0 0.0
    %7374 = vmatprep.subr.mxu0 0.0
    %7375 = vmatpush1.msra.mxu0 0.0
    %7376 = vmatprep.subr.mxu0 0.0
    %7377 = vmatpush1.msra.mxu0 0.0
    %7378 = vmatprep.subr.mxu0 0.0
    %7379 = vmatpush1.msra.mxu0 0.0
    %7380 = vmatprep.subr.mxu0 0.0
    %7381 = vmatpush1.msra.mxu0 0.0
    %7382 = vmatprep.subr.mxu0 0.0
    %7383 = vmatpush1.msra.mxu0 0.0
    %7384 = vmatprep.subr.mxu0 0.0
    %7385 = vmatpush1.msra.mxu0 0.0
    %7386 = vmatprep.subr.mxu0 0.0
    %7387 = vmatpush1.msra.mxu0 0.0
    %7388 = vmatprep.subr.mxu0 0.0
    %7389 = vmatpush1.msra.mxu0 0.0
    %7390 = vmatprep.subr.mxu0 0.0
    %7391 = vmatpush1.msra.mxu0 0.0
    %7392 = vmatprep.subr.mxu0 0.0
    %7393 = vmatpush1.msra.mxu0 0.0
    %7394 = vmatprep.subr.mxu0 0.0
    %7395 = vmatpush1.msra.mxu0 0.0
    %7396 = vmatprep.subr.mxu0 0.0
    %7397 = vmatpush1.msra.mxu0 0.0
    %7398 = vmatprep.subr.mxu0 0.0
    %7399 = vmatpush1.msra.mxu0 0.0
    %7400 = vmatprep.subr.mxu0 0.0
    %7401 = vmatpush1.msra.mxu0 0.0
    %7402 = vmatprep.subr.mxu0 0.0
    %7403 = vmatpush1.msra.mxu0 0.0
    %7404 = vmatprep.subr.mxu0 0.0
    %7405 = vmatpush1.msra.mxu0 0.0
    %7406 = vmatprep.subr.mxu0 0.0
    %7407 = vmatpush1.msra.mxu0 0.0
    %7408 = vmatprep.subr.mxu0 0.0
    %7409 = vmatpush1.msra.mxu0 0.0
    %7410 = vmatprep.subr.mxu0 0.0
    %7411 = vmatpush1.msra.mxu0 0.0
    %7412 = vmatprep.subr.mxu0 0.0
    %7413 = vmatpush1.msra.mxu0 0.0
    %7414 = vmatprep.mubr.f32.mxu0 0.0
    %7415 = vmatmul.mubr.f32.gmra.mrb[0].mxu0 %v7345
    %v7416 = vpop.f32.mrb[0].mxu0
    %v7417 = vadd.f32 %v6121, %v7416
    %v7418 = vpop.f32.mrb[0].mxu0
    %7419 = vmatprep.mubr.f32.mxu0 0.0
    %7420 = vmatmul.mubr.f32.gmra.mrb[0].mxu0 %v7348
    %v7421 = vpop.f32.mrb[0].mxu0
    %v7422 = vadd.f32 %v6126, %v7421
    %v7423 = vpop.f32.mrb[0].mxu0
    %7424 = vdwg.mxu0
    %v7426 = vsel %vm354, %v5669, 0
    %v7429 = vsel %vm354, %v5671, 0
    %7431 = vmatprep.subr.mxu0 0.0
    %7432 = vmatpush1.msra.mxu0 %v501
    %7433 = vmatprep.subr.mxu0 0.0
    %7434 = vmatpush1.msra.mxu0 %v502
    %7435 = vmatprep.subr.mxu0 0.0
    %7436 = vmatpush1.msra.mxu0 0.0
    %7437 = vmatprep.subr.mxu0 0.0
    %7438 = vmatpush1.msra.mxu0 0.0
    %7439 = vmatprep.subr.mxu0 0.0
    %7440 = vmatpush1.msra.mxu0 0.0
    %7441 = vmatprep.subr.mxu0 0.0
    %7442 = vmatpush1.msra.mxu0 0.0
    %7443 = vmatprep.subr.mxu0 0.0
    %7444 = vmatpush1.msra.mxu0 0.0
    %7445 = vmatprep.subr.mxu0 0.0
    %7446 = vmatpush1.msra.mxu0 0.0
    %7447 = vmatprep.subr.mxu0 0.0
    %7448 = vmatpush1.msra.mxu0 0.0
    %7449 = vmatprep.subr.mxu0 0.0
    %7450 = vmatpush1.msra.mxu0 0.0
    %7451 = vmatprep.subr.mxu0 0.0
    %7452 = vmatpush1.msra.mxu0 0.0
    %7453 = vmatprep.subr.mxu0 0.0
    %7454 = vmatpush1.msra.mxu0 0.0
    %7455 = vmatprep.subr.mxu0 0.0
    %7456 = vmatpush1.msra.mxu0 0.0
    %7457 = vmatprep.subr.mxu0 0.0
    %7458 = vmatpush1.msra.mxu0 0.0
    %7459 = vmatprep.subr.mxu0 0.0
    %7460 = vmatpush1.msra.mxu0 0.0
    %7461 = vmatprep.subr.mxu0 0.0
    %7462 = vmatpush1.msra.mxu0 0.0
    %7463 = vmatprep.subr.mxu0 0.0
    %7464 = vmatpush1.msra.mxu0 0.0
    %7465 = vmatprep.subr.mxu0 0.0
    %7466 = vmatpush1.msra.mxu0 0.0
    %7467 = vmatprep.subr.mxu0 0.0
    %7468 = vmatpush1.msra.mxu0 0.0
    %7469 = vmatprep.subr.mxu0 0.0
    %7470 = vmatpush1.msra.mxu0 0.0
    %7471 = vmatprep.subr.mxu0 0.0
    %7472 = vmatpush1.msra.mxu0 0.0
    %7473 = vmatprep.subr.mxu0 0.0
    %7474 = vmatpush1.msra.mxu0 0.0
    %7475 = vmatprep.subr.mxu0 0.0
    %7476 = vmatpush1.msra.mxu0 0.0
    %7477 = vmatprep.subr.mxu0 0.0
    %7478 = vmatpush1.msra.mxu0 0.0
    %7479 = vmatprep.subr.mxu0 0.0
    %7480 = vmatpush1.msra.mxu0 0.0
    %7481 = vmatprep.subr.mxu0 0.0
    %7482 = vmatpush1.msra.mxu0 0.0
    %7483 = vmatprep.subr.mxu0 0.0
    %7484 = vmatpush1.msra.mxu0 0.0
    %7485 = vmatprep.subr.mxu0 0.0
    %7486 = vmatpush1.msra.mxu0 0.0
    %7487 = vmatprep.subr.mxu0 0.0
    %7488 = vmatpush1.msra.mxu0 0.0
    %7489 = vmatprep.subr.mxu0 0.0
    %7490 = vmatpush1.msra.mxu0 0.0
    %7491 = vmatprep.subr.mxu0 0.0
    %7492 = vmatpush1.msra.mxu0 0.0
    %7493 = vmatprep.subr.mxu0 0.0
    %7494 = vmatpush1.msra.mxu0 0.0
    %7495 = vmatprep.mubr.f32.mxu0 0.0
    %7496 = vmatmul.mubr.f32.gmra.mrb[0].mxu0 %v7426
    %v7497 = vpop.f32.mrb[0].mxu0
    %v7498 = vadd.f32 %v6202, %v7497
    %v7499 = vpop.f32.mrb[0].mxu0
    %7500 = vmatprep.mubr.f32.mxu0 0.0
    %7501 = vmatmul.mubr.f32.gmra.mrb[0].mxu0 %v7429
    %v7502 = vpop.f32.mrb[0].mxu0
    %v7503 = vadd.f32 %v6207, %v7502
    %v7504 = vpop.f32.mrb[0].mxu0
    %7505 = vdwg.mxu0
    %v7507 = vsel %vm354, %v5673, 0
    %v7510 = vsel %vm354, %v5675, 0
    %7512 = vmatprep.subr.mxu0 0.0
    %7513 = vmatpush1.msra.mxu0 %v503
    %7514 = vmatprep.subr.mxu0 0.0
    %7515 = vmatpush1.msra.mxu0 %v504
    %7516 = vmatprep.subr.mxu0 0.0
    %7517 = vmatpush1.msra.mxu0 0.0
    %7518 = vmatprep.subr.mxu0 0.0
    %7519 = vmatpush1.msra.mxu0 0.0
    %7520 = vmatprep.subr.mxu0 0.0
    %7521 = vmatpush1.msra.mxu0 0.0
    %7522 = vmatprep.subr.mxu0 0.0
    %7523 = vmatpush1.msra.mxu0 0.0
    %7524 = vmatprep.subr.mxu0 0.0
    %7525 = vmatpush1.msra.mxu0 0.0
    %7526 = vmatprep.subr.mxu0 0.0
    %7527 = vmatpush1.msra.mxu0 0.0
    %7528 = vmatprep.subr.mxu0 0.0
    %7529 = vmatpush1.msra.mxu0 0.0
    %7530 = vmatprep.subr.mxu0 0.0
    %7531 = vmatpush1.msra.mxu0 0.0
    %7532 = vmatprep.subr.mxu0 0.0
    %7533 = vmatpush1.msra.mxu0 0.0
    %7534 = vmatprep.subr.mxu0 0.0
    %7535 = vmatpush1.msra.mxu0 0.0
    %7536 = vmatprep.subr.mxu0 0.0
    %7537 = vmatpush1.msra.mxu0 0.0
    %7538 = vmatprep.subr.mxu0 0.0
    %7539 = vmatpush1.msra.mxu0 0.0
    %7540 = vmatprep.subr.mxu0 0.0
    %7541 = vmatpush1.msra.mxu0 0.0
    %7542 = vmatprep.subr.mxu0 0.0
    %7543 = vmatpush1.msra.mxu0 0.0
    %7544 = vmatprep.subr.mxu0 0.0
    %7545 = vmatpush1.msra.mxu0 0.0
    %7546 = vmatprep.subr.mxu0 0.0
    %7547 = vmatpush1.msra.mxu0 0.0
    %7548 = vmatprep.subr.mxu0 0.0
    %7549 = vmatpush1.msra.mxu0 0.0
    %7550 = vmatprep.subr.mxu0 0.0
    %7551 = vmatpush1.msra.mxu0 0.0
    %7552 = vmatprep.subr.mxu0 0.0
    %7553 = vmatpush1.msra.mxu0 0.0
    %7554 = vmatprep.subr.mxu0 0.0
    %7555 = vmatpush1.msra.mxu0 0.0
    %7556 = vmatprep.subr.mxu0 0.0
    %7557 = vmatpush1.msra.mxu0 0.0
    %7558 = vmatprep.subr.mxu0 0.0
    %7559 = vmatpush1.msra.mxu0 0.0
    %7560 = vmatprep.subr.mxu0 0.0
    %7561 = vmatpush1.msra.mxu0 0.0
    %7562 = vmatprep.subr.mxu0 0.0
    %7563 = vmatpush1.msra.mxu0 0.0
    %7564 = vmatprep.subr.mxu0 0.0
    %7565 = vmatpush1.msra.mxu0 0.0
    %7566 = vmatprep.subr.mxu0 0.0
    %7567 = vmatpush1.msra.mxu0 0.0
    %7568 = vmatprep.subr.mxu0 0.0
    %7569 = vmatpush1.msra.mxu0 0.0
    %7570 = vmatprep.subr.mxu0 0.0
    %7571 = vmatpush1.msra.mxu0 0.0
    %7572 = vmatprep.subr.mxu0 0.0
    %7573 = vmatpush1.msra.mxu0 0.0
    %7574 = vmatprep.subr.mxu0 0.0
    %7575 = vmatpush1.msra.mxu0 0.0
    %7576 = vmatprep.mubr.f32.mxu0 0.0
    %7577 = vmatmul.mubr.f32.gmra.mrb[0].mxu0 %v7507
    %v7578 = vpop.f32.mrb[0].mxu0
    %v7579 = vadd.f32 %v6283, %v7578
    %v7580 = vpop.f32.mrb[0].mxu0
    %7581 = vmatprep.mubr.f32.mxu0 0.0
    %7582 = vmatmul.mubr.f32.gmra.mrb[0].mxu0 %v7510
    %v7583 = vpop.f32.mrb[0].mxu0
    %v7584 = vadd.f32 %v6288, %v7583
    %v7585 = vpop.f32.mrb[0].mxu0
    %7586 = vdwg.mxu0
    %v7588 = vsel %vm354, %v5677, 0
    %v7591 = vsel %vm354, %v5679, 0
    %7593 = vmatprep.subr.mxu0 0.0
    %7594 = vmatpush1.msra.mxu0 %v505
    %7595 = vmatprep.subr.mxu0 0.0
    %7596 = vmatpush1.msra.mxu0 %v506
    %7597 = vmatprep.subr.mxu0 0.0
    %7598 = vmatpush1.msra.mxu0 0.0
    %7599 = vmatprep.subr.mxu0 0.0
    %7600 = vmatpush1.msra.mxu0 0.0
    %7601 = vmatprep.subr.mxu0 0.0
    %7602 = vmatpush1.msra.mxu0 0.0
    %7603 = vmatprep.subr.mxu0 0.0
    %7604 = vmatpush1.msra.mxu0 0.0
    %7605 = vmatprep.subr.mxu0 0.0
    %7606 = vmatpush1.msra.mxu0 0.0
    %7607 = vmatprep.subr.mxu0 0.0
    %7608 = vmatpush1.msra.mxu0 0.0
    %7609 = vmatprep.subr.mxu0 0.0
    %7610 = vmatpush1.msra.mxu0 0.0
    %7611 = vmatprep.subr.mxu0 0.0
    %7612 = vmatpush1.msra.mxu0 0.0
    %7613 = vmatprep.subr.mxu0 0.0
    %7614 = vmatpush1.msra.mxu0 0.0
    %7615 = vmatprep.subr.mxu0 0.0
    %7616 = vmatpush1.msra.mxu0 0.0
    %7617 = vmatprep.subr.mxu0 0.0
    %7618 = vmatpush1.msra.mxu0 0.0
    %7619 = vmatprep.subr.mxu0 0.0
    %7620 = vmatpush1.msra.mxu0 0.0
    %7621 = vmatprep.subr.mxu0 0.0
    %7622 = vmatpush1.msra.mxu0 0.0
    %7623 = vmatprep.subr.mxu0 0.0
    %7624 = vmatpush1.msra.mxu0 0.0
    %7625 = vmatprep.subr.mxu0 0.0
    %7626 = vmatpush1.msra.mxu0 0.0
    %7627 = vmatprep.subr.mxu0 0.0
    %7628 = vmatpush1.msra.mxu0 0.0
    %7629 = vmatprep.subr.mxu0 0.0
    %7630 = vmatpush1.msra.mxu0 0.0
    %7631 = vmatprep.subr.mxu0 0.0
    %7632 = vmatpush1.msra.mxu0 0.0
    %7633 = vmatprep.subr.mxu0 0.0
    %7634 = vmatpush1.msra.mxu0 0.0
    %7635 = vmatprep.subr.mxu0 0.0
    %7636 = vmatpush1.msra.mxu0 0.0
    %7637 = vmatprep.subr.mxu0 0.0
    %7638 = vmatpush1.msra.mxu0 0.0
    %7639 = vmatprep.subr.mxu0 0.0
    %7640 = vmatpush1.msra.mxu0 0.0
    %7641 = vmatprep.subr.mxu0 0.0
    %7642 = vmatpush1.msra.mxu0 0.0
    %7643 = vmatprep.subr.mxu0 0.0
    %7644 = vmatpush1.msra.mxu0 0.0
    %7645 = vmatprep.subr.mxu0 0.0
    %7646 = vmatpush1.msra.mxu0 0.0
    %7647 = vmatprep.subr.mxu0 0.0
    %7648 = vmatpush1.msra.mxu0 0.0
    %7649 = vmatprep.subr.mxu0 0.0
    %7650 = vmatpush1.msra.mxu0 0.0
    %7651 = vmatprep.subr.mxu0 0.0
    %7652 = vmatpush1.msra.mxu0 0.0
    %7653 = vmatprep.subr.mxu0 0.0
    %7654 = vmatpush1.msra.mxu0 0.0
    %7655 = vmatprep.subr.mxu0 0.0
    %7656 = vmatpush1.msra.mxu0 0.0
    %7657 = vmatprep.mubr.f32.mxu0 0.0
    %7658 = vmatmul.mubr.f32.gmra.mrb[0].mxu0 %v7588
    %v7659 = vpop.f32.mrb[0].mxu0
    %v7660 = vadd.f32 %v6364, %v7659
    %v7661 = vpop.f32.mrb[0].mxu0
    %7662 = vmatprep.mubr.f32.mxu0 0.0
    %7663 = vmatmul.mubr.f32.gmra.mrb[0].mxu0 %v7591
    %v7664 = vpop.f32.mrb[0].mxu0
    %v7665 = vadd.f32 %v6369, %v7664
    %v7666 = vpop.f32.mrb[0].mxu0
    %7667 = vdwg.mxu0
    %v7669 = vsel %vm354, %v5681, 0
    %v7672 = vsel %vm354, %v5683, 0
    %7674 = vmatprep.subr.mxu0 0.0
    %7675 = vmatpush1.msra.mxu0 %v511
    %7676 = vmatprep.subr.mxu0 0.0
    %7677 = vmatpush1.msra.mxu0 %v512
    %7678 = vmatprep.subr.mxu0 0.0
    %7679 = vmatpush1.msra.mxu0 0.0
    %7680 = vmatprep.subr.mxu0 0.0
    %7681 = vmatpush1.msra.mxu0 0.0
    %7682 = vmatprep.subr.mxu0 0.0
    %7683 = vmatpush1.msra.mxu0 0.0
    %7684 = vmatprep.subr.mxu0 0.0
    %7685 = vmatpush1.msra.mxu0 0.0
    %7686 = vmatprep.subr.mxu0 0.0
    %7687 = vmatpush1.msra.mxu0 0.0
    %7688 = vmatprep.subr.mxu0 0.0
    %7689 = vmatpush1.msra.mxu0 0.0
    %7690 = vmatprep.subr.mxu0 0.0
    %7691 = vmatpush1.msra.mxu0 0.0
    %7692 = vmatprep.subr.mxu0 0.0
    %7693 = vmatpush1.msra.mxu0 0.0
    %7694 = vmatprep.subr.mxu0 0.0
    %7695 = vmatpush1.msra.mxu0 0.0
    %7696 = vmatprep.subr.mxu0 0.0
    %7697 = vmatpush1.msra.mxu0 0.0
    %7698 = vmatprep.subr.mxu0 0.0
    %7699 = vmatpush1.msra.mxu0 0.0
    %7700 = vmatprep.subr.mxu0 0.0
    %7701 = vmatpush1.msra.mxu0 0.0
    %7702 = vmatprep.subr.mxu0 0.0
    %7703 = vmatpush1.msra.mxu0 0.0
    %7704 = vmatprep.subr.mxu0 0.0
    %7705 = vmatpush1.msra.mxu0 0.0
    %7706 = vmatprep.subr.mxu0 0.0
    %7707 = vmatpush1.msra.mxu0 0.0
    %7708 = vmatprep.subr.mxu0 0.0
    %7709 = vmatpush1.msra.mxu0 0.0
    %7710 = vmatprep.subr.mxu0 0.0
    %7711 = vmatpush1.msra.mxu0 0.0
    %7712 = vmatprep.subr.mxu0 0.0
    %7713 = vmatpush1.msra.mxu0 0.0
    %7714 = vmatprep.subr.mxu0 0.0
    %7715 = vmatpush1.msra.mxu0 0.0
    %7716 = vmatprep.subr.mxu0 0.0
    %7717 = vmatpush1.msra.mxu0 0.0
    %7718 = vmatprep.subr.mxu0 0.0
    %7719 = vmatpush1.msra.mxu0 0.0
    %7720 = vmatprep.subr.mxu0 0.0
    %7721 = vmatpush1.msra.mxu0 0.0
    %7722 = vmatprep.subr.mxu0 0.0
    %7723 = vmatpush1.msra.mxu0 0.0
    %7724 = vmatprep.subr.mxu0 0.0
    %7725 = vmatpush1.msra.mxu0 0.0
    %7726 = vmatprep.subr.mxu0 0.0
    %7727 = vmatpush1.msra.mxu0 0.0
    %7728 = vmatprep.subr.mxu0 0.0
    %7729 = vmatpush1.msra.mxu0 0.0
    %7730 = vmatprep.subr.mxu0 0.0
    %7731 = vmatpush1.msra.mxu0 0.0
    %7732 = vmatprep.subr.mxu0 0.0
    %7733 = vmatpush1.msra.mxu0 0.0
    %7734 = vmatprep.subr.mxu0 0.0
    %7735 = vmatpush1.msra.mxu0 0.0
    %7736 = vmatprep.subr.mxu0 0.0
    %7737 = vmatpush1.msra.mxu0 0.0
    %7738 = vmatprep.mubr.f32.mxu0 0.0
    %7739 = vmatmul.mubr.f32.gmra.mrb[0].mxu0 %v7669
    %v7740 = vpop.f32.mrb[0].mxu0
    %v7741 = vadd.f32 %v6445, %v7740
    %v7742 = vpop.f32.mrb[0].mxu0
    %7743 = vmatprep.mubr.f32.mxu0 0.0
    %7744 = vmatmul.mubr.f32.gmra.mrb[0].mxu0 %v7672
    %v7745 = vpop.f32.mrb[0].mxu0
    %v7746 = vadd.f32 %v6450, %v7745
    %v7747 = vpop.f32.mrb[0].mxu0
    %7748 = vdwg.mxu0
    %v7750 = vsel %vm354, %v5685, 0
    %v7753 = vsel %vm354, %v5687, 0
    %7755 = vmatprep.subr.mxu0 0.0
    %7756 = vmatpush1.msra.mxu0 %v513
    %7757 = vmatprep.subr.mxu0 0.0
    %7758 = vmatpush1.msra.mxu0 %v514
    %7759 = vmatprep.subr.mxu0 0.0
    %7760 = vmatpush1.msra.mxu0 0.0
    %7761 = vmatprep.subr.mxu0 0.0
    %7762 = vmatpush1.msra.mxu0 0.0
    %7763 = vmatprep.subr.mxu0 0.0
    %7764 = vmatpush1.msra.mxu0 0.0
    %7765 = vmatprep.subr.mxu0 0.0
    %7766 = vmatpush1.msra.mxu0 0.0
    %7767 = vmatprep.subr.mxu0 0.0
    %7768 = vmatpush1.msra.mxu0 0.0
    %7769 = vmatprep.subr.mxu0 0.0
    %7770 = vmatpush1.msra.mxu0 0.0
    %7771 = vmatprep.subr.mxu0 0.0
    %7772 = vmatpush1.msra.mxu0 0.0
    %7773 = vmatprep.subr.mxu0 0.0
    %7774 = vmatpush1.msra.mxu0 0.0
    %7775 = vmatprep.subr.mxu0 0.0
    %7776 = vmatpush1.msra.mxu0 0.0
    %7777 = vmatprep.subr.mxu0 0.0
    %7778 = vmatpush1.msra.mxu0 0.0
    %7779 = vmatprep.subr.mxu0 0.0
    %7780 = vmatpush1.msra.mxu0 0.0
    %7781 = vmatprep.subr.mxu0 0.0
    %7782 = vmatpush1.msra.mxu0 0.0
    %7783 = vmatprep.subr.mxu0 0.0
    %7784 = vmatpush1.msra.mxu0 0.0
    %7785 = vmatprep.subr.mxu0 0.0
    %7786 = vmatpush1.msra.mxu0 0.0
    %7787 = vmatprep.subr.mxu0 0.0
    %7788 = vmatpush1.msra.mxu0 0.0
    %7789 = vmatprep.subr.mxu0 0.0
    %7790 = vmatpush1.msra.mxu0 0.0
    %7791 = vmatprep.subr.mxu0 0.0
    %7792 = vmatpush1.msra.mxu0 0.0
    %7793 = vmatprep.subr.mxu0 0.0
    %7794 = vmatpush1.msra.mxu0 0.0
    %7795 = vmatprep.subr.mxu0 0.0
    %7796 = vmatpush1.msra.mxu0 0.0
    %7797 = vmatprep.subr.mxu0 0.0
    %7798 = vmatpush1.msra.mxu0 0.0
    %7799 = vmatprep.subr.mxu0 0.0
    %7800 = vmatpush1.msra.mxu0 0.0
    %7801 = vmatprep.subr.mxu0 0.0
    %7802 = vmatpush1.msra.mxu0 0.0
    %7803 = vmatprep.subr.mxu0 0.0
    %7804 = vmatpush1.msra.mxu0 0.0
    %7805 = vmatprep.subr.mxu0 0.0
    %7806 = vmatpush1.msra.mxu0 0.0
    %7807 = vmatprep.subr.mxu0 0.0
    %7808 = vmatpush1.msra.mxu0 0.0
    %7809 = vmatprep.subr.mxu0 0.0
    %7810 = vmatpush1.msra.mxu0 0.0
    %7811 = vmatprep.subr.mxu0 0.0
    %7812 = vmatpush1.msra.mxu0 0.0
    %7813 = vmatprep.subr.mxu0 0.0
    %7814 = vmatpush1.msra.mxu0 0.0
    %7815 = vmatprep.subr.mxu0 0.0
    %7816 = vmatpush1.msra.mxu0 0.0
    %7817 = vmatprep.subr.mxu0 0.0
    %7818 = vmatpush1.msra.mxu0 0.0
    %7819 = vmatprep.mubr.f32.mxu0 0.0
    %7820 = vmatmul.mubr.f32.gmra.mrb[0].mxu0 %v7750
    %v7821 = vpop.f32.mrb[0].mxu0
    %v7822 = vadd.f32 %v6526, %v7821
    %v7823 = vpop.f32.mrb[0].mxu0
    %7824 = vmatprep.mubr.f32.mxu0 0.0
    %7825 = vmatmul.mubr.f32.gmra.mrb[0].mxu0 %v7753
    %v7826 = vpop.f32.mrb[0].mxu0
    %v7827 = vadd.f32 %v6531, %v7826
    %v7828 = vpop.f32.mrb[0].mxu0
    %7829 = vdwg.mxu0
    %v7831 = vsel %vm354, %v5689, 0
    %v7834 = vsel %vm354, %v5691, 0
    %7836 = vmatprep.subr.mxu0 0.0
    %7837 = vmatpush1.msra.mxu0 %v515
    %7838 = vmatprep.subr.mxu0 0.0
    %7839 = vmatpush1.msra.mxu0 %v516
    %7840 = vmatprep.subr.mxu0 0.0
    %7841 = vmatpush1.msra.mxu0 0.0
    %7842 = vmatprep.subr.mxu0 0.0
    %7843 = vmatpush1.msra.mxu0 0.0
    %7844 = vmatprep.subr.mxu0 0.0
    %7845 = vmatpush1.msra.mxu0 0.0
    %7846 = vmatprep.subr.mxu0 0.0
    %7847 = vmatpush1.msra.mxu0 0.0
    %7848 = vmatprep.subr.mxu0 0.0
    %7849 = vmatpush1.msra.mxu0 0.0
    %7850 = vmatprep.subr.mxu0 0.0
    %7851 = vmatpush1.msra.mxu0 0.0
    %7852 = vmatprep.subr.mxu0 0.0
    %7853 = vmatpush1.msra.mxu0 0.0
    %7854 = vmatprep.subr.mxu0 0.0
    %7855 = vmatpush1.msra.mxu0 0.0
    %7856 = vmatprep.subr.mxu0 0.0
    %7857 = vmatpush1.msra.mxu0 0.0
    %7858 = vmatprep.subr.mxu0 0.0
    %7859 = vmatpush1.msra.mxu0 0.0
    %7860 = vmatprep.subr.mxu0 0.0
    %7861 = vmatpush1.msra.mxu0 0.0
    %7862 = vmatprep.subr.mxu0 0.0
    %7863 = vmatpush1.msra.mxu0 0.0
    %7864 = vmatprep.subr.mxu0 0.0
    %7865 = vmatpush1.msra.mxu0 0.0
    %7866 = vmatprep.subr.mxu0 0.0
    %7867 = vmatpush1.msra.mxu0 0.0
    %7868 = vmatprep.subr.mxu0 0.0
    %7869 = vmatpush1.msra.mxu0 0.0
    %7870 = vmatprep.subr.mxu0 0.0
    %7871 = vmatpush1.msra.mxu0 0.0
    %7872 = vmatprep.subr.mxu0 0.0
    %7873 = vmatpush1.msra.mxu0 0.0
    %7874 = vmatprep.subr.mxu0 0.0
    %7875 = vmatpush1.msra.mxu0 0.0
    %7876 = vmatprep.subr.mxu0 0.0
    %7877 = vmatpush1.msra.mxu0 0.0
    %7878 = vmatprep.subr.mxu0 0.0
    %7879 = vmatpush1.msra.mxu0 0.0
    %7880 = vmatprep.subr.mxu0 0.0
    %7881 = vmatpush1.msra.mxu0 0.0
    %7882 = vmatprep.subr.mxu0 0.0
    %7883 = vmatpush1.msra.mxu0 0.0
    %7884 = vmatprep.subr.mxu0 0.0
    %7885 = vmatpush1.msra.mxu0 0.0
    %7886 = vmatprep.subr.mxu0 0.0
    %7887 = vmatpush1.msra.mxu0 0.0
    %7888 = vmatprep.subr.mxu0 0.0
    %7889 = vmatpush1.msra.mxu0 0.0
    %7890 = vmatprep.subr.mxu0 0.0
    %7891 = vmatpush1.msra.mxu0 0.0
    %7892 = vmatprep.subr.mxu0 0.0
    %7893 = vmatpush1.msra.mxu0 0.0
    %7894 = vmatprep.subr.mxu0 0.0
    %7895 = vmatpush1.msra.mxu0 0.0
    %7896 = vmatprep.subr.mxu0 0.0
    %7897 = vmatpush1.msra.mxu0 0.0
    %7898 = vmatprep.subr.mxu0 0.0
    %7899 = vmatpush1.msra.mxu0 0.0
    %7900 = vmatprep.mubr.f32.mxu0 0.0
    %7901 = vmatmul.mubr.f32.gmra.mrb[0].mxu0 %v7831
    %v7902 = vpop.f32.mrb[0].mxu0
    %v7903 = vadd.f32 %v6607, %v7902
    %v7904 = vpop.f32.mrb[0].mxu0
    %7905 = vmatprep.mubr.f32.mxu0 0.0
    %7906 = vmatmul.mubr.f32.gmra.mrb[0].mxu0 %v7834
    %v7907 = vpop.f32.mrb[0].mxu0
    %v7908 = vadd.f32 %v6612, %v7907
    %v7909 = vpop.f32.mrb[0].mxu0
    %7910 = vdwg.mxu0
    %v7912 = vsel %vm354, %v5693, 0
    %v7915 = vsel %vm354, %v5695, 0
    %7917 = vmatprep.subr.mxu0 0.0
    %7918 = vmatpush1.msra.mxu0 %v517
    %7919 = vmatprep.subr.mxu0 0.0
    %7920 = vmatpush1.msra.mxu0 %v518
    %7921 = vmatprep.subr.mxu0 0.0
    %7922 = vmatpush1.msra.mxu0 0.0
    %7923 = vmatprep.subr.mxu0 0.0
    %7924 = vmatpush1.msra.mxu0 0.0
    %7925 = vmatprep.subr.mxu0 0.0
    %7926 = vmatpush1.msra.mxu0 0.0
    %7927 = vmatprep.subr.mxu0 0.0
    %7928 = vmatpush1.msra.mxu0 0.0
    %7929 = vmatprep.subr.mxu0 0.0
    %7930 = vmatpush1.msra.mxu0 0.0
    %7931 = vmatprep.subr.mxu0 0.0
    %7932 = vmatpush1.msra.mxu0 0.0
    %7933 = vmatprep.subr.mxu0 0.0
    %7934 = vmatpush1.msra.mxu0 0.0
    %7935 = vmatprep.subr.mxu0 0.0
    %7936 = vmatpush1.msra.mxu0 0.0
    %7937 = vmatprep.subr.mxu0 0.0
    %7938 = vmatpush1.msra.mxu0 0.0
    %7939 = vmatprep.subr.mxu0 0.0
    %7940 = vmatpush1.msra.mxu0 0.0
    %7941 = vmatprep.subr.mxu0 0.0
    %7942 = vmatpush1.msra.mxu0 0.0
    %7943 = vmatprep.subr.mxu0 0.0
    %7944 = vmatpush1.msra.mxu0 0.0
    %7945 = vmatprep.subr.mxu0 0.0
    %7946 = vmatpush1.msra.mxu0 0.0
    %7947 = vmatprep.subr.mxu0 0.0
    %7948 = vmatpush1.msra.mxu0 0.0
    %7949 = vmatprep.subr.mxu0 0.0
    %7950 = vmatpush1.msra.mxu0 0.0
    %7951 = vmatprep.subr.mxu0 0.0
    %7952 = vmatpush1.msra.mxu0 0.0
    %7953 = vmatprep.subr.mxu0 0.0
    %7954 = vmatpush1.msra.mxu0 0.0
    %7955 = vmatprep.subr.mxu0 0.0
    %7956 = vmatpush1.msra.mxu0 0.0
    %7957 = vmatprep.subr.mxu0 0.0
    %7958 = vmatpush1.msra.mxu0 0.0
    %7959 = vmatprep.subr.mxu0 0.0
    %7960 = vmatpush1.msra.mxu0 0.0
    %7961 = vmatprep.subr.mxu0 0.0
    %7962 = vmatpush1.msra.mxu0 0.0
    %7963 = vmatprep.subr.mxu0 0.0
    %7964 = vmatpush1.msra.mxu0 0.0
    %7965 = vmatprep.subr.mxu0 0.0
    %7966 = vmatpush1.msra.mxu0 0.0
    %7967 = vmatprep.subr.mxu0 0.0
    %7968 = vmatpush1.msra.mxu0 0.0
    %7969 = vmatprep.subr.mxu0 0.0
    %7970 = vmatpush1.msra.mxu0 0.0
    %7971 = vmatprep.subr.mxu0 0.0
    %7972 = vmatpush1.msra.mxu0 0.0
    %7973 = vmatprep.subr.mxu0 0.0
    %7974 = vmatpush1.msra.mxu0 0.0
    %7975 = vmatprep.subr.mxu0 0.0
    %7976 = vmatpush1.msra.mxu0 0.0
    %7977 = vmatprep.subr.mxu0 0.0
    %7978 = vmatpush1.msra.mxu0 0.0
    %7979 = vmatprep.subr.mxu0 0.0
    %7980 = vmatpush1.msra.mxu0 0.0
    %7981 = vmatprep.mubr.f32.mxu0 0.0
    %7982 = vmatmul.mubr.f32.gmra.mrb[0].mxu0 %v7912
    %v7983 = vpop.f32.mrb[0].mxu0
    %v7984 = vadd.f32 %v6688, %v7983
    %v7985 = vpop.f32.mrb[0].mxu0
    %7986 = vmatprep.mubr.f32.mxu0 0.0
    %7987 = vmatmul.mubr.f32.gmra.mrb[0].mxu0 %v7915
    %v7988 = vpop.f32.mrb[0].mxu0
    %v7989 = vadd.f32 %v6693, %v7988
    %v7990 = vpop.f32.mrb[0].mxu0
    %7991 = vdwg.mxu0
    %v7993 = vsel %vm354, %v5697, 0
    %v7996 = vsel %vm354, %v5699, 0
    %7998 = vmatprep.subr.mxu0 0.0
    %7999 = vmatpush1.msra.mxu0 %v523
    %8000 = vmatprep.subr.mxu0 0.0
    %8001 = vmatpush1.msra.mxu0 %v524
    %8002 = vmatprep.subr.mxu0 0.0
    %8003 = vmatpush1.msra.mxu0 0.0
    %8004 = vmatprep.subr.mxu0 0.0
    %8005 = vmatpush1.msra.mxu0 0.0
    %8006 = vmatprep.subr.mxu0 0.0
    %8007 = vmatpush1.msra.mxu0 0.0
    %8008 = vmatprep.subr.mxu0 0.0
    %8009 = vmatpush1.msra.mxu0 0.0
    %8010 = vmatprep.subr.mxu0 0.0
    %8011 = vmatpush1.msra.mxu0 0.0
    %8012 = vmatprep.subr.mxu0 0.0
    %8013 = vmatpush1.msra.mxu0 0.0
    %8014 = vmatprep.subr.mxu0 0.0
    %8015 = vmatpush1.msra.mxu0 0.0
    %8016 = vmatprep.subr.mxu0 0.0
    %8017 = vmatpush1.msra.mxu0 0.0
    %8018 = vmatprep.subr.mxu0 0.0
    %8019 = vmatpush1.msra.mxu0 0.0
    %8020 = vmatprep.subr.mxu0 0.0
    %8021 = vmatpush1.msra.mxu0 0.0
    %8022 = vmatprep.subr.mxu0 0.0
    %8023 = vmatpush1.msra.mxu0 0.0
    %8024 = vmatprep.subr.mxu0 0.0
    %8025 = vmatpush1.msra.mxu0 0.0
    %8026 = vmatprep.subr.mxu0 0.0
    %8027 = vmatpush1.msra.mxu0 0.0
    %8028 = vmatprep.subr.mxu0 0.0
    %8029 = vmatpush1.msra.mxu0 0.0
    %8030 = vmatprep.subr.mxu0 0.0
    %8031 = vmatpush1.msra.mxu0 0.0
    %8032 = vmatprep.subr.mxu0 0.0
    %8033 = vmatpush1.msra.mxu0 0.0
    %8034 = vmatprep.subr.mxu0 0.0
    %8035 = vmatpush1.msra.mxu0 0.0
    %8036 = vmatprep.subr.mxu0 0.0
    %8037 = vmatpush1.msra.mxu0 0.0
    %8038 = vmatprep.subr.mxu0 0.0
    %8039 = vmatpush1.msra.mxu0 0.0
    %8040 = vmatprep.subr.mxu0 0.0
    %8041 = vmatpush1.msra.mxu0 0.0
    %8042 = vmatprep.subr.mxu0 0.0
    %8043 = vmatpush1.msra.mxu0 0.0
    %8044 = vmatprep.subr.mxu0 0.0
    %8045 = vmatpush1.msra.mxu0 0.0
    %8046 = vmatprep.subr.mxu0 0.0
    %8047 = vmatpush1.msra.mxu0 0.0
    %8048 = vmatprep.subr.mxu0 0.0
    %8049 = vmatpush1.msra.mxu0 0.0
    %8050 = vmatprep.subr.mxu0 0.0
    %8051 = vmatpush1.msra.mxu0 0.0
    %8052 = vmatprep.subr.mxu0 0.0
    %8053 = vmatpush1.msra.mxu0 0.0
    %8054 = vmatprep.subr.mxu0 0.0
    %8055 = vmatpush1.msra.mxu0 0.0
    %8056 = vmatprep.subr.mxu0 0.0
    %8057 = vmatpush1.msra.mxu0 0.0
    %8058 = vmatprep.subr.mxu0 0.0
    %8059 = vmatpush1.msra.mxu0 0.0
    %8060 = vmatprep.subr.mxu0 0.0
    %8061 = vmatpush1.msra.mxu0 0.0
    %8062 = vmatprep.mubr.f32.mxu0 0.0
    %8063 = vmatmul.mubr.f32.gmra.mrb[0].mxu0 %v7993
    %v8064 = vpop.f32.mrb[0].mxu0
    %v8065 = vadd.f32 %v6769, %v8064
    %v8066 = vpop.f32.mrb[0].mxu0
    %8067 = vmatprep.mubr.f32.mxu0 0.0
    %8068 = vmatmul.mubr.f32.gmra.mrb[0].mxu0 %v7996
    %v8069 = vpop.f32.mrb[0].mxu0
    %v8070 = vadd.f32 %v6774, %v8069
    %v8071 = vpop.f32.mrb[0].mxu0
    %8072 = vdwg.mxu0
    %v8074 = vsel %vm354, %v5701, 0
    %v8077 = vsel %vm354, %v5703, 0
    %8079 = vmatprep.subr.mxu0 0.0
    %8080 = vmatpush1.msra.mxu0 %v525
    %8081 = vmatprep.subr.mxu0 0.0
    %8082 = vmatpush1.msra.mxu0 %v526
    %8083 = vmatprep.subr.mxu0 0.0
    %8084 = vmatpush1.msra.mxu0 0.0
    %8085 = vmatprep.subr.mxu0 0.0
    %8086 = vmatpush1.msra.mxu0 0.0
    %8087 = vmatprep.subr.mxu0 0.0
    %8088 = vmatpush1.msra.mxu0 0.0
    %8089 = vmatprep.subr.mxu0 0.0
    %8090 = vmatpush1.msra.mxu0 0.0
    %8091 = vmatprep.subr.mxu0 0.0
    %8092 = vmatpush1.msra.mxu0 0.0
    %8093 = vmatprep.subr.mxu0 0.0
    %8094 = vmatpush1.msra.mxu0 0.0
    %8095 = vmatprep.subr.mxu0 0.0
    %8096 = vmatpush1.msra.mxu0 0.0
    %8097 = vmatprep.subr.mxu0 0.0
    %8098 = vmatpush1.msra.mxu0 0.0
    %8099 = vmatprep.subr.mxu0 0.0
    %8100 = vmatpush1.msra.mxu0 0.0
    %8101 = vmatprep.subr.mxu0 0.0
    %8102 = vmatpush1.msra.mxu0 0.0
    %8103 = vmatprep.subr.mxu0 0.0
    %8104 = vmatpush1.msra.mxu0 0.0
    %8105 = vmatprep.subr.mxu0 0.0
    %8106 = vmatpush1.msra.mxu0 0.0
    %8107 = vmatprep.subr.mxu0 0.0
    %8108 = vmatpush1.msra.mxu0 0.0
    %8109 = vmatprep.subr.mxu0 0.0
    %8110 = vmatpush1.msra.mxu0 0.0
    %8111 = vmatprep.subr.mxu0 0.0
    %8112 = vmatpush1.msra.mxu0 0.0
    %8113 = vmatprep.subr.mxu0 0.0
    %8114 = vmatpush1.msra.mxu0 0.0
    %8115 = vmatprep.subr.mxu0 0.0
    %8116 = vmatpush1.msra.mxu0 0.0
    %8117 = vmatprep.subr.mxu0 0.0
    %8118 = vmatpush1.msra.mxu0 0.0
    %8119 = vmatprep.subr.mxu0 0.0
    %8120 = vmatpush1.msra.mxu0 0.0
    %8121 = vmatprep.subr.mxu0 0.0
    %8122 = vmatpush1.msra.mxu0 0.0
    %8123 = vmatprep.subr.mxu0 0.0
    %8124 = vmatpush1.msra.mxu0 0.0
    %8125 = vmatprep.subr.mxu0 0.0
    %8126 = vmatpush1.msra.mxu0 0.0
    %8127 = vmatprep.subr.mxu0 0.0
    %8128 = vmatpush1.msra.mxu0 0.0
    %8129 = vmatprep.subr.mxu0 0.0
    %8130 = vmatpush1.msra.mxu0 0.0
    %8131 = vmatprep.subr.mxu0 0.0
    %8132 = vmatpush1.msra.mxu0 0.0
    %8133 = vmatprep.subr.mxu0 0.0
    %8134 = vmatpush1.msra.mxu0 0.0
    %8135 = vmatprep.subr.mxu0 0.0
    %8136 = vmatpush1.msra.mxu0 0.0
    %8137 = vmatprep.subr.mxu0 0.0
    %8138 = vmatpush1.msra.mxu0 0.0
    %8139 = vmatprep.subr.mxu0 0.0
    %8140 = vmatpush1.msra.mxu0 0.0
    %8141 = vmatprep.subr.mxu0 0.0
    %8142 = vmatpush1.msra.mxu0 0.0
    %8143 = vmatprep.mubr.f32.mxu0 0.0
    %8144 = vmatmul.mubr.f32.gmra.mrb[0].mxu0 %v8074
    %v8145 = vpop.f32.mrb[0].mxu0
    %v8146 = vadd.f32 %v6850, %v8145
    %v8147 = vpop.f32.mrb[0].mxu0
    %8148 = vmatprep.mubr.f32.mxu0 0.0
    %8149 = vmatmul.mubr.f32.gmra.mrb[0].mxu0 %v8077
    %v8150 = vpop.f32.mrb[0].mxu0
    %v8151 = vadd.f32 %v6855, %v8150
    %v8152 = vpop.f32.mrb[0].mxu0
    %8153 = vdwg.mxu0
    %v8155 = vsel %vm354, %v5705, 0
    %v8158 = vsel %vm354, %v5707, 0
    %8160 = vmatprep.subr.mxu0 0.0
    %8161 = vmatpush1.msra.mxu0 %v527
    %8162 = vmatprep.subr.mxu0 0.0
    %8163 = vmatpush1.msra.mxu0 %v528
    %8164 = vmatprep.subr.mxu0 0.0
    %8165 = vmatpush1.msra.mxu0 0.0
    %8166 = vmatprep.subr.mxu0 0.0
    %8167 = vmatpush1.msra.mxu0 0.0
    %8168 = vmatprep.subr.mxu0 0.0
    %8169 = vmatpush1.msra.mxu0 0.0
    %8170 = vmatprep.subr.mxu0 0.0
    %8171 = vmatpush1.msra.mxu0 0.0
    %8172 = vmatprep.subr.mxu0 0.0
    %8173 = vmatpush1.msra.mxu0 0.0
    %8174 = vmatprep.subr.mxu0 0.0
    %8175 = vmatpush1.msra.mxu0 0.0
    %8176 = vmatprep.subr.mxu0 0.0
    %8177 = vmatpush1.msra.mxu0 0.0
    %8178 = vmatprep.subr.mxu0 0.0
    %8179 = vmatpush1.msra.mxu0 0.0
    %8180 = vmatprep.subr.mxu0 0.0
    %8181 = vmatpush1.msra.mxu0 0.0
    %8182 = vmatprep.subr.mxu0 0.0
    %8183 = vmatpush1.msra.mxu0 0.0
    %8184 = vmatprep.subr.mxu0 0.0
    %8185 = vmatpush1.msra.mxu0 0.0
    %8186 = vmatprep.subr.mxu0 0.0
    %8187 = vmatpush1.msra.mxu0 0.0
    %8188 = vmatprep.subr.mxu0 0.0
    %8189 = vmatpush1.msra.mxu0 0.0
    %8190 = vmatprep.subr.mxu0 0.0
    %8191 = vmatpush1.msra.mxu0 0.0
    %8192 = vmatprep.subr.mxu0 0.0
    %8193 = vmatpush1.msra.mxu0 0.0
    %8194 = vmatprep.subr.mxu0 0.0
    %8195 = vmatpush1.msra.mxu0 0.0
    %8196 = vmatprep.subr.mxu0 0.0
    %8197 = vmatpush1.msra.mxu0 0.0
    %8198 = vmatprep.subr.mxu0 0.0
    %8199 = vmatpush1.msra.mxu0 0.0
    %8200 = vmatprep.subr.mxu0 0.0
    %8201 = vmatpush1.msra.mxu0 0.0
    %8202 = vmatprep.subr.mxu0 0.0
    %8203 = vmatpush1.msra.mxu0 0.0
    %8204 = vmatprep.subr.mxu0 0.0
    %8205 = vmatpush1.msra.mxu0 0.0
    %8206 = vmatprep.subr.mxu0 0.0
    %8207 = vmatpush1.msra.mxu0 0.0
    %8208 = vmatprep.subr.mxu0 0.0
    %8209 = vmatpush1.msra.mxu0 0.0
    %8210 = vmatprep.subr.mxu0 0.0
    %8211 = vmatpush1.msra.mxu0 0.0
    %8212 = vmatprep.subr.mxu0 0.0
    %8213 = vmatpush1.msra.mxu0 0.0
    %8214 = vmatprep.subr.mxu0 0.0
    %8215 = vmatpush1.msra.mxu0 0.0
    %8216 = vmatprep.subr.mxu0 0.0
    %8217 = vmatpush1.msra.mxu0 0.0
    %8218 = vmatprep.subr.mxu0 0.0
    %8219 = vmatpush1.msra.mxu0 0.0
    %8220 = vmatprep.subr.mxu0 0.0
    %8221 = vmatpush1.msra.mxu0 0.0
    %8222 = vmatprep.subr.mxu0 0.0
    %8223 = vmatpush1.msra.mxu0 0.0
    %8224 = vmatprep.mubr.f32.mxu0 0.0
    %8225 = vmatmul.mubr.f32.gmra.mrb[0].mxu0 %v8155
    %v8226 = vpop.f32.mrb[0].mxu0
    %v8227 = vadd.f32 %v6931, %v8226
    %v8228 = vpop.f32.mrb[0].mxu0
    %8229 = vmatprep.mubr.f32.mxu0 0.0
    %8230 = vmatmul.mubr.f32.gmra.mrb[0].mxu0 %v8158
    %v8231 = vpop.f32.mrb[0].mxu0
    %v8232 = vadd.f32 %v6936, %v8231
    %v8233 = vpop.f32.mrb[0].mxu0
    %8234 = vdwg.mxu0
    %v8236 = vsel %vm354, %v5709, 0
    %v8239 = vsel %vm354, %v5711, 0
    %8241 = vmatprep.subr.mxu0 0.0
    %8242 = vmatpush1.msra.mxu0 %v529
    %8243 = vmatprep.subr.mxu0 0.0
    %8244 = vmatpush1.msra.mxu0 %v530
    %8245 = vmatprep.subr.mxu0 0.0
    %8246 = vmatpush1.msra.mxu0 0.0
    %8247 = vmatprep.subr.mxu0 0.0
    %8248 = vmatpush1.msra.mxu0 0.0
    %8249 = vmatprep.subr.mxu0 0.0
    %8250 = vmatpush1.msra.mxu0 0.0
    %8251 = vmatprep.subr.mxu0 0.0
    %8252 = vmatpush1.msra.mxu0 0.0
    %8253 = vmatprep.subr.mxu0 0.0
    %8254 = vmatpush1.msra.mxu0 0.0
    %8255 = vmatprep.subr.mxu0 0.0
    %8256 = vmatpush1.msra.mxu0 0.0
    %8257 = vmatprep.subr.mxu0 0.0
    %8258 = vmatpush1.msra.mxu0 0.0
    %8259 = vmatprep.subr.mxu0 0.0
    %8260 = vmatpush1.msra.mxu0 0.0
    %8261 = vmatprep.subr.mxu0 0.0
    %8262 = vmatpush1.msra.mxu0 0.0
    %8263 = vmatprep.subr.mxu0 0.0
    %8264 = vmatpush1.msra.mxu0 0.0
    %8265 = vmatprep.subr.mxu0 0.0
    %8266 = vmatpush1.msra.mxu0 0.0
    %8267 = vmatprep.subr.mxu0 0.0
    %8268 = vmatpush1.msra.mxu0 0.0
    %8269 = vmatprep.subr.mxu0 0.0
    %8270 = vmatpush1.msra.mxu0 0.0
    %8271 = vmatprep.subr.mxu0 0.0
    %8272 = vmatpush1.msra.mxu0 0.0
    %8273 = vmatprep.subr.mxu0 0.0
    %8274 = vmatpush1.msra.mxu0 0.0
    %8275 = vmatprep.subr.mxu0 0.0
    %8276 = vmatpush1.msra.mxu0 0.0
    %8277 = vmatprep.subr.mxu0 0.0
    %8278 = vmatpush1.msra.mxu0 0.0
    %8279 = vmatprep.subr.mxu0 0.0
    %8280 = vmatpush1.msra.mxu0 0.0
    %8281 = vmatprep.subr.mxu0 0.0
    %8282 = vmatpush1.msra.mxu0 0.0
    %8283 = vmatprep.subr.mxu0 0.0
    %8284 = vmatpush1.msra.mxu0 0.0
    %8285 = vmatprep.subr.mxu0 0.0
    %8286 = vmatpush1.msra.mxu0 0.0
    %8287 = vmatprep.subr.mxu0 0.0
    %8288 = vmatpush1.msra.mxu0 0.0
    %8289 = vmatprep.subr.mxu0 0.0
    %8290 = vmatpush1.msra.mxu0 0.0
    %8291 = vmatprep.subr.mxu0 0.0
    %8292 = vmatpush1.msra.mxu0 0.0
    %8293 = vmatprep.subr.mxu0 0.0
    %8294 = vmatpush1.msra.mxu0 0.0
    %8295 = vmatprep.subr.mxu0 0.0
    %8296 = vmatpush1.msra.mxu0 0.0
    %8297 = vmatprep.subr.mxu0 0.0
    %8298 = vmatpush1.msra.mxu0 0.0
    %8299 = vmatprep.subr.mxu0 0.0
    %8300 = vmatpush1.msra.mxu0 0.0
    %8301 = vmatprep.subr.mxu0 0.0
    %8302 = vmatpush1.msra.mxu0 0.0
    %8303 = vmatprep.subr.mxu0 0.0
    %8304 = vmatpush1.msra.mxu0 0.0
    %8305 = vmatprep.mubr.f32.mxu0 0.0
    %8306 = vmatmul.mubr.f32.gmra.mrb[0].mxu0 %v8236
    %v8307 = vpop.f32.mrb[0].mxu0
    %v8308 = vadd.f32 %v7012, %v8307
    %v8309 = vpop.f32.mrb[0].mxu0
    %8310 = vmatprep.mubr.f32.mxu0 0.0
    %8311 = vmatmul.mubr.f32.gmra.mrb[0].mxu0 %v8239
    %v8312 = vpop.f32.mrb[0].mxu0
    %v8313 = vadd.f32 %v7017, %v8312
    %v8314 = vpop.f32.mrb[0].mxu0
    %8315 = vdwg.mxu0
    %v8317 = vsel %vm354, %v5713, 0
    %v8320 = vsel %vm354, %v5715, 0
    %8322 = vmatprep.subr.mxu0 0.0
    %8323 = vmatpush1.msra.mxu0 %v535
    %8324 = vmatprep.subr.mxu0 0.0
    %8325 = vmatpush1.msra.mxu0 %v536
    %8326 = vmatprep.subr.mxu0 0.0
    %8327 = vmatpush1.msra.mxu0 0.0
    %8328 = vmatprep.subr.mxu0 0.0
    %8329 = vmatpush1.msra.mxu0 0.0
    %8330 = vmatprep.subr.mxu0 0.0
    %8331 = vmatpush1.msra.mxu0 0.0
    %8332 = vmatprep.subr.mxu0 0.0
    %8333 = vmatpush1.msra.mxu0 0.0
    %8334 = vmatprep.subr.mxu0 0.0
    %8335 = vmatpush1.msra.mxu0 0.0
    %8336 = vmatprep.subr.mxu0 0.0
    %8337 = vmatpush1.msra.mxu0 0.0
    %8338 = vmatprep.subr.mxu0 0.0
    %8339 = vmatpush1.msra.mxu0 0.0
    %8340 = vmatprep.subr.mxu0 0.0
    %8341 = vmatpush1.msra.mxu0 0.0
    %8342 = vmatprep.subr.mxu0 0.0
    %8343 = vmatpush1.msra.mxu0 0.0
    %8344 = vmatprep.subr.mxu0 0.0
    %8345 = vmatpush1.msra.mxu0 0.0
    %8346 = vmatprep.subr.mxu0 0.0
    %8347 = vmatpush1.msra.mxu0 0.0
    %8348 = vmatprep.subr.mxu0 0.0
    %8349 = vmatpush1.msra.mxu0 0.0
    %8350 = vmatprep.subr.mxu0 0.0
    %8351 = vmatpush1.msra.mxu0 0.0
    %8352 = vmatprep.subr.mxu0 0.0
    %8353 = vmatpush1.msra.mxu0 0.0
    %8354 = vmatprep.subr.mxu0 0.0
    %8355 = vmatpush1.msra.mxu0 0.0
    %8356 = vmatprep.subr.mxu0 0.0
    %8357 = vmatpush1.msra.mxu0 0.0
    %8358 = vmatprep.subr.mxu0 0.0
    %8359 = vmatpush1.msra.mxu0 0.0
    %8360 = vmatprep.subr.mxu0 0.0
    %8361 = vmatpush1.msra.mxu0 0.0
    %8362 = vmatprep.subr.mxu0 0.0
    %8363 = vmatpush1.msra.mxu0 0.0
    %8364 = vmatprep.subr.mxu0 0.0
    %8365 = vmatpush1.msra.mxu0 0.0
    %8366 = vmatprep.subr.mxu0 0.0
    %8367 = vmatpush1.msra.mxu0 0.0
    %8368 = vmatprep.subr.mxu0 0.0
    %8369 = vmatpush1.msra.mxu0 0.0
    %8370 = vmatprep.subr.mxu0 0.0
    %8371 = vmatpush1.msra.mxu0 0.0
    %8372 = vmatprep.subr.mxu0 0.0
    %8373 = vmatpush1.msra.mxu0 0.0
    %8374 = vmatprep.subr.mxu0 0.0
    %8375 = vmatpush1.msra.mxu0 0.0
    %8376 = vmatprep.subr.mxu0 0.0
    %8377 = vmatpush1.msra.mxu0 0.0
    %8378 = vmatprep.subr.mxu0 0.0
    %8379 = vmatpush1.msra.mxu0 0.0
    %8380 = vmatprep.subr.mxu0 0.0
    %8381 = vmatpush1.msra.mxu0 0.0
    %8382 = vmatprep.subr.mxu0 0.0
    %8383 = vmatpush1.msra.mxu0 0.0
    %8384 = vmatprep.subr.mxu0 0.0
    %8385 = vmatpush1.msra.mxu0 0.0
    %8386 = vmatprep.mubr.f32.mxu0 0.0
    %8387 = vmatmul.mubr.f32.gmra.mrb[0].mxu0 %v8317
    %v8388 = vpop.f32.mrb[0].mxu0
    %v8389 = vadd.f32 %v7093, %v8388
    %v8390 = vpop.f32.mrb[0].mxu0
    %8391 = vmatprep.mubr.f32.mxu0 0.0
    %8392 = vmatmul.mubr.f32.gmra.mrb[0].mxu0 %v8320
    %v8393 = vpop.f32.mrb[0].mxu0
    %v8394 = vadd.f32 %v7098, %v8393
    %v8395 = vpop.f32.mrb[0].mxu0
    %8396 = vdwg.mxu0
    %v8398 = vsel %vm354, %v5717, 0
    %v8401 = vsel %vm354, %v5719, 0
    %8403 = vmatprep.subr.mxu0 0.0
    %8404 = vmatpush1.msra.mxu0 %v537
    %8405 = vmatprep.subr.mxu0 0.0
    %8406 = vmatpush1.msra.mxu0 %v538
    %8407 = vmatprep.subr.mxu0 0.0
    %8408 = vmatpush1.msra.mxu0 0.0
    %8409 = vmatprep.subr.mxu0 0.0
    %8410 = vmatpush1.msra.mxu0 0.0
    %8411 = vmatprep.subr.mxu0 0.0
    %8412 = vmatpush1.msra.mxu0 0.0
    %8413 = vmatprep.subr.mxu0 0.0
    %8414 = vmatpush1.msra.mxu0 0.0
    %8415 = vmatprep.subr.mxu0 0.0
    %8416 = vmatpush1.msra.mxu0 0.0
    %8417 = vmatprep.subr.mxu0 0.0
    %8418 = vmatpush1.msra.mxu0 0.0
    %8419 = vmatprep.subr.mxu0 0.0
    %8420 = vmatpush1.msra.mxu0 0.0
    %8421 = vmatprep.subr.mxu0 0.0
    %8422 = vmatpush1.msra.mxu0 0.0
    %8423 = vmatprep.subr.mxu0 0.0
    %8424 = vmatpush1.msra.mxu0 0.0
    %8425 = vmatprep.subr.mxu0 0.0
    %8426 = vmatpush1.msra.mxu0 0.0
    %8427 = vmatprep.subr.mxu0 0.0
    %8428 = vmatpush1.msra.mxu0 0.0
    %8429 = vmatprep.subr.mxu0 0.0
    %8430 = vmatpush1.msra.mxu0 0.0
    %8431 = vmatprep.subr.mxu0 0.0
    %8432 = vmatpush1.msra.mxu0 0.0
    %8433 = vmatprep.subr.mxu0 0.0
    %8434 = vmatpush1.msra.mxu0 0.0
    %8435 = vmatprep.subr.mxu0 0.0
    %8436 = vmatpush1.msra.mxu0 0.0
    %8437 = vmatprep.subr.mxu0 0.0
    %8438 = vmatpush1.msra.mxu0 0.0
    %8439 = vmatprep.subr.mxu0 0.0
    %8440 = vmatpush1.msra.mxu0 0.0
    %8441 = vmatprep.subr.mxu0 0.0
    %8442 = vmatpush1.msra.mxu0 0.0
    %8443 = vmatprep.subr.mxu0 0.0
    %8444 = vmatpush1.msra.mxu0 0.0
    %8445 = vmatprep.subr.mxu0 0.0
    %8446 = vmatpush1.msra.mxu0 0.0
    %8447 = vmatprep.subr.mxu0 0.0
    %8448 = vmatpush1.msra.mxu0 0.0
    %8449 = vmatprep.subr.mxu0 0.0
    %8450 = vmatpush1.msra.mxu0 0.0
    %8451 = vmatprep.subr.mxu0 0.0
    %8452 = vmatpush1.msra.mxu0 0.0
    %8453 = vmatprep.subr.mxu0 0.0
    %8454 = vmatpush1.msra.mxu0 0.0
    %8455 = vmatprep.subr.mxu0 0.0
    %8456 = vmatpush1.msra.mxu0 0.0
    %8457 = vmatprep.subr.mxu0 0.0
    %8458 = vmatpush1.msra.mxu0 0.0
    %8459 = vmatprep.subr.mxu0 0.0
    %8460 = vmatpush1.msra.mxu0 0.0
    %8461 = vmatprep.subr.mxu0 0.0
    %8462 = vmatpush1.msra.mxu0 0.0
    %8463 = vmatprep.subr.mxu0 0.0
    %8464 = vmatpush1.msra.mxu0 0.0
    %8465 = vmatprep.subr.mxu0 0.0
    %8466 = vmatpush1.msra.mxu0 0.0
    %8467 = vmatprep.mubr.f32.mxu0 0.0
    %8468 = vmatmul.mubr.f32.gmra.mrb[0].mxu0 %v8398
    %v8469 = vpop.f32.mrb[0].mxu0
    %v8470 = vadd.f32 %v7174, %v8469
    %v8471 = vpop.f32.mrb[0].mxu0
    %8472 = vmatprep.mubr.f32.mxu0 0.0
    %8473 = vmatmul.mubr.f32.gmra.mrb[0].mxu0 %v8401
    %v8474 = vpop.f32.mrb[0].mxu0
    %v8475 = vadd.f32 %v7179, %v8474
    %v8476 = vpop.f32.mrb[0].mxu0
    %8477 = vdwg.mxu0
    %v8479 = vsel %vm354, %v5721, 0
    %v8482 = vsel %vm354, %v5723, 0
    %8484 = vmatprep.subr.mxu0 0.0
    %8485 = vmatpush1.msra.mxu0 %v539
    %8486 = vmatprep.subr.mxu0 0.0
    %8487 = vmatpush1.msra.mxu0 %v540
    %8488 = vmatprep.subr.mxu0 0.0
    %8489 = vmatpush1.msra.mxu0 0.0
    %8490 = vmatprep.subr.mxu0 0.0
    %8491 = vmatpush1.msra.mxu0 0.0
    %8492 = vmatprep.subr.mxu0 0.0
    %8493 = vmatpush1.msra.mxu0 0.0
    %8494 = vmatprep.subr.mxu0 0.0
    %8495 = vmatpush1.msra.mxu0 0.0
    %8496 = vmatprep.subr.mxu0 0.0
    %8497 = vmatpush1.msra.mxu0 0.0
    %8498 = vmatprep.subr.mxu0 0.0
    %8499 = vmatpush1.msra.mxu0 0.0
    %8500 = vmatprep.subr.mxu0 0.0
    %8501 = vmatpush1.msra.mxu0 0.0
    %8502 = vmatprep.subr.mxu0 0.0
    %8503 = vmatpush1.msra.mxu0 0.0
    %8504 = vmatprep.subr.mxu0 0.0
    %8505 = vmatpush1.msra.mxu0 0.0
    %8506 = vmatprep.subr.mxu0 0.0
    %8507 = vmatpush1.msra.mxu0 0.0
    %8508 = vmatprep.subr.mxu0 0.0
    %8509 = vmatpush1.msra.mxu0 0.0
    %8510 = vmatprep.subr.mxu0 0.0
    %8511 = vmatpush1.msra.mxu0 0.0
    %8512 = vmatprep.subr.mxu0 0.0
    %8513 = vmatpush1.msra.mxu0 0.0
    %8514 = vmatprep.subr.mxu0 0.0
    %8515 = vmatpush1.msra.mxu0 0.0
    %8516 = vmatprep.subr.mxu0 0.0
    %8517 = vmatpush1.msra.mxu0 0.0
    %8518 = vmatprep.subr.mxu0 0.0
    %8519 = vmatpush1.msra.mxu0 0.0
    %8520 = vmatprep.subr.mxu0 0.0
    %8521 = vmatpush1.msra.mxu0 0.0
    %8522 = vmatprep.subr.mxu0 0.0
    %8523 = vmatpush1.msra.mxu0 0.0
    %8524 = vmatprep.subr.mxu0 0.0
    %8525 = vmatpush1.msra.mxu0 0.0
    %8526 = vmatprep.subr.mxu0 0.0
    %8527 = vmatpush1.msra.mxu0 0.0
    %8528 = vmatprep.subr.mxu0 0.0
    %8529 = vmatpush1.msra.mxu0 0.0
    %8530 = vmatprep.subr.mxu0 0.0
    %8531 = vmatpush1.msra.mxu0 0.0
    %8532 = vmatprep.subr.mxu0 0.0
    %8533 = vmatpush1.msra.mxu0 0.0
    %8534 = vmatprep.subr.mxu0 0.0
    %8535 = vmatpush1.msra.mxu0 0.0
    %8536 = vmatprep.subr.mxu0 0.0
    %8537 = vmatpush1.msra.mxu0 0.0
    %8538 = vmatprep.subr.mxu0 0.0
    %8539 = vmatpush1.msra.mxu0 0.0
    %8540 = vmatprep.subr.mxu0 0.0
    %8541 = vmatpush1.msra.mxu0 0.0
    %8542 = vmatprep.subr.mxu0 0.0
    %8543 = vmatpush1.msra.mxu0 0.0
    %8544 = vmatprep.subr.mxu0 0.0
    %8545 = vmatpush1.msra.mxu0 0.0
    %8546 = vmatprep.subr.mxu0 0.0
    %8547 = vmatpush1.msra.mxu0 0.0
    %8548 = vmatprep.mubr.f32.mxu0 0.0
    %8549 = vmatmul.mubr.f32.gmra.mrb[0].mxu0 %v8479
    %v8550 = vpop.f32.mrb[0].mxu0
    %v8551 = vadd.f32 %v7255, %v8550
    %v8552 = vpop.f32.mrb[0].mxu0
    %8553 = vmatprep.mubr.f32.mxu0 0.0
    %8554 = vmatmul.mubr.f32.gmra.mrb[0].mxu0 %v8482
    %v8555 = vpop.f32.mrb[0].mxu0
    %v8556 = vadd.f32 %v7260, %v8555
    %v8557 = vpop.f32.mrb[0].mxu0
    %8558 = vdwg.mxu0
    %v8560 = vsel %vm354, %v5725, 0
    %v8563 = vsel %vm354, %v5727, 0
    %8565 = vmatprep.subr.mxu0 0.0
    %8566 = vmatpush1.msra.mxu0 %v541
    %8567 = vmatprep.subr.mxu0 0.0
    %8568 = vmatpush1.msra.mxu0 %v542
    %8569 = vmatprep.subr.mxu0 0.0
    %8570 = vmatpush1.msra.mxu0 0.0
    %8571 = vmatprep.subr.mxu0 0.0
    %8572 = vmatpush1.msra.mxu0 0.0
    %8573 = vmatprep.subr.mxu0 0.0
    %8574 = vmatpush1.msra.mxu0 0.0
    %8575 = vmatprep.subr.mxu0 0.0
    %8576 = vmatpush1.msra.mxu0 0.0
    %8577 = vmatprep.subr.mxu0 0.0
    %8578 = vmatpush1.msra.mxu0 0.0
    %8579 = vmatprep.subr.mxu0 0.0
    %8580 = vmatpush1.msra.mxu0 0.0
    %8581 = vmatprep.subr.mxu0 0.0
    %8582 = vmatpush1.msra.mxu0 0.0
    %8583 = vmatprep.subr.mxu0 0.0
    %8584 = vmatpush1.msra.mxu0 0.0
    %8585 = vmatprep.subr.mxu0 0.0
    %8586 = vmatpush1.msra.mxu0 0.0
    %8587 = vmatprep.subr.mxu0 0.0
    %8588 = vmatpush1.msra.mxu0 0.0
    %8589 = vmatprep.subr.mxu0 0.0
    %8590 = vmatpush1.msra.mxu0 0.0
    %8591 = vmatprep.subr.mxu0 0.0
    %8592 = vmatpush1.msra.mxu0 0.0
    %8593 = vmatprep.subr.mxu0 0.0
    %8594 = vmatpush1.msra.mxu0 0.0
    %8595 = vmatprep.subr.mxu0 0.0
    %8596 = vmatpush1.msra.mxu0 0.0
    %8597 = vmatprep.subr.mxu0 0.0
    %8598 = vmatpush1.msra.mxu0 0.0
    %8599 = vmatprep.subr.mxu0 0.0
    %8600 = vmatpush1.msra.mxu0 0.0
    %8601 = vmatprep.subr.mxu0 0.0
    %8602 = vmatpush1.msra.mxu0 0.0
    %8603 = vmatprep.subr.mxu0 0.0
    %8604 = vmatpush1.msra.mxu0 0.0
    %8605 = vmatprep.subr.mxu0 0.0
    %8606 = vmatpush1.msra.mxu0 0.0
    %8607 = vmatprep.subr.mxu0 0.0
    %8608 = vmatpush1.msra.mxu0 0.0
    %8609 = vmatprep.subr.mxu0 0.0
    %8610 = vmatpush1.msra.mxu0 0.0
    %8611 = vmatprep.subr.mxu0 0.0
    %8612 = vmatpush1.msra.mxu0 0.0
    %8613 = vmatprep.subr.mxu0 0.0
    %8614 = vmatpush1.msra.mxu0 0.0
    %8615 = vmatprep.subr.mxu0 0.0
    %8616 = vmatpush1.msra.mxu0 0.0
    %8617 = vmatprep.subr.mxu0 0.0
    %8618 = vmatpush1.msra.mxu0 0.0
    %8619 = vmatprep.subr.mxu0 0.0
    %8620 = vmatpush1.msra.mxu0 0.0
    %8621 = vmatprep.subr.mxu0 0.0
    %8622 = vmatpush1.msra.mxu0 0.0
    %8623 = vmatprep.subr.mxu0 0.0
    %8624 = vmatpush1.msra.mxu0 0.0
    %8625 = vmatprep.subr.mxu0 0.0
    %8626 = vmatpush1.msra.mxu0 0.0
    %8627 = vmatprep.subr.mxu0 0.0
    %8628 = vmatpush1.msra.mxu0 0.0
    %8629 = vmatprep.mubr.f32.mxu0 0.0
    %8630 = vmatmul.mubr.f32.gmra.mrb[0].mxu0 %v8560
    %v8631 = vpop.f32.mrb[0].mxu0
    %v8632 = vadd.f32 %v7336, %v8631
    %v8633 = vpop.f32.mrb[0].mxu0
    %8634 = vmatprep.mubr.f32.mxu0 0.0
    %8635 = vmatmul.mubr.f32.gmra.mrb[0].mxu0 %v8563
    %v8636 = vpop.f32.mrb[0].mxu0
    %v8637 = vadd.f32 %v7341, %v8636
    %v8638 = vpop.f32.mrb[0].mxu0
    %8639 = vdwg.mxu0
    %v8640 = vsub.f32 %v5248, %v5600
    %v8641 = vsub.f32 %v5249, %v5601
    %v8642 = vsub.f32 %v5250, %v5602
    %v8643 = vsub.f32 %v5251, %v5603
    %v8644 = vsub.f32 %v5252, %v5604
    %v8645 = vsub.f32 %v5253, %v5605
    %v8646 = vsub.f32 %v5254, %v5606
    %v8647 = vsub.f32 %v5255, %v5607
    %v8648 = vsub.f32 %v5256, %v5608
    %v8649 = vsub.f32 %v5257, %v5609
    %v8650 = vsub.f32 %v5258, %v5610
    %v8651 = vsub.f32 %v5259, %v5611
    %v8652 = vsub.f32 %v5260, %v5612
    %v8653 = vsub.f32 %v5261, %v5613
    %v8654 = vsub.f32 %v5262, %v5614
    %v8655 = vsub.f32 %v5263, %v5615
    %v8656 = vsub.f32 %v5264, %v5616
    %v8657 = vsub.f32 %v5265, %v5617
    %v8658 = vsub.f32 %v5266, %v5618
    %v8659 = vsub.f32 %v5267, %v5619
    %v8660 = vsub.f32 %v5268, %v5620
    %v8661 = vsub.f32 %v5269, %v5621
    %v8662 = vsub.f32 %v5270, %v5622
    %v8663 = vsub.f32 %v5271, %v5623
    %v8664 = vsub.f32 %v5272, %v5624
    %v8665 = vsub.f32 %v5273, %v5625
    %v8666 = vsub.f32 %v5274, %v5626
    %v8667 = vsub.f32 %v5275, %v5627
    %v8668 = vsub.f32 %v5276, %v5628
    %v8669 = vsub.f32 %v5277, %v5629
    %v8670 = vsub.f32 %v5278, %v5630
    %v8671 = vsub.f32 %v5279, %v5631
    %v8672 = vmul.f32 %v8640, 1.442695
    %v8673 = vpow.pop %v8672
    %v8674 = vmul.f32 %v8641, 1.442695
    %v8675 = vpow.pop %v8674
    %v8676 = vmul.f32 %v8642, 1.442695
    %v8677 = vpow.pop %v8676
    %v8678 = vmul.f32 %v8643, 1.442695
    %v8679 = vpow.pop %v8678
    %v8680 = vmul.f32 %v8644, 1.442695
    %v8681 = vpow.pop %v8680
    %v8682 = vmul.f32 %v8645, 1.442695
    %v8683 = vpow.pop %v8682
    %v8684 = vmul.f32 %v8646, 1.442695
    %v8685 = vpow.pop %v8684
    %v8686 = vmul.f32 %v8647, 1.442695
    %v8687 = vpow.pop %v8686
    %v8688 = vmul.f32 %v8648, 1.442695
    %v8689 = vpow.pop %v8688
    %v8690 = vmul.f32 %v8649, 1.442695
    %v8691 = vpow.pop %v8690
    %v8692 = vmul.f32 %v8650, 1.442695
    %v8693 = vpow.pop %v8692
    %v8694 = vmul.f32 %v8651, 1.442695
    %v8695 = vpow.pop %v8694
    %v8696 = vmul.f32 %v8652, 1.442695
    %v8697 = vpow.pop %v8696
    %v8698 = vmul.f32 %v8653, 1.442695
    %v8699 = vpow.pop %v8698
    %v8700 = vmul.f32 %v8654, 1.442695
    %v8701 = vpow.pop %v8700
    %v8702 = vmul.f32 %v8655, 1.442695
    %v8703 = vpow.pop %v8702
    %v8704 = vmul.f32 %v8656, 1.442695
    %v8705 = vpow.pop %v8704
    %v8706 = vmul.f32 %v8657, 1.442695
    %v8707 = vpow.pop %v8706
    %v8708 = vmul.f32 %v8658, 1.442695
    %v8709 = vpow.pop %v8708
    %v8710 = vmul.f32 %v8659, 1.442695
    %v8711 = vpow.pop %v8710
    %v8712 = vmul.f32 %v8660, 1.442695
    %v8713 = vpow.pop %v8712
    %v8714 = vmul.f32 %v8661, 1.442695
    %v8715 = vpow.pop %v8714
    %v8716 = vmul.f32 %v8662, 1.442695
    %v8717 = vpow.pop %v8716
    %v8718 = vmul.f32 %v8663, 1.442695
    %v8719 = vpow.pop %v8718
    %v8720 = vmul.f32 %v8664, 1.442695
    %v8721 = vpow.pop %v8720
    %v8722 = vmul.f32 %v8665, 1.442695
    %v8723 = vpow.pop %v8722
    %v8724 = vmul.f32 %v8666, 1.442695
    %v8725 = vpow.pop %v8724
    %v8726 = vmul.f32 %v8667, 1.442695
    %v8727 = vpow.pop %v8726
    %v8728 = vmul.f32 %v8668, 1.442695
    %v8729 = vpow.pop %v8728
    %v8730 = vmul.f32 %v8669, 1.442695
    %v8731 = vpow.pop %v8730
    %v8732 = vmul.f32 %v8670, 1.442695
    %v8733 = vpow.pop %v8732
    %v8734 = vmul.f32 %v8671, 1.442695
    %v8735 = vpow.pop %v8734
    %v8736 = vsel %vm354, %v8673, 0.0
    %8737 = vadd.xlane.f32.xlu0 %v8736
    %v8738 = vpop.xlane.xlu0 %8737
    %v8739 = vsel %vm354, %v8675, 0.0
    %8740 = vadd.xlane.f32.xlu0 %v8739
    %v8741 = vpop.xlane.xlu0 %8740
    %v8742 = vsel %vm354, %v8677, 0.0
    %8743 = vadd.xlane.f32.xlu0 %v8742
    %v8744 = vpop.xlane.xlu0 %8743
    %v8745 = vsel %vm354, %v8679, 0.0
    %8746 = vadd.xlane.f32.xlu0 %v8745
    %v8747 = vpop.xlane.xlu0 %8746
    %v8748 = vsel %vm354, %v8681, 0.0
    %8749 = vadd.xlane.f32.xlu0 %v8748
    %v8750 = vpop.xlane.xlu0 %8749
    %v8751 = vsel %vm354, %v8683, 0.0
    %8752 = vadd.xlane.f32.xlu0 %v8751
    %v8753 = vpop.xlane.xlu0 %8752
    %v8754 = vsel %vm354, %v8685, 0.0
    %8755 = vadd.xlane.f32.xlu0 %v8754
    %v8756 = vpop.xlane.xlu0 %8755
    %v8757 = vsel %vm354, %v8687, 0.0
    %8758 = vadd.xlane.f32.xlu0 %v8757
    %v8759 = vpop.xlane.xlu0 %8758
    %v8760 = vsel %vm354, %v8689, 0.0
    %8761 = vadd.xlane.f32.xlu0 %v8760
    %v8762 = vpop.xlane.xlu0 %8761
    %v8763 = vsel %vm354, %v8691, 0.0
    %8764 = vadd.xlane.f32.xlu0 %v8763
    %v8765 = vpop.xlane.xlu0 %8764
    %v8766 = vsel %vm354, %v8693, 0.0
    %8767 = vadd.xlane.f32.xlu0 %v8766
    %v8768 = vpop.xlane.xlu0 %8767
    %v8769 = vsel %vm354, %v8695, 0.0
    %8770 = vadd.xlane.f32.xlu0 %v8769
    %v8771 = vpop.xlane.xlu0 %8770
    %v8772 = vsel %vm354, %v8697, 0.0
    %8773 = vadd.xlane.f32.xlu0 %v8772
    %v8774 = vpop.xlane.xlu0 %8773
    %v8775 = vsel %vm354, %v8699, 0.0
    %8776 = vadd.xlane.f32.xlu0 %v8775
    %v8777 = vpop.xlane.xlu0 %8776
    %v8778 = vsel %vm354, %v8701, 0.0
    %8779 = vadd.xlane.f32.xlu0 %v8778
    %v8780 = vpop.xlane.xlu0 %8779
    %v8781 = vsel %vm354, %v8703, 0.0
    %8782 = vadd.xlane.f32.xlu0 %v8781
    %v8783 = vpop.xlane.xlu0 %8782
    %v8784 = vsel %vm354, %v8705, 0.0
    %8785 = vadd.xlane.f32.xlu0 %v8784
    %v8786 = vpop.xlane.xlu0 %8785
    %v8787 = vsel %vm354, %v8707, 0.0
    %8788 = vadd.xlane.f32.xlu0 %v8787
    %v8789 = vpop.xlane.xlu0 %8788
    %v8790 = vsel %vm354, %v8709, 0.0
    %8791 = vadd.xlane.f32.xlu0 %v8790
    %v8792 = vpop.xlane.xlu0 %8791
    %v8793 = vsel %vm354, %v8711, 0.0
    %8794 = vadd.xlane.f32.xlu0 %v8793
    %v8795 = vpop.xlane.xlu0 %8794
    %v8796 = vsel %vm354, %v8713, 0.0
    %8797 = vadd.xlane.f32.xlu0 %v8796
    %v8798 = vpop.xlane.xlu0 %8797
    %v8799 = vsel %vm354, %v8715, 0.0
    %8800 = vadd.xlane.f32.xlu0 %v8799
    %v8801 = vpop.xlane.xlu0 %8800
    %v8802 = vsel %vm354, %v8717, 0.0
    %8803 = vadd.xlane.f32.xlu0 %v8802
    %v8804 = vpop.xlane.xlu0 %8803
    %v8805 = vsel %vm354, %v8719, 0.0
    %8806 = vadd.xlane.f32.xlu0 %v8805
    %v8807 = vpop.xlane.xlu0 %8806
    %v8808 = vsel %vm354, %v8721, 0.0
    %8809 = vadd.xlane.f32.xlu0 %v8808
    %v8810 = vpop.xlane.xlu0 %8809
    %v8811 = vsel %vm354, %v8723, 0.0
    %8812 = vadd.xlane.f32.xlu0 %v8811
    %v8813 = vpop.xlane.xlu0 %8812
    %v8814 = vsel %vm354, %v8725, 0.0
    %8815 = vadd.xlane.f32.xlu0 %v8814
    %v8816 = vpop.xlane.xlu0 %8815
    %v8817 = vsel %vm354, %v8727, 0.0
    %8818 = vadd.xlane.f32.xlu0 %v8817
    %v8819 = vpop.xlane.xlu0 %8818
    %v8820 = vsel %vm354, %v8729, 0.0
    %8821 = vadd.xlane.f32.xlu0 %v8820
    %v8822 = vpop.xlane.xlu0 %8821
    %v8823 = vsel %vm354, %v8731, 0.0
    %8824 = vadd.xlane.f32.xlu0 %v8823
    %v8825 = vpop.xlane.xlu0 %8824
    %v8826 = vsel %vm354, %v8733, 0.0
    %8827 = vadd.xlane.f32.xlu0 %v8826
    %v8828 = vpop.xlane.xlu0 %8827
    %v8829 = vsel %vm354, %v8735, 0.0
    %8830 = vadd.xlane.f32.xlu0 %v8829
    %v8831 = vpop.xlane.xlu0 %8830
    %v8832 = vadd.f32 %v6016, %v8738
    %v8833 = vadd.f32 %v6017, %v8741
    %v8834 = vadd.f32 %v6018, %v8744
    %v8835 = vadd.f32 %v6019, %v8747
    %v8836 = vadd.f32 %v6020, %v8750
    %v8837 = vadd.f32 %v6021, %v8753
    %v8838 = vadd.f32 %v6022, %v8756
    %v8839 = vadd.f32 %v6023, %v8759
    %v8840 = vadd.f32 %v6024, %v8762
    %v8841 = vadd.f32 %v6025, %v8765
    %v8842 = vadd.f32 %v6026, %v8768
    %v8843 = vadd.f32 %v6027, %v8771
    %v8844 = vadd.f32 %v6028, %v8774
    %v8845 = vadd.f32 %v6029, %v8777
    %v8846 = vadd.f32 %v6030, %v8780
    %v8847 = vadd.f32 %v6031, %v8783
    %v8848 = vadd.f32 %v6032, %v8786
    %v8849 = vadd.f32 %v6033, %v8789
    %v8850 = vadd.f32 %v6034, %v8792
    %v8851 = vadd.f32 %v6035, %v8795
    %v8852 = vadd.f32 %v6036, %v8798
    %v8853 = vadd.f32 %v6037, %v8801
    %v8854 = vadd.f32 %v6038, %v8804
    %v8855 = vadd.f32 %v6039, %v8807
    %v8856 = vadd.f32 %v6040, %v8810
    %v8857 = vadd.f32 %v6041, %v8813
    %v8858 = vadd.f32 %v6042, %v8816
    %v8859 = vadd.f32 %v6043, %v8819
    %v8860 = vadd.f32 %v6044, %v8822
    %v8861 = vadd.f32 %v6045, %v8825
    %v8862 = vadd.f32 %v6046, %v8828
    %v8863 = vadd.f32 %v6047, %v8831
    %v8865 = vsel %vm354, %v8673, 0
    %v8868 = vsel %vm354, %v8675, 0
    %8870 = vmatprep.subr.mxu0 0.0
    %8871 = vmatpush1.msra.mxu0 %v503
    %8872 = vmatprep.subr.mxu0 0.0
    %8873 = vmatpush1.msra.mxu0 %v504
    %8874 = vmatprep.subr.mxu0 0.0
    %8875 = vmatpush1.msra.mxu0 0.0
    %8876 = vmatprep.subr.mxu0 0.0
    %8877 = vmatpush1.msra.mxu0 0.0
    %8878 = vmatprep.subr.mxu0 0.0
    %8879 = vmatpush1.msra.mxu0 0.0
    %8880 = vmatprep.subr.mxu0 0.0
    %8881 = vmatpush1.msra.mxu0 0.0
    %8882 = vmatprep.subr.mxu0 0.0
    %8883 = vmatpush1.msra.mxu0 0.0
    %8884 = vmatprep.subr.mxu0 0.0
    %8885 = vmatpush1.msra.mxu0 0.0
    %8886 = vmatprep.subr.mxu0 0.0
    %8887 = vmatpush1.msra.mxu0 0.0
    %8888 = vmatprep.subr.mxu0 0.0
    %8889 = vmatpush1.msra.mxu0 0.0
    %8890 = vmatprep.subr.mxu0 0.0
    %8891 = vmatpush1.msra.mxu0 0.0
    %8892 = vmatprep.subr.mxu0 0.0
    %8893 = vmatpush1.msra.mxu0 0.0
    %8894 = vmatprep.subr.mxu0 0.0
    %8895 = vmatpush1.msra.mxu0 0.0
    %8896 = vmatprep.subr.mxu0 0.0
    %8897 = vmatpush1.msra.mxu0 0.0
    %8898 = vmatprep.subr.mxu0 0.0
    %8899 = vmatpush1.msra.mxu0 0.0
    %8900 = vmatprep.subr.mxu0 0.0
    %8901 = vmatpush1.msra.mxu0 0.0
    %8902 = vmatprep.subr.mxu0 0.0
    %8903 = vmatpush1.msra.mxu0 0.0
    %8904 = vmatprep.subr.mxu0 0.0
    %8905 = vmatpush1.msra.mxu0 0.0
    %8906 = vmatprep.subr.mxu0 0.0
    %8907 = vmatpush1.msra.mxu0 0.0
    %8908 = vmatprep.subr.mxu0 0.0
    %8909 = vmatpush1.msra.mxu0 0.0
    %8910 = vmatprep.subr.mxu0 0.0
    %8911 = vmatpush1.msra.mxu0 0.0
    %8912 = vmatprep.subr.mxu0 0.0
    %8913 = vmatpush1.msra.mxu0 0.0
    %8914 = vmatprep.subr.mxu0 0.0
    %8915 = vmatpush1.msra.mxu0 0.0
    %8916 = vmatprep.subr.mxu0 0.0
    %8917 = vmatpush1.msra.mxu0 0.0
    %8918 = vmatprep.subr.mxu0 0.0
    %8919 = vmatpush1.msra.mxu0 0.0
    %8920 = vmatprep.subr.mxu0 0.0
    %8921 = vmatpush1.msra.mxu0 0.0
    %8922 = vmatprep.subr.mxu0 0.0
    %8923 = vmatpush1.msra.mxu0 0.0
    %8924 = vmatprep.subr.mxu0 0.0
    %8925 = vmatpush1.msra.mxu0 0.0
    %8926 = vmatprep.subr.mxu0 0.0
    %8927 = vmatpush1.msra.mxu0 0.0
    %8928 = vmatprep.subr.mxu0 0.0
    %8929 = vmatpush1.msra.mxu0 0.0
    %8930 = vmatprep.subr.mxu0 0.0
    %8931 = vmatpush1.msra.mxu0 0.0
    %8932 = vmatprep.subr.mxu0 0.0
    %8933 = vmatpush1.msra.mxu0 0.0
    %8934 = vmatprep.mubr.f32.mxu0 0.0
    %8935 = vmatmul.mubr.f32.gmra.mrb[0].mxu0 %v8865
    %v8936 = vpop.f32.mrb[0].mxu0
    %v8937 = vadd.f32 0.0, %v8936
    %v8938 = vpop.f32.mrb[0].mxu0
    %8939 = vmatprep.mubr.f32.mxu0 0.0
    %8940 = vmatmul.mubr.f32.gmra.mrb[0].mxu0 %v8868
    %v8941 = vpop.f32.mrb[0].mxu0
    %v8942 = vadd.f32 0.0, %v8941
    %v8943 = vpop.f32.mrb[0].mxu0
    %8944 = vdwg.mxu0
    %v8946 = vsel %vm354, %v8677, 0
    %v8949 = vsel %vm354, %v8679, 0
    %8951 = vmatprep.subr.mxu0 0.0
    %8952 = vmatpush1.msra.mxu0 %v505
    %8953 = vmatprep.subr.mxu0 0.0
    %8954 = vmatpush1.msra.mxu0 %v506
    %8955 = vmatprep.subr.mxu0 0.0
    %8956 = vmatpush1.msra.mxu0 0.0
    %8957 = vmatprep.subr.mxu0 0.0
    %8958 = vmatpush1.msra.mxu0 0.0
    %8959 = vmatprep.subr.mxu0 0.0
    %8960 = vmatpush1.msra.mxu0 0.0
    %8961 = vmatprep.subr.mxu0 0.0
    %8962 = vmatpush1.msra.mxu0 0.0
    %8963 = vmatprep.subr.mxu0 0.0
    %8964 = vmatpush1.msra.mxu0 0.0
    %8965 = vmatprep.subr.mxu0 0.0
    %8966 = vmatpush1.msra.mxu0 0.0
    %8967 = vmatprep.subr.mxu0 0.0
    %8968 = vmatpush1.msra.mxu0 0.0
    %8969 = vmatprep.subr.mxu0 0.0
    %8970 = vmatpush1.msra.mxu0 0.0
    %8971 = vmatprep.subr.mxu0 0.0
    %8972 = vmatpush1.msra.mxu0 0.0
    %8973 = vmatprep.subr.mxu0 0.0
    %8974 = vmatpush1.msra.mxu0 0.0
    %8975 = vmatprep.subr.mxu0 0.0
    %8976 = vmatpush1.msra.mxu0 0.0
    %8977 = vmatprep.subr.mxu0 0.0
    %8978 = vmatpush1.msra.mxu0 0.0
    %8979 = vmatprep.subr.mxu0 0.0
    %8980 = vmatpush1.msra.mxu0 0.0
    %8981 = vmatprep.subr.mxu0 0.0
    %8982 = vmatpush1.msra.mxu0 0.0
    %8983 = vmatprep.subr.mxu0 0.0
    %8984 = vmatpush1.msra.mxu0 0.0
    %8985 = vmatprep.subr.mxu0 0.0
    %8986 = vmatpush1.msra.mxu0 0.0
    %8987 = vmatprep.subr.mxu0 0.0
    %8988 = vmatpush1.msra.mxu0 0.0
    %8989 = vmatprep.subr.mxu0 0.0
    %8990 = vmatpush1.msra.mxu0 0.0
    %8991 = vmatprep.subr.mxu0 0.0
    %8992 = vmatpush1.msra.mxu0 0.0
    %8993 = vmatprep.subr.mxu0 0.0
    %8994 = vmatpush1.msra.mxu0 0.0
    %8995 = vmatprep.subr.mxu0 0.0
    %8996 = vmatpush1.msra.mxu0 0.0
    %8997 = vmatprep.subr.mxu0 0.0
    %8998 = vmatpush1.msra.mxu0 0.0
    %8999 = vmatprep.subr.mxu0 0.0
    %9000 = vmatpush1.msra.mxu0 0.0
    %9001 = vmatprep.subr.mxu0 0.0
    %9002 = vmatpush1.msra.mxu0 0.0
    %9003 = vmatprep.subr.mxu0 0.0
    %9004 = vmatpush1.msra.mxu0 0.0
    %9005 = vmatprep.subr.mxu0 0.0
    %9006 = vmatpush1.msra.mxu0 0.0
    %9007 = vmatprep.subr.mxu0 0.0
    %9008 = vmatpush1.msra.mxu0 0.0
    %9009 = vmatprep.subr.mxu0 0.0
    %9010 = vmatpush1.msra.mxu0 0.0
    %9011 = vmatprep.subr.mxu0 0.0
    %9012 = vmatpush1.msra.mxu0 0.0
    %9013 = vmatprep.subr.mxu0 0.0
    %9014 = vmatpush1.msra.mxu0 0.0
    %9015 = vmatprep.mubr.f32.mxu0 0.0
    %9016 = vmatmul.mubr.f32.gmra.mrb[0].mxu0 %v8946
    %v9017 = vpop.f32.mrb[0].mxu0
    %v9018 = vadd.f32 0.0, %v9017
    %v9019 = vpop.f32.mrb[0].mxu0
    %9020 = vmatprep.mubr.f32.mxu0 0.0
    %9021 = vmatmul.mubr.f32.gmra.mrb[0].mxu0 %v8949
    %v9022 = vpop.f32.mrb[0].mxu0
    %v9023 = vadd.f32 0.0, %v9022
    %v9024 = vpop.f32.mrb[0].mxu0
    %9025 = vdwg.mxu0
    %v9027 = vsel %vm354, %v8681, 0
    %v9030 = vsel %vm354, %v8683, 0
    %9032 = vmatprep.subr.mxu0 0.0
    %9033 = vmatpush1.msra.mxu0 %v507
    %9034 = vmatprep.subr.mxu0 0.0
    %9035 = vmatpush1.msra.mxu0 %v508
    %9036 = vmatprep.subr.mxu0 0.0
    %9037 = vmatpush1.msra.mxu0 0.0
    %9038 = vmatprep.subr.mxu0 0.0
    %9039 = vmatpush1.msra.mxu0 0.0
    %9040 = vmatprep.subr.mxu0 0.0
    %9041 = vmatpush1.msra.mxu0 0.0
    %9042 = vmatprep.subr.mxu0 0.0
    %9043 = vmatpush1.msra.mxu0 0.0
    %9044 = vmatprep.subr.mxu0 0.0
    %9045 = vmatpush1.msra.mxu0 0.0
    %9046 = vmatprep.subr.mxu0 0.0
    %9047 = vmatpush1.msra.mxu0 0.0
    %9048 = vmatprep.subr.mxu0 0.0
    %9049 = vmatpush1.msra.mxu0 0.0
    %9050 = vmatprep.subr.mxu0 0.0
    %9051 = vmatpush1.msra.mxu0 0.0
    %9052 = vmatprep.subr.mxu0 0.0
    %9053 = vmatpush1.msra.mxu0 0.0
    %9054 = vmatprep.subr.mxu0 0.0
    %9055 = vmatpush1.msra.mxu0 0.0
    %9056 = vmatprep.subr.mxu0 0.0
    %9057 = vmatpush1.msra.mxu0 0.0
    %9058 = vmatprep.subr.mxu0 0.0
    %9059 = vmatpush1.msra.mxu0 0.0
    %9060 = vmatprep.subr.mxu0 0.0
    %9061 = vmatpush1.msra.mxu0 0.0
    %9062 = vmatprep.subr.mxu0 0.0
    %9063 = vmatpush1.msra.mxu0 0.0
    %9064 = vmatprep.subr.mxu0 0.0
    %9065 = vmatpush1.msra.mxu0 0.0
    %9066 = vmatprep.subr.mxu0 0.0
    %9067 = vmatpush1.msra.mxu0 0.0
    %9068 = vmatprep.subr.mxu0 0.0
    %9069 = vmatpush1.msra.mxu0 0.0
    %9070 = vmatprep.subr.mxu0 0.0
    %9071 = vmatpush1.msra.mxu0 0.0
    %9072 = vmatprep.subr.mxu0 0.0
    %9073 = vmatpush1.msra.mxu0 0.0
    %9074 = vmatprep.subr.mxu0 0.0
    %9075 = vmatpush1.msra.mxu0 0.0
    %9076 = vmatprep.subr.mxu0 0.0
    %9077 = vmatpush1.msra.mxu0 0.0
    %9078 = vmatprep.subr.mxu0 0.0
    %9079 = vmatpush1.msra.mxu0 0.0
    %9080 = vmatprep.subr.mxu0 0.0
    %9081 = vmatpush1.msra.mxu0 0.0
    %9082 = vmatprep.subr.mxu0 0.0
    %9083 = vmatpush1.msra.mxu0 0.0
    %9084 = vmatprep.subr.mxu0 0.0
    %9085 = vmatpush1.msra.mxu0 0.0
    %9086 = vmatprep.subr.mxu0 0.0
    %9087 = vmatpush1.msra.mxu0 0.0
    %9088 = vmatprep.subr.mxu0 0.0
    %9089 = vmatpush1.msra.mxu0 0.0
    %9090 = vmatprep.subr.mxu0 0.0
    %9091 = vmatpush1.msra.mxu0 0.0
    %9092 = vmatprep.subr.mxu0 0.0
    %9093 = vmatpush1.msra.mxu0 0.0
    %9094 = vmatprep.subr.mxu0 0.0
    %9095 = vmatpush1.msra.mxu0 0.0
    %9096 = vmatprep.mubr.f32.mxu0 0.0
    %9097 = vmatmul.mubr.f32.gmra.mrb[0].mxu0 %v9027
    %v9098 = vpop.f32.mrb[0].mxu0
    %v9099 = vadd.f32 0.0, %v9098
    %v9100 = vpop.f32.mrb[0].mxu0
    %9101 = vmatprep.mubr.f32.mxu0 0.0
    %9102 = vmatmul.mubr.f32.gmra.mrb[0].mxu0 %v9030
    %v9103 = vpop.f32.mrb[0].mxu0
    %v9104 = vadd.f32 0.0, %v9103
    %v9105 = vpop.f32.mrb[0].mxu0
    %9106 = vdwg.mxu0
    %v9108 = vsel %vm354, %v8685, 0
    %v9111 = vsel %vm354, %v8687, 0
    %9113 = vmatprep.subr.mxu0 0.0
    %9114 = vmatpush1.msra.mxu0 %v509
    %9115 = vmatprep.subr.mxu0 0.0
    %9116 = vmatpush1.msra.mxu0 %v510
    %9117 = vmatprep.subr.mxu0 0.0
    %9118 = vmatpush1.msra.mxu0 0.0
    %9119 = vmatprep.subr.mxu0 0.0
    %9120 = vmatpush1.msra.mxu0 0.0
    %9121 = vmatprep.subr.mxu0 0.0
    %9122 = vmatpush1.msra.mxu0 0.0
    %9123 = vmatprep.subr.mxu0 0.0
    %9124 = vmatpush1.msra.mxu0 0.0
    %9125 = vmatprep.subr.mxu0 0.0
    %9126 = vmatpush1.msra.mxu0 0.0
    %9127 = vmatprep.subr.mxu0 0.0
    %9128 = vmatpush1.msra.mxu0 0.0
    %9129 = vmatprep.subr.mxu0 0.0
    %9130 = vmatpush1.msra.mxu0 0.0
    %9131 = vmatprep.subr.mxu0 0.0
    %9132 = vmatpush1.msra.mxu0 0.0
    %9133 = vmatprep.subr.mxu0 0.0
    %9134 = vmatpush1.msra.mxu0 0.0
    %9135 = vmatprep.subr.mxu0 0.0
    %9136 = vmatpush1.msra.mxu0 0.0
    %9137 = vmatprep.subr.mxu0 0.0
    %9138 = vmatpush1.msra.mxu0 0.0
    %9139 = vmatprep.subr.mxu0 0.0
    %9140 = vmatpush1.msra.mxu0 0.0
    %9141 = vmatprep.subr.mxu0 0.0
    %9142 = vmatpush1.msra.mxu0 0.0
    %9143 = vmatprep.subr.mxu0 0.0
    %9144 = vmatpush1.msra.mxu0 0.0
    %9145 = vmatprep.subr.mxu0 0.0
    %9146 = vmatpush1.msra.mxu0 0.0
    %9147 = vmatprep.subr.mxu0 0.0
    %9148 = vmatpush1.msra.mxu0 0.0
    %9149 = vmatprep.subr.mxu0 0.0
    %9150 = vmatpush1.msra.mxu0 0.0
    %9151 = vmatprep.subr.mxu0 0.0
    %9152 = vmatpush1.msra.mxu0 0.0
    %9153 = vmatprep.subr.mxu0 0.0
    %9154 = vmatpush1.msra.mxu0 0.0
    %9155 = vmatprep.subr.mxu0 0.0
    %9156 = vmatpush1.msra.mxu0 0.0
    %9157 = vmatprep.subr.mxu0 0.0
    %9158 = vmatpush1.msra.mxu0 0.0
    %9159 = vmatprep.subr.mxu0 0.0
    %9160 = vmatpush1.msra.mxu0 0.0
    %9161 = vmatprep.subr.mxu0 0.0
    %9162 = vmatpush1.msra.mxu0 0.0
    %9163 = vmatprep.subr.mxu0 0.0
    %9164 = vmatpush1.msra.mxu0 0.0
    %9165 = vmatprep.subr.mxu0 0.0
    %9166 = vmatpush1.msra.mxu0 0.0
    %9167 = vmatprep.subr.mxu0 0.0
    %9168 = vmatpush1.msra.mxu0 0.0
    %9169 = vmatprep.subr.mxu0 0.0
    %9170 = vmatpush1.msra.mxu0 0.0
    %9171 = vmatprep.subr.mxu0 0.0
    %9172 = vmatpush1.msra.mxu0 0.0
    %9173 = vmatprep.subr.mxu0 0.0
    %9174 = vmatpush1.msra.mxu0 0.0
    %9175 = vmatprep.subr.mxu0 0.0
    %9176 = vmatpush1.msra.mxu0 0.0
    %9177 = vmatprep.mubr.f32.mxu0 0.0
    %9178 = vmatmul.mubr.f32.gmra.mrb[0].mxu0 %v9108
    %v9179 = vpop.f32.mrb[0].mxu0
    %v9180 = vadd.f32 0.0, %v9179
    %v9181 = vpop.f32.mrb[0].mxu0
    %9182 = vmatprep.mubr.f32.mxu0 0.0
    %9183 = vmatmul.mubr.f32.gmra.mrb[0].mxu0 %v9111
    %v9184 = vpop.f32.mrb[0].mxu0
    %v9185 = vadd.f32 0.0, %v9184
    %v9186 = vpop.f32.mrb[0].mxu0
    %9187 = vdwg.mxu0
    %v9189 = vsel %vm354, %v8689, 0
    %v9192 = vsel %vm354, %v8691, 0
    %9194 = vmatprep.subr.mxu0 0.0
    %9195 = vmatpush1.msra.mxu0 %v515
    %9196 = vmatprep.subr.mxu0 0.0
    %9197 = vmatpush1.msra.mxu0 %v516
    %9198 = vmatprep.subr.mxu0 0.0
    %9199 = vmatpush1.msra.mxu0 0.0
    %9200 = vmatprep.subr.mxu0 0.0
    %9201 = vmatpush1.msra.mxu0 0.0
    %9202 = vmatprep.subr.mxu0 0.0
    %9203 = vmatpush1.msra.mxu0 0.0
    %9204 = vmatprep.subr.mxu0 0.0
    %9205 = vmatpush1.msra.mxu0 0.0
    %9206 = vmatprep.subr.mxu0 0.0
    %9207 = vmatpush1.msra.mxu0 0.0
    %9208 = vmatprep.subr.mxu0 0.0
    %9209 = vmatpush1.msra.mxu0 0.0
    %9210 = vmatprep.subr.mxu0 0.0
    %9211 = vmatpush1.msra.mxu0 0.0
    %9212 = vmatprep.subr.mxu0 0.0
    %9213 = vmatpush1.msra.mxu0 0.0
    %9214 = vmatprep.subr.mxu0 0.0
    %9215 = vmatpush1.msra.mxu0 0.0
    %9216 = vmatprep.subr.mxu0 0.0
    %9217 = vmatpush1.msra.mxu0 0.0
    %9218 = vmatprep.subr.mxu0 0.0
    %9219 = vmatpush1.msra.mxu0 0.0
    %9220 = vmatprep.subr.mxu0 0.0
    %9221 = vmatpush1.msra.mxu0 0.0
    %9222 = vmatprep.subr.mxu0 0.0
    %9223 = vmatpush1.msra.mxu0 0.0
    %9224 = vmatprep.subr.mxu0 0.0
    %9225 = vmatpush1.msra.mxu0 0.0
    %9226 = vmatprep.subr.mxu0 0.0
    %9227 = vmatpush1.msra.mxu0 0.0
    %9228 = vmatprep.subr.mxu0 0.0
    %9229 = vmatpush1.msra.mxu0 0.0
    %9230 = vmatprep.subr.mxu0 0.0
    %9231 = vmatpush1.msra.mxu0 0.0
    %9232 = vmatprep.subr.mxu0 0.0
    %9233 = vmatpush1.msra.mxu0 0.0
    %9234 = vmatprep.subr.mxu0 0.0
    %9235 = vmatpush1.msra.mxu0 0.0
    %9236 = vmatprep.subr.mxu0 0.0
    %9237 = vmatpush1.msra.mxu0 0.0
    %9238 = vmatprep.subr.mxu0 0.0
    %9239 = vmatpush1.msra.mxu0 0.0
    %9240 = vmatprep.subr.mxu0 0.0
    %9241 = vmatpush1.msra.mxu0 0.0
    %9242 = vmatprep.subr.mxu0 0.0
    %9243 = vmatpush1.msra.mxu0 0.0
    %9244 = vmatprep.subr.mxu0 0.0
    %9245 = vmatpush1.msra.mxu0 0.0
    %9246 = vmatprep.subr.mxu0 0.0
    %9247 = vmatpush1.msra.mxu0 0.0
    %9248 = vmatprep.subr.mxu0 0.0
    %9249 = vmatpush1.msra.mxu0 0.0
    %9250 = vmatprep.subr.mxu0 0.0
    %9251 = vmatpush1.msra.mxu0 0.0
    %9252 = vmatprep.subr.mxu0 0.0
    %9253 = vmatpush1.msra.mxu0 0.0
    %9254 = vmatprep.subr.mxu0 0.0
    %9255 = vmatpush1.msra.mxu0 0.0
    %9256 = vmatprep.subr.mxu0 0.0
    %9257 = vmatpush1.msra.mxu0 0.0
    %9258 = vmatprep.mubr.f32.mxu0 0.0
    %9259 = vmatmul.mubr.f32.gmra.mrb[0].mxu0 %v9189
    %v9260 = vpop.f32.mrb[0].mxu0
    %v9261 = vadd.f32 0.0, %v9260
    %v9262 = vpop.f32.mrb[0].mxu0
    %9263 = vmatprep.mubr.f32.mxu0 0.0
    %9264 = vmatmul.mubr.f32.gmra.mrb[0].mxu0 %v9192
    %v9265 = vpop.f32.mrb[0].mxu0
    %v9266 = vadd.f32 0.0, %v9265
    %v9267 = vpop.f32.mrb[0].mxu0
    %9268 = vdwg.mxu0
    %v9270 = vsel %vm354, %v8693, 0
    %v9273 = vsel %vm354, %v8695, 0
    %9275 = vmatprep.subr.mxu0 0.0
    %9276 = vmatpush1.msra.mxu0 %v517
    %9277 = vmatprep.subr.mxu0 0.0
    %9278 = vmatpush1.msra.mxu0 %v518
    %9279 = vmatprep.subr.mxu0 0.0
    %9280 = vmatpush1.msra.mxu0 0.0
    %9281 = vmatprep.subr.mxu0 0.0
    %9282 = vmatpush1.msra.mxu0 0.0
    %9283 = vmatprep.subr.mxu0 0.0
    %9284 = vmatpush1.msra.mxu0 0.0
    %9285 = vmatprep.subr.mxu0 0.0
    %9286 = vmatpush1.msra.mxu0 0.0
    %9287 = vmatprep.subr.mxu0 0.0
    %9288 = vmatpush1.msra.mxu0 0.0
    %9289 = vmatprep.subr.mxu0 0.0
    %9290 = vmatpush1.msra.mxu0 0.0
    %9291 = vmatprep.subr.mxu0 0.0
    %9292 = vmatpush1.msra.mxu0 0.0
    %9293 = vmatprep.subr.mxu0 0.0
    %9294 = vmatpush1.msra.mxu0 0.0
    %9295 = vmatprep.subr.mxu0 0.0
    %9296 = vmatpush1.msra.mxu0 0.0
    %9297 = vmatprep.subr.mxu0 0.0
    %9298 = vmatpush1.msra.mxu0 0.0
    %9299 = vmatprep.subr.mxu0 0.0
    %9300 = vmatpush1.msra.mxu0 0.0
    %9301 = vmatprep.subr.mxu0 0.0
    %9302 = vmatpush1.msra.mxu0 0.0
    %9303 = vmatprep.subr.mxu0 0.0
    %9304 = vmatpush1.msra.mxu0 0.0
    %9305 = vmatprep.subr.mxu0 0.0
    %9306 = vmatpush1.msra.mxu0 0.0
    %9307 = vmatprep.subr.mxu0 0.0
    %9308 = vmatpush1.msra.mxu0 0.0
    %9309 = vmatprep.subr.mxu0 0.0
    %9310 = vmatpush1.msra.mxu0 0.0
    %9311 = vmatprep.subr.mxu0 0.0
    %9312 = vmatpush1.msra.mxu0 0.0
    %9313 = vmatprep.subr.mxu0 0.0
    %9314 = vmatpush1.msra.mxu0 0.0
    %9315 = vmatprep.subr.mxu0 0.0
    %9316 = vmatpush1.msra.mxu0 0.0
    %9317 = vmatprep.subr.mxu0 0.0
    %9318 = vmatpush1.msra.mxu0 0.0
    %9319 = vmatprep.subr.mxu0 0.0
    %9320 = vmatpush1.msra.mxu0 0.0
    %9321 = vmatprep.subr.mxu0 0.0
    %9322 = vmatpush1.msra.mxu0 0.0
    %9323 = vmatprep.subr.mxu0 0.0
    %9324 = vmatpush1.msra.mxu0 0.0
    %9325 = vmatprep.subr.mxu0 0.0
    %9326 = vmatpush1.msra.mxu0 0.0
    %9327 = vmatprep.subr.mxu0 0.0
    %9328 = vmatpush1.msra.mxu0 0.0
    %9329 = vmatprep.subr.mxu0 0.0
    %9330 = vmatpush1.msra.mxu0 0.0
    %9331 = vmatprep.subr.mxu0 0.0
    %9332 = vmatpush1.msra.mxu0 0.0
    %9333 = vmatprep.subr.mxu0 0.0
    %9334 = vmatpush1.msra.mxu0 0.0
    %9335 = vmatprep.subr.mxu0 0.0
    %9336 = vmatpush1.msra.mxu0 0.0
    %9337 = vmatprep.subr.mxu0 0.0
    %9338 = vmatpush1.msra.mxu0 0.0
    %9339 = vmatprep.mubr.f32.mxu0 0.0
    %9340 = vmatmul.mubr.f32.gmra.mrb[0].mxu0 %v9270
    %v9341 = vpop.f32.mrb[0].mxu0
    %v9342 = vadd.f32 0.0, %v9341
    %v9343 = vpop.f32.mrb[0].mxu0
    %9344 = vmatprep.mubr.f32.mxu0 0.0
    %9345 = vmatmul.mubr.f32.gmra.mrb[0].mxu0 %v9273
    %v9346 = vpop.f32.mrb[0].mxu0
    %v9347 = vadd.f32 0.0, %v9346
    %v9348 = vpop.f32.mrb[0].mxu0
    %9349 = vdwg.mxu0
    %v9351 = vsel %vm354, %v8697, 0
    %v9354 = vsel %vm354, %v8699, 0
    %9356 = vmatprep.subr.mxu0 0.0
    %9357 = vmatpush1.msra.mxu0 %v519
    %9358 = vmatprep.subr.mxu0 0.0
    %9359 = vmatpush1.msra.mxu0 %v520
    %9360 = vmatprep.subr.mxu0 0.0
    %9361 = vmatpush1.msra.mxu0 0.0
    %9362 = vmatprep.subr.mxu0 0.0
    %9363 = vmatpush1.msra.mxu0 0.0
    %9364 = vmatprep.subr.mxu0 0.0
    %9365 = vmatpush1.msra.mxu0 0.0
    %9366 = vmatprep.subr.mxu0 0.0
    %9367 = vmatpush1.msra.mxu0 0.0
    %9368 = vmatprep.subr.mxu0 0.0
    %9369 = vmatpush1.msra.mxu0 0.0
    %9370 = vmatprep.subr.mxu0 0.0
    %9371 = vmatpush1.msra.mxu0 0.0
    %9372 = vmatprep.subr.mxu0 0.0
    %9373 = vmatpush1.msra.mxu0 0.0
    %9374 = vmatprep.subr.mxu0 0.0
    %9375 = vmatpush1.msra.mxu0 0.0
    %9376 = vmatprep.subr.mxu0 0.0
    %9377 = vmatpush1.msra.mxu0 0.0
    %9378 = vmatprep.subr.mxu0 0.0
    %9379 = vmatpush1.msra.mxu0 0.0
    %9380 = vmatprep.subr.mxu0 0.0
    %9381 = vmatpush1.msra.mxu0 0.0
    %9382 = vmatprep.subr.mxu0 0.0
    %9383 = vmatpush1.msra.mxu0 0.0
    %9384 = vmatprep.subr.mxu0 0.0
    %9385 = vmatpush1.msra.mxu0 0.0
    %9386 = vmatprep.subr.mxu0 0.0
    %9387 = vmatpush1.msra.mxu0 0.0
    %9388 = vmatprep.subr.mxu0 0.0
    %9389 = vmatpush1.msra.mxu0 0.0
    %9390 = vmatprep.subr.mxu0 0.0
    %9391 = vmatpush1.msra.mxu0 0.0
    %9392 = vmatprep.subr.mxu0 0.0
    %9393 = vmatpush1.msra.mxu0 0.0
    %9394 = vmatprep.subr.mxu0 0.0
    %9395 = vmatpush1.msra.mxu0 0.0
    %9396 = vmatprep.subr.mxu0 0.0
    %9397 = vmatpush1.msra.mxu0 0.0
    %9398 = vmatprep.subr.mxu0 0.0
    %9399 = vmatpush1.msra.mxu0 0.0
    %9400 = vmatprep.subr.mxu0 0.0
    %9401 = vmatpush1.msra.mxu0 0.0
    %9402 = vmatprep.subr.mxu0 0.0
    %9403 = vmatpush1.msra.mxu0 0.0
    %9404 = vmatprep.subr.mxu0 0.0
    %9405 = vmatpush1.msra.mxu0 0.0
    %9406 = vmatprep.subr.mxu0 0.0
    %9407 = vmatpush1.msra.mxu0 0.0
    %9408 = vmatprep.subr.mxu0 0.0
    %9409 = vmatpush1.msra.mxu0 0.0
    %9410 = vmatprep.subr.mxu0 0.0
    %9411 = vmatpush1.msra.mxu0 0.0
    %9412 = vmatprep.subr.mxu0 0.0
    %9413 = vmatpush1.msra.mxu0 0.0
    %9414 = vmatprep.subr.mxu0 0.0
    %9415 = vmatpush1.msra.mxu0 0.0
    %9416 = vmatprep.subr.mxu0 0.0
    %9417 = vmatpush1.msra.mxu0 0.0
    %9418 = vmatprep.subr.mxu0 0.0
    %9419 = vmatpush1.msra.mxu0 0.0
    %9420 = vmatprep.mubr.f32.mxu0 0.0
    %9421 = vmatmul.mubr.f32.gmra.mrb[0].mxu0 %v9351
    %v9422 = vpop.f32.mrb[0].mxu0
    %v9423 = vadd.f32 0.0, %v9422
    %v9424 = vpop.f32.mrb[0].mxu0
    %9425 = vmatprep.mubr.f32.mxu0 0.0
    %9426 = vmatmul.mubr.f32.gmra.mrb[0].mxu0 %v9354
    %v9427 = vpop.f32.mrb[0].mxu0
    %v9428 = vadd.f32 0.0, %v9427
    %v9429 = vpop.f32.mrb[0].mxu0
    %9430 = vdwg.mxu0
    %v9432 = vsel %vm354, %v8701, 0
    %v9435 = vsel %vm354, %v8703, 0
    %9437 = vmatprep.subr.mxu0 0.0
    %9438 = vmatpush1.msra.mxu0 %v521
    %9439 = vmatprep.subr.mxu0 0.0
    %9440 = vmatpush1.msra.mxu0 %v522
    %9441 = vmatprep.subr.mxu0 0.0
    %9442 = vmatpush1.msra.mxu0 0.0
    %9443 = vmatprep.subr.mxu0 0.0
    %9444 = vmatpush1.msra.mxu0 0.0
    %9445 = vmatprep.subr.mxu0 0.0
    %9446 = vmatpush1.msra.mxu0 0.0
    %9447 = vmatprep.subr.mxu0 0.0
    %9448 = vmatpush1.msra.mxu0 0.0
    %9449 = vmatprep.subr.mxu0 0.0
    %9450 = vmatpush1.msra.mxu0 0.0
    %9451 = vmatprep.subr.mxu0 0.0
    %9452 = vmatpush1.msra.mxu0 0.0
    %9453 = vmatprep.subr.mxu0 0.0
    %9454 = vmatpush1.msra.mxu0 0.0
    %9455 = vmatprep.subr.mxu0 0.0
    %9456 = vmatpush1.msra.mxu0 0.0
    %9457 = vmatprep.subr.mxu0 0.0
    %9458 = vmatpush1.msra.mxu0 0.0
    %9459 = vmatprep.subr.mxu0 0.0
    %9460 = vmatpush1.msra.mxu0 0.0
    %9461 = vmatprep.subr.mxu0 0.0
    %9462 = vmatpush1.msra.mxu0 0.0
    %9463 = vmatprep.subr.mxu0 0.0
    %9464 = vmatpush1.msra.mxu0 0.0
    %9465 = vmatprep.subr.mxu0 0.0
    %9466 = vmatpush1.msra.mxu0 0.0
    %9467 = vmatprep.subr.mxu0 0.0
    %9468 = vmatpush1.msra.mxu0 0.0
    %9469 = vmatprep.subr.mxu0 0.0
    %9470 = vmatpush1.msra.mxu0 0.0
    %9471 = vmatprep.subr.mxu0 0.0
    %9472 = vmatpush1.msra.mxu0 0.0
    %9473 = vmatprep.subr.mxu0 0.0
    %9474 = vmatpush1.msra.mxu0 0.0
    %9475 = vmatprep.subr.mxu0 0.0
    %9476 = vmatpush1.msra.mxu0 0.0
    %9477 = vmatprep.subr.mxu0 0.0
    %9478 = vmatpush1.msra.mxu0 0.0
    %9479 = vmatprep.subr.mxu0 0.0
    %9480 = vmatpush1.msra.mxu0 0.0
    %9481 = vmatprep.subr.mxu0 0.0
    %9482 = vmatpush1.msra.mxu0 0.0
    %9483 = vmatprep.subr.mxu0 0.0
    %9484 = vmatpush1.msra.mxu0 0.0
    %9485 = vmatprep.subr.mxu0 0.0
    %9486 = vmatpush1.msra.mxu0 0.0
    %9487 = vmatprep.subr.mxu0 0.0
    %9488 = vmatpush1.msra.mxu0 0.0
    %9489 = vmatprep.subr.mxu0 0.0
    %9490 = vmatpush1.msra.mxu0 0.0
    %9491 = vmatprep.subr.mxu0 0.0
    %9492 = vmatpush1.msra.mxu0 0.0
    %9493 = vmatprep.subr.mxu0 0.0
    %9494 = vmatpush1.msra.mxu0 0.0
    %9495 = vmatprep.subr.mxu0 0.0
    %9496 = vmatpush1.msra.mxu0 0.0
    %9497 = vmatprep.subr.mxu0 0.0
    %9498 = vmatpush1.msra.mxu0 0.0
    %9499 = vmatprep.subr.mxu0 0.0
    %9500 = vmatpush1.msra.mxu0 0.0
    %9501 = vmatprep.mubr.f32.mxu0 0.0
    %9502 = vmatmul.mubr.f32.gmra.mrb[0].mxu0 %v9432
    %v9503 = vpop.f32.mrb[0].mxu0
    %v9504 = vadd.f32 0.0, %v9503
    %v9505 = vpop.f32.mrb[0].mxu0
    %9506 = vmatprep.mubr.f32.mxu0 0.0
    %9507 = vmatmul.mubr.f32.gmra.mrb[0].mxu0 %v9435
    %v9508 = vpop.f32.mrb[0].mxu0
    %v9509 = vadd.f32 0.0, %v9508
    %v9510 = vpop.f32.mrb[0].mxu0
    %9511 = vdwg.mxu0
    %v9513 = vsel %vm354, %v8705, 0
    %v9516 = vsel %vm354, %v8707, 0
    %9518 = vmatprep.subr.mxu0 0.0
    %9519 = vmatpush1.msra.mxu0 %v527
    %9520 = vmatprep.subr.mxu0 0.0
    %9521 = vmatpush1.msra.mxu0 %v528
    %9522 = vmatprep.subr.mxu0 0.0
    %9523 = vmatpush1.msra.mxu0 0.0
    %9524 = vmatprep.subr.mxu0 0.0
    %9525 = vmatpush1.msra.mxu0 0.0
    %9526 = vmatprep.subr.mxu0 0.0
    %9527 = vmatpush1.msra.mxu0 0.0
    %9528 = vmatprep.subr.mxu0 0.0
    %9529 = vmatpush1.msra.mxu0 0.0
    %9530 = vmatprep.subr.mxu0 0.0
    %9531 = vmatpush1.msra.mxu0 0.0
    %9532 = vmatprep.subr.mxu0 0.0
    %9533 = vmatpush1.msra.mxu0 0.0
    %9534 = vmatprep.subr.mxu0 0.0
    %9535 = vmatpush1.msra.mxu0 0.0
    %9536 = vmatprep.subr.mxu0 0.0
    %9537 = vmatpush1.msra.mxu0 0.0
    %9538 = vmatprep.subr.mxu0 0.0
    %9539 = vmatpush1.msra.mxu0 0.0
    %9540 = vmatprep.subr.mxu0 0.0
    %9541 = vmatpush1.msra.mxu0 0.0
    %9542 = vmatprep.subr.mxu0 0.0
    %9543 = vmatpush1.msra.mxu0 0.0
    %9544 = vmatprep.subr.mxu0 0.0
    %9545 = vmatpush1.msra.mxu0 0.0
    %9546 = vmatprep.subr.mxu0 0.0
    %9547 = vmatpush1.msra.mxu0 0.0
    %9548 = vmatprep.subr.mxu0 0.0
    %9549 = vmatpush1.msra.mxu0 0.0
    %9550 = vmatprep.subr.mxu0 0.0
    %9551 = vmatpush1.msra.mxu0 0.0
    %9552 = vmatprep.subr.mxu0 0.0
    %9553 = vmatpush1.msra.mxu0 0.0
    %9554 = vmatprep.subr.mxu0 0.0
    %9555 = vmatpush1.msra.mxu0 0.0
    %9556 = vmatprep.subr.mxu0 0.0
    %9557 = vmatpush1.msra.mxu0 0.0
    %9558 = vmatprep.subr.mxu0 0.0
    %9559 = vmatpush1.msra.mxu0 0.0
    %9560 = vmatprep.subr.mxu0 0.0
    %9561 = vmatpush1.msra.mxu0 0.0
    %9562 = vmatprep.subr.mxu0 0.0
    %9563 = vmatpush1.msra.mxu0 0.0
    %9564 = vmatprep.subr.mxu0 0.0
    %9565 = vmatpush1.msra.mxu0 0.0
    %9566 = vmatprep.subr.mxu0 0.0
    %9567 = vmatpush1.msra.mxu0 0.0
    %9568 = vmatprep.subr.mxu0 0.0
    %9569 = vmatpush1.msra.mxu0 0.0
    %9570 = vmatprep.subr.mxu0 0.0
    %9571 = vmatpush1.msra.mxu0 0.0
    %9572 = vmatprep.subr.mxu0 0.0
    %9573 = vmatpush1.msra.mxu0 0.0
    %9574 = vmatprep.subr.mxu0 0.0
    %9575 = vmatpush1.msra.mxu0 0.0
    %9576 = vmatprep.subr.mxu0 0.0
    %9577 = vmatpush1.msra.mxu0 0.0
    %9578 = vmatprep.subr.mxu0 0.0
    %9579 = vmatpush1.msra.mxu0 0.0
    %9580 = vmatprep.subr.mxu0 0.0
    %9581 = vmatpush1.msra.mxu0 0.0
    %9582 = vmatprep.mubr.f32.mxu0 0.0
    %9583 = vmatmul.mubr.f32.gmra.mrb[0].mxu0 %v9513
    %v9584 = vpop.f32.mrb[0].mxu0
    %v9585 = vadd.f32 0.0, %v9584
    %v9586 = vpop.f32.mrb[0].mxu0
    %9587 = vmatprep.mubr.f32.mxu0 0.0
    %9588 = vmatmul.mubr.f32.gmra.mrb[0].mxu0 %v9516
    %v9589 = vpop.f32.mrb[0].mxu0
    %v9590 = vadd.f32 0.0, %v9589
    %v9591 = vpop.f32.mrb[0].mxu0
    %9592 = vdwg.mxu0
    %v9594 = vsel %vm354, %v8709, 0
    %v9597 = vsel %vm354, %v8711, 0
    %9599 = vmatprep.subr.mxu0 0.0
    %9600 = vmatpush1.msra.mxu0 %v529
    %9601 = vmatprep.subr.mxu0 0.0
    %9602 = vmatpush1.msra.mxu0 %v530
    %9603 = vmatprep.subr.mxu0 0.0
    %9604 = vmatpush1.msra.mxu0 0.0
    %9605 = vmatprep.subr.mxu0 0.0
    %9606 = vmatpush1.msra.mxu0 0.0
    %9607 = vmatprep.subr.mxu0 0.0
    %9608 = vmatpush1.msra.mxu0 0.0
    %9609 = vmatprep.subr.mxu0 0.0
    %9610 = vmatpush1.msra.mxu0 0.0
    %9611 = vmatprep.subr.mxu0 0.0
    %9612 = vmatpush1.msra.mxu0 0.0
    %9613 = vmatprep.subr.mxu0 0.0
    %9614 = vmatpush1.msra.mxu0 0.0
    %9615 = vmatprep.subr.mxu0 0.0
    %9616 = vmatpush1.msra.mxu0 0.0
    %9617 = vmatprep.subr.mxu0 0.0
    %9618 = vmatpush1.msra.mxu0 0.0
    %9619 = vmatprep.subr.mxu0 0.0
    %9620 = vmatpush1.msra.mxu0 0.0
    %9621 = vmatprep.subr.mxu0 0.0
    %9622 = vmatpush1.msra.mxu0 0.0
    %9623 = vmatprep.subr.mxu0 0.0
    %9624 = vmatpush1.msra.mxu0 0.0
    %9625 = vmatprep.subr.mxu0 0.0
    %9626 = vmatpush1.msra.mxu0 0.0
    %9627 = vmatprep.subr.mxu0 0.0
    %9628 = vmatpush1.msra.mxu0 0.0
    %9629 = vmatprep.subr.mxu0 0.0
    %9630 = vmatpush1.msra.mxu0 0.0
    %9631 = vmatprep.subr.mxu0 0.0
    %9632 = vmatpush1.msra.mxu0 0.0
    %9633 = vmatprep.subr.mxu0 0.0
    %9634 = vmatpush1.msra.mxu0 0.0
    %9635 = vmatprep.subr.mxu0 0.0
    %9636 = vmatpush1.msra.mxu0 0.0
    %9637 = vmatprep.subr.mxu0 0.0
    %9638 = vmatpush1.msra.mxu0 0.0
    %9639 = vmatprep.subr.mxu0 0.0
    %9640 = vmatpush1.msra.mxu0 0.0
    %9641 = vmatprep.subr.mxu0 0.0
    %9642 = vmatpush1.msra.mxu0 0.0
    %9643 = vmatprep.subr.mxu0 0.0
    %9644 = vmatpush1.msra.mxu0 0.0
    %9645 = vmatprep.subr.mxu0 0.0
    %9646 = vmatpush1.msra.mxu0 0.0
    %9647 = vmatprep.subr.mxu0 0.0
    %9648 = vmatpush1.msra.mxu0 0.0
    %9649 = vmatprep.subr.mxu0 0.0
    %9650 = vmatpush1.msra.mxu0 0.0
    %9651 = vmatprep.subr.mxu0 0.0
    %9652 = vmatpush1.msra.mxu0 0.0
    %9653 = vmatprep.subr.mxu0 0.0
    %9654 = vmatpush1.msra.mxu0 0.0
    %9655 = vmatprep.subr.mxu0 0.0
    %9656 = vmatpush1.msra.mxu0 0.0
    %9657 = vmatprep.subr.mxu0 0.0
    %9658 = vmatpush1.msra.mxu0 0.0
    %9659 = vmatprep.subr.mxu0 0.0
    %9660 = vmatpush1.msra.mxu0 0.0
    %9661 = vmatprep.subr.mxu0 0.0
    %9662 = vmatpush1.msra.mxu0 0.0
    %9663 = vmatprep.mubr.f32.mxu0 0.0
    %9664 = vmatmul.mubr.f32.gmra.mrb[0].mxu0 %v9594
    %v9665 = vpop.f32.mrb[0].mxu0
    %v9666 = vadd.f32 0.0, %v9665
    %v9667 = vpop.f32.mrb[0].mxu0
    %9668 = vmatprep.mubr.f32.mxu0 0.0
    %9669 = vmatmul.mubr.f32.gmra.mrb[0].mxu0 %v9597
    %v9670 = vpop.f32.mrb[0].mxu0
    %v9671 = vadd.f32 0.0, %v9670
    %v9672 = vpop.f32.mrb[0].mxu0
    %9673 = vdwg.mxu0
    %v9675 = vsel %vm354, %v8713, 0
    %v9678 = vsel %vm354, %v8715, 0
    %9680 = vmatprep.subr.mxu0 0.0
    %9681 = vmatpush1.msra.mxu0 %v531
    %9682 = vmatprep.subr.mxu0 0.0
    %9683 = vmatpush1.msra.mxu0 %v532
    %9684 = vmatprep.subr.mxu0 0.0
    %9685 = vmatpush1.msra.mxu0 0.0
    %9686 = vmatprep.subr.mxu0 0.0
    %9687 = vmatpush1.msra.mxu0 0.0
    %9688 = vmatprep.subr.mxu0 0.0
    %9689 = vmatpush1.msra.mxu0 0.0
    %9690 = vmatprep.subr.mxu0 0.0
    %9691 = vmatpush1.msra.mxu0 0.0
    %9692 = vmatprep.subr.mxu0 0.0
    %9693 = vmatpush1.msra.mxu0 0.0
    %9694 = vmatprep.subr.mxu0 0.0
    %9695 = vmatpush1.msra.mxu0 0.0
    %9696 = vmatprep.subr.mxu0 0.0
    %9697 = vmatpush1.msra.mxu0 0.0
    %9698 = vmatprep.subr.mxu0 0.0
    %9699 = vmatpush1.msra.mxu0 0.0
    %9700 = vmatprep.subr.mxu0 0.0
    %9701 = vmatpush1.msra.mxu0 0.0
    %9702 = vmatprep.subr.mxu0 0.0
    %9703 = vmatpush1.msra.mxu0 0.0
    %9704 = vmatprep.subr.mxu0 0.0
    %9705 = vmatpush1.msra.mxu0 0.0
    %9706 = vmatprep.subr.mxu0 0.0
    %9707 = vmatpush1.msra.mxu0 0.0
    %9708 = vmatprep.subr.mxu0 0.0
    %9709 = vmatpush1.msra.mxu0 0.0
    %9710 = vmatprep.subr.mxu0 0.0
    %9711 = vmatpush1.msra.mxu0 0.0
    %9712 = vmatprep.subr.mxu0 0.0
    %9713 = vmatpush1.msra.mxu0 0.0
    %9714 = vmatprep.subr.mxu0 0.0
    %9715 = vmatpush1.msra.mxu0 0.0
    %9716 = vmatprep.subr.mxu0 0.0
    %9717 = vmatpush1.msra.mxu0 0.0
    %9718 = vmatprep.subr.mxu0 0.0
    %9719 = vmatpush1.msra.mxu0 0.0
    %9720 = vmatprep.subr.mxu0 0.0
    %9721 = vmatpush1.msra.mxu0 0.0
    %9722 = vmatprep.subr.mxu0 0.0
    %9723 = vmatpush1.msra.mxu0 0.0
    %9724 = vmatprep.subr.mxu0 0.0
    %9725 = vmatpush1.msra.mxu0 0.0
    %9726 = vmatprep.subr.mxu0 0.0
    %9727 = vmatpush1.msra.mxu0 0.0
    %9728 = vmatprep.subr.mxu0 0.0
    %9729 = vmatpush1.msra.mxu0 0.0
    %9730 = vmatprep.subr.mxu0 0.0
    %9731 = vmatpush1.msra.mxu0 0.0
    %9732 = vmatprep.subr.mxu0 0.0
    %9733 = vmatpush1.msra.mxu0 0.0
    %9734 = vmatprep.subr.mxu0 0.0
    %9735 = vmatpush1.msra.mxu0 0.0
    %9736 = vmatprep.subr.mxu0 0.0
    %9737 = vmatpush1.msra.mxu0 0.0
    %9738 = vmatprep.subr.mxu0 0.0
    %9739 = vmatpush1.msra.mxu0 0.0
    %9740 = vmatprep.subr.mxu0 0.0
    %9741 = vmatpush1.msra.mxu0 0.0
    %9742 = vmatprep.subr.mxu0 0.0
    %9743 = vmatpush1.msra.mxu0 0.0
    %9744 = vmatprep.mubr.f32.mxu0 0.0
    %9745 = vmatmul.mubr.f32.gmra.mrb[0].mxu0 %v9675
    %v9746 = vpop.f32.mrb[0].mxu0
    %v9747 = vadd.f32 0.0, %v9746
    %v9748 = vpop.f32.mrb[0].mxu0
    %9749 = vmatprep.mubr.f32.mxu0 0.0
    %9750 = vmatmul.mubr.f32.gmra.mrb[0].mxu0 %v9678
    %v9751 = vpop.f32.mrb[0].mxu0
    %v9752 = vadd.f32 0.0, %v9751
    %v9753 = vpop.f32.mrb[0].mxu0
    %9754 = vdwg.mxu0
    %v9756 = vsel %vm354, %v8717, 0
    %v9759 = vsel %vm354, %v8719, 0
    %9761 = vmatprep.subr.mxu0 0.0
    %9762 = vmatpush1.msra.mxu0 %v533
    %9763 = vmatprep.subr.mxu0 0.0
    %9764 = vmatpush1.msra.mxu0 %v534
    %9765 = vmatprep.subr.mxu0 0.0
    %9766 = vmatpush1.msra.mxu0 0.0
    %9767 = vmatprep.subr.mxu0 0.0
    %9768 = vmatpush1.msra.mxu0 0.0
    %9769 = vmatprep.subr.mxu0 0.0
    %9770 = vmatpush1.msra.mxu0 0.0
    %9771 = vmatprep.subr.mxu0 0.0
    %9772 = vmatpush1.msra.mxu0 0.0
    %9773 = vmatprep.subr.mxu0 0.0
    %9774 = vmatpush1.msra.mxu0 0.0
    %9775 = vmatprep.subr.mxu0 0.0
    %9776 = vmatpush1.msra.mxu0 0.0
    %9777 = vmatprep.subr.mxu0 0.0
    %9778 = vmatpush1.msra.mxu0 0.0
    %9779 = vmatprep.subr.mxu0 0.0
    %9780 = vmatpush1.msra.mxu0 0.0
    %9781 = vmatprep.subr.mxu0 0.0
    %9782 = vmatpush1.msra.mxu0 0.0
    %9783 = vmatprep.subr.mxu0 0.0
    %9784 = vmatpush1.msra.mxu0 0.0
    %9785 = vmatprep.subr.mxu0 0.0
    %9786 = vmatpush1.msra.mxu0 0.0
    %9787 = vmatprep.subr.mxu0 0.0
    %9788 = vmatpush1.msra.mxu0 0.0
    %9789 = vmatprep.subr.mxu0 0.0
    %9790 = vmatpush1.msra.mxu0 0.0
    %9791 = vmatprep.subr.mxu0 0.0
    %9792 = vmatpush1.msra.mxu0 0.0
    %9793 = vmatprep.subr.mxu0 0.0
    %9794 = vmatpush1.msra.mxu0 0.0
    %9795 = vmatprep.subr.mxu0 0.0
    %9796 = vmatpush1.msra.mxu0 0.0
    %9797 = vmatprep.subr.mxu0 0.0
    %9798 = vmatpush1.msra.mxu0 0.0
    %9799 = vmatprep.subr.mxu0 0.0
    %9800 = vmatpush1.msra.mxu0 0.0
    %9801 = vmatprep.subr.mxu0 0.0
    %9802 = vmatpush1.msra.mxu0 0.0
    %9803 = vmatprep.subr.mxu0 0.0
    %9804 = vmatpush1.msra.mxu0 0.0
    %9805 = vmatprep.subr.mxu0 0.0
    %9806 = vmatpush1.msra.mxu0 0.0
    %9807 = vmatprep.subr.mxu0 0.0
    %9808 = vmatpush1.msra.mxu0 0.0
    %9809 = vmatprep.subr.mxu0 0.0
    %9810 = vmatpush1.msra.mxu0 0.0
    %9811 = vmatprep.subr.mxu0 0.0
    %9812 = vmatpush1.msra.mxu0 0.0
    %9813 = vmatprep.subr.mxu0 0.0
    %9814 = vmatpush1.msra.mxu0 0.0
    %9815 = vmatprep.subr.mxu0 0.0
    %9816 = vmatpush1.msra.mxu0 0.0
    %9817 = vmatprep.subr.mxu0 0.0
    %9818 = vmatpush1.msra.mxu0 0.0
    %9819 = vmatprep.subr.mxu0 0.0
    %9820 = vmatpush1.msra.mxu0 0.0
    %9821 = vmatprep.subr.mxu0 0.0
    %9822 = vmatpush1.msra.mxu0 0.0
    %9823 = vmatprep.subr.mxu0 0.0
    %9824 = vmatpush1.msra.mxu0 0.0
    %9825 = vmatprep.mubr.f32.mxu0 0.0
    %9826 = vmatmul.mubr.f32.gmra.mrb[0].mxu0 %v9756
    %v9827 = vpop.f32.mrb[0].mxu0
    %v9828 = vadd.f32 0.0, %v9827
    %v9829 = vpop.f32.mrb[0].mxu0
    %9830 = vmatprep.mubr.f32.mxu0 0.0
    %9831 = vmatmul.mubr.f32.gmra.mrb[0].mxu0 %v9759
    %v9832 = vpop.f32.mrb[0].mxu0
    %v9833 = vadd.f32 0.0, %v9832
    %v9834 = vpop.f32.mrb[0].mxu0
    %9835 = vdwg.mxu0
    %v9837 = vsel %vm354, %v8721, 0
    %v9840 = vsel %vm354, %v8723, 0
    %9842 = vmatprep.subr.mxu0 0.0
    %9843 = vmatpush1.msra.mxu0 %v539
    %9844 = vmatprep.subr.mxu0 0.0
    %9845 = vmatpush1.msra.mxu0 %v540
    %9846 = vmatprep.subr.mxu0 0.0
    %9847 = vmatpush1.msra.mxu0 0.0
    %9848 = vmatprep.subr.mxu0 0.0
    %9849 = vmatpush1.msra.mxu0 0.0
    %9850 = vmatprep.subr.mxu0 0.0
    %9851 = vmatpush1.msra.mxu0 0.0
    %9852 = vmatprep.subr.mxu0 0.0
    %9853 = vmatpush1.msra.mxu0 0.0
    %9854 = vmatprep.subr.mxu0 0.0
    %9855 = vmatpush1.msra.mxu0 0.0
    %9856 = vmatprep.subr.mxu0 0.0
    %9857 = vmatpush1.msra.mxu0 0.0
    %9858 = vmatprep.subr.mxu0 0.0
    %9859 = vmatpush1.msra.mxu0 0.0
    %9860 = vmatprep.subr.mxu0 0.0
    %9861 = vmatpush1.msra.mxu0 0.0
    %9862 = vmatprep.subr.mxu0 0.0
    %9863 = vmatpush1.msra.mxu0 0.0
    %9864 = vmatprep.subr.mxu0 0.0
    %9865 = vmatpush1.msra.mxu0 0.0
    %9866 = vmatprep.subr.mxu0 0.0
    %9867 = vmatpush1.msra.mxu0 0.0
    %9868 = vmatprep.subr.mxu0 0.0
    %9869 = vmatpush1.msra.mxu0 0.0
    %9870 = vmatprep.subr.mxu0 0.0
    %9871 = vmatpush1.msra.mxu0 0.0
    %9872 = vmatprep.subr.mxu0 0.0
    %9873 = vmatpush1.msra.mxu0 0.0
    %9874 = vmatprep.subr.mxu0 0.0
    %9875 = vmatpush1.msra.mxu0 0.0
    %9876 = vmatprep.subr.mxu0 0.0
    %9877 = vmatpush1.msra.mxu0 0.0
    %9878 = vmatprep.subr.mxu0 0.0
    %9879 = vmatpush1.msra.mxu0 0.0
    %9880 = vmatprep.subr.mxu0 0.0
    %9881 = vmatpush1.msra.mxu0 0.0
    %9882 = vmatprep.subr.mxu0 0.0
    %9883 = vmatpush1.msra.mxu0 0.0
    %9884 = vmatprep.subr.mxu0 0.0
    %9885 = vmatpush1.msra.mxu0 0.0
    %9886 = vmatprep.subr.mxu0 0.0
    %9887 = vmatpush1.msra.mxu0 0.0
    %9888 = vmatprep.subr.mxu0 0.0
    %9889 = vmatpush1.msra.mxu0 0.0
    %9890 = vmatprep.subr.mxu0 0.0
    %9891 = vmatpush1.msra.mxu0 0.0
    %9892 = vmatprep.subr.mxu0 0.0
    %9893 = vmatpush1.msra.mxu0 0.0
    %9894 = vmatprep.subr.mxu0 0.0
    %9895 = vmatpush1.msra.mxu0 0.0
    %9896 = vmatprep.subr.mxu0 0.0
    %9897 = vmatpush1.msra.mxu0 0.0
    %9898 = vmatprep.subr.mxu0 0.0
    %9899 = vmatpush1.msra.mxu0 0.0
    %9900 = vmatprep.subr.mxu0 0.0
    %9901 = vmatpush1.msra.mxu0 0.0
    %9902 = vmatprep.subr.mxu0 0.0
    %9903 = vmatpush1.msra.mxu0 0.0
    %9904 = vmatprep.subr.mxu0 0.0
    %9905 = vmatpush1.msra.mxu0 0.0
    %9906 = vmatprep.mubr.f32.mxu0 0.0
    %9907 = vmatmul.mubr.f32.gmra.mrb[0].mxu0 %v9837
    %v9908 = vpop.f32.mrb[0].mxu0
    %v9909 = vadd.f32 0.0, %v9908
    %v9910 = vpop.f32.mrb[0].mxu0
    %9911 = vmatprep.mubr.f32.mxu0 0.0
    %9912 = vmatmul.mubr.f32.gmra.mrb[0].mxu0 %v9840
    %v9913 = vpop.f32.mrb[0].mxu0
    %v9914 = vadd.f32 0.0, %v9913
    %v9915 = vpop.f32.mrb[0].mxu0
    %9916 = vdwg.mxu0
    %v9918 = vsel %vm354, %v8725, 0
    %v9921 = vsel %vm354, %v8727, 0
    %9923 = vmatprep.subr.mxu0 0.0
    %9924 = vmatpush1.msra.mxu0 %v541
    %9925 = vmatprep.subr.mxu0 0.0
    %9926 = vmatpush1.msra.mxu0 %v542
    %9927 = vmatprep.subr.mxu0 0.0
    %9928 = vmatpush1.msra.mxu0 0.0
    %9929 = vmatprep.subr.mxu0 0.0
    %9930 = vmatpush1.msra.mxu0 0.0
    %9931 = vmatprep.subr.mxu0 0.0
    %9932 = vmatpush1.msra.mxu0 0.0
    %9933 = vmatprep.subr.mxu0 0.0
    %9934 = vmatpush1.msra.mxu0 0.0
    %9935 = vmatprep.subr.mxu0 0.0
    %9936 = vmatpush1.msra.mxu0 0.0
    %9937 = vmatprep.subr.mxu0 0.0
    %9938 = vmatpush1.msra.mxu0 0.0
    %9939 = vmatprep.subr.mxu0 0.0
    %9940 = vmatpush1.msra.mxu0 0.0
    %9941 = vmatprep.subr.mxu0 0.0
    %9942 = vmatpush1.msra.mxu0 0.0
    %9943 = vmatprep.subr.mxu0 0.0
    %9944 = vmatpush1.msra.mxu0 0.0
    %9945 = vmatprep.subr.mxu0 0.0
    %9946 = vmatpush1.msra.mxu0 0.0
    %9947 = vmatprep.subr.mxu0 0.0
    %9948 = vmatpush1.msra.mxu0 0.0
    %9949 = vmatprep.subr.mxu0 0.0
    %9950 = vmatpush1.msra.mxu0 0.0
    %9951 = vmatprep.subr.mxu0 0.0
    %9952 = vmatpush1.msra.mxu0 0.0
    %9953 = vmatprep.subr.mxu0 0.0
    %9954 = vmatpush1.msra.mxu0 0.0
    %9955 = vmatprep.subr.mxu0 0.0
    %9956 = vmatpush1.msra.mxu0 0.0
    %9957 = vmatprep.subr.mxu0 0.0
    %9958 = vmatpush1.msra.mxu0 0.0
    %9959 = vmatprep.subr.mxu0 0.0
    %9960 = vmatpush1.msra.mxu0 0.0
    %9961 = vmatprep.subr.mxu0 0.0
    %9962 = vmatpush1.msra.mxu0 0.0
    %9963 = vmatprep.subr.mxu0 0.0
    %9964 = vmatpush1.msra.mxu0 0.0
    %9965 = vmatprep.subr.mxu0 0.0
    %9966 = vmatpush1.msra.mxu0 0.0
    %9967 = vmatprep.subr.mxu0 0.0
    %9968 = vmatpush1.msra.mxu0 0.0
    %9969 = vmatprep.subr.mxu0 0.0
    %9970 = vmatpush1.msra.mxu0 0.0
    %9971 = vmatprep.subr.mxu0 0.0
    %9972 = vmatpush1.msra.mxu0 0.0
    %9973 = vmatprep.subr.mxu0 0.0
    %9974 = vmatpush1.msra.mxu0 0.0
    %9975 = vmatprep.subr.mxu0 0.0
    %9976 = vmatpush1.msra.mxu0 0.0
    %9977 = vmatprep.subr.mxu0 0.0
    %9978 = vmatpush1.msra.mxu0 0.0
    %9979 = vmatprep.subr.mxu0 0.0
    %9980 = vmatpush1.msra.mxu0 0.0
    %9981 = vmatprep.subr.mxu0 0.0
    %9982 = vmatpush1.msra.mxu0 0.0
    %9983 = vmatprep.subr.mxu0 0.0
    %9984 = vmatpush1.msra.mxu0 0.0
    %9985 = vmatprep.subr.mxu0 0.0
    %9986 = vmatpush1.msra.mxu0 0.0
    %9987 = vmatprep.mubr.f32.mxu0 0.0
    %9988 = vmatmul.mubr.f32.gmra.mrb[0].mxu0 %v9918
    %v9989 = vpop.f32.mrb[0].mxu0
    %v9990 = vadd.f32 0.0, %v9989
    %v9991 = vpop.f32.mrb[0].mxu0
    %9992 = vmatprep.mubr.f32.mxu0 0.0
    %9993 = vmatmul.mubr.f32.gmra.mrb[0].mxu0 %v9921
    %v9994 = vpop.f32.mrb[0].mxu0
    %v9995 = vadd.f32 0.0, %v9994
    %v9996 = vpop.f32.mrb[0].mxu0
    %9997 = vdwg.mxu0
    %v9999 = vsel %vm354, %v8729, 0
    %v10002 = vsel %vm354, %v8731, 0
    %10004 = vmatprep.subr.mxu0 0.0
    %10005 = vmatpush1.msra.mxu0 %v543
    %10006 = vmatprep.subr.mxu0 0.0
    %10007 = vmatpush1.msra.mxu0 %v544
    %10008 = vmatprep.subr.mxu0 0.0
    %10009 = vmatpush1.msra.mxu0 0.0
    %10010 = vmatprep.subr.mxu0 0.0
    %10011 = vmatpush1.msra.mxu0 0.0
    %10012 = vmatprep.subr.mxu0 0.0
    %10013 = vmatpush1.msra.mxu0 0.0
    %10014 = vmatprep.subr.mxu0 0.0
    %10015 = vmatpush1.msra.mxu0 0.0
    %10016 = vmatprep.subr.mxu0 0.0
    %10017 = vmatpush1.msra.mxu0 0.0
    %10018 = vmatprep.subr.mxu0 0.0
    %10019 = vmatpush1.msra.mxu0 0.0
    %10020 = vmatprep.subr.mxu0 0.0
    %10021 = vmatpush1.msra.mxu0 0.0
    %10022 = vmatprep.subr.mxu0 0.0
    %10023 = vmatpush1.msra.mxu0 0.0
    %10024 = vmatprep.subr.mxu0 0.0
    %10025 = vmatpush1.msra.mxu0 0.0
    %10026 = vmatprep.subr.mxu0 0.0
    %10027 = vmatpush1.msra.mxu0 0.0
    %10028 = vmatprep.subr.mxu0 0.0
    %10029 = vmatpush1.msra.mxu0 0.0
    %10030 = vmatprep.subr.mxu0 0.0
    %10031 = vmatpush1.msra.mxu0 0.0
    %10032 = vmatprep.subr.mxu0 0.0
    %10033 = vmatpush1.msra.mxu0 0.0
    %10034 = vmatprep.subr.mxu0 0.0
    %10035 = vmatpush1.msra.mxu0 0.0
    %10036 = vmatprep.subr.mxu0 0.0
    %10037 = vmatpush1.msra.mxu0 0.0
    %10038 = vmatprep.subr.mxu0 0.0
    %10039 = vmatpush1.msra.mxu0 0.0
    %10040 = vmatprep.subr.mxu0 0.0
    %10041 = vmatpush1.msra.mxu0 0.0
    %10042 = vmatprep.subr.mxu0 0.0
    %10043 = vmatpush1.msra.mxu0 0.0
    %10044 = vmatprep.subr.mxu0 0.0
    %10045 = vmatpush1.msra.mxu0 0.0
    %10046 = vmatprep.subr.mxu0 0.0
    %10047 = vmatpush1.msra.mxu0 0.0
    %10048 = vmatprep.subr.mxu0 0.0
    %10049 = vmatpush1.msra.mxu0 0.0
    %10050 = vmatprep.subr.mxu0 0.0
    %10051 = vmatpush1.msra.mxu0 0.0
    %10052 = vmatprep.subr.mxu0 0.0
    %10053 = vmatpush1.msra.mxu0 0.0
    %10054 = vmatprep.subr.mxu0 0.0
    %10055 = vmatpush1.msra.mxu0 0.0
    %10056 = vmatprep.subr.mxu0 0.0
    %10057 = vmatpush1.msra.mxu0 0.0
    %10058 = vmatprep.subr.mxu0 0.0
    %10059 = vmatpush1.msra.mxu0 0.0
    %10060 = vmatprep.subr.mxu0 0.0
    %10061 = vmatpush1.msra.mxu0 0.0
    %10062 = vmatprep.subr.mxu0 0.0
    %10063 = vmatpush1.msra.mxu0 0.0
    %10064 = vmatprep.subr.mxu0 0.0
    %10065 = vmatpush1.msra.mxu0 0.0
    %10066 = vmatprep.subr.mxu0 0.0
    %10067 = vmatpush1.msra.mxu0 0.0
    %10068 = vmatprep.mubr.f32.mxu0 0.0
    %10069 = vmatmul.mubr.f32.gmra.mrb[0].mxu0 %v9999
    %v10070 = vpop.f32.mrb[0].mxu0
    %v10071 = vadd.f32 0.0, %v10070
    %v10072 = vpop.f32.mrb[0].mxu0
    %10073 = vmatprep.mubr.f32.mxu0 0.0
    %10074 = vmatmul.mubr.f32.gmra.mrb[0].mxu0 %v10002
    %v10075 = vpop.f32.mrb[0].mxu0
    %v10076 = vadd.f32 0.0, %v10075
    %v10077 = vpop.f32.mrb[0].mxu0
    %10078 = vdwg.mxu0
    %v10080 = vsel %vm354, %v8733, 0
    %v10083 = vsel %vm354, %v8735, 0
    %10085 = vmatprep.subr.mxu0 0.0
    %10086 = vmatpush1.msra.mxu0 %v545
    %10087 = vmatprep.subr.mxu0 0.0
    %10088 = vmatpush1.msra.mxu0 %v546
    %10089 = vmatprep.subr.mxu0 0.0
    %10090 = vmatpush1.msra.mxu0 0.0
    %10091 = vmatprep.subr.mxu0 0.0
    %10092 = vmatpush1.msra.mxu0 0.0
    %10093 = vmatprep.subr.mxu0 0.0
    %10094 = vmatpush1.msra.mxu0 0.0
    %10095 = vmatprep.subr.mxu0 0.0
    %10096 = vmatpush1.msra.mxu0 0.0
    %10097 = vmatprep.subr.mxu0 0.0
    %10098 = vmatpush1.msra.mxu0 0.0
    %10099 = vmatprep.subr.mxu0 0.0
    %10100 = vmatpush1.msra.mxu0 0.0
    %10101 = vmatprep.subr.mxu0 0.0
    %10102 = vmatpush1.msra.mxu0 0.0
    %10103 = vmatprep.subr.mxu0 0.0
    %10104 = vmatpush1.msra.mxu0 0.0
    %10105 = vmatprep.subr.mxu0 0.0
    %10106 = vmatpush1.msra.mxu0 0.0
    %10107 = vmatprep.subr.mxu0 0.0
    %10108 = vmatpush1.msra.mxu0 0.0
    %10109 = vmatprep.subr.mxu0 0.0
    %10110 = vmatpush1.msra.mxu0 0.0
    %10111 = vmatprep.subr.mxu0 0.0
    %10112 = vmatpush1.msra.mxu0 0.0
    %10113 = vmatprep.subr.mxu0 0.0
    %10114 = vmatpush1.msra.mxu0 0.0
    %10115 = vmatprep.subr.mxu0 0.0
    %10116 = vmatpush1.msra.mxu0 0.0
    %10117 = vmatprep.subr.mxu0 0.0
    %10118 = vmatpush1.msra.mxu0 0.0
    %10119 = vmatprep.subr.mxu0 0.0
    %10120 = vmatpush1.msra.mxu0 0.0
    %10121 = vmatprep.subr.mxu0 0.0
    %10122 = vmatpush1.msra.mxu0 0.0
    %10123 = vmatprep.subr.mxu0 0.0
    %10124 = vmatpush1.msra.mxu0 0.0
    %10125 = vmatprep.subr.mxu0 0.0
    %10126 = vmatpush1.msra.mxu0 0.0
    %10127 = vmatprep.subr.mxu0 0.0
    %10128 = vmatpush1.msra.mxu0 0.0
    %10129 = vmatprep.subr.mxu0 0.0
    %10130 = vmatpush1.msra.mxu0 0.0
    %10131 = vmatprep.subr.mxu0 0.0
    %10132 = vmatpush1.msra.mxu0 0.0
    %10133 = vmatprep.subr.mxu0 0.0
    %10134 = vmatpush1.msra.mxu0 0.0
    %10135 = vmatprep.subr.mxu0 0.0
    %10136 = vmatpush1.msra.mxu0 0.0
    %10137 = vmatprep.subr.mxu0 0.0
    %10138 = vmatpush1.msra.mxu0 0.0
    %10139 = vmatprep.subr.mxu0 0.0
    %10140 = vmatpush1.msra.mxu0 0.0
    %10141 = vmatprep.subr.mxu0 0.0
    %10142 = vmatpush1.msra.mxu0 0.0
    %10143 = vmatprep.subr.mxu0 0.0
    %10144 = vmatpush1.msra.mxu0 0.0
    %10145 = vmatprep.subr.mxu0 0.0
    %10146 = vmatpush1.msra.mxu0 0.0
    %10147 = vmatprep.subr.mxu0 0.0
    %10148 = vmatpush1.msra.mxu0 0.0
    %10149 = vmatprep.mubr.f32.mxu0 0.0
    %10150 = vmatmul.mubr.f32.gmra.mrb[0].mxu0 %v10080
    %v10151 = vpop.f32.mrb[0].mxu0
    %v10152 = vadd.f32 0.0, %v10151
    %v10153 = vpop.f32.mrb[0].mxu0
    %10154 = vmatprep.mubr.f32.mxu0 0.0
    %10155 = vmatmul.mubr.f32.gmra.mrb[0].mxu0 %v10083
    %v10156 = vpop.f32.mrb[0].mxu0
    %v10157 = vadd.f32 0.0, %v10156
    %v10158 = vpop.f32.mrb[0].mxu0
    %10159 = vdwg.mxu0
    %v10160 = vadd.f32 %v7417, %v8937
    %v10161 = vadd.f32 %v7422, %v8942
    %v10162 = vadd.f32 %v7498, %v9018
    %v10163 = vadd.f32 %v7503, %v9023
    %v10164 = vadd.f32 %v7579, %v9099
    %v10165 = vadd.f32 %v7584, %v9104
    %v10166 = vadd.f32 %v7660, %v9180
    %v10167 = vadd.f32 %v7665, %v9185
    %v10168 = vadd.f32 %v7741, %v9261
    %v10169 = vadd.f32 %v7746, %v9266
    %v10170 = vadd.f32 %v7822, %v9342
    %v10171 = vadd.f32 %v7827, %v9347
    %v10172 = vadd.f32 %v7903, %v9423
    %v10173 = vadd.f32 %v7908, %v9428
    %v10174 = vadd.f32 %v7984, %v9504
    %v10175 = vadd.f32 %v7989, %v9509
    %v10176 = vadd.f32 %v8065, %v9585
    %v10177 = vadd.f32 %v8070, %v9590
    %v10178 = vadd.f32 %v8146, %v9666
    %v10179 = vadd.f32 %v8151, %v9671
    %v10180 = vadd.f32 %v8227, %v9747
    %v10181 = vadd.f32 %v8232, %v9752
    %v10182 = vadd.f32 %v8308, %v9828
    %v10183 = vadd.f32 %v8313, %v9833
    %v10184 = vadd.f32 %v8389, %v9909
    %v10185 = vadd.f32 %v8394, %v9914
    %v10186 = vadd.f32 %v8470, %v9990
    %v10187 = vadd.f32 %v8475, %v9995
    %v10188 = vadd.f32 %v8551, %v10071
    %v10189 = vadd.f32 %v8556, %v10076
    %v10190 = vadd.f32 %v8632, %v10152
    %v10191 = vadd.f32 %v8637, %v10157
    %v10192 = vrcp.pop %v8832
    %v10193 = vrcp.pop %v8833
    %v10194 = vrcp.pop %v8834
    %v10195 = vrcp.pop %v8835
    %v10196 = vrcp.pop %v8836
    %v10197 = vrcp.pop %v8837
    %v10198 = vrcp.pop %v8838
    %v10199 = vrcp.pop %v8839
    %v10200 = vrcp.pop %v8840
    %v10201 = vrcp.pop %v8841
    %v10202 = vrcp.pop %v8842
    %v10203 = vrcp.pop %v8843
    %v10204 = vrcp.pop %v8844
    %v10205 = vrcp.pop %v8845
    %v10206 = vrcp.pop %v8846
    %v10207 = vrcp.pop %v8847
    %v10208 = vrcp.pop %v8848
    %v10209 = vrcp.pop %v8849
    %v10210 = vrcp.pop %v8850
    %v10211 = vrcp.pop %v8851
    %v10212 = vrcp.pop %v8852
    %v10213 = vrcp.pop %v8853
    %v10214 = vrcp.pop %v8854
    %v10215 = vrcp.pop %v8855
    %v10216 = vrcp.pop %v8856
    %v10217 = vrcp.pop %v8857
    %v10218 = vrcp.pop %v8858
    %v10219 = vrcp.pop %v8859
    %v10220 = vrcp.pop %v8860
    %v10221 = vrcp.pop %v8861
    %v10222 = vrcp.pop %v8862
    %v10223 = vrcp.pop %v8863
    %v10224 = vmul.f32 %v8832, %v10192
    %v10225 = vmul.f32 %v8833, %v10193
    %v10226 = vmul.f32 %v8834, %v10194
    %v10227 = vmul.f32 %v8835, %v10195
    %v10228 = vmul.f32 %v8836, %v10196
    %v10229 = vmul.f32 %v8837, %v10197
    %v10230 = vmul.f32 %v8838, %v10198
    %v10231 = vmul.f32 %v8839, %v10199
    %v10232 = vmul.f32 %v8840, %v10200
    %v10233 = vmul.f32 %v8841, %v10201
    %v10234 = vmul.f32 %v8842, %v10202
    %v10235 = vmul.f32 %v8843, %v10203
    %v10236 = vmul.f32 %v8844, %v10204
    %v10237 = vmul.f32 %v8845, %v10205
    %v10238 = vmul.f32 %v8846, %v10206
    %v10239 = vmul.f32 %v8847, %v10207
    %v10240 = vmul.f32 %v8848, %v10208
    %v10241 = vmul.f32 %v8849, %v10209
    %v10242 = vmul.f32 %v8850, %v10210
    %v10243 = vmul.f32 %v8851, %v10211
    %v10244 = vmul.f32 %v8852, %v10212
    %v10245 = vmul.f32 %v8853, %v10213
    %v10246 = vmul.f32 %v8854, %v10214
    %v10247 = vmul.f32 %v8855, %v10215
    %v10248 = vmul.f32 %v8856, %v10216
    %v10249 = vmul.f32 %v8857, %v10217
    %v10250 = vmul.f32 %v8858, %v10218
    %v10251 = vmul.f32 %v8859, %v10219
    %v10252 = vmul.f32 %v8860, %v10220
    %v10253 = vmul.f32 %v8861, %v10221
    %v10254 = vmul.f32 %v8862, %v10222
    %v10255 = vmul.f32 %v8863, %v10223
    %v10256 = vsub.f32 2.0, %v10224
    %v10257 = vsub.f32 2.0, %v10225
    %v10258 = vsub.f32 2.0, %v10226
    %v10259 = vsub.f32 2.0, %v10227
    %v10260 = vsub.f32 2.0, %v10228
    %v10261 = vsub.f32 2.0, %v10229
    %v10262 = vsub.f32 2.0, %v10230
    %v10263 = vsub.f32 2.0, %v10231
    %v10264 = vsub.f32 2.0, %v10232
    %v10265 = vsub.f32 2.0, %v10233
    %v10266 = vsub.f32 2.0, %v10234
    %v10267 = vsub.f32 2.0, %v10235
    %v10268 = vsub.f32 2.0, %v10236
    %v10269 = vsub.f32 2.0, %v10237
    %v10270 = vsub.f32 2.0, %v10238
    %v10271 = vsub.f32 2.0, %v10239
    %v10272 = vsub.f32 2.0, %v10240
    %v10273 = vsub.f32 2.0, %v10241
    %v10274 = vsub.f32 2.0, %v10242
    %v10275 = vsub.f32 2.0, %v10243
    %v10276 = vsub.f32 2.0, %v10244
    %v10277 = vsub.f32 2.0, %v10245
    %v10278 = vsub.f32 2.0, %v10246
    %v10279 = vsub.f32 2.0, %v10247
    %v10280 = vsub.f32 2.0, %v10248
    %v10281 = vsub.f32 2.0, %v10249
    %v10282 = vsub.f32 2.0, %v10250
    %v10283 = vsub.f32 2.0, %v10251
    %v10284 = vsub.f32 2.0, %v10252
    %v10285 = vsub.f32 2.0, %v10253
    %v10286 = vsub.f32 2.0, %v10254
    %v10287 = vsub.f32 2.0, %v10255
    %v10288 = vmul.f32 %v10192, %v10256
    %v10289 = vmul.f32 %v10193, %v10257
    %v10290 = vmul.f32 %v10194, %v10258
    %v10291 = vmul.f32 %v10195, %v10259
    %v10292 = vmul.f32 %v10196, %v10260
    %v10293 = vmul.f32 %v10197, %v10261
    %v10294 = vmul.f32 %v10198, %v10262
    %v10295 = vmul.f32 %v10199, %v10263
    %v10296 = vmul.f32 %v10200, %v10264
    %v10297 = vmul.f32 %v10201, %v10265
    %v10298 = vmul.f32 %v10202, %v10266
    %v10299 = vmul.f32 %v10203, %v10267
    %v10300 = vmul.f32 %v10204, %v10268
    %v10301 = vmul.f32 %v10205, %v10269
    %v10302 = vmul.f32 %v10206, %v10270
    %v10303 = vmul.f32 %v10207, %v10271
    %v10304 = vmul.f32 %v10208, %v10272
    %v10305 = vmul.f32 %v10209, %v10273
    %v10306 = vmul.f32 %v10210, %v10274
    %v10307 = vmul.f32 %v10211, %v10275
    %v10308 = vmul.f32 %v10212, %v10276
    %v10309 = vmul.f32 %v10213, %v10277
    %v10310 = vmul.f32 %v10214, %v10278
    %v10311 = vmul.f32 %v10215, %v10279
    %v10312 = vmul.f32 %v10216, %v10280
    %v10313 = vmul.f32 %v10217, %v10281
    %v10314 = vmul.f32 %v10218, %v10282
    %v10315 = vmul.f32 %v10219, %v10283
    %v10316 = vmul.f32 %v10220, %v10284
    %v10317 = vmul.f32 %v10221, %v10285
    %v10318 = vmul.f32 %v10222, %v10286
    %v10319 = vmul.f32 %v10223, %v10287
    %v10320 = vmul.f32 %v10160, %v10288
    %v10321 = vmul.f32 %v10161, %v10289
    %v10322 = vmul.f32 %v10162, %v10290
    %v10323 = vmul.f32 %v10163, %v10291
    %v10324 = vmul.f32 %v10164, %v10292
    %v10325 = vmul.f32 %v10165, %v10293
    %v10326 = vmul.f32 %v10166, %v10294
    %v10327 = vmul.f32 %v10167, %v10295
    %v10328 = vmul.f32 %v10168, %v10296
    %v10329 = vmul.f32 %v10169, %v10297
    %v10330 = vmul.f32 %v10170, %v10298
    %v10331 = vmul.f32 %v10171, %v10299
    %v10332 = vmul.f32 %v10172, %v10300
    %v10333 = vmul.f32 %v10173, %v10301
    %v10334 = vmul.f32 %v10174, %v10302
    %v10335 = vmul.f32 %v10175, %v10303
    %v10336 = vmul.f32 %v10176, %v10304
    %v10337 = vmul.f32 %v10177, %v10305
    %v10338 = vmul.f32 %v10178, %v10306
    %v10339 = vmul.f32 %v10179, %v10307
    %v10340 = vmul.f32 %v10180, %v10308
    %v10341 = vmul.f32 %v10181, %v10309
    %v10342 = vmul.f32 %v10182, %v10310
    %v10343 = vmul.f32 %v10183, %v10311
    %v10344 = vmul.f32 %v10184, %v10312
    %v10345 = vmul.f32 %v10185, %v10313
    %v10346 = vmul.f32 %v10186, %v10314
    %v10347 = vmul.f32 %v10187, %v10315
    %v10348 = vmul.f32 %v10188, %v10316
    %v10349 = vmul.f32 %v10189, %v10317
    %v10350 = vmul.f32 %v10190, %v10318
    %v10351 = vmul.f32 %v10191, %v10319
    %10352 = vst.msk [vmem:[#allocation8] sm:$0xff] %vm903, %v10320
    %10353 = vst.msk [vmem:[#allocation8 + $0x8] sm:$0xff] %vm903, %v10321
    %10354 = vst.msk [vmem:[#allocation8 + $0x10] sm:$0xff] %vm903, %v10322
    %10355 = vst.msk [vmem:[#allocation8 + $0x18] sm:$0xff] %vm903, %v10323
    %10356 = vst.msk [vmem:[#allocation8 + $0x20] sm:$0xff] %vm903, %v10324
    %10357 = vst.msk [vmem:[#allocation8 + $0x28] sm:$0xff] %vm903, %v10325
    %10358 = vst.msk [vmem:[#allocation8 + $0x30] sm:$0xff] %vm903, %v10326
    %10359 = vst.msk [vmem:[#allocation8 + $0x38] sm:$0xff] %vm903, %v10327
    %10360 = vst.msk [vmem:[#allocation8 + $0x40] sm:$0xff] %vm903, %v10328
    %10361 = vst.msk [vmem:[#allocation8 + $0x48] sm:$0xff] %vm903, %v10329
    %10362 = vst.msk [vmem:[#allocation8 + $0x50] sm:$0xff] %vm903, %v10330
    %10363 = vst.msk [vmem:[#allocation8 + $0x58] sm:$0xff] %vm903, %v10331
    %10364 = vst.msk [vmem:[#allocation8 + $0x60] sm:$0xff] %vm903, %v10332
    %10365 = vst.msk [vmem:[#allocation8 + $0x68] sm:$0xff] %vm903, %v10333
    %10366 = vst.msk [vmem:[#allocation8 + $0x70] sm:$0xff] %vm903, %v10334
    %10367 = vst.msk [vmem:[#allocation8 + $0x78] sm:$0xff] %vm903, %v10335
    %10368 = vst.msk [vmem:[#allocation8 + $0x80] sm:$0xff] %vm903, %v10336
    %10369 = vst.msk [vmem:[#allocation8 + $0x88] sm:$0xff] %vm903, %v10337
    %10370 = vst.msk [vmem:[#allocation8 + $0x90] sm:$0xff] %vm903, %v10338
    %10371 = vst.msk [vmem:[#allocation8 + $0x98] sm:$0xff] %vm903, %v10339
    %10372 = vst.msk [vmem:[#allocation8 + $0xa0] sm:$0xff] %vm903, %v10340
    %10373 = vst.msk [vmem:[#allocation8 + $0xa8] sm:$0xff] %vm903, %v10341
    %10374 = vst.msk [vmem:[#allocation8 + $0xb0] sm:$0xff] %vm903, %v10342
    %10375 = vst.msk [vmem:[#allocation8 + $0xb8] sm:$0xff] %vm903, %v10343
    %10376 = vst.msk [vmem:[#allocation8 + $0xc0] sm:$0xff] %vm903, %v10344
    %10377 = vst.msk [vmem:[#allocation8 + $0xc8] sm:$0xff] %vm903, %v10345
    %10378 = vst.msk [vmem:[#allocation8 + $0xd0] sm:$0xff] %vm903, %v10346
    %10379 = vst.msk [vmem:[#allocation8 + $0xd8] sm:$0xff] %vm903, %v10347
    %10380 = vst.msk [vmem:[#allocation8 + $0xe0] sm:$0xff] %vm903, %v10348
    %10381 = vst.msk [vmem:[#allocation8 + $0xe8] sm:$0xff] %vm903, %v10349
    %10382 = vst.msk [vmem:[#allocation8 + $0xf0] sm:$0xff] %vm903, %v10350
    %10383 = vst.msk [vmem:[#allocation8 + $0xf8] sm:$0xff] %vm903, %v10351
    // Predicated region
    $region34: #{tpu_custom_call.1} parent=1 // pred_check
      _
    $region35: #{tpu_custom_call.1} parent=1 // pred_check_branch
      %10385 = sbr.rel (0) target = $region37
    $region36: #{tpu_custom_call.1} parent=1 // pred_region
      %s10387 = ssub.s32 4096, 4096
      %10388 = vsyncadd [#allocation4], %s10387
      %s10389 = sshll.u32 [#allocation8], 4
      %s10390 = int_to_ptr.vmem [resolvable:$true] %s10389
      %10395 = dma.vmem_to_hbm [thread:$0]  %s10390, 4096, %s5, [#allocation4], 128, 128, 8
    $region37: #{tpu_custom_call.1} parent=1 // pred_fallthru
      _
    // Predicated region
    $region38: #{tpu_custom_call.1} parent=1 // pred_check
      _
    $region39: #{tpu_custom_call.1} parent=1 // pred_check_branch
      %10397 = sbr.rel (0) target = $region41
    $region40: #{tpu_custom_call.1} parent=1 // pred_region
      %10398 = dma.done [#allocation4], 4096
    $region41: #{tpu_custom_call.1} parent=1 // pred_fallthru
      _
    %10399 = vsyncpa [#allocation3], 1
    %10400 = vsyncpa [#allocation6], 1
    %10401 = vsyncpa [#allocation4], 1

</llo_original>
